<compile_context>
chip_gen: v5e
topology: v5e:2x2
jax: 0.10.0
libtpu: 0.0.40
codegen_flags: <defaults>
</compile_context>

<pallas_src>
import functools

import jax
import jax.numpy as jnp
from jax import lax
from jax.experimental import pallas as pl
from jax.experimental.pallas import tpu as pltpu

IMG = 32            # small image consistent with patch-16 ViT demo
PATCH = 16
IN_CH = 3
PDIM = IN_CH * PATCH * PATCH          # 768 flattened patch dim
D = 384             # ViT-S embed dim (backbone_out_channel = [384])
HEADS = 6
HEAD_DIM = D // HEADS                 # 64
MLP = 4 * D                           # 1536
DEPTH = 2           # TODO(synk): real ViT-S has 12 blocks; kept small for demo
EPS = 1e-6
N_PATCH = (IMG // PATCH) ** 2         # 4
T = N_PATCH + 1                       # 5 (+1 class token)
T_PAD = 8           # pad tokens to a sublane multiple
NEG = -1e30


def _gelu(x):
    # TODO(synk): tanh-approx GELU; PyTorch nn.GELU default is exact erf.
    c = 0.7978845608028654  # sqrt(2/pi)
    return 0.5 * x * (1.0 + jnp.tanh(c * (x + 0.044715 * x * x * x)))


def _layernorm(x, w, b):
    mu = jnp.mean(x, axis=-1, keepdims=True)
    var = jnp.mean((x - mu) ** 2, axis=-1, keepdims=True)
    return (x - mu) * lax.rsqrt(var + EPS) * w + b


# --------------------------- fused forward kernel ---------------------------
# grid = (DEPTH, G): d outer "arbitrary" (weights DMA'd once per block, reused
# by every group), g inner batch-group axis ("parallel" when G > 1).
def backbone_kernel(BG,
                    patches_hbm, bias_ref, pw_ref,
                    ln1w_ref, ln1b_ref, qkvw_ref, qkvb_ref,
                    projw_ref, projb_ref, ln2w_ref, ln2b_ref,
                    fc1w_ref, fc1b_ref, fc2w_ref, fc2b_ref,
                    normw_ref, normb_ref,
                    out_hbm,
                    tok_ref, pbuf_ref, qkv_ref, dma_sem):
    d = pl.program_id(0)
    g = pl.program_id(1)
    M = BG * T_PAD

    # ---- prologue (first block only): patch embed + cls/pos/conv bias ----
    @pl.when(d == 0)
    def _prologue():
        cp = pltpu.make_async_copy(patches_hbm.at[g], pbuf_ref, dma_sem)
        cp.start()
        cp.wait()
        emb = jnp.dot(pbuf_ref[...], pw_ref[...],
                      preferred_element_type=jnp.float32)          # (M, D)
        tok_ref[g] = (emb.reshape(BG, T_PAD, D)
                      + bias_ref[...][None]).reshape(M, D)

    x = tok_ref[g]                                  # (M, D) f32 residual stream

    # ---- multi-head self attention (per-image batched, pad keys masked) ----
    h = _layernorm(x, ln1w_ref[0], ln1b_ref[0])
    qkv_ref[...] = jnp.dot(h.astype(jnp.bfloat16), qkvw_ref[0],
                           preferred_element_type=jnp.float32) + qkvb_ref[0]

    kmask = jnp.where(
        lax.broadcasted_iota(jnp.int32, (T_PAD, T_PAD), 1) < T,
        0.0, NEG).astype(jnp.float32)               # (T_PAD, T_PAD) pad-key mask

    attn = jnp.zeros((M, D), jnp.float32)
    for hh in range(HEADS):                         # static unroll
        o = hh * HEAD_DIM
        q = qkv_ref[:, pl.ds(o, HEAD_DIM)].reshape(BG, T_PAD, HEAD_DIM)
        k = qkv_ref[:, pl.ds(D + o, HEAD_DIM)].reshape(BG, T_PAD, HEAD_DIM)
        v = qkv_ref[:, pl.ds(2 * D + o, HEAD_DIM)].reshape(BG, T_PAD, HEAD_DIM)
        s = jnp.einsum('bqd,bkd->bqk',
                       q.astype(jnp.bfloat16), k.astype(jnp.bfloat16),
                       preferred_element_type=jnp.float32)   # (BG, T_PAD, T_PAD)
        s = s + kmask[None]                         # scale pre-folded into q
        s = s - jnp.max(s, axis=-1, keepdims=True)
        p = jnp.exp(s)
        p = p * pl.reciprocal(jnp.sum(p, axis=-1, keepdims=True), approx=True)
        av = jnp.einsum('bqk,bkd->bqd',
                        p.astype(jnp.bfloat16), v.astype(jnp.bfloat16),
                        preferred_element_type=jnp.float32)  # (BG, T_PAD, HD)
        # fuse head output straight into the output projection
        attn = attn + jnp.dot(av.reshape(M, HEAD_DIM).astype(jnp.bfloat16),
                              projw_ref[0, hh],
                              preferred_element_type=jnp.float32)
    x = x + attn + projb_ref[0]

    # ---- MLP ----
    h2 = _layernorm(x, ln2w_ref[0], ln2b_ref[0])
    h2 = jnp.dot(h2.astype(jnp.bfloat16), fc1w_ref[0],
                 preferred_element_type=jnp.float32) + fc1b_ref[0]
    h2 = _gelu(h2)
    h2 = jnp.dot(h2.astype(jnp.bfloat16), fc2w_ref[0],
                 preferred_element_type=jnp.float32) + fc2b_ref[0]
    x = x + h2
    tok_ref[g] = x

    # ---- epilogue (last block): final LN, one lane-dense slab -> HBM ----
    @pl.when(d == DEPTH - 1)
    def _epilogue():
        tok_ref[g] = _layernorm(x, normw_ref[...], normb_ref[...])
        cp = pltpu.make_async_copy(tok_ref.at[g], out_hbm.at[g], dma_sem)
        cp.start()
        cp.wait()


# --------------------------- weight init / packing --------------------------
def init_params(key):
    def nrm(k, shape):
        return 0.02 * jax.random.normal(k, shape, jnp.float32)

    scale = HEAD_DIM ** -0.5
    keys = jax.random.split(key, 3 + DEPTH)
    layers = {k: [] for k in ("ln1_w", "ln1_b", "qkv_w", "qkv_b", "proj_w",
                              "proj_b", "ln2_w", "ln2_b", "fc1_w", "fc1_b",
                              "fc2_w", "fc2_b")}
    for i in range(DEPTH):
        bk = jax.random.split(keys[3 + i], 4)
        qkv_w = nrm(bk[0], (D, 3 * D))
        qkv_b = jnp.zeros((3 * D,), jnp.float32)
        # fold 1/sqrt(head_dim) into the q columns (weights AND bias)
        qkv_w = qkv_w.at[:, :D].multiply(scale)
        qkv_b = qkv_b.at[:D].multiply(scale)
        layers["ln1_w"].append(jnp.ones((1, D), jnp.float32))
        layers["ln1_b"].append(jnp.zeros((1, D), jnp.float32))
        layers["qkv_w"].append(qkv_w.astype(jnp.bfloat16))
        layers["qkv_b"].append(qkv_b[None, :])
        # proj stored head-major: (HEADS, HEAD_DIM, D) -> clean per-head row slab
        layers["proj_w"].append(
            nrm(bk[1], (D, D)).reshape(HEADS, HEAD_DIM, D).astype(jnp.bfloat16))
        layers["proj_b"].append(jnp.zeros((1, D), jnp.float32))
        layers["ln2_w"].append(jnp.ones((1, D), jnp.float32))
        layers["ln2_b"].append(jnp.zeros((1, D), jnp.float32))
        layers["fc1_w"].append(nrm(bk[2], (D, MLP)).astype(jnp.bfloat16))
        layers["fc1_b"].append(jnp.zeros((1, MLP), jnp.float32))
        layers["fc2_w"].append(nrm(bk[3], (MLP, D)).astype(jnp.bfloat16))
        layers["fc2_b"].append(jnp.zeros((1, D), jnp.float32))

    params = {k: jnp.stack(v) for k, v in layers.items()}
    params.update(
        patch_w=nrm(keys[0], (PDIM, D)).astype(jnp.bfloat16),
        patch_b=jnp.zeros((1, D), jnp.float32),
        cls=nrm(keys[1], (1, 1, D)),
        pos=nrm(keys[2], (1, T, D)),
        norm_w=jnp.ones((1, D), jnp.float32),
        norm_b=jnp.zeros((1, D), jnp.float32),
    )
    return params


# --------------------------- forward ----------------------------------------
def backbone_forward(image, params, *, block_batch=16):
    """Backbone.forward for opt.backbone == 'Vit-S' -> (B, N_PATCH, 384)."""
    B = image.shape[0]
    BG = min(B, block_batch)          # images folded into one GEMM M block
    G = pl.cdiv(B, BG)                # batch groups (inner grid axis)
    B_pad = G * BG
    M = BG * T_PAD

    # non-overlapping 16x16 patch extraction (Conv2d k=16 s=16, NCHW layout),
    # pre-padded to T_PAD rows per image (row 0 = cls slot, rows >T-1 = pads)
    nh = IMG // PATCH
    x = image.reshape(B, IN_CH, nh, PATCH, nh, PATCH)
    patches = x.transpose(0, 2, 4, 1, 3, 5).reshape(B, N_PATCH, PDIM)
    ptok = jnp.zeros((B_pad, T_PAD, PDIM), jnp.bfloat16)
    ptok = ptok.at[:B, 1:1 + N_PATCH, :].set(patches.astype(jnp.bfloat16))
    ptok = ptok.reshape(G, M, PDIM)

    # (T_PAD, D) per-image token bias: [cls+pos0, conv_bias+pos1..4, zeros]
    bias = jnp.concatenate(
        [params["cls"][0] + params["pos"][0, :1],
         params["pos"][0, 1:] + params["patch_b"],
         jnp.zeros((T_PAD - T, D), jnp.float32)], axis=0)

    dep3 = lambda di, gi: (di, 0, 0)
    dep4 = lambda di, gi: (di, 0, 0, 0)
    cst2 = lambda di, gi: (0, 0)

    in_specs = [
        pl.BlockSpec(memory_space=pl.ANY),              # patches: manual DMA @ d==0
        pl.BlockSpec((T_PAD, D), cst2),                 # cls/pos/conv bias (resident)
        pl.BlockSpec((PDIM, D), cst2),                  # patch_w (resident)
        pl.BlockSpec((1, 1, D), dep3),                  # ln1_w
        pl.BlockSpec((1, 1, D), dep3),                  # ln1_b
        pl.BlockSpec((1, D, 3 * D), dep3),              # qkv_w (unpadded)
        pl.BlockSpec((1, 1, 3 * D), dep3),              # qkv_b
        pl.BlockSpec((1, HEADS, HEAD_DIM, D), dep4),    # proj_w (head-major)
        pl.BlockSpec((1, 1, D), dep3),                  # proj_b
        pl.BlockSpec((1, 1, D), dep3),                  # ln2_w
        pl.BlockSpec((1, 1, D), dep3),                  # ln2_b
        pl.BlockSpec((1, D, MLP), dep3),                # fc1_w
        pl.BlockSpec((1, 1, MLP), dep3),                # fc1_b
        pl.BlockSpec((1, MLP, D), dep3),                # fc2_w
        pl.BlockSpec((1, 1, D), dep3),                  # fc2_b
        pl.BlockSpec((1, D), cst2),                     # norm_w
        pl.BlockSpec((1, D), cst2),                     # norm_b
    ]

    # depth OUTER so each block's weights are DMA'd once and reused across all
    # batch groups; group axis is 'parallel' only when it is non-trivial (G>1),
    # which lets v7x shard groups across its two TensorCores.
    dim_sem = ("arbitrary", "parallel" if G > 1 else "arbitrary")

    out = pl.pallas_call(
        functools.partial(backbone_kernel, BG),
        out_shape=jax.ShapeDtypeStruct((G, M, D), jnp.float32),
        grid=(DEPTH, G),
        in_specs=in_specs,
        out_specs=pl.BlockSpec(memory_space=pl.ANY),    # manual DMA @ last block
        scratch_shapes=[
            pltpu.VMEM((G, M, D), jnp.float32),         # residual carry (per group)
            pltpu.VMEM((M, PDIM), jnp.bfloat16),        # patch staging
            pltpu.VMEM((M, 3 * D), jnp.float32),        # qkv staging
            pltpu.SemaphoreType.DMA,
        ],
        compiler_params=pltpu.CompilerParams(
            dimension_semantics=dim_sem,
            vmem_limit_bytes=48 << 20),                 # fits v7x 64 MiB/TC
    )(ptok, bias,
      params["patch_w"],
      params["ln1_w"], params["ln1_b"], params["qkv_w"], params["qkv_b"],
      params["proj_w"], params["proj_b"], params["ln2_w"], params["ln2_b"],
      params["fc1_w"], params["fc1_b"], params["fc2_w"], params["fc2_b"],
      params["norm_w"], params["norm_b"])

    # drop cls token + pad rows (free XLA slice outside the kernel)
    feats = out.reshape(B_pad, T_PAD, D)[:B, 1:1 + N_PATCH, :]
    return feats


if __name__ == "__main__":
    key = jax.random.PRNGKey(0)
    pkey, xkey = jax.random.split(key)
    params = init_params(pkey)
    image = jax.random.normal(xkey, (2, IN_CH, IMG, IMG), jnp.float32)

    fwd = jax.jit(backbone_forward)
    feats = jax.block_until_ready(fwd(image, params))
    assert feats.shape == (2, N_PATCH, D), feats.shape
    assert bool(jnp.all(jnp.isfinite(feats)))
    print("KERNEL_OK")
</pallas_src>

<mosaic_0001>
module attributes {stable_mosaic.version = 11 : i64} {
  func.func @backbone_kernel(%arg0: i32, %arg1: i32, %arg2: memref<1x16x768xbf16, #tpu.memory_space<any>>, %arg3: memref<8x384xf32, #tpu.memory_space<vmem>>, %arg4: memref<768x384xbf16, #tpu.memory_space<vmem>>, %arg5: memref<1x1x384xf32, #tpu.memory_space<vmem>>, %arg6: memref<1x1x384xf32, #tpu.memory_space<vmem>>, %arg7: memref<1x384x1152xbf16, #tpu.memory_space<vmem>>, %arg8: memref<1x1x1152xf32, #tpu.memory_space<vmem>>, %arg9: memref<1x6x64x384xbf16, #tpu.memory_space<vmem>>, %arg10: memref<1x1x384xf32, #tpu.memory_space<vmem>>, %arg11: memref<1x1x384xf32, #tpu.memory_space<vmem>>, %arg12: memref<1x1x384xf32, #tpu.memory_space<vmem>>, %arg13: memref<1x384x1536xbf16, #tpu.memory_space<vmem>>, %arg14: memref<1x1x1536xf32, #tpu.memory_space<vmem>>, %arg15: memref<1x1536x384xbf16, #tpu.memory_space<vmem>>, %arg16: memref<1x1x384xf32, #tpu.memory_space<vmem>>, %arg17: memref<1x384xf32, #tpu.memory_space<vmem>>, %arg18: memref<1x384xf32, #tpu.memory_space<vmem>>, %arg19: memref<1x16x384xf32, #tpu.memory_space<any>>, %arg20: memref<1x16x384xf32, #tpu.memory_space<vmem>>, %arg21: memref<16x768xbf16, #tpu.memory_space<vmem>>, %arg22: memref<16x1152xf32, #tpu.memory_space<vmem>>, %arg23: memref<!tpu.dma_semaphore, #tpu.memory_space<semaphore_mem>>) attributes {dimension_semantics = [#tpu.dimension_semantics<arbitrary>, #tpu.dimension_semantics<arbitrary>], iteration_bounds = array<i64: 2, 1>, scalar_prefetch = 0 : i64, scratch_operands = 4 : i64, tpu.core_type = #tpu.core_type<tc>, window_params = [{}, {pipeline_mode = #tpu.pipeline_mode<synchronous>, transform_indices = @transform_1, window_bounds = array<i64: 8, 384>}, {pipeline_mode = #tpu.pipeline_mode<synchronous>, transform_indices = @transform_2, window_bounds = array<i64: 768, 384>}, {transform_indices = @transform_3, window_bounds = array<i64: 1, 1, 384>}, {transform_indices = @transform_4, window_bounds = array<i64: 1, 1, 384>}, {transform_indices = @transform_5, window_bounds = array<i64: 1, 384, 1152>}, {transform_indices = @transform_6, window_bounds = array<i64: 1, 1, 1152>}, {transform_indices = @transform_7, window_bounds = array<i64: 1, 6, 64, 384>}, {transform_indices = @transform_8, window_bounds = array<i64: 1, 1, 384>}, {transform_indices = @transform_9, window_bounds = array<i64: 1, 1, 384>}, {transform_indices = @transform_10, window_bounds = array<i64: 1, 1, 384>}, {transform_indices = @transform_11, window_bounds = array<i64: 1, 384, 1536>}, {transform_indices = @transform_12, window_bounds = array<i64: 1, 1, 1536>}, {transform_indices = @transform_13, window_bounds = array<i64: 1, 1536, 384>}, {transform_indices = @transform_14, window_bounds = array<i64: 1, 1, 384>}, {pipeline_mode = #tpu.pipeline_mode<synchronous>, transform_indices = @transform_15, window_bounds = array<i64: 1, 384>}, {pipeline_mode = #tpu.pipeline_mode<synchronous>, transform_indices = @transform_16, window_bounds = array<i64: 1, 384>}, {}]} {
    %c0_i32 = arith.constant 0 : i32
    %0 = arith.cmpi eq, %arg0, %c0_i32 : i32
    %1 = arith.extui %0 : i1 to i32
    %c0_i32_0 = arith.constant 0 : i32
    %2 = arith.cmpi ne, %1, %c0_i32_0 : i32
    scf.if %2 {
      %c0_i32_127 = arith.constant 0 : i32
      %c0_i32_128 = arith.constant 0 : i32
      %302 = tpu.memref_slice %arg2[%arg1, %c0_i32_127, %c0_i32_128] : memref<1x16x768xbf16, #tpu.memory_space<any>> -> memref<1x16x768xbf16, #tpu.memory_space<any>>
      %303 = tpu.memref_squeeze %302 : memref<1x16x768xbf16, #tpu.memory_space<any>> -> memref<16x768xbf16, #tpu.memory_space<any>>
      tpu.enqueue_dma source(%303 : memref<16x768xbf16, #tpu.memory_space<any>>) target(%arg21 : memref<16x768xbf16, #tpu.memory_space<vmem>>) target_semaphore(%arg23 : memref<!tpu.dma_semaphore, #tpu.memory_space<semaphore_mem>>)
      %c0_i32_129 = arith.constant 0 : i32
      %c0_i32_130 = arith.constant 0 : i32
      %304 = tpu.memref_slice %arg2[%arg1, %c0_i32_129, %c0_i32_130] : memref<1x16x768xbf16, #tpu.memory_space<any>> -> memref<1x16x768xbf16, #tpu.memory_space<any>>
      %305 = tpu.memref_squeeze %304 : memref<1x16x768xbf16, #tpu.memory_space<any>> -> memref<16x768xbf16, #tpu.memory_space<any>>
      tpu.wait_dma2 semaphore(%arg23 : memref<!tpu.dma_semaphore, #tpu.memory_space<semaphore_mem>>) src(%305 : memref<16x768xbf16, #tpu.memory_space<any>>) dst(%arg21 : memref<16x768xbf16, #tpu.memory_space<vmem>>)
      %c0_131 = arith.constant 0 : index
      %c0_132 = arith.constant 0 : index
      %306 = vector.load %arg21[%c0_131, %c0_132] : memref<16x768xbf16, #tpu.memory_space<vmem>>, vector<16x768xbf16>
      %c0_133 = arith.constant 0 : index
      %c0_134 = arith.constant 0 : index
      %307 = vector.load %arg4[%c0_133, %c0_134] : memref<768x384xbf16, #tpu.memory_space<vmem>>, vector<768x384xbf16>
      %cst_135 = arith.constant dense<0.000000e+00> : vector<16x384xf32>
      %308 = tpu.matmul %306, %307, %cst_135 {dimension_numbers = #tpu.dot_dimension_numbers<[1], [0], [0], [1], [0, 0, 1, 1], [], []>} : vector<16x768xbf16>, vector<768x384xbf16>, vector<16x384xf32> -> vector<16x384xf32>
      %309 = vector.shape_cast %308 : vector<16x384xf32> to vector<2x8x384xf32>
      %c0_136 = arith.constant 0 : index
      %c0_137 = arith.constant 0 : index
      %310 = vector.load %arg3[%c0_136, %c0_137] : memref<8x384xf32, #tpu.memory_space<vmem>>, vector<8x384xf32>
      %311 = vector.shape_cast %310 : vector<8x384xf32> to vector<1x8x384xf32>
      %312 = vector.broadcast %311 : vector<1x8x384xf32> to vector<2x8x384xf32>
      %313 = arith.addf %309, %312 : vector<2x8x384xf32>
      %314 = vector.shape_cast %313 : vector<2x8x384xf32> to vector<16x384xf32>
      %315 = arith.index_cast %arg1 : i32 to index
      %c0_138 = arith.constant 0 : index
      %c0_139 = arith.constant 0 : index
      %316 = vector.load %arg20[%315, %c0_138, %c0_139] : memref<1x16x384xf32, #tpu.memory_space<vmem>>, vector<1x16x384xf32>
      %317 = vector.shape_cast %316 : vector<1x16x384xf32> to vector<16x384xf32>
      %318 = vector.shape_cast %314 : vector<16x384xf32> to vector<1x16x384xf32>
      tpu.vector_store %arg20[%315, %c0_138, %c0_139], %318 {strides = array<i32>} : memref<1x16x384xf32, #tpu.memory_space<vmem>>, vector<1x16x384xf32>,
    } else {
    }
    %3 = arith.index_cast %arg1 : i32 to index
    %c0 = arith.constant 0 : index
    %c0_1 = arith.constant 0 : index
    %4 = vector.load %arg20[%3, %c0, %c0_1] : memref<1x16x384xf32, #tpu.memory_space<vmem>>, vector<1x16x384xf32>
    %5 = vector.shape_cast %4 : vector<1x16x384xf32> to vector<16x384xf32>
    %c0_2 = arith.constant 0 : index
    %c0_3 = arith.constant 0 : index
    %c0_4 = arith.constant 0 : index
    %6 = vector.load %arg5[%c0_2, %c0_3, %c0_4] : memref<1x1x384xf32, #tpu.memory_space<vmem>>, vector<1x1x384xf32>
    %7 = vector.shape_cast %6 : vector<1x1x384xf32> to vector<1x384xf32>
    %c0_5 = arith.constant 0 : index
    %c0_6 = arith.constant 0 : index
    %c0_7 = arith.constant 0 : index
    %8 = vector.load %arg6[%c0_5, %c0_6, %c0_7] : memref<1x1x384xf32, #tpu.memory_space<vmem>>, vector<1x1x384xf32>
    %9 = vector.shape_cast %8 : vector<1x1x384xf32> to vector<1x384xf32>
    %cst = arith.constant dense<0.000000e+00> : vector<16xf32>
    %10 = vector.multi_reduction <add>, %5, %cst [1] : vector<16x384xf32> to vector<16xf32>
    %11 = vector.shape_cast %10 : vector<16xf32> to vector<16x1xf32>
    %cst_8 = arith.constant 3.840000e+02 : f32
    %12 = vector.broadcast %cst_8 : f32 to vector<16x1xf32>
    %13 = arith.divf %11, %12 : vector<16x1xf32>
    %14 = vector.broadcast %13 : vector<16x1xf32> to vector<16x384xf32>
    %15 = arith.subf %5, %14 : vector<16x384xf32>
    %16 = arith.mulf %15, %15 : vector<16x384xf32>
    %cst_9 = arith.constant dense<0.000000e+00> : vector<16xf32>
    %17 = vector.multi_reduction <add>, %16, %cst_9 [1] : vector<16x384xf32> to vector<16xf32>
    %18 = vector.shape_cast %17 : vector<16xf32> to vector<16x1xf32>
    %cst_10 = arith.constant 3.840000e+02 : f32
    %19 = vector.broadcast %cst_10 : f32 to vector<16x1xf32>
    %20 = arith.divf %18, %19 : vector<16x1xf32>
    %21 = vector.broadcast %13 : vector<16x1xf32> to vector<16x384xf32>
    %22 = arith.subf %5, %21 : vector<16x384xf32>
    %cst_11 = arith.constant 9.99999997E-7 : f32
    %23 = vector.broadcast %cst_11 : f32 to vector<16x1xf32>
    %24 = arith.addf %20, %23 : vector<16x1xf32>
    %25 = math.rsqrt %24 : vector<16x1xf32>
    %26 = vector.broadcast %25 : vector<16x1xf32> to vector<16x384xf32>
    %27 = arith.mulf %22, %26 : vector<16x384xf32>
    %28 = vector.broadcast %7 : vector<1x384xf32> to vector<16x384xf32>
    %29 = arith.mulf %27, %28 : vector<16x384xf32>
    %30 = vector.broadcast %9 : vector<1x384xf32> to vector<16x384xf32>
    %31 = arith.addf %29, %30 : vector<16x384xf32>
    %32 = arith.truncf %31 : vector<16x384xf32> to vector<16x384xbf16>
    %c0_12 = arith.constant 0 : index
    %c0_13 = arith.constant 0 : index
    %c0_14 = arith.constant 0 : index
    %33 = vector.load %arg7[%c0_12, %c0_13, %c0_14] : memref<1x384x1152xbf16, #tpu.memory_space<vmem>>, vector<1x384x1152xbf16>
    %34 = vector.shape_cast %33 : vector<1x384x1152xbf16> to vector<384x1152xbf16>
    %cst_15 = arith.constant dense<0.000000e+00> : vector<16x1152xf32>
    %35 = tpu.matmul %32, %34, %cst_15 {dimension_numbers = #tpu.dot_dimension_numbers<[1], [0], [0], [1], [0, 0, 1, 1], [], []>} : vector<16x384xbf16>, vector<384x1152xbf16>, vector<16x1152xf32> -> vector<16x1152xf32>
    %c0_16 = arith.constant 0 : index
    %c0_17 = arith.constant 0 : index
    %c0_18 = arith.constant 0 : index
    %36 = vector.load %arg8[%c0_16, %c0_17, %c0_18] : memref<1x1x1152xf32, #tpu.memory_space<vmem>>, vector<1x1x1152xf32>
    %37 = vector.shape_cast %36 : vector<1x1x1152xf32> to vector<1x1152xf32>
    %38 = vector.broadcast %37 : vector<1x1152xf32> to vector<16x1152xf32>
    %39 = arith.addf %35, %38 : vector<16x1152xf32>
    %c0_19 = arith.constant 0 : index
    %c0_20 = arith.constant 0 : index
    %40 = vector.load %arg22[%c0_19, %c0_20] : memref<16x1152xf32, #tpu.memory_space<vmem>>, vector<16x1152xf32>
    tpu.vector_store %arg22[%c0_19, %c0_20], %39 {strides = array<i32>} : memref<16x1152xf32, #tpu.memory_space<vmem>>, vector<16x1152xf32>,
    %41 = tpu.iota {dimensions = array<i32: 1>} : vector<8x8xi32>
    %c5_i32 = arith.constant 5 : i32
    %42 = vector.broadcast %c5_i32 : i32 to vector<8x8xi32>
    %43 = arith.cmpi slt, %41, %42 : vector<8x8xi32>
    %cst_21 = arith.constant 0.000000e+00 : f32
    %cst_22 = arith.constant -1.000000e+30 : f32
    %44 = vector.broadcast %cst_21 : f32 to vector<8x8xf32>
    %45 = vector.broadcast %cst_22 : f32 to vector<8x8xf32>
    %46 = arith.select %43, %44, %45 : vector<8x8xi1>, vector<8x8xf32>
    %cst_23 = arith.constant 0.000000e+00 : f32
    %47 = vector.broadcast %cst_23 : f32 to vector<16x384xf32>
    %c0_24 = arith.constant 0 : index
    %c0_25 = arith.constant 0 : index
    %48 = vector.load %arg22[%c0_24, %c0_25] : memref<16x1152xf32, #tpu.memory_space<vmem>>, vector<16x64xf32>
    %49 = vector.shape_cast %48 : vector<16x64xf32> to vector<2x8x64xf32>
    %c0_26 = arith.constant 0 : index
    %c384 = arith.constant 384 : index
    %50 = vector.load %arg22[%c0_26, %c384] : memref<16x1152xf32, #tpu.memory_space<vmem>>, vector<16x64xf32>
    %51 = vector.shape_cast %50 : vector<16x64xf32> to vector<2x8x64xf32>
    %c0_27 = arith.constant 0 : index
    %c768 = arith.constant 768 : index
    %52 = vector.load %arg22[%c0_27, %c768] : memref<16x1152xf32, #tpu.memory_space<vmem>>, vector<16x64xf32>
    %53 = vector.shape_cast %52 : vector<16x64xf32> to vector<2x8x64xf32>
    %54 = arith.truncf %49 : vector<2x8x64xf32> to vector<2x8x64xbf16>
    %55 = arith.truncf %51 : vector<2x8x64xf32> to vector<2x8x64xbf16>
    "tpu.trace_start"() <{level = 10 : i32, message = "bqd,bkd->bqk"}> : () -> ()
    %cst_28 = arith.constant dense<0.000000e+00> : vector<2x8x8xf32>
    %56 = tpu.matmul %54, %55, %cst_28 {dimension_numbers = #tpu.dot_dimension_numbers<[2], [2], [1], [1], [0, 0, 0, 1, 1, 1], [0], [0]>} : vector<2x8x64xbf16>, vector<2x8x64xbf16>, vector<2x8x8xf32> -> vector<2x8x8xf32>
    "tpu.trace_stop"() : () -> ()
    %57 = vector.shape_cast %46 : vector<8x8xf32> to vector<1x8x8xf32>
    %58 = vector.broadcast %57 : vector<1x8x8xf32> to vector<2x8x8xf32>
    %59 = arith.addf %56, %58 : vector<2x8x8xf32>
    %cst_29 = arith.constant dense<0xFF800000> : vector<2x8xf32>
    %60 = vector.multi_reduction <maximumf>, %59, %cst_29 [2] : vector<2x8x8xf32> to vector<2x8xf32>
    %61 = vector.shape_cast %60 : vector<2x8xf32> to vector<2x8x1xf32>
    %62 = vector.broadcast %61 : vector<2x8x1xf32> to vector<2x8x8xf32>
    %63 = arith.subf %59, %62 : vector<2x8x8xf32>
    %64 = math.exp %63 : vector<2x8x8xf32>
    %cst_30 = arith.constant dense<0.000000e+00> : vector<2x8xf32>
    %65 = vector.multi_reduction <add>, %64, %cst_30 [2] : vector<2x8x8xf32> to vector<2x8xf32>
    %66 = vector.shape_cast %65 : vector<2x8xf32> to vector<2x8x1xf32>
    %67 = tpu.reciprocal %66 {approx = true} : vector<2x8x1xf32> -> vector<2x8x1xf32>
    %68 = vector.broadcast %67 : vector<2x8x1xf32> to vector<2x8x8xf32>
    %69 = arith.mulf %64, %68 : vector<2x8x8xf32>
    %70 = arith.truncf %69 : vector<2x8x8xf32> to vector<2x8x8xbf16>
    %71 = arith.truncf %53 : vector<2x8x64xf32> to vector<2x8x64xbf16>
    "tpu.trace_start"() <{level = 10 : i32, message = "bqk,bkd->bqd"}> : () -> ()
    %cst_31 = arith.constant dense<0.000000e+00> : vector<2x8x64xf32>
    %72 = tpu.matmul %70, %71, %cst_31 {dimension_numbers = #tpu.dot_dimension_numbers<[2], [1], [1], [2], [0, 0, 0, 1, 1, 2], [0], [0]>} : vector<2x8x8xbf16>, vector<2x8x64xbf16>, vector<2x8x64xf32> -> vector<2x8x64xf32>
    "tpu.trace_stop"() : () -> ()
    %73 = vector.shape_cast %72 : vector<2x8x64xf32> to vector<16x64xf32>
    %74 = arith.truncf %73 : vector<16x64xf32> to vector<16x64xbf16>
    %c0_32 = arith.constant 0 : index
    %c0_33 = arith.constant 0 : index
    %c0_34 = arith.constant 0 : index
    %c0_35 = arith.constant 0 : index
    %75 = vector.load %arg9[%c0_32, %c0_33, %c0_34, %c0_35] : memref<1x6x64x384xbf16, #tpu.memory_space<vmem>>, vector<1x1x64x384xbf16>
    %76 = vector.shape_cast %75 : vector<1x1x64x384xbf16> to vector<64x384xbf16>
    %cst_36 = arith.constant dense<0.000000e+00> : vector<16x384xf32>
    %77 = tpu.matmul %74, %76, %cst_36 {dimension_numbers = #tpu.dot_dimension_numbers<[1], [0], [0], [1], [0, 0, 1, 1], [], []>} : vector<16x64xbf16>, vector<64x384xbf16>, vector<16x384xf32> -> vector<16x384xf32>
    %78 = arith.addf %47, %77 : vector<16x384xf32>
    %c0_37 = arith.constant 0 : index
    %c64 = arith.constant 64 : index
    %79 = vector.load %arg22[%c0_37, %c64] : memref<16x1152xf32, #tpu.memory_space<vmem>>, vector<16x64xf32>
    %80 = vector.shape_cast %79 : vector<16x64xf32> to vector<2x8x64xf32>
    %c0_38 = arith.constant 0 : index
    %c448 = arith.constant 448 : index
    %81 = vector.load %arg22[%c0_38, %c448] : memref<16x1152xf32, #tpu.memory_space<vmem>>, vector<16x64xf32>
    %82 = vector.shape_cast %81 : vector<16x64xf32> to vector<2x8x64xf32>
    %c0_39 = arith.constant 0 : index
    %c832 = arith.constant 832 : index
    %83 = vector.load %arg22[%c0_39, %c832] : memref<16x1152xf32, #tpu.memory_space<vmem>>, vector<16x64xf32>
    %84 = vector.shape_cast %83 : vector<16x64xf32> to vector<2x8x64xf32>
    %85 = arith.truncf %80 : vector<2x8x64xf32> to vector<2x8x64xbf16>
    %86 = arith.truncf %82 : vector<2x8x64xf32> to vector<2x8x64xbf16>
    "tpu.trace_start"() <{level = 10 : i32, message = "bqd,bkd->bqk"}> : () -> ()
    %cst_40 = arith.constant dense<0.000000e+00> : vector<2x8x8xf32>
    %87 = tpu.matmul %85, %86, %cst_40 {dimension_numbers = #tpu.dot_dimension_numbers<[2], [2], [1], [1], [0, 0, 0, 1, 1, 1], [0], [0]>} : vector<2x8x64xbf16>, vector<2x8x64xbf16>, vector<2x8x8xf32> -> vector<2x8x8xf32>
    "tpu.trace_stop"() : () -> ()
    %88 = vector.shape_cast %46 : vector<8x8xf32> to vector<1x8x8xf32>
    %89 = vector.broadcast %88 : vector<1x8x8xf32> to vector<2x8x8xf32>
    %90 = arith.addf %87, %89 : vector<2x8x8xf32>
    %cst_41 = arith.constant dense<0xFF800000> : vector<2x8xf32>
    %91 = vector.multi_reduction <maximumf>, %90, %cst_41 [2] : vector<2x8x8xf32> to vector<2x8xf32>
    %92 = vector.shape_cast %91 : vector<2x8xf32> to vector<2x8x1xf32>
    %93 = vector.broadcast %92 : vector<2x8x1xf32> to vector<2x8x8xf32>
    %94 = arith.subf %90, %93 : vector<2x8x8xf32>
    %95 = math.exp %94 : vector<2x8x8xf32>
    %cst_42 = arith.constant dense<0.000000e+00> : vector<2x8xf32>
    %96 = vector.multi_reduction <add>, %95, %cst_42 [2] : vector<2x8x8xf32> to vector<2x8xf32>
    %97 = vector.shape_cast %96 : vector<2x8xf32> to vector<2x8x1xf32>
    %98 = tpu.reciprocal %97 {approx = true} : vector<2x8x1xf32> -> vector<2x8x1xf32>
    %99 = vector.broadcast %98 : vector<2x8x1xf32> to vector<2x8x8xf32>
    %100 = arith.mulf %95, %99 : vector<2x8x8xf32>
    %101 = arith.truncf %100 : vector<2x8x8xf32> to vector<2x8x8xbf16>
    %102 = arith.truncf %84 : vector<2x8x64xf32> to vector<2x8x64xbf16>
    "tpu.trace_start"() <{level = 10 : i32, message = "bqk,bkd->bqd"}> : () -> ()
    %cst_43 = arith.constant dense<0.000000e+00> : vector<2x8x64xf32>
    %103 = tpu.matmul %101, %102, %cst_43 {dimension_numbers = #tpu.dot_dimension_numbers<[2], [1], [1], [2], [0, 0, 0, 1, 1, 2], [0], [0]>} : vector<2x8x8xbf16>, vector<2x8x64xbf16>, vector<2x8x64xf32> -> vector<2x8x64xf32>
    "tpu.trace_stop"() : () -> ()
    %104 = vector.shape_cast %103 : vector<2x8x64xf32> to vector<16x64xf32>
    %105 = arith.truncf %104 : vector<16x64xf32> to vector<16x64xbf16>
    %c0_44 = arith.constant 0 : index
    %c1 = arith.constant 1 : index
    %c0_45 = arith.constant 0 : index
    %c0_46 = arith.constant 0 : index
    %106 = vector.load %arg9[%c0_44, %c1, %c0_45, %c0_46] : memref<1x6x64x384xbf16, #tpu.memory_space<vmem>>, vector<1x1x64x384xbf16>
    %107 = vector.shape_cast %106 : vector<1x1x64x384xbf16> to vector<64x384xbf16>
    %cst_47 = arith.constant dense<0.000000e+00> : vector<16x384xf32>
    %108 = tpu.matmul %105, %107, %cst_47 {dimension_numbers = #tpu.dot_dimension_numbers<[1], [0], [0], [1], [0, 0, 1, 1], [], []>} : vector<16x64xbf16>, vector<64x384xbf16>, vector<16x384xf32> -> vector<16x384xf32>
    %109 = arith.addf %78, %108 : vector<16x384xf32>
    %c0_48 = arith.constant 0 : index
    %c128 = arith.constant 128 : index
    %110 = vector.load %arg22[%c0_48, %c128] : memref<16x1152xf32, #tpu.memory_space<vmem>>, vector<16x64xf32>
    %111 = vector.shape_cast %110 : vector<16x64xf32> to vector<2x8x64xf32>
    %c0_49 = arith.constant 0 : index
    %c512 = arith.constant 512 : index
    %112 = vector.load %arg22[%c0_49, %c512] : memref<16x1152xf32, #tpu.memory_space<vmem>>, vector<16x64xf32>
    %113 = vector.shape_cast %112 : vector<16x64xf32> to vector<2x8x64xf32>
    %c0_50 = arith.constant 0 : index
    %c896 = arith.constant 896 : index
    %114 = vector.load %arg22[%c0_50, %c896] : memref<16x1152xf32, #tpu.memory_space<vmem>>, vector<16x64xf32>
    %115 = vector.shape_cast %114 : vector<16x64xf32> to vector<2x8x64xf32>
    %116 = arith.truncf %111 : vector<2x8x64xf32> to vector<2x8x64xbf16>
    %117 = arith.truncf %113 : vector<2x8x64xf32> to vector<2x8x64xbf16>
    "tpu.trace_start"() <{level = 10 : i32, message = "bqd,bkd->bqk"}> : () -> ()
    %cst_51 = arith.constant dense<0.000000e+00> : vector<2x8x8xf32>
    %118 = tpu.matmul %116, %117, %cst_51 {dimension_numbers = #tpu.dot_dimension_numbers<[2], [2], [1], [1], [0, 0, 0, 1, 1, 1], [0], [0]>} : vector<2x8x64xbf16>, vector<2x8x64xbf16>, vector<2x8x8xf32> -> vector<2x8x8xf32>
    "tpu.trace_stop"() : () -> ()
    %119 = vector.shape_cast %46 : vector<8x8xf32> to vector<1x8x8xf32>
    %120 = vector.broadcast %119 : vector<1x8x8xf32> to vector<2x8x8xf32>
    %121 = arith.addf %118, %120 : vector<2x8x8xf32>
    %cst_52 = arith.constant dense<0xFF800000> : vector<2x8xf32>
    %122 = vector.multi_reduction <maximumf>, %121, %cst_52 [2] : vector<2x8x8xf32> to vector<2x8xf32>
    %123 = vector.shape_cast %122 : vector<2x8xf32> to vector<2x8x1xf32>
    %124 = vector.broadcast %123 : vector<2x8x1xf32> to vector<2x8x8xf32>
    %125 = arith.subf %121, %124 : vector<2x8x8xf32>
    %126 = math.exp %125 : vector<2x8x8xf32>
    %cst_53 = arith.constant dense<0.000000e+00> : vector<2x8xf32>
    %127 = vector.multi_reduction <add>, %126, %cst_53 [2] : vector<2x8x8xf32> to vector<2x8xf32>
    %128 = vector.shape_cast %127 : vector<2x8xf32> to vector<2x8x1xf32>
    %129 = tpu.reciprocal %128 {approx = true} : vector<2x8x1xf32> -> vector<2x8x1xf32>
    %130 = vector.broadcast %129 : vector<2x8x1xf32> to vector<2x8x8xf32>
    %131 = arith.mulf %126, %130 : vector<2x8x8xf32>
    %132 = arith.truncf %131 : vector<2x8x8xf32> to vector<2x8x8xbf16>
    %133 = arith.truncf %115 : vector<2x8x64xf32> to vector<2x8x64xbf16>
    "tpu.trace_start"() <{level = 10 : i32, message = "bqk,bkd->bqd"}> : () -> ()
    %cst_54 = arith.constant dense<0.000000e+00> : vector<2x8x64xf32>
    %134 = tpu.matmul %132, %133, %cst_54 {dimension_numbers = #tpu.dot_dimension_numbers<[2], [1], [1], [2], [0, 0, 0, 1, 1, 2], [0], [0]>} : vector<2x8x8xbf16>, vector<2x8x64xbf16>, vector<2x8x64xf32> -> vector<2x8x64xf32>
    "tpu.trace_stop"() : () -> ()
    %135 = vector.shape_cast %134 : vector<2x8x64xf32> to vector<16x64xf32>
    %136 = arith.truncf %135 : vector<16x64xf32> to vector<16x64xbf16>
    %c0_55 = arith.constant 0 : index
    %c2 = arith.constant 2 : index
    %c0_56 = arith.constant 0 : index
    %c0_57 = arith.constant 0 : index
    %137 = vector.load %arg9[%c0_55, %c2, %c0_56, %c0_57] : memref<1x6x64x384xbf16, #tpu.memory_space<vmem>>, vector<1x1x64x384xbf16>
    %138 = vector.shape_cast %137 : vector<1x1x64x384xbf16> to vector<64x384xbf16>
    %cst_58 = arith.constant dense<0.000000e+00> : vector<16x384xf32>
    %139 = tpu.matmul %136, %138, %cst_58 {dimension_numbers = #tpu.dot_dimension_numbers<[1], [0], [0], [1], [0, 0, 1, 1], [], []>} : vector<16x64xbf16>, vector<64x384xbf16>, vector<16x384xf32> -> vector<16x384xf32>
    %140 = arith.addf %109, %139 : vector<16x384xf32>
    %c0_59 = arith.constant 0 : index
    %c192 = arith.constant 192 : index
    %141 = vector.load %arg22[%c0_59, %c192] : memref<16x1152xf32, #tpu.memory_space<vmem>>, vector<16x64xf32>
    %142 = vector.shape_cast %141 : vector<16x64xf32> to vector<2x8x64xf32>
    %c0_60 = arith.constant 0 : index
    %c576 = arith.constant 576 : index
    %143 = vector.load %arg22[%c0_60, %c576] : memref<16x1152xf32, #tpu.memory_space<vmem>>, vector<16x64xf32>
    %144 = vector.shape_cast %143 : vector<16x64xf32> to vector<2x8x64xf32>
    %c0_61 = arith.constant 0 : index
    %c960 = arith.constant 960 : index
    %145 = vector.load %arg22[%c0_61, %c960] : memref<16x1152xf32, #tpu.memory_space<vmem>>, vector<16x64xf32>
    %146 = vector.shape_cast %145 : vector<16x64xf32> to vector<2x8x64xf32>
    %147 = arith.truncf %142 : vector<2x8x64xf32> to vector<2x8x64xbf16>
    %148 = arith.truncf %144 : vector<2x8x64xf32> to vector<2x8x64xbf16>
    "tpu.trace_start"() <{level = 10 : i32, message = "bqd,bkd->bqk"}> : () -> ()
    %cst_62 = arith.constant dense<0.000000e+00> : vector<2x8x8xf32>
    %149 = tpu.matmul %147, %148, %cst_62 {dimension_numbers = #tpu.dot_dimension_numbers<[2], [2], [1], [1], [0, 0, 0, 1, 1, 1], [0], [0]>} : vector<2x8x64xbf16>, vector<2x8x64xbf16>, vector<2x8x8xf32> -> vector<2x8x8xf32>
    "tpu.trace_stop"() : () -> ()
    %150 = vector.shape_cast %46 : vector<8x8xf32> to vector<1x8x8xf32>
    %151 = vector.broadcast %150 : vector<1x8x8xf32> to vector<2x8x8xf32>
    %152 = arith.addf %149, %151 : vector<2x8x8xf32>
    %cst_63 = arith.constant dense<0xFF800000> : vector<2x8xf32>
    %153 = vector.multi_reduction <maximumf>, %152, %cst_63 [2] : vector<2x8x8xf32> to vector<2x8xf32>
    %154 = vector.shape_cast %153 : vector<2x8xf32> to vector<2x8x1xf32>
    %155 = vector.broadcast %154 : vector<2x8x1xf32> to vector<2x8x8xf32>
    %156 = arith.subf %152, %155 : vector<2x8x8xf32>
    %157 = math.exp %156 : vector<2x8x8xf32>
    %cst_64 = arith.constant dense<0.000000e+00> : vector<2x8xf32>
    %158 = vector.multi_reduction <add>, %157, %cst_64 [2] : vector<2x8x8xf32> to vector<2x8xf32>
    %159 = vector.shape_cast %158 : vector<2x8xf32> to vector<2x8x1xf32>
    %160 = tpu.reciprocal %159 {approx = true} : vector<2x8x1xf32> -> vector<2x8x1xf32>
    %161 = vector.broadcast %160 : vector<2x8x1xf32> to vector<2x8x8xf32>
    %162 = arith.mulf %157, %161 : vector<2x8x8xf32>
    %163 = arith.truncf %162 : vector<2x8x8xf32> to vector<2x8x8xbf16>
    %164 = arith.truncf %146 : vector<2x8x64xf32> to vector<2x8x64xbf16>
    "tpu.trace_start"() <{level = 10 : i32, message = "bqk,bkd->bqd"}> : () -> ()
    %cst_65 = arith.constant dense<0.000000e+00> : vector<2x8x64xf32>
    %165 = tpu.matmul %163, %164, %cst_65 {dimension_numbers = #tpu.dot_dimension_numbers<[2], [1], [1], [2], [0, 0, 0, 1, 1, 2], [0], [0]>} : vector<2x8x8xbf16>, vector<2x8x64xbf16>, vector<2x8x64xf32> -> vector<2x8x64xf32>
    "tpu.trace_stop"() : () -> ()
    %166 = vector.shape_cast %165 : vector<2x8x64xf32> to vector<16x64xf32>
    %167 = arith.truncf %166 : vector<16x64xf32> to vector<16x64xbf16>
    %c0_66 = arith.constant 0 : index
    %c3 = arith.constant 3 : index
    %c0_67 = arith.constant 0 : index
    %c0_68 = arith.constant 0 : index
    %168 = vector.load %arg9[%c0_66, %c3, %c0_67, %c0_68] : memref<1x6x64x384xbf16, #tpu.memory_space<vmem>>, vector<1x1x64x384xbf16>
    %169 = vector.shape_cast %168 : vector<1x1x64x384xbf16> to vector<64x384xbf16>
    %cst_69 = arith.constant dense<0.000000e+00> : vector<16x384xf32>
    %170 = tpu.matmul %167, %169, %cst_69 {dimension_numbers = #tpu.dot_dimension_numbers<[1], [0], [0], [1], [0, 0, 1, 1], [], []>} : vector<16x64xbf16>, vector<64x384xbf16>, vector<16x384xf32> -> vector<16x384xf32>
    %171 = arith.addf %140, %170 : vector<16x384xf32>
    %c0_70 = arith.constant 0 : index
    %c256 = arith.constant 256 : index
    %172 = vector.load %arg22[%c0_70, %c256] : memref<16x1152xf32, #tpu.memory_space<vmem>>, vector<16x64xf32>
    %173 = vector.shape_cast %172 : vector<16x64xf32> to vector<2x8x64xf32>
    %c0_71 = arith.constant 0 : index
    %c640 = arith.constant 640 : index
    %174 = vector.load %arg22[%c0_71, %c640] : memref<16x1152xf32, #tpu.memory_space<vmem>>, vector<16x64xf32>
    %175 = vector.shape_cast %174 : vector<16x64xf32> to vector<2x8x64xf32>
    %c0_72 = arith.constant 0 : index
    %c1024 = arith.constant 1024 : index
    %176 = vector.load %arg22[%c0_72, %c1024] : memref<16x1152xf32, #tpu.memory_space<vmem>>, vector<16x64xf32>
    %177 = vector.shape_cast %176 : vector<16x64xf32> to vector<2x8x64xf32>
    %178 = arith.truncf %173 : vector<2x8x64xf32> to vector<2x8x64xbf16>
    %179 = arith.truncf %175 : vector<2x8x64xf32> to vector<2x8x64xbf16>
    "tpu.trace_start"() <{level = 10 : i32, message = "bqd,bkd->bqk"}> : () -> ()
    %cst_73 = arith.constant dense<0.000000e+00> : vector<2x8x8xf32>
    %180 = tpu.matmul %178, %179, %cst_73 {dimension_numbers = #tpu.dot_dimension_numbers<[2], [2], [1], [1], [0, 0, 0, 1, 1, 1], [0], [0]>} : vector<2x8x64xbf16>, vector<2x8x64xbf16>, vector<2x8x8xf32> -> vector<2x8x8xf32>
    "tpu.trace_stop"() : () -> ()
    %181 = vector.shape_cast %46 : vector<8x8xf32> to vector<1x8x8xf32>
    %182 = vector.broadcast %181 : vector<1x8x8xf32> to vector<2x8x8xf32>
    %183 = arith.addf %180, %182 : vector<2x8x8xf32>
    %cst_74 = arith.constant dense<0xFF800000> : vector<2x8xf32>
    %184 = vector.multi_reduction <maximumf>, %183, %cst_74 [2] : vector<2x8x8xf32> to vector<2x8xf32>
    %185 = vector.shape_cast %184 : vector<2x8xf32> to vector<2x8x1xf32>
    %186 = vector.broadcast %185 : vector<2x8x1xf32> to vector<2x8x8xf32>
    %187 = arith.subf %183, %186 : vector<2x8x8xf32>
    %188 = math.exp %187 : vector<2x8x8xf32>
    %cst_75 = arith.constant dense<0.000000e+00> : vector<2x8xf32>
    %189 = vector.multi_reduction <add>, %188, %cst_75 [2] : vector<2x8x8xf32> to vector<2x8xf32>
    %190 = vector.shape_cast %189 : vector<2x8xf32> to vector<2x8x1xf32>
    %191 = tpu.reciprocal %190 {approx = true} : vector<2x8x1xf32> -> vector<2x8x1xf32>
    %192 = vector.broadcast %191 : vector<2x8x1xf32> to vector<2x8x8xf32>
    %193 = arith.mulf %188, %192 : vector<2x8x8xf32>
    %194 = arith.truncf %193 : vector<2x8x8xf32> to vector<2x8x8xbf16>
    %195 = arith.truncf %177 : vector<2x8x64xf32> to vector<2x8x64xbf16>
    "tpu.trace_start"() <{level = 10 : i32, message = "bqk,bkd->bqd"}> : () -> ()
    %cst_76 = arith.constant dense<0.000000e+00> : vector<2x8x64xf32>
    %196 = tpu.matmul %194, %195, %cst_76 {dimension_numbers = #tpu.dot_dimension_numbers<[2], [1], [1], [2], [0, 0, 0, 1, 1, 2], [0], [0]>} : vector<2x8x8xbf16>, vector<2x8x64xbf16>, vector<2x8x64xf32> -> vector<2x8x64xf32>
    "tpu.trace_stop"() : () -> ()
    %197 = vector.shape_cast %196 : vector<2x8x64xf32> to vector<16x64xf32>
    %198 = arith.truncf %197 : vector<16x64xf32> to vector<16x64xbf16>
    %c0_77 = arith.constant 0 : index
    %c4 = arith.constant 4 : index
    %c0_78 = arith.constant 0 : index
    %c0_79 = arith.constant 0 : index
    %199 = vector.load %arg9[%c0_77, %c4, %c0_78, %c0_79] : memref<1x6x64x384xbf16, #tpu.memory_space<vmem>>, vector<1x1x64x384xbf16>
    %200 = vector.shape_cast %199 : vector<1x1x64x384xbf16> to vector<64x384xbf16>
    %cst_80 = arith.constant dense<0.000000e+00> : vector<16x384xf32>
    %201 = tpu.matmul %198, %200, %cst_80 {dimension_numbers = #tpu.dot_dimension_numbers<[1], [0], [0], [1], [0, 0, 1, 1], [], []>} : vector<16x64xbf16>, vector<64x384xbf16>, vector<16x384xf32> -> vector<16x384xf32>
    %202 = arith.addf %171, %201 : vector<16x384xf32>
    %c0_81 = arith.constant 0 : index
    %c320 = arith.constant 320 : index
    %203 = vector.load %arg22[%c0_81, %c320] : memref<16x1152xf32, #tpu.memory_space<vmem>>, vector<16x64xf32>
    %204 = vector.shape_cast %203 : vector<16x64xf32> to vector<2x8x64xf32>
    %c0_82 = arith.constant 0 : index
    %c704 = arith.constant 704 : index
    %205 = vector.load %arg22[%c0_82, %c704] : memref<16x1152xf32, #tpu.memory_space<vmem>>, vector<16x64xf32>
    %206 = vector.shape_cast %205 : vector<16x64xf32> to vector<2x8x64xf32>
    %c0_83 = arith.constant 0 : index
    %c1088 = arith.constant 1088 : index
    %207 = vector.load %arg22[%c0_83, %c1088] : memref<16x1152xf32, #tpu.memory_space<vmem>>, vector<16x64xf32>
    %208 = vector.shape_cast %207 : vector<16x64xf32> to vector<2x8x64xf32>
    %209 = arith.truncf %204 : vector<2x8x64xf32> to vector<2x8x64xbf16>
    %210 = arith.truncf %206 : vector<2x8x64xf32> to vector<2x8x64xbf16>
    "tpu.trace_start"() <{level = 10 : i32, message = "bqd,bkd->bqk"}> : () -> ()
    %cst_84 = arith.constant dense<0.000000e+00> : vector<2x8x8xf32>
    %211 = tpu.matmul %209, %210, %cst_84 {dimension_numbers = #tpu.dot_dimension_numbers<[2], [2], [1], [1], [0, 0, 0, 1, 1, 1], [0], [0]>} : vector<2x8x64xbf16>, vector<2x8x64xbf16>, vector<2x8x8xf32> -> vector<2x8x8xf32>
    "tpu.trace_stop"() : () -> ()
    %212 = vector.shape_cast %46 : vector<8x8xf32> to vector<1x8x8xf32>
    %213 = vector.broadcast %212 : vector<1x8x8xf32> to vector<2x8x8xf32>
    %214 = arith.addf %211, %213 : vector<2x8x8xf32>
    %cst_85 = arith.constant dense<0xFF800000> : vector<2x8xf32>
    %215 = vector.multi_reduction <maximumf>, %214, %cst_85 [2] : vector<2x8x8xf32> to vector<2x8xf32>
    %216 = vector.shape_cast %215 : vector<2x8xf32> to vector<2x8x1xf32>
    %217 = vector.broadcast %216 : vector<2x8x1xf32> to vector<2x8x8xf32>
    %218 = arith.subf %214, %217 : vector<2x8x8xf32>
    %219 = math.exp %218 : vector<2x8x8xf32>
    %cst_86 = arith.constant dense<0.000000e+00> : vector<2x8xf32>
    %220 = vector.multi_reduction <add>, %219, %cst_86 [2] : vector<2x8x8xf32> to vector<2x8xf32>
    %221 = vector.shape_cast %220 : vector<2x8xf32> to vector<2x8x1xf32>
    %222 = tpu.reciprocal %221 {approx = true} : vector<2x8x1xf32> -> vector<2x8x1xf32>
    %223 = vector.broadcast %222 : vector<2x8x1xf32> to vector<2x8x8xf32>
    %224 = arith.mulf %219, %223 : vector<2x8x8xf32>
    %225 = arith.truncf %224 : vector<2x8x8xf32> to vector<2x8x8xbf16>
    %226 = arith.truncf %208 : vector<2x8x64xf32> to vector<2x8x64xbf16>
    "tpu.trace_start"() <{level = 10 : i32, message = "bqk,bkd->bqd"}> : () -> ()
    %cst_87 = arith.constant dense<0.000000e+00> : vector<2x8x64xf32>
    %227 = tpu.matmul %225, %226, %cst_87 {dimension_numbers = #tpu.dot_dimension_numbers<[2], [1], [1], [2], [0, 0, 0, 1, 1, 2], [0], [0]>} : vector<2x8x8xbf16>, vector<2x8x64xbf16>, vector<2x8x64xf32> -> vector<2x8x64xf32>
    "tpu.trace_stop"() : () -> ()
    %228 = vector.shape_cast %227 : vector<2x8x64xf32> to vector<16x64xf32>
    %229 = arith.truncf %228 : vector<16x64xf32> to vector<16x64xbf16>
    %c0_88 = arith.constant 0 : index
    %c5 = arith.constant 5 : index
    %c0_89 = arith.constant 0 : index
    %c0_90 = arith.constant 0 : index
    %230 = vector.load %arg9[%c0_88, %c5, %c0_89, %c0_90] : memref<1x6x64x384xbf16, #tpu.memory_space<vmem>>, vector<1x1x64x384xbf16>
    %231 = vector.shape_cast %230 : vector<1x1x64x384xbf16> to vector<64x384xbf16>
    %cst_91 = arith.constant dense<0.000000e+00> : vector<16x384xf32>
    %232 = tpu.matmul %229, %231, %cst_91 {dimension_numbers = #tpu.dot_dimension_numbers<[1], [0], [0], [1], [0, 0, 1, 1], [], []>} : vector<16x64xbf16>, vector<64x384xbf16>, vector<16x384xf32> -> vector<16x384xf32>
    %233 = arith.addf %202, %232 : vector<16x384xf32>
    %234 = arith.addf %5, %233 : vector<16x384xf32>
    %c0_92 = arith.constant 0 : index
    %c0_93 = arith.constant 0 : index
    %c0_94 = arith.constant 0 : index
    %235 = vector.load %arg10[%c0_92, %c0_93, %c0_94] : memref<1x1x384xf32, #tpu.memory_space<vmem>>, vector<1x1x384xf32>
    %236 = vector.shape_cast %235 : vector<1x1x384xf32> to vector<1x384xf32>
    %237 = vector.broadcast %236 : vector<1x384xf32> to vector<16x384xf32>
    %238 = arith.addf %234, %237 : vector<16x384xf32>
    %c0_95 = arith.constant 0 : index
    %c0_96 = arith.constant 0 : index
    %c0_97 = arith.constant 0 : index
    %239 = vector.load %arg11[%c0_95, %c0_96, %c0_97] : memref<1x1x384xf32, #tpu.memory_space<vmem>>, vector<1x1x384xf32>
    %240 = vector.shape_cast %239 : vector<1x1x384xf32> to vector<1x384xf32>
    %c0_98 = arith.constant 0 : index
    %c0_99 = arith.constant 0 : index
    %c0_100 = arith.constant 0 : index
    %241 = vector.load %arg12[%c0_98, %c0_99, %c0_100] : memref<1x1x384xf32, #tpu.memory_space<vmem>>, vector<1x1x384xf32>
    %242 = vector.shape_cast %241 : vector<1x1x384xf32> to vector<1x384xf32>
    %cst_101 = arith.constant dense<0.000000e+00> : vector<16xf32>
    %243 = vector.multi_reduction <add>, %238, %cst_101 [1] : vector<16x384xf32> to vector<16xf32>
    %244 = vector.shape_cast %243 : vector<16xf32> to vector<16x1xf32>
    %cst_102 = arith.constant 3.840000e+02 : f32
    %245 = vector.broadcast %cst_102 : f32 to vector<16x1xf32>
    %246 = arith.divf %244, %245 : vector<16x1xf32>
    %247 = vector.broadcast %246 : vector<16x1xf32> to vector<16x384xf32>
    %248 = arith.subf %238, %247 : vector<16x384xf32>
    %249 = arith.mulf %248, %248 : vector<16x384xf32>
    %cst_103 = arith.constant dense<0.000000e+00> : vector<16xf32>
    %250 = vector.multi_reduction <add>, %249, %cst_103 [1] : vector<16x384xf32> to vector<16xf32>
    %251 = vector.shape_cast %250 : vector<16xf32> to vector<16x1xf32>
    %cst_104 = arith.constant 3.840000e+02 : f32
    %252 = vector.broadcast %cst_104 : f32 to vector<16x1xf32>
    %253 = arith.divf %251, %252 : vector<16x1xf32>
    %254 = vector.broadcast %246 : vector<16x1xf32> to vector<16x384xf32>
    %255 = arith.subf %238, %254 : vector<16x384xf32>
    %cst_105 = arith.constant 9.99999997E-7 : f32
    %256 = vector.broadcast %cst_105 : f32 to vector<16x1xf32>
    %257 = arith.addf %253, %256 : vector<16x1xf32>
    %258 = math.rsqrt %257 : vector<16x1xf32>
    %259 = vector.broadcast %258 : vector<16x1xf32> to vector<16x384xf32>
    %260 = arith.mulf %255, %259 : vector<16x384xf32>
    %261 = vector.broadcast %240 : vector<1x384xf32> to vector<16x384xf32>
    %262 = arith.mulf %260, %261 : vector<16x384xf32>
    %263 = vector.broadcast %242 : vector<1x384xf32> to vector<16x384xf32>
    %264 = arith.addf %262, %263 : vector<16x384xf32>
    %265 = arith.truncf %264 : vector<16x384xf32> to vector<16x384xbf16>
    %c0_106 = arith.constant 0 : index
    %c0_107 = arith.constant 0 : index
    %c0_108 = arith.constant 0 : index
    %266 = vector.load %arg13[%c0_106, %c0_107, %c0_108] : memref<1x384x1536xbf16, #tpu.memory_space<vmem>>, vector<1x384x1536xbf16>
    %267 = vector.shape_cast %266 : vector<1x384x1536xbf16> to vector<384x1536xbf16>
    %cst_109 = arith.constant dense<0.000000e+00> : vector<16x1536xf32>
    %268 = tpu.matmul %265, %267, %cst_109 {dimension_numbers = #tpu.dot_dimension_numbers<[1], [0], [0], [1], [0, 0, 1, 1], [], []>} : vector<16x384xbf16>, vector<384x1536xbf16>, vector<16x1536xf32> -> vector<16x1536xf32>
    %c0_110 = arith.constant 0 : index
    %c0_111 = arith.constant 0 : index
    %c0_112 = arith.constant 0 : index
    %269 = vector.load %arg14[%c0_110, %c0_111, %c0_112] : memref<1x1x1536xf32, #tpu.memory_space<vmem>>, vector<1x1x1536xf32>
    %270 = vector.shape_cast %269 : vector<1x1x1536xf32> to vector<1x1536xf32>
    %271 = vector.broadcast %270 : vector<1x1536xf32> to vector<16x1536xf32>
    %272 = arith.addf %268, %271 : vector<16x1536xf32>
    %cst_113 = arith.constant 5.000000e-01 : f32
    %273 = vector.broadcast %cst_113 : f32 to vector<16x1536xf32>
    %274 = arith.mulf %273, %272 : vector<16x1536xf32>
    %cst_114 = arith.constant 4.471500e-02 : f32
    %275 = vector.broadcast %cst_114 : f32 to vector<16x1536xf32>
    %276 = arith.mulf %275, %272 : vector<16x1536xf32>
    %277 = arith.mulf %276, %272 : vector<16x1536xf32>
    %278 = arith.mulf %277, %272 : vector<16x1536xf32>
    %279 = arith.addf %272, %278 : vector<16x1536xf32>
    %cst_115 = arith.constant 0.797884583 : f32
    %280 = vector.broadcast %cst_115 : f32 to vector<16x1536xf32>
    %281 = arith.mulf %280, %279 : vector<16x1536xf32>
    %282 = math.tanh %281 : vector<16x1536xf32>
    %cst_116 = arith.constant 1.000000e+00 : f32
    %283 = vector.broadcast %cst_116 : f32 to vector<16x1536xf32>
    %284 = arith.addf %283, %282 : vector<16x1536xf32>
    %285 = arith.mulf %274, %284 : vector<16x1536xf32>
    %286 = arith.truncf %285 : vector<16x1536xf32> to vector<16x1536xbf16>
    %c0_117 = arith.constant 0 : index
    %c0_118 = arith.constant 0 : index
    %c0_119 = arith.constant 0 : index
    %287 = vector.load %arg15[%c0_117, %c0_118, %c0_119] : memref<1x1536x384xbf16, #tpu.memory_space<vmem>>, vector<1x1536x384xbf16>
    %288 = vector.shape_cast %287 : vector<1x1536x384xbf16> to vector<1536x384xbf16>
    %cst_120 = arith.constant dense<0.000000e+00> : vector<16x384xf32>
    %289 = tpu.matmul %286, %288, %cst_120 {dimension_numbers = #tpu.dot_dimension_numbers<[1], [0], [0], [1], [0, 0, 1, 1], [], []>} : vector<16x1536xbf16>, vector<1536x384xbf16>, vector<16x384xf32> -> vector<16x384xf32>
    %c0_121 = arith.constant 0 : index
    %c0_122 = arith.constant 0 : index
    %c0_123 = arith.constant 0 : index
    %290 = vector.load %arg16[%c0_121, %c0_122, %c0_123] : memref<1x1x384xf32, #tpu.memory_space<vmem>>, vector<1x1x384xf32>
    %291 = vector.shape_cast %290 : vector<1x1x384xf32> to vector<1x384xf32>
    %292 = vector.broadcast %291 : vector<1x384xf32> to vector<16x384xf32>
    %293 = arith.addf %289, %292 : vector<16x384xf32>
    %294 = arith.addf %238, %293 : vector<16x384xf32>
    %295 = arith.index_cast %arg1 : i32 to index
    %c0_124 = arith.constant 0 : index
    %c0_125 = arith.constant 0 : index
    %296 = vector.load %arg20[%295, %c0_124, %c0_125] : memref<1x16x384xf32, #tpu.memory_space<vmem>>, vector<1x16x384xf32>
    %297 = vector.shape_cast %296 : vector<1x16x384xf32> to vector<16x384xf32>
    %298 = vector.shape_cast %294 : vector<16x384xf32> to vector<1x16x384xf32>
    tpu.vector_store %arg20[%295, %c0_124, %c0_125], %298 {strides = array<i32>} : memref<1x16x384xf32, #tpu.memory_space<vmem>>, vector<1x16x384xf32>,
    %c1_i32 = arith.constant 1 : i32
    %299 = arith.cmpi eq, %arg0, %c1_i32 : i32
    %300 = arith.extui %299 : i1 to i32
    %c0_i32_126 = arith.constant 0 : i32
    %301 = arith.cmpi ne, %300, %c0_i32_126 : i32
    scf.if %301 {
      %c0_127 = arith.constant 0 : index
      %c0_128 = arith.constant 0 : index
      %302 = vector.load %arg17[%c0_127, %c0_128] : memref<1x384xf32, #tpu.memory_space<vmem>>, vector<1x384xf32>
      %c0_129 = arith.constant 0 : index
      %c0_130 = arith.constant 0 : index
      %303 = vector.load %arg18[%c0_129, %c0_130] : memref<1x384xf32, #tpu.memory_space<vmem>>, vector<1x384xf32>
      %cst_131 = arith.constant dense<0.000000e+00> : vector<16xf32>
      %304 = vector.multi_reduction <add>, %294, %cst_131 [1] : vector<16x384xf32> to vector<16xf32>
      %305 = vector.shape_cast %304 : vector<16xf32> to vector<16x1xf32>
      %cst_132 = arith.constant 3.840000e+02 : f32
      %306 = vector.broadcast %cst_132 : f32 to vector<16x1xf32>
      %307 = arith.divf %305, %306 : vector<16x1xf32>
      %308 = vector.broadcast %307 : vector<16x1xf32> to vector<16x384xf32>
      %309 = arith.subf %294, %308 : vector<16x384xf32>
      %310 = arith.mulf %309, %309 : vector<16x384xf32>
      %cst_133 = arith.constant dense<0.000000e+00> : vector<16xf32>
      %311 = vector.multi_reduction <add>, %310, %cst_133 [1] : vector<16x384xf32> to vector<16xf32>
      %312 = vector.shape_cast %311 : vector<16xf32> to vector<16x1xf32>
      %cst_134 = arith.constant 3.840000e+02 : f32
      %313 = vector.broadcast %cst_134 : f32 to vector<16x1xf32>
      %314 = arith.divf %312, %313 : vector<16x1xf32>
      %315 = vector.broadcast %307 : vector<16x1xf32> to vector<16x384xf32>
      %316 = arith.subf %294, %315 : vector<16x384xf32>
      %cst_135 = arith.constant 9.99999997E-7 : f32
      %317 = vector.broadcast %cst_135 : f32 to vector<16x1xf32>
      %318 = arith.addf %314, %317 : vector<16x1xf32>
      %319 = math.rsqrt %318 : vector<16x1xf32>
      %320 = vector.broadcast %319 : vector<16x1xf32> to vector<16x384xf32>
      %321 = arith.mulf %316, %320 : vector<16x384xf32>
      %322 = vector.broadcast %302 : vector<1x384xf32> to vector<16x384xf32>
      %323 = arith.mulf %321, %322 : vector<16x384xf32>
      %324 = vector.broadcast %303 : vector<1x384xf32> to vector<16x384xf32>
      %325 = arith.addf %323, %324 : vector<16x384xf32>
      %326 = arith.index_cast %arg1 : i32 to index
      %c0_136 = arith.constant 0 : index
      %c0_137 = arith.constant 0 : index
      %327 = vector.load %arg20[%326, %c0_136, %c0_137] : memref<1x16x384xf32, #tpu.memory_space<vmem>>, vector<1x16x384xf32>
      %328 = vector.shape_cast %327 : vector<1x16x384xf32> to vector<16x384xf32>
      %329 = vector.shape_cast %325 : vector<16x384xf32> to vector<1x16x384xf32>
      tpu.vector_store %arg20[%326, %c0_136, %c0_137], %329 {strides = array<i32>} : memref<1x16x384xf32, #tpu.memory_space<vmem>>, vector<1x16x384xf32>,
      %c0_i32_138 = arith.constant 0 : i32
      %c0_i32_139 = arith.constant 0 : i32
      %330 = tpu.memref_slice %arg20[%arg1, %c0_i32_138, %c0_i32_139] : memref<1x16x384xf32, #tpu.memory_space<vmem>> -> memref<1x16x384xf32, #tpu.memory_space<vmem>>
      %331 = tpu.memref_squeeze %330 : memref<1x16x384xf32, #tpu.memory_space<vmem>> -> memref<16x384xf32, #tpu.memory_space<vmem>>
      %c0_i32_140 = arith.constant 0 : i32
      %c0_i32_141 = arith.constant 0 : i32
      %332 = tpu.memref_slice %arg19[%arg1, %c0_i32_140, %c0_i32_141] : memref<1x16x384xf32, #tpu.memory_space<any>> -> memref<1x16x384xf32, #tpu.memory_space<any>>
      %333 = tpu.memref_squeeze %332 : memref<1x16x384xf32, #tpu.memory_space<any>> -> memref<16x384xf32, #tpu.memory_space<any>>
      tpu.enqueue_dma source(%331 : memref<16x384xf32, #tpu.memory_space<vmem>>) target(%333 : memref<16x384xf32, #tpu.memory_space<any>>) target_semaphore(%arg23 : memref<!tpu.dma_semaphore, #tpu.memory_space<semaphore_mem>>)
      %c0_i32_142 = arith.constant 0 : i32
      %c0_i32_143 = arith.constant 0 : i32
      %334 = tpu.memref_slice %arg20[%arg1, %c0_i32_142, %c0_i32_143] : memref<1x16x384xf32, #tpu.memory_space<vmem>> -> memref<1x16x384xf32, #tpu.memory_space<vmem>>
      %335 = tpu.memref_squeeze %334 : memref<1x16x384xf32, #tpu.memory_space<vmem>> -> memref<16x384xf32, #tpu.memory_space<vmem>>
      %c0_i32_144 = arith.constant 0 : i32
      %c0_i32_145 = arith.constant 0 : i32
      %336 = tpu.memref_slice %arg19[%arg1, %c0_i32_144, %c0_i32_145] : memref<1x16x384xf32, #tpu.memory_space<any>> -> memref<1x16x384xf32, #tpu.memory_space<any>>
      %337 = tpu.memref_squeeze %336 : memref<1x16x384xf32, #tpu.memory_space<any>> -> memref<16x384xf32, #tpu.memory_space<any>>
      tpu.wait_dma2 semaphore(%arg23 : memref<!tpu.dma_semaphore, #tpu.memory_space<semaphore_mem>>) src(%335 : memref<16x384xf32, #tpu.memory_space<vmem>>) dst(%337 : memref<16x384xf32, #tpu.memory_space<any>>)
    } else {
    }
    return
  }
  func.func @transform_1(%arg0: i32, %arg1: i32) -> (i32, i32) {
    %c0_i32 = arith.constant 0 : i32
    %c0_i32_0 = arith.constant 0 : i32
    %c0_i32_1 = arith.constant 0 : i32
    return %c0_i32, %c0_i32_0 : i32, i32
  }
  func.func @transform_2(%arg0: i32, %arg1: i32) -> (i32, i32) {
    %c0_i32 = arith.constant 0 : i32
    %c0_i32_0 = arith.constant 0 : i32
    %c0_i32_1 = arith.constant 0 : i32
    return %c0_i32, %c0_i32_0 : i32, i32
  }
  func.func @transform_3(%arg0: i32, %arg1: i32) -> (i32, i32, i32) {
    %c0_i32 = arith.constant 0 : i32
    %c0_i32_0 = arith.constant 0 : i32
    %c0_i32_1 = arith.constant 0 : i32
    return %arg0, %c0_i32, %c0_i32_0 : i32, i32, i32
  }
  func.func @transform_4(%arg0: i32, %arg1: i32) -> (i32, i32, i32) {
    %c0_i32 = arith.constant 0 : i32
    %c0_i32_0 = arith.constant 0 : i32
    %c0_i32_1 = arith.constant 0 : i32
    return %arg0, %c0_i32, %c0_i32_0 : i32, i32, i32
  }
  func.func @transform_5(%arg0: i32, %arg1: i32) -> (i32, i32, i32) {
    %c0_i32 = arith.constant 0 : i32
    %c0_i32_0 = arith.constant 0 : i32
    %c0_i32_1 = arith.constant 0 : i32
    return %arg0, %c0_i32, %c0_i32_0 : i32, i32, i32
  }
  func.func @transform_6(%arg0: i32, %arg1: i32) -> (i32, i32, i32) {
    %c0_i32 = arith.constant 0 : i32
    %c0_i32_0 = arith.constant 0 : i32
    %c0_i32_1 = arith.constant 0 : i32
    return %arg0, %c0_i32, %c0_i32_0 : i32, i32, i32
  }
  func.func @transform_7(%arg0: i32, %arg1: i32) -> (i32, i32, i32, i32) {
    %c0_i32 = arith.constant 0 : i32
    %c0_i32_0 = arith.constant 0 : i32
    %c0_i32_1 = arith.constant 0 : i32
    %c0_i32_2 = arith.constant 0 : i32
    return %arg0, %c0_i32, %c0_i32_0, %c0_i32_1 : i32, i32, i32, i32
  }
  func.func @transform_8(%arg0: i32, %arg1: i32) -> (i32, i32, i32) {
    %c0_i32 = arith.constant 0 : i32
    %c0_i32_0 = arith.constant 0 : i32
    %c0_i32_1 = arith.constant 0 : i32
    return %arg0, %c0_i32, %c0_i32_0 : i32, i32, i32
  }
  func.func @transform_9(%arg0: i32, %arg1: i32) -> (i32, i32, i32) {
    %c0_i32 = arith.constant 0 : i32
    %c0_i32_0 = arith.constant 0 : i32
    %c0_i32_1 = arith.constant 0 : i32
    return %arg0, %c0_i32, %c0_i32_0 : i32, i32, i32
  }
  func.func @transform_10(%arg0: i32, %arg1: i32) -> (i32, i32, i32) {
    %c0_i32 = arith.constant 0 : i32
    %c0_i32_0 = arith.constant 0 : i32
    %c0_i32_1 = arith.constant 0 : i32
    return %arg0, %c0_i32, %c0_i32_0 : i32, i32, i32
  }
  func.func @transform_11(%arg0: i32, %arg1: i32) -> (i32, i32, i32) {
    %c0_i32 = arith.constant 0 : i32
    %c0_i32_0 = arith.constant 0 : i32
    %c0_i32_1 = arith.constant 0 : i32
    return %arg0, %c0_i32, %c0_i32_0 : i32, i32, i32
  }
  func.func @transform_12(%arg0: i32, %arg1: i32) -> (i32, i32, i32) {
    %c0_i32 = arith.constant 0 : i32
    %c0_i32_0 = arith.constant 0 : i32
    %c0_i32_1 = arith.constant 0 : i32
    return %arg0, %c0_i32, %c0_i32_0 : i32, i32, i32
  }
  func.func @transform_13(%arg0: i32, %arg1: i32) -> (i32, i32, i32) {
    %c0_i32 = arith.constant 0 : i32
    %c0_i32_0 = arith.constant 0 : i32
    %c0_i32_1 = arith.constant 0 : i32
    return %arg0, %c0_i32, %c0_i32_0 : i32, i32, i32
  }
  func.func @transform_14(%arg0: i32, %arg1: i32) -> (i32, i32, i32) {
    %c0_i32 = arith.constant 0 : i32
    %c0_i32_0 = arith.constant 0 : i32
    %c0_i32_1 = arith.constant 0 : i32
    return %arg0, %c0_i32, %c0_i32_0 : i32, i32, i32
  }
  func.func @transform_15(%arg0: i32, %arg1: i32) -> (i32, i32) {
    %c0_i32 = arith.constant 0 : i32
    %c0_i32_0 = arith.constant 0 : i32
    %c0_i32_1 = arith.constant 0 : i32
    return %c0_i32, %c0_i32_0 : i32, i32
  }
  func.func @transform_16(%arg0: i32, %arg1: i32) -> (i32, i32) {
    %c0_i32 = arith.constant 0 : i32
    %c0_i32_0 = arith.constant 0 : i32
    %c0_i32_1 = arith.constant 0 : i32
    return %c0_i32, %c0_i32_0 : i32, i32
  }
}

</mosaic_0001>

<llo_original>
// kernel: backbone_forward.1
$region0: #{backbone_forward.1}
  #allocation0 [shape = 'u32[]', space=smem, size = 0x4, offset = 0x4, fixed_abs, tag = 'smem constant byte address 0x4 - core index']
  #allocation1 [shape = 'u32[72,128]{1,0:T(1,128)}', space=vmem, size = 0x9000, scoped, tag = 'internal scratch']
  #allocation2 [shape = 'f32[1,16,384]{2,1,0:T(8,128)}', space=vmem, size = 0x6000, scoped, tag = 'scratch operand']
  #allocation3 [shape = 'bf16[16,768]{1,0:T(8,128)(2,1)}', space=vmem, size = 0x6000, scoped, tag = 'scratch operand']
  #allocation4 [shape = 'f32[16,1152]{1,0:T(8,128)}', space=vmem, size = 0x12000, scoped, tag = 'scratch operand']
  #allocation5 [shape = 's32[1]{0}', space=sflag, size = 0x4, scoped, tag = 'scratch operand']
  #allocation29 [shape = 's32[]', space=sflag, size = 0x4, offset = 0, fixed_abs, tag = 'sflag constant byte address 0x0 - dummy sync flag']
  #allocation30 [shape = 's32[]', space=sflag, size = 0x4, offset = 0, fixed_abs, tag = 'sflag constant byte address 0x0 - dummy sync flag']
  %s0 = inlined_call_operand.vmem [shape: bf16[1,16,768], index: 0, kind: input, shape index: {}]
  %s1 = inlined_call_operand.vmem [shape: f32[8,384], index: 1, kind: input, shape index: {}]
  %s2 = inlined_call_operand.hbm [shape: bf16[768,384], index: 2, kind: input, shape index: {}]
  %s3 = inlined_call_operand.hbm [shape: f32[2,1,384], index: 3, kind: input, shape index: {}]
  %s4 = inlined_call_operand.hbm [shape: f32[2,1,384], index: 4, kind: input, shape index: {}]
  %s5 = inlined_call_operand.hbm [shape: bf16[2,384,1152], index: 5, kind: input, shape index: {}]
  %s6 = inlined_call_operand.hbm [shape: f32[2,1,1152], index: 6, kind: input, shape index: {}]
  %s7 = inlined_call_operand.hbm [shape: bf16[2,6,64,384], index: 7, kind: input, shape index: {}]
  %s8 = inlined_call_operand.hbm [shape: f32[2,1,384], index: 8, kind: input, shape index: {}]
  %s9 = inlined_call_operand.hbm [shape: f32[2,1,384], index: 9, kind: input, shape index: {}]
  %s10 = inlined_call_operand.hbm [shape: f32[2,1,384], index: 10, kind: input, shape index: {}]
  %s11 = inlined_call_operand.hbm [shape: bf16[2,384,1536], index: 11, kind: input, shape index: {}]
  %s12 = inlined_call_operand.hbm [shape: f32[2,1,1536], index: 12, kind: input, shape index: {}]
  %s13 = inlined_call_operand.hbm [shape: bf16[2,1536,384], index: 13, kind: input, shape index: {}]
  %s14 = inlined_call_operand.hbm [shape: f32[2,1,384], index: 14, kind: input, shape index: {}]
  %s15 = inlined_call_operand.hbm [shape: f32[1,384], index: 15, kind: input, shape index: {}]
  %s16 = inlined_call_operand.hbm [shape: f32[1,384], index: 16, kind: input, shape index: {}]
  %s17 = inlined_call_operand.vmem [shape: f32[1,16,384], index: 17, kind: output, shape index: {}]
  %s18 = sld [smem:[#allocation0]]
  $region191: #{backbone_forward.1} parent=0
    _
  %s20 = ssub.s32 1, %s18
  %s21 = scalar_select 0, %s20, %s18
  $region1: #{backbone_forward.1} parent=0
    #allocation6 [shape = 'u8[589824]{0}', space=vmem, size = 0x90000, scoped, tag = 'input window, operand 2, single buffered']
    #allocation7 [shape = 's32[2]{0}', space=sflag, size = 0x8, scoped, tag = 'scoped memory for backbone_forward.1']
    #allocation8 [shape = 'u8[3072]{0}', space=vmem, size = 0xc00, scoped, tag = 'input window, operand 3']
    #allocation9 [shape = 's32[2]{0}', space=sflag, size = 0x8, scoped, tag = 'scoped memory for backbone_forward.1']
    #allocation10 [shape = 'u8[3072]{0}', space=vmem, size = 0xc00, scoped, tag = 'input window, operand 4']
    #allocation11 [shape = 'u8[1769472]{0}', space=vmem, size = 0x1b0000, scoped, tag = 'input window, operand 5']
    #allocation12 [shape = 's32[2]{0}', space=sflag, size = 0x8, scoped, tag = 'scoped memory for backbone_forward.1']
    #allocation13 [shape = 'u8[9216]{0}', space=vmem, size = 0x2400, scoped, tag = 'input window, operand 6']
    #allocation14 [shape = 'u8[589824]{0}', space=vmem, size = 0x90000, scoped, tag = 'input window, operand 7']
    #allocation15 [shape = 's32[2]{0}', space=sflag, size = 0x8, scoped, tag = 'scoped memory for backbone_forward.1']
    #allocation16 [shape = 'u8[3072]{0}', space=vmem, size = 0xc00, scoped, tag = 'input window, operand 8']
    #allocation17 [shape = 'u8[3072]{0}', space=vmem, size = 0xc00, scoped, tag = 'input window, operand 9']
    #allocation18 [shape = 's32[2]{0}', space=sflag, size = 0x8, scoped, tag = 'scoped memory for backbone_forward.1']
    #allocation19 [shape = 'u8[3072]{0}', space=vmem, size = 0xc00, scoped, tag = 'input window, operand 10']
    #allocation20 [shape = 'u8[2359296]{0}', space=vmem, size = 0x240000, scoped, tag = 'input window, operand 11']
    #allocation21 [shape = 's32[2]{0}', space=sflag, size = 0x8, scoped, tag = 'scoped memory for backbone_forward.1']
    #allocation22 [shape = 'u8[12288]{0}', space=vmem, size = 0x3000, scoped, tag = 'input window, operand 12']
    #allocation23 [shape = 'u8[2359296]{0}', space=vmem, size = 0x240000, scoped, tag = 'input window, operand 13']
    #allocation24 [shape = 's32[2]{0}', space=sflag, size = 0x8, scoped, tag = 'scoped memory for backbone_forward.1']
    #allocation25 [shape = 'u8[3072]{0}', space=vmem, size = 0xc00, scoped, tag = 'input window, operand 14']
    #allocation26 [shape = 'u8[1536]{0}', space=vmem, size = 0x800, scoped, tag = 'input window, operand 15, single buffered']
    #allocation27 [shape = 's32[1]{0}', space=sflag, size = 0x4, scoped, tag = 'scoped memory for backbone_forward.1']
    #allocation28 [shape = 'u8[1536]{0}', space=vmem, size = 0x800, scoped, tag = 'input window, operand 16, single buffered']
    %22 = vsyncpa [#allocation7], 0
    %23 = vsyncpa [#allocation9], 0
    %s24 = scalar_lea.sflag [#allocation9], 1
    %25 = vsyncpa %s24, 0
    %26 = vsyncpa [#allocation12], 0
    %s27 = scalar_lea.sflag [#allocation12], 1
    %28 = vsyncpa %s27, 0
    %29 = vsyncpa [#allocation15], 0
    %s30 = scalar_lea.sflag [#allocation15], 1
    %31 = vsyncpa %s30, 0
    %32 = vsyncpa [#allocation18], 0
    %s33 = scalar_lea.sflag [#allocation18], 1
    %34 = vsyncpa %s33, 0
    %35 = vsyncpa [#allocation21], 0
    %s36 = scalar_lea.sflag [#allocation21], 1
    %37 = vsyncpa %s36, 0
    %38 = vsyncpa [#allocation24], 0
    %s39 = scalar_lea.sflag [#allocation24], 1
    %40 = vsyncpa %s39, 0
    %41 = vsyncpa [#allocation27], 0
    loop: start=0, step=1, limit=3
    $region2: #{backbone_forward.1} parent=1 // loop_pre_header
      _
    $region3: #{backbone_forward.1} parent=1 // loop_header
      %s43 = sphi 0, %s47
      %p44 = scmp.ge.s32.totalorder %s43, 3
      %s49 = sphi 0, %s59
      %s50 = sphi 0, %s55
      %s51 = sphi 0, %s49
      %s52 = sphi 0, %s50
      %s60 = sphi 0, %s60
      %s62 = sphi 0, %s60
      %s70 = sphi 0, %s62
      %s74 = sphi 0, %s74
      %s76 = sphi 0, %s74
      %s84 = sphi 0, %s76
      %s90 = sphi 0, %s92
      %s93 = sphi 0, %s90
      %s103 = sphi 0, %s93
      %s109 = sphi 0, %s111
      %s112 = sphi 0, %s109
      %s122 = sphi 0, %s112
      %s128 = sphi 0, %s130
      %s131 = sphi 0, %s128
      %s141 = sphi 0, %s131
      %s147 = sphi 0, %s149
      %s150 = sphi 0, %s147
      %s160 = sphi 0, %s150
      %s166 = sphi 0, %s168
      %s169 = sphi 0, %s166
      %s179 = sphi 0, %s169
      %s185 = sphi 0, %s187
      %s188 = sphi 0, %s185
      %s198 = sphi 0, %s188
      %s204 = sphi 0, %s206
      %s207 = sphi 0, %s204
      %s217 = sphi 0, %s207
      %s223 = sphi 0, %s225
      %s226 = sphi 0, %s223
      %s236 = sphi 0, %s226
      %s242 = sphi 0, %s244
      %s245 = sphi 0, %s242
      %s255 = sphi 0, %s245
      %s261 = sphi 0, %s263
      %s264 = sphi 0, %s261
      %s274 = sphi 0, %s264
      %s280 = sphi 0, %s282
      %s283 = sphi 0, %s280
      %s293 = sphi 0, %s283
      %s299 = sphi 0, %s301
      %s302 = sphi 0, %s299
      %s312 = sphi 0, %s302
      %s316 = sphi 0, %s316
      %s318 = sphi 0, %s316
      %s326 = sphi 0, %s318
      %s330 = sphi 0, %s330
      %s332 = sphi 0, %s330
      %s340 = sphi 0, %s332
    $region4: #{backbone_forward.1} parent=1 // loop_header_branch
      %46 = sbr.rel (%p44) target = $region8
    $region5: #{backbone_forward.1} parent=1 // loop_body
      %s48 = ssub.s32 %s43, 1
      %s53 = sadd.s32 1, %s50
      %p54 = scmp.ge.s32.totalorder %s53, 1
      %s55 = scalar_select %p54, 0, %s53
      %s56 = sadd.s32 1, %s49
      %s57 = scalar_select %p54, %s56, %s49
      %p58 = scmp.ge.s32.totalorder %s57, 2
      %s59 = scalar_select %p58, 0, %s57
      %s61 = sadd.s32 %s60, 1
      %p63 = scmp.eq.s32.totalorder %s43, 1
      %p64 = scmp.ne.s32.totalorder %s60, %s62
      %p65 = scmp.eq.s32.totalorder %s43, 0
      %p66 = por %p64, %p65
      %p67 = scmp.ne.s32.totalorder %s60, %s62
      %p68 = scmp.eq.s32.totalorder %s48, 1
      %p69 = por %p67, %p68
      %p71 = scmp.ne.s32.totalorder %s62, %s70
      %p72 = scmp.eq.s32.totalorder %s48, 0
      %p73 = por %p71, %p72
      %s75 = sadd.s32 %s74, 1
      %p77 = scmp.eq.s32.totalorder %s43, 1
      %p78 = scmp.ne.s32.totalorder %s74, %s76
      %p79 = scmp.eq.s32.totalorder %s43, 0
      %p80 = por %p78, %p79
      %p81 = scmp.ne.s32.totalorder %s74, %s76
      %p82 = scmp.eq.s32.totalorder %s48, 1
      %p83 = por %p81, %p82
      %p85 = scmp.ne.s32.totalorder %s76, %s84
      %p86 = scmp.eq.s32.totalorder %s48, 0
      %p87 = por %p85, %p86
      %s88 = ssub.s32 %s49, %s59
      %p89 = scmp.eq.s32.totalorder %s88, 0
      %s91 = sadd.s32 %s90, 1
      %s92 = scalar_select %p89, %s90, %s91
      %p94 = pneg %p89
      %p95 = scmp.eq.s32.totalorder %s43, 1
      %p96 = por %p94, %p95
      %p97 = scmp.ne.s32.totalorder %s90, %s93
      %p98 = scmp.eq.s32.totalorder %s43, 0
      %p99 = por %p97, %p98
      %p100 = scmp.ne.s32.totalorder %s90, %s93
      %p101 = scmp.eq.s32.totalorder %s48, 1
      %p102 = por %p100, %p101
      %p104 = scmp.ne.s32.totalorder %s93, %s103
      %p105 = scmp.eq.s32.totalorder %s48, 0
      %p106 = por %p104, %p105
      %s107 = ssub.s32 %s49, %s59
      %p108 = scmp.eq.s32.totalorder %s107, 0
      %s110 = sadd.s32 %s109, 1
      %s111 = scalar_select %p108, %s109, %s110
      %p113 = pneg %p108
      %p114 = scmp.eq.s32.totalorder %s43, 1
      %p115 = por %p113, %p114
      %p116 = scmp.ne.s32.totalorder %s109, %s112
      %p117 = scmp.eq.s32.totalorder %s43, 0
      %p118 = por %p116, %p117
      %p119 = scmp.ne.s32.totalorder %s109, %s112
      %p120 = scmp.eq.s32.totalorder %s48, 1
      %p121 = por %p119, %p120
      %p123 = scmp.ne.s32.totalorder %s112, %s122
      %p124 = scmp.eq.s32.totalorder %s48, 0
      %p125 = por %p123, %p124
      %s126 = ssub.s32 %s49, %s59
      %p127 = scmp.eq.s32.totalorder %s126, 0
      %s129 = sadd.s32 %s128, 1
      %s130 = scalar_select %p127, %s128, %s129
      %p132 = pneg %p127
      %p133 = scmp.eq.s32.totalorder %s43, 1
      %p134 = por %p132, %p133
      %p135 = scmp.ne.s32.totalorder %s128, %s131
      %p136 = scmp.eq.s32.totalorder %s43, 0
      %p137 = por %p135, %p136
      %p138 = scmp.ne.s32.totalorder %s128, %s131
      %p139 = scmp.eq.s32.totalorder %s48, 1
      %p140 = por %p138, %p139
      %p142 = scmp.ne.s32.totalorder %s131, %s141
      %p143 = scmp.eq.s32.totalorder %s48, 0
      %p144 = por %p142, %p143
      %s145 = ssub.s32 %s49, %s59
      %p146 = scmp.eq.s32.totalorder %s145, 0
      %s148 = sadd.s32 %s147, 1
      %s149 = scalar_select %p146, %s147, %s148
      %p151 = pneg %p146
      %p152 = scmp.eq.s32.totalorder %s43, 1
      %p153 = por %p151, %p152
      %p154 = scmp.ne.s32.totalorder %s147, %s150
      %p155 = scmp.eq.s32.totalorder %s43, 0
      %p156 = por %p154, %p155
      %p157 = scmp.ne.s32.totalorder %s147, %s150
      %p158 = scmp.eq.s32.totalorder %s48, 1
      %p159 = por %p157, %p158
      %p161 = scmp.ne.s32.totalorder %s150, %s160
      %p162 = scmp.eq.s32.totalorder %s48, 0
      %p163 = por %p161, %p162
      %s164 = ssub.s32 %s49, %s59
      %p165 = scmp.eq.s32.totalorder %s164, 0
      %s167 = sadd.s32 %s166, 1
      %s168 = scalar_select %p165, %s166, %s167
      %p170 = pneg %p165
      %p171 = scmp.eq.s32.totalorder %s43, 1
      %p172 = por %p170, %p171
      %p173 = scmp.ne.s32.totalorder %s166, %s169
      %p174 = scmp.eq.s32.totalorder %s43, 0
      %p175 = por %p173, %p174
      %p176 = scmp.ne.s32.totalorder %s166, %s169
      %p177 = scmp.eq.s32.totalorder %s48, 1
      %p178 = por %p176, %p177
      %p180 = scmp.ne.s32.totalorder %s169, %s179
      %p181 = scmp.eq.s32.totalorder %s48, 0
      %p182 = por %p180, %p181
      %s183 = ssub.s32 %s49, %s59
      %p184 = scmp.eq.s32.totalorder %s183, 0
      %s186 = sadd.s32 %s185, 1
      %s187 = scalar_select %p184, %s185, %s186
      %p189 = pneg %p184
      %p190 = scmp.eq.s32.totalorder %s43, 1
      %p191 = por %p189, %p190
      %p192 = scmp.ne.s32.totalorder %s185, %s188
      %p193 = scmp.eq.s32.totalorder %s43, 0
      %p194 = por %p192, %p193
      %p195 = scmp.ne.s32.totalorder %s185, %s188
      %p196 = scmp.eq.s32.totalorder %s48, 1
      %p197 = por %p195, %p196
      %p199 = scmp.ne.s32.totalorder %s188, %s198
      %p200 = scmp.eq.s32.totalorder %s48, 0
      %p201 = por %p199, %p200
      %s202 = ssub.s32 %s49, %s59
      %p203 = scmp.eq.s32.totalorder %s202, 0
      %s205 = sadd.s32 %s204, 1
      %s206 = scalar_select %p203, %s204, %s205
      %p208 = pneg %p203
      %p209 = scmp.eq.s32.totalorder %s43, 1
      %p210 = por %p208, %p209
      %p211 = scmp.ne.s32.totalorder %s204, %s207
      %p212 = scmp.eq.s32.totalorder %s43, 0
      %p213 = por %p211, %p212
      %p214 = scmp.ne.s32.totalorder %s204, %s207
      %p215 = scmp.eq.s32.totalorder %s48, 1
      %p216 = por %p214, %p215
      %p218 = scmp.ne.s32.totalorder %s207, %s217
      %p219 = scmp.eq.s32.totalorder %s48, 0
      %p220 = por %p218, %p219
      %s221 = ssub.s32 %s49, %s59
      %p222 = scmp.eq.s32.totalorder %s221, 0
      %s224 = sadd.s32 %s223, 1
      %s225 = scalar_select %p222, %s223, %s224
      %p227 = pneg %p222
      %p228 = scmp.eq.s32.totalorder %s43, 1
      %p229 = por %p227, %p228
      %p230 = scmp.ne.s32.totalorder %s223, %s226
      %p231 = scmp.eq.s32.totalorder %s43, 0
      %p232 = por %p230, %p231
      %p233 = scmp.ne.s32.totalorder %s223, %s226
      %p234 = scmp.eq.s32.totalorder %s48, 1
      %p235 = por %p233, %p234
      %p237 = scmp.ne.s32.totalorder %s226, %s236
      %p238 = scmp.eq.s32.totalorder %s48, 0
      %p239 = por %p237, %p238
      %s240 = ssub.s32 %s49, %s59
      %p241 = scmp.eq.s32.totalorder %s240, 0
      %s243 = sadd.s32 %s242, 1
      %s244 = scalar_select %p241, %s242, %s243
      %p246 = pneg %p241
      %p247 = scmp.eq.s32.totalorder %s43, 1
      %p248 = por %p246, %p247
      %p249 = scmp.ne.s32.totalorder %s242, %s245
      %p250 = scmp.eq.s32.totalorder %s43, 0
      %p251 = por %p249, %p250
      %p252 = scmp.ne.s32.totalorder %s242, %s245
      %p253 = scmp.eq.s32.totalorder %s48, 1
      %p254 = por %p252, %p253
      %p256 = scmp.ne.s32.totalorder %s245, %s255
      %p257 = scmp.eq.s32.totalorder %s48, 0
      %p258 = por %p256, %p257
      %s259 = ssub.s32 %s49, %s59
      %p260 = scmp.eq.s32.totalorder %s259, 0
      %s262 = sadd.s32 %s261, 1
      %s263 = scalar_select %p260, %s261, %s262
      %p265 = pneg %p260
      %p266 = scmp.eq.s32.totalorder %s43, 1
      %p267 = por %p265, %p266
      %p268 = scmp.ne.s32.totalorder %s261, %s264
      %p269 = scmp.eq.s32.totalorder %s43, 0
      %p270 = por %p268, %p269
      %p271 = scmp.ne.s32.totalorder %s261, %s264
      %p272 = scmp.eq.s32.totalorder %s48, 1
      %p273 = por %p271, %p272
      %p275 = scmp.ne.s32.totalorder %s264, %s274
      %p276 = scmp.eq.s32.totalorder %s48, 0
      %p277 = por %p275, %p276
      %s278 = ssub.s32 %s49, %s59
      %p279 = scmp.eq.s32.totalorder %s278, 0
      %s281 = sadd.s32 %s280, 1
      %s282 = scalar_select %p279, %s280, %s281
      %p284 = pneg %p279
      %p285 = scmp.eq.s32.totalorder %s43, 1
      %p286 = por %p284, %p285
      %p287 = scmp.ne.s32.totalorder %s280, %s283
      %p288 = scmp.eq.s32.totalorder %s43, 0
      %p289 = por %p287, %p288
      %p290 = scmp.ne.s32.totalorder %s280, %s283
      %p291 = scmp.eq.s32.totalorder %s48, 1
      %p292 = por %p290, %p291
      %p294 = scmp.ne.s32.totalorder %s283, %s293
      %p295 = scmp.eq.s32.totalorder %s48, 0
      %p296 = por %p294, %p295
      %s297 = ssub.s32 %s49, %s59
      %p298 = scmp.eq.s32.totalorder %s297, 0
      %s300 = sadd.s32 %s299, 1
      %s301 = scalar_select %p298, %s299, %s300
      %p303 = pneg %p298
      %p304 = scmp.eq.s32.totalorder %s43, 1
      %p305 = por %p303, %p304
      %p306 = scmp.ne.s32.totalorder %s299, %s302
      %p307 = scmp.eq.s32.totalorder %s43, 0
      %p308 = por %p306, %p307
      %p309 = scmp.ne.s32.totalorder %s299, %s302
      %p310 = scmp.eq.s32.totalorder %s48, 1
      %p311 = por %p309, %p310
      %p313 = scmp.ne.s32.totalorder %s302, %s312
      %p314 = scmp.eq.s32.totalorder %s48, 0
      %p315 = por %p313, %p314
      %s317 = sadd.s32 %s316, 1
      %p319 = scmp.eq.s32.totalorder %s43, 1
      %p320 = scmp.ne.s32.totalorder %s316, %s318
      %p321 = scmp.eq.s32.totalorder %s43, 0
      %p322 = por %p320, %p321
      %p323 = scmp.ne.s32.totalorder %s316, %s318
      %p324 = scmp.eq.s32.totalorder %s48, 1
      %p325 = por %p323, %p324
      %p327 = scmp.ne.s32.totalorder %s318, %s326
      %p328 = scmp.eq.s32.totalorder %s48, 0
      %p329 = por %p327, %p328
      %s331 = sadd.s32 %s330, 1
      %p333 = scmp.eq.s32.totalorder %s43, 1
      %p334 = scmp.ne.s32.totalorder %s330, %s332
      %p335 = scmp.eq.s32.totalorder %s43, 0
      %p336 = por %p334, %p335
      %p337 = scmp.ne.s32.totalorder %s330, %s332
      %p338 = scmp.eq.s32.totalorder %s48, 1
      %p339 = por %p337, %p338
      %p341 = scmp.ne.s32.totalorder %s332, %s340
      %p342 = scmp.eq.s32.totalorder %s48, 0
      %p343 = por %p341, %p342
      %p344 = scmp.le.s32.totalorder 1, %s43
      // Predicated region
      $region9: #{backbone_forward.1} parent=5 // pred_check
        %p345 = pneg %p344
      $region10: #{backbone_forward.1} parent=5 // pred_check_branch
        %347 = sbr.rel (%p345) target = $region12
      $region11: #{backbone_forward.1} parent=5 // pred_region
        %s348 = ssub.s32 %s43, 1
        // Predicated region
        $region13: #{backbone_forward.1} parent=11 // pred_check
          %p349 = pneg %p73
        $region14: #{backbone_forward.1} parent=11 // pred_check_branch
          %351 = sbr.rel (%p349) target = $region16
        $region15: #{backbone_forward.1} parent=11 // pred_region
          _
        $region16: #{backbone_forward.1} parent=11 // pred_fallthru
          _
        // Predicated region
        $region17: #{backbone_forward.1} parent=11 // pred_check
          %p352 = pneg %p87
        $region18: #{backbone_forward.1} parent=11 // pred_check_branch
          %354 = sbr.rel (%p352) target = $region20
        $region19: #{backbone_forward.1} parent=11 // pred_region
          %356 = vsyncadd [#allocation7], 0
          %s357 = sshll.u32 %s2, 4
          %s358 = int_to_ptr.hbm [resolvable:$true] %s357
          %s359 = sshll.u32 [#allocation6], 4
          %s360 = int_to_ptr.vmem [resolvable:$true] %s359
          %365 = dma.hbm_to_vmem [thread:$0]  %s358, 18432, %s360, [#allocation7], 192, 192, 12
        $region20: #{backbone_forward.1} parent=11 // pred_fallthru
          _
        // Predicated region
        $region21: #{backbone_forward.1} parent=11 // pred_check
          %p366 = pneg %p329
        $region22: #{backbone_forward.1} parent=11 // pred_check_branch
          %368 = sbr.rel (%p366) target = $region24
        $region23: #{backbone_forward.1} parent=11 // pred_region
          %370 = vsyncadd [#allocation27], 0
          %s372 = sshll.u32 %s15, 4
          %s373 = int_to_ptr.hbm [resolvable:$true] %s372
          %s374 = sshll.u32 [#allocation26], 4
          %s375 = int_to_ptr.vmem [resolvable:$true] %s374
          %377 = dma.hbm_to_vmem [thread:$0]  %s373, 48, %s375, [#allocation27]
        $region24: #{backbone_forward.1} parent=11 // pred_fallthru
          _
        // Predicated region
        $region25: #{backbone_forward.1} parent=11 // pred_check
          %p378 = pneg %p343
        $region26: #{backbone_forward.1} parent=11 // pred_check_branch
          %380 = sbr.rel (%p378) target = $region28
        $region27: #{backbone_forward.1} parent=11 // pred_region
          %382 = vsyncadd [#allocation27], 0
          %s384 = sshll.u32 %s16, 4
          %s385 = int_to_ptr.hbm [resolvable:$true] %s384
          %s386 = sshll.u32 [#allocation28], 4
          %s387 = int_to_ptr.vmem [resolvable:$true] %s386
          %389 = dma.hbm_to_vmem [thread:$0]  %s385, 48, %s387, [#allocation27]
        $region28: #{backbone_forward.1} parent=11 // pred_fallthru
          _
      $region12: #{backbone_forward.1} parent=5 // pred_fallthru
        _
      %p390 = scmp.lt.s32.totalorder %s43, 2
      // Predicated region
      $region29: #{backbone_forward.1} parent=5 // pred_check
        %p391 = pneg %p390
      $region30: #{backbone_forward.1} parent=5 // pred_check_branch
        %393 = sbr.rel (%p391) target = $region32
      $region31: #{backbone_forward.1} parent=5 // pred_region
        // Predicated region
        $region33: #{backbone_forward.1} parent=31 // pred_check
          %p394 = pneg %p99
        $region34: #{backbone_forward.1} parent=31 // pred_check_branch
          %396 = sbr.rel (%p394) target = $region36
        $region35: #{backbone_forward.1} parent=31 // pred_region
          %s397 = sand.u32 %s43, 1
          %s398 = scalar_lea.sflag [#allocation9], %s397
          %s399 = sand.u32 %s90, 1
          %s400 = smul.addr %s399, 3
          %s401 = scalar_lea.vmem [#allocation8], %s400
          %403 = vsyncadd %s398, 0
          %s404 = smul.addr %s49, 3
          %s405 = scalar_lea.hbm %s3, %s404
          %s407 = sshll.u32 %s405, 4
          %s408 = int_to_ptr.hbm [resolvable:$true] %s407
          %s409 = sshll.u32 %s401, 4
          %s410 = int_to_ptr.vmem [resolvable:$true] %s409
          %412 = dma.hbm_to_vmem [thread:$0]  %s408, 48, %s410, %s398
        $region36: #{backbone_forward.1} parent=31 // pred_fallthru
          _
        // Predicated region
        $region37: #{backbone_forward.1} parent=31 // pred_check
          %p413 = pneg %p118
        $region38: #{backbone_forward.1} parent=31 // pred_check_branch
          %415 = sbr.rel (%p413) target = $region40
        $region39: #{backbone_forward.1} parent=31 // pred_region
          %s416 = sand.u32 %s43, 1
          %s417 = scalar_lea.sflag [#allocation9], %s416
          %s418 = sand.u32 %s109, 1
          %s419 = smul.addr %s418, 3
          %s420 = scalar_lea.vmem [#allocation10], %s419
          %422 = vsyncadd %s417, 0
          %s423 = smul.addr %s49, 3
          %s424 = scalar_lea.hbm %s4, %s423
          %s426 = sshll.u32 %s424, 4
          %s427 = int_to_ptr.hbm [resolvable:$true] %s426
          %s428 = sshll.u32 %s420, 4
          %s429 = int_to_ptr.vmem [resolvable:$true] %s428
          %431 = dma.hbm_to_vmem [thread:$0]  %s427, 48, %s429, %s417
        $region40: #{backbone_forward.1} parent=31 // pred_fallthru
          _
        // Predicated region
        $region41: #{backbone_forward.1} parent=31 // pred_check
          %p432 = pneg %p137
        $region42: #{backbone_forward.1} parent=31 // pred_check_branch
          %434 = sbr.rel (%p432) target = $region44
        $region43: #{backbone_forward.1} parent=31 // pred_region
          %s435 = sand.u32 %s43, 1
          %s436 = scalar_lea.sflag [#allocation12], %s435
          %s437 = sand.u32 %s128, 1
          %s438 = smul.addr %s437, 1728
          %s439 = scalar_lea.vmem [#allocation11], %s438
          %441 = vsyncadd %s436, 0
          %s442 = smul.addr %s49, 432
          %s443 = smul.addr %s442, 4
          %s444 = scalar_lea.hbm %s5, %s443
          %s445 = sshll.u32 %s444, 4
          %s446 = int_to_ptr.hbm [resolvable:$true] %s445
          %s447 = sshll.u32 %s439, 4
          %s448 = int_to_ptr.vmem [resolvable:$true] %s447
          %453 = dma.hbm_to_vmem [thread:$0]  %s446, 27648, %s448, %s436, 576, 576, 36
        $region44: #{backbone_forward.1} parent=31 // pred_fallthru
          _
        // Predicated region
        $region45: #{backbone_forward.1} parent=31 // pred_check
          %p454 = pneg %p156
        $region46: #{backbone_forward.1} parent=31 // pred_check_branch
          %456 = sbr.rel (%p454) target = $region48
        $region47: #{backbone_forward.1} parent=31 // pred_region
          %s457 = sand.u32 %s43, 1
          %s458 = scalar_lea.sflag [#allocation12], %s457
          %s459 = sand.u32 %s147, 1
          %s460 = smul.addr %s459, 9
          %s461 = scalar_lea.vmem [#allocation13], %s460
          %463 = vsyncadd %s458, 0
          %s464 = smul.addr %s49, 9
          %s465 = scalar_lea.hbm %s6, %s464
          %s467 = sshll.u32 %s465, 4
          %s468 = int_to_ptr.hbm [resolvable:$true] %s467
          %s469 = sshll.u32 %s461, 4
          %s470 = int_to_ptr.vmem [resolvable:$true] %s469
          %472 = dma.hbm_to_vmem [thread:$0]  %s468, 144, %s470, %s458
        $region48: #{backbone_forward.1} parent=31 // pred_fallthru
          _
        // Predicated region
        $region49: #{backbone_forward.1} parent=31 // pred_check
          %p473 = pneg %p175
        $region50: #{backbone_forward.1} parent=31 // pred_check_branch
          %475 = sbr.rel (%p473) target = $region52
        $region51: #{backbone_forward.1} parent=31 // pred_region
          %s476 = sand.u32 %s43, 1
          %s477 = scalar_lea.sflag [#allocation15], %s476
          %s478 = sand.u32 %s166, 1
          %s479 = smul.addr %s478, 576
          %s480 = scalar_lea.vmem [#allocation14], %s479
          %482 = vsyncadd %s477, 0
          %s483 = smul.addr %s49, 144
          %s484 = smul.addr %s483, 4
          %s485 = scalar_lea.hbm %s7, %s484
          %s486 = sshll.u32 %s485, 4
          %s487 = int_to_ptr.hbm [resolvable:$true] %s486
          %s488 = sshll.u32 %s480, 4
          %s489 = int_to_ptr.vmem [resolvable:$true] %s488
          %494 = dma.hbm_to_vmem [thread:$0]  %s487, 9216, %s489, %s477, 192, 192, 12
        $region52: #{backbone_forward.1} parent=31 // pred_fallthru
          _
        // Predicated region
        $region53: #{backbone_forward.1} parent=31 // pred_check
          %p495 = pneg %p194
        $region54: #{backbone_forward.1} parent=31 // pred_check_branch
          %497 = sbr.rel (%p495) target = $region56
        $region55: #{backbone_forward.1} parent=31 // pred_region
          %s498 = sand.u32 %s43, 1
          %s499 = scalar_lea.sflag [#allocation15], %s498
          %s500 = sand.u32 %s185, 1
          %s501 = smul.addr %s500, 3
          %s502 = scalar_lea.vmem [#allocation16], %s501
          %504 = vsyncadd %s499, 0
          %s505 = smul.addr %s49, 3
          %s506 = scalar_lea.hbm %s8, %s505
          %s508 = sshll.u32 %s506, 4
          %s509 = int_to_ptr.hbm [resolvable:$true] %s508
          %s510 = sshll.u32 %s502, 4
          %s511 = int_to_ptr.vmem [resolvable:$true] %s510
          %513 = dma.hbm_to_vmem [thread:$0]  %s509, 48, %s511, %s499
        $region56: #{backbone_forward.1} parent=31 // pred_fallthru
          _
        // Predicated region
        $region57: #{backbone_forward.1} parent=31 // pred_check
          %p514 = pneg %p213
        $region58: #{backbone_forward.1} parent=31 // pred_check_branch
          %516 = sbr.rel (%p514) target = $region60
        $region59: #{backbone_forward.1} parent=31 // pred_region
          %s517 = sand.u32 %s43, 1
          %s518 = scalar_lea.sflag [#allocation18], %s517
          %s519 = sand.u32 %s204, 1
          %s520 = smul.addr %s519, 3
          %s521 = scalar_lea.vmem [#allocation17], %s520
          %523 = vsyncadd %s518, 0
          %s524 = smul.addr %s49, 3
          %s525 = scalar_lea.hbm %s9, %s524
          %s527 = sshll.u32 %s525, 4
          %s528 = int_to_ptr.hbm [resolvable:$true] %s527
          %s529 = sshll.u32 %s521, 4
          %s530 = int_to_ptr.vmem [resolvable:$true] %s529
          %532 = dma.hbm_to_vmem [thread:$0]  %s528, 48, %s530, %s518
        $region60: #{backbone_forward.1} parent=31 // pred_fallthru
          _
        // Predicated region
        $region61: #{backbone_forward.1} parent=31 // pred_check
          %p533 = pneg %p232
        $region62: #{backbone_forward.1} parent=31 // pred_check_branch
          %535 = sbr.rel (%p533) target = $region64
        $region63: #{backbone_forward.1} parent=31 // pred_region
          %s536 = sand.u32 %s43, 1
          %s537 = scalar_lea.sflag [#allocation18], %s536
          %s538 = sand.u32 %s223, 1
          %s539 = smul.addr %s538, 3
          %s540 = scalar_lea.vmem [#allocation19], %s539
          %542 = vsyncadd %s537, 0
          %s543 = smul.addr %s49, 3
          %s544 = scalar_lea.hbm %s10, %s543
          %s546 = sshll.u32 %s544, 4
          %s547 = int_to_ptr.hbm [resolvable:$true] %s546
          %s548 = sshll.u32 %s540, 4
          %s549 = int_to_ptr.vmem [resolvable:$true] %s548
          %551 = dma.hbm_to_vmem [thread:$0]  %s547, 48, %s549, %s537
        $region64: #{backbone_forward.1} parent=31 // pred_fallthru
          _
        // Predicated region
        $region65: #{backbone_forward.1} parent=31 // pred_check
          %p552 = pneg %p251
        $region66: #{backbone_forward.1} parent=31 // pred_check_branch
          %554 = sbr.rel (%p552) target = $region68
        $region67: #{backbone_forward.1} parent=31 // pred_region
          %s555 = sand.u32 %s43, 1
          %s556 = scalar_lea.sflag [#allocation21], %s555
          %s557 = sand.u32 %s242, 1
          %s558 = smul.addr %s557, 2304
          %s559 = scalar_lea.vmem [#allocation20], %s558
          %561 = vsyncadd %s556, 0
          %s562 = smul.addr %s49, 576
          %s563 = smul.addr %s562, 4
          %s564 = scalar_lea.hbm %s11, %s563
          %s565 = sshll.u32 %s564, 4
          %s566 = int_to_ptr.hbm [resolvable:$true] %s565
          %s567 = sshll.u32 %s559, 4
          %s568 = int_to_ptr.vmem [resolvable:$true] %s567
          %573 = dma.hbm_to_vmem [thread:$0]  %s566, 36864, %s568, %s556, 768, 768, 48
        $region68: #{backbone_forward.1} parent=31 // pred_fallthru
          _
        // Predicated region
        $region69: #{backbone_forward.1} parent=31 // pred_check
          %p574 = pneg %p270
        $region70: #{backbone_forward.1} parent=31 // pred_check_branch
          %576 = sbr.rel (%p574) target = $region72
        $region71: #{backbone_forward.1} parent=31 // pred_region
          %s577 = sand.u32 %s43, 1
          %s578 = scalar_lea.sflag [#allocation21], %s577
          %s579 = sand.u32 %s261, 1
          %s580 = smul.addr %s579, 12
          %s581 = scalar_lea.vmem [#allocation22], %s580
          %583 = vsyncadd %s578, 0
          %s584 = smul.addr %s49, 12
          %s585 = scalar_lea.hbm %s12, %s584
          %s587 = sshll.u32 %s585, 4
          %s588 = int_to_ptr.hbm [resolvable:$true] %s587
          %s589 = sshll.u32 %s581, 4
          %s590 = int_to_ptr.vmem [resolvable:$true] %s589
          %592 = dma.hbm_to_vmem [thread:$0]  %s588, 192, %s590, %s578
        $region72: #{backbone_forward.1} parent=31 // pred_fallthru
          _
        // Predicated region
        $region73: #{backbone_forward.1} parent=31 // pred_check
          %p593 = pneg %p289
        $region74: #{backbone_forward.1} parent=31 // pred_check_branch
          %595 = sbr.rel (%p593) target = $region76
        $region75: #{backbone_forward.1} parent=31 // pred_region
          %s596 = sand.u32 %s43, 1
          %s597 = scalar_lea.sflag [#allocation24], %s596
          %s598 = sand.u32 %s280, 1
          %s599 = smul.addr %s598, 2304
          %s600 = scalar_lea.vmem [#allocation23], %s599
          %602 = vsyncadd %s597, 0
          %s603 = smul.addr %s49, 576
          %s604 = smul.addr %s603, 4
          %s605 = scalar_lea.hbm %s13, %s604
          %s606 = sshll.u32 %s605, 4
          %s607 = int_to_ptr.hbm [resolvable:$true] %s606
          %s608 = sshll.u32 %s600, 4
          %s609 = int_to_ptr.vmem [resolvable:$true] %s608
          %614 = dma.hbm_to_vmem [thread:$0]  %s607, 36864, %s609, %s597, 192, 192, 12
        $region76: #{backbone_forward.1} parent=31 // pred_fallthru
          _
        // Predicated region
        $region77: #{backbone_forward.1} parent=31 // pred_check
          %p615 = pneg %p308
        $region78: #{backbone_forward.1} parent=31 // pred_check_branch
          %617 = sbr.rel (%p615) target = $region80
        $region79: #{backbone_forward.1} parent=31 // pred_region
          %s618 = sand.u32 %s43, 1
          %s619 = scalar_lea.sflag [#allocation24], %s618
          %s620 = sand.u32 %s299, 1
          %s621 = smul.addr %s620, 3
          %s622 = scalar_lea.vmem [#allocation25], %s621
          %624 = vsyncadd %s619, 0
          %s625 = smul.addr %s49, 3
          %s626 = scalar_lea.hbm %s14, %s625
          %s628 = sshll.u32 %s626, 4
          %s629 = int_to_ptr.hbm [resolvable:$true] %s628
          %s630 = sshll.u32 %s622, 4
          %s631 = int_to_ptr.vmem [resolvable:$true] %s630
          %633 = dma.hbm_to_vmem [thread:$0]  %s629, 48, %s631, %s619
        $region80: #{backbone_forward.1} parent=31 // pred_fallthru
          _
      $region32: #{backbone_forward.1} parent=5 // pred_fallthru
        _
      %p634 = scmp.le.s32.totalorder 1, %s43
      // Predicated region
      $region81: #{backbone_forward.1} parent=5 // pred_check
        %p635 = pneg %p634
      $region82: #{backbone_forward.1} parent=5 // pred_check_branch
        %637 = sbr.rel (%p635) target = $region84
      $region83: #{backbone_forward.1} parent=5 // pred_region
        %s638 = ssub.s32 %s43, 1
        // Predicated region
        $region85: #{backbone_forward.1} parent=83 // pred_check
          %p639 = pneg %p87
        $region86: #{backbone_forward.1} parent=83 // pred_check_branch
          %641 = sbr.rel (%p639) target = $region88
        $region87: #{backbone_forward.1} parent=83 // pred_region
          %643 = dma.done [#allocation7], 18432
        $region88: #{backbone_forward.1} parent=83 // pred_fallthru
          _
        %s644 = sand.u32 %s48, 1
        %s645 = scalar_lea.sflag [#allocation9], %s644
        %s646 = sand.u32 %s93, 1
        %s647 = smul.addr %s646, 3
        %s648 = scalar_lea.vmem [#allocation8], %s647
        // Predicated region
        $region89: #{backbone_forward.1} parent=83 // pred_check
          %p649 = pneg %p106
        $region90: #{backbone_forward.1} parent=83 // pred_check_branch
          %651 = sbr.rel (%p649) target = $region92
        $region91: #{backbone_forward.1} parent=83 // pred_region
          %653 = dma.done %s645, 48
        $region92: #{backbone_forward.1} parent=83 // pred_fallthru
          _
        %s654 = sand.u32 %s48, 1
        %s655 = scalar_lea.sflag [#allocation9], %s654
        %s656 = sand.u32 %s112, 1
        %s657 = smul.addr %s656, 3
        %s658 = scalar_lea.vmem [#allocation10], %s657
        // Predicated region
        $region93: #{backbone_forward.1} parent=83 // pred_check
          %p659 = pneg %p125
        $region94: #{backbone_forward.1} parent=83 // pred_check_branch
          %661 = sbr.rel (%p659) target = $region96
        $region95: #{backbone_forward.1} parent=83 // pred_region
          %663 = dma.done %s655, 48
        $region96: #{backbone_forward.1} parent=83 // pred_fallthru
          _
        %s664 = sand.u32 %s48, 1
        %s665 = scalar_lea.sflag [#allocation12], %s664
        %s666 = sand.u32 %s131, 1
        %s667 = smul.addr %s666, 1728
        %s668 = scalar_lea.vmem [#allocation11], %s667
        // Predicated region
        $region97: #{backbone_forward.1} parent=83 // pred_check
          %p669 = pneg %p144
        $region98: #{backbone_forward.1} parent=83 // pred_check_branch
          %671 = sbr.rel (%p669) target = $region100
        $region99: #{backbone_forward.1} parent=83 // pred_region
          %673 = dma.done %s665, 27648
        $region100: #{backbone_forward.1} parent=83 // pred_fallthru
          _
        %s674 = sand.u32 %s48, 1
        %s675 = scalar_lea.sflag [#allocation12], %s674
        %s676 = sand.u32 %s150, 1
        %s677 = smul.addr %s676, 9
        %s678 = scalar_lea.vmem [#allocation13], %s677
        // Predicated region
        $region101: #{backbone_forward.1} parent=83 // pred_check
          %p679 = pneg %p163
        $region102: #{backbone_forward.1} parent=83 // pred_check_branch
          %681 = sbr.rel (%p679) target = $region104
        $region103: #{backbone_forward.1} parent=83 // pred_region
          %683 = dma.done %s675, 144
        $region104: #{backbone_forward.1} parent=83 // pred_fallthru
          _
        %s684 = sand.u32 %s48, 1
        %s685 = scalar_lea.sflag [#allocation15], %s684
        %s686 = sand.u32 %s169, 1
        %s687 = smul.addr %s686, 576
        %s688 = scalar_lea.vmem [#allocation14], %s687
        // Predicated region
        $region105: #{backbone_forward.1} parent=83 // pred_check
          %p689 = pneg %p182
        $region106: #{backbone_forward.1} parent=83 // pred_check_branch
          %691 = sbr.rel (%p689) target = $region108
        $region107: #{backbone_forward.1} parent=83 // pred_region
          %693 = dma.done %s685, 9216
        $region108: #{backbone_forward.1} parent=83 // pred_fallthru
          _
        %s694 = sand.u32 %s48, 1
        %s695 = scalar_lea.sflag [#allocation15], %s694
        %s696 = sand.u32 %s188, 1
        %s697 = smul.addr %s696, 3
        %s698 = scalar_lea.vmem [#allocation16], %s697
        // Predicated region
        $region109: #{backbone_forward.1} parent=83 // pred_check
          %p699 = pneg %p201
        $region110: #{backbone_forward.1} parent=83 // pred_check_branch
          %701 = sbr.rel (%p699) target = $region112
        $region111: #{backbone_forward.1} parent=83 // pred_region
          %703 = dma.done %s695, 48
        $region112: #{backbone_forward.1} parent=83 // pred_fallthru
          _
        %s704 = sand.u32 %s48, 1
        %s705 = scalar_lea.sflag [#allocation18], %s704
        %s706 = sand.u32 %s207, 1
        %s707 = smul.addr %s706, 3
        %s708 = scalar_lea.vmem [#allocation17], %s707
        // Predicated region
        $region113: #{backbone_forward.1} parent=83 // pred_check
          %p709 = pneg %p220
        $region114: #{backbone_forward.1} parent=83 // pred_check_branch
          %711 = sbr.rel (%p709) target = $region116
        $region115: #{backbone_forward.1} parent=83 // pred_region
          %713 = dma.done %s705, 48
        $region116: #{backbone_forward.1} parent=83 // pred_fallthru
          _
        %s714 = sand.u32 %s48, 1
        %s715 = scalar_lea.sflag [#allocation18], %s714
        %s716 = sand.u32 %s226, 1
        %s717 = smul.addr %s716, 3
        %s718 = scalar_lea.vmem [#allocation19], %s717
        // Predicated region
        $region117: #{backbone_forward.1} parent=83 // pred_check
          %p719 = pneg %p239
        $region118: #{backbone_forward.1} parent=83 // pred_check_branch
          %721 = sbr.rel (%p719) target = $region120
        $region119: #{backbone_forward.1} parent=83 // pred_region
          %723 = dma.done %s715, 48
        $region120: #{backbone_forward.1} parent=83 // pred_fallthru
          _
        %s724 = sand.u32 %s48, 1
        %s725 = scalar_lea.sflag [#allocation21], %s724
        %s726 = sand.u32 %s245, 1
        %s727 = smul.addr %s726, 2304
        %s728 = scalar_lea.vmem [#allocation20], %s727
        // Predicated region
        $region121: #{backbone_forward.1} parent=83 // pred_check
          %p729 = pneg %p258
        $region122: #{backbone_forward.1} parent=83 // pred_check_branch
          %731 = sbr.rel (%p729) target = $region124
        $region123: #{backbone_forward.1} parent=83 // pred_region
          %733 = dma.done %s725, 36864
        $region124: #{backbone_forward.1} parent=83 // pred_fallthru
          _
        %s734 = sand.u32 %s48, 1
        %s735 = scalar_lea.sflag [#allocation21], %s734
        %s736 = sand.u32 %s264, 1
        %s737 = smul.addr %s736, 12
        %s738 = scalar_lea.vmem [#allocation22], %s737
        // Predicated region
        $region125: #{backbone_forward.1} parent=83 // pred_check
          %p739 = pneg %p277
        $region126: #{backbone_forward.1} parent=83 // pred_check_branch
          %741 = sbr.rel (%p739) target = $region128
        $region127: #{backbone_forward.1} parent=83 // pred_region
          %743 = dma.done %s735, 192
        $region128: #{backbone_forward.1} parent=83 // pred_fallthru
          _
        %s744 = sand.u32 %s48, 1
        %s745 = scalar_lea.sflag [#allocation24], %s744
        %s746 = sand.u32 %s283, 1
        %s747 = smul.addr %s746, 2304
        %s748 = scalar_lea.vmem [#allocation23], %s747
        // Predicated region
        $region129: #{backbone_forward.1} parent=83 // pred_check
          %p749 = pneg %p296
        $region130: #{backbone_forward.1} parent=83 // pred_check_branch
          %751 = sbr.rel (%p749) target = $region132
        $region131: #{backbone_forward.1} parent=83 // pred_region
          %753 = dma.done %s745, 36864
        $region132: #{backbone_forward.1} parent=83 // pred_fallthru
          _
        %s754 = sand.u32 %s48, 1
        %s755 = scalar_lea.sflag [#allocation24], %s754
        %s756 = sand.u32 %s302, 1
        %s757 = smul.addr %s756, 3
        %s758 = scalar_lea.vmem [#allocation25], %s757
        // Predicated region
        $region133: #{backbone_forward.1} parent=83 // pred_check
          %p759 = pneg %p315
        $region134: #{backbone_forward.1} parent=83 // pred_check_branch
          %761 = sbr.rel (%p759) target = $region136
        $region135: #{backbone_forward.1} parent=83 // pred_region
          %763 = dma.done %s755, 48
        $region136: #{backbone_forward.1} parent=83 // pred_fallthru
          _
        // Predicated region
        $region137: #{backbone_forward.1} parent=83 // pred_check
          %p764 = pneg %p329
        $region138: #{backbone_forward.1} parent=83 // pred_check_branch
          %766 = sbr.rel (%p764) target = $region140
        $region139: #{backbone_forward.1} parent=83 // pred_region
          %768 = dma.done [#allocation27], 48
        $region140: #{backbone_forward.1} parent=83 // pred_fallthru
          _
        // Predicated region
        $region141: #{backbone_forward.1} parent=83 // pred_check
          %p769 = pneg %p343
        $region142: #{backbone_forward.1} parent=83 // pred_check_branch
          %771 = sbr.rel (%p769) target = $region144
        $region143: #{backbone_forward.1} parent=83 // pred_region
          %773 = dma.done [#allocation27], 48
        $region144: #{backbone_forward.1} parent=83 // pred_fallthru
          _
        %p774 = pneg %p73
        %p775 = pneg %p69
        %p776 = pneg %p87
        %p777 = pneg %p83
        %s778 = sand.u32 %s48, 1
        %s779 = scalar_lea.sflag [#allocation9], %s778
        %s780 = sand.u32 %s93, 1
        %s781 = smul.addr %s780, 3
        %s782 = scalar_lea.vmem [#allocation8], %s781
        %p783 = pneg %p106
        %p784 = pneg %p102
        %s785 = sand.u32 %s48, 1
        %s786 = scalar_lea.sflag [#allocation9], %s785
        %s787 = sand.u32 %s112, 1
        %s788 = smul.addr %s787, 3
        %s789 = scalar_lea.vmem [#allocation10], %s788
        %p790 = pneg %p125
        %p791 = pneg %p121
        %s792 = sand.u32 %s48, 1
        %s793 = scalar_lea.sflag [#allocation12], %s792
        %s794 = sand.u32 %s131, 1
        %s795 = smul.addr %s794, 1728
        %s796 = scalar_lea.vmem [#allocation11], %s795
        %p797 = pneg %p144
        %p798 = pneg %p140
        %s799 = sand.u32 %s48, 1
        %s800 = scalar_lea.sflag [#allocation12], %s799
        %s801 = sand.u32 %s150, 1
        %s802 = smul.addr %s801, 9
        %s803 = scalar_lea.vmem [#allocation13], %s802
        %p804 = pneg %p163
        %p805 = pneg %p159
        %s806 = sand.u32 %s48, 1
        %s807 = scalar_lea.sflag [#allocation15], %s806
        %s808 = sand.u32 %s169, 1
        %s809 = smul.addr %s808, 576
        %s810 = scalar_lea.vmem [#allocation14], %s809
        %p811 = pneg %p182
        %p812 = pneg %p178
        %s813 = sand.u32 %s48, 1
        %s814 = scalar_lea.sflag [#allocation15], %s813
        %s815 = sand.u32 %s188, 1
        %s816 = smul.addr %s815, 3
        %s817 = scalar_lea.vmem [#allocation16], %s816
        %p818 = pneg %p201
        %p819 = pneg %p197
        %s820 = sand.u32 %s48, 1
        %s821 = scalar_lea.sflag [#allocation18], %s820
        %s822 = sand.u32 %s207, 1
        %s823 = smul.addr %s822, 3
        %s824 = scalar_lea.vmem [#allocation17], %s823
        %p825 = pneg %p220
        %p826 = pneg %p216
        %s827 = sand.u32 %s48, 1
        %s828 = scalar_lea.sflag [#allocation18], %s827
        %s829 = sand.u32 %s226, 1
        %s830 = smul.addr %s829, 3
        %s831 = scalar_lea.vmem [#allocation19], %s830
        %p832 = pneg %p239
        %p833 = pneg %p235
        %s834 = sand.u32 %s48, 1
        %s835 = scalar_lea.sflag [#allocation21], %s834
        %s836 = sand.u32 %s245, 1
        %s837 = smul.addr %s836, 2304
        %s838 = scalar_lea.vmem [#allocation20], %s837
        %p839 = pneg %p258
        %p840 = pneg %p254
        %s841 = sand.u32 %s48, 1
        %s842 = scalar_lea.sflag [#allocation21], %s841
        %s843 = sand.u32 %s264, 1
        %s844 = smul.addr %s843, 12
        %s845 = scalar_lea.vmem [#allocation22], %s844
        %p846 = pneg %p277
        %p847 = pneg %p273
        %s848 = sand.u32 %s48, 1
        %s849 = scalar_lea.sflag [#allocation24], %s848
        %s850 = sand.u32 %s283, 1
        %s851 = smul.addr %s850, 2304
        %s852 = scalar_lea.vmem [#allocation23], %s851
        %p853 = pneg %p296
        %p854 = pneg %p292
        %s855 = sand.u32 %s48, 1
        %s856 = scalar_lea.sflag [#allocation24], %s855
        %s857 = sand.u32 %s302, 1
        %s858 = smul.addr %s857, 3
        %s859 = scalar_lea.vmem [#allocation25], %s858
        %p860 = pneg %p315
        %p861 = pneg %p311
        %p862 = pneg %p329
        %p863 = pneg %p325
        %p864 = pneg %p343
        %p865 = pneg %p339
        %p867 = scmp.eq.s32.totalorder %s51, 0
        // Predicated region
        $region145: #{backbone_forward.1} parent=83 // pred_check
          %p868 = pneg %p867
        $region146: #{backbone_forward.1} parent=83 // pred_check_branch
          %870 = sbr.rel (%p868) target = $region148
        $region147: #{backbone_forward.1} parent=83 // pred_region
          %s871 = smul.u32 %s52, 12
          %s872 = smul.addr %s871, 4
          %s873 = scalar_lea.vmem %s0, %s872
          // Predicated region
          $region149: #{backbone_forward.1} parent=147 // pred_check
            _
          $region150: #{backbone_forward.1} parent=147 // pred_check_branch
            %875 = sbr.rel (0) target = $region152
          $region151: #{backbone_forward.1} parent=147 // pred_region
            loop: start=0, step=1, limit=1
            $region153: #{backbone_forward.1} parent=151 // loop_pre_header
              _
            $region154: #{backbone_forward.1} parent=151 // loop_header
              %s877 = sphi 0, %s881
              %p878 = scmp.ge.s32.totalorder %s877, 1
              %s882 = sphi %s873, %s873
              %s883 = sphi [#allocation3], [#allocation3]
            $region155: #{backbone_forward.1} parent=151 // loop_header_branch
              %880 = sbr.rel (%p878) target = $region159
            $region156: #{backbone_forward.1} parent=151 // loop_body
              %v884 = vld [vmem:[%s882] sm:$0xff]
              %885 = vst [vmem:[%s883] sm:$0xff] %v884
              %v886 = vld [vmem:[%s882 + $0x8] sm:$0xff]
              %887 = vst [vmem:[%s883 + $0x8] sm:$0xff] %v886
              %v888 = vld [vmem:[%s882 + $0x10] sm:$0xff]
              %889 = vst [vmem:[%s883 + $0x10] sm:$0xff] %v888
              %v890 = vld [vmem:[%s882 + $0x18] sm:$0xff]
              %891 = vst [vmem:[%s883 + $0x18] sm:$0xff] %v890
              %v892 = vld [vmem:[%s882 + $0x20] sm:$0xff]
              %893 = vst [vmem:[%s883 + $0x20] sm:$0xff] %v892
              %v894 = vld [vmem:[%s882 + $0x28] sm:$0xff]
              %895 = vst [vmem:[%s883 + $0x28] sm:$0xff] %v894
            $region157: #{backbone_forward.1} parent=151 // loop_footer
              %s881 = sadd.s32 1, %s877
            $region158: #{backbone_forward.1} parent=151 // loop_footer_branch
              %876 = sbr.rel target = $region154
            $region159: #{backbone_forward.1} parent=151 // loop_exit
              _
          $region152: #{backbone_forward.1} parent=147 // pred_fallthru
            _
          // Predicated region
          $region160: #{backbone_forward.1} parent=147 // pred_check
            _
          $region161: #{backbone_forward.1} parent=147 // pred_check_branch
            %897 = sbr.rel target = $region163
          $region162: #{backbone_forward.1} parent=147 // pred_region
            _
          $region163: #{backbone_forward.1} parent=147 // pred_fallthru
            _
          // Predicated region
          $region164: #{backbone_forward.1} parent=147 // pred_check
            _
          $region165: #{backbone_forward.1} parent=147 // pred_check_branch
            %900 = sbr.rel (0) target = $region167
          $region166: #{backbone_forward.1} parent=147 // pred_region
            %901 = vsyncadd [#allocation5], 768
          $region167: #{backbone_forward.1} parent=147 // pred_fallthru
            _
          %s902 = smul.u32 4, 2
          %s903 = smul.u32 %s902, 6
          %s904 = sshll.u32 %s903, 4
          %905 = dma.done [#allocation5], %s904
          %v906 = vld [vmem:[#allocation3] sm:$0xff]
          %v907 = vld [vmem:[#allocation3 + $0x8] sm:$0xff]
          %v908 = vld [vmem:[#allocation3 + $0x10] sm:$0xff]
          %v909 = vld [vmem:[#allocation3 + $0x18] sm:$0xff]
          %v910 = vld [vmem:[#allocation3 + $0x20] sm:$0xff]
          %v911 = vld [vmem:[#allocation3 + $0x28] sm:$0xff]
          %v912 = vld [vmem:[#allocation6] sm:$0xff]
          %v913 = vld [vmem:[#allocation6 + $0x8] sm:$0xf]
          %v914 = vld [vmem:[#allocation6 + $0xc] sm:$0xff]
          %v915 = vld [vmem:[#allocation6 + $0x14] sm:$0xf]
          %v916 = vld [vmem:[#allocation6 + $0x18] sm:$0xff]
          %v917 = vld [vmem:[#allocation6 + $0x20] sm:$0xf]
          %v918 = vld [vmem:[#allocation6 + $0x24] sm:$0xff]
          %v919 = vld [vmem:[#allocation6 + $0x2c] sm:$0xf]
          %v920 = vld [vmem:[#allocation6 + $0x30] sm:$0xff]
          %v921 = vld [vmem:[#allocation6 + $0x38] sm:$0xf]
          %v922 = vld [vmem:[#allocation6 + $0x3c] sm:$0xff]
          %v923 = vld [vmem:[#allocation6 + $0x44] sm:$0xf]
          %v924 = vld [vmem:[#allocation6 + $0x48] sm:$0xff]
          %v925 = vld [vmem:[#allocation6 + $0x50] sm:$0xf]
          %v926 = vld [vmem:[#allocation6 + $0x54] sm:$0xff]
          %v927 = vld [vmem:[#allocation6 + $0x5c] sm:$0xf]
          %v928 = vld [vmem:[#allocation6 + $0x60] sm:$0xff]
          %v929 = vld [vmem:[#allocation6 + $0x68] sm:$0xf]
          %v930 = vld [vmem:[#allocation6 + $0x6c] sm:$0xff]
          %v931 = vld [vmem:[#allocation6 + $0x74] sm:$0xf]
          %v932 = vld [vmem:[#allocation6 + $0x78] sm:$0xff]
          %v933 = vld [vmem:[#allocation6 + $0x80] sm:$0xf]
          %v934 = vld [vmem:[#allocation6 + $0x84] sm:$0xff]
          %v935 = vld [vmem:[#allocation6 + $0x8c] sm:$0xf]
          %v936 = vld [vmem:[#allocation6 + $0x90] sm:$0xff]
          %v937 = vld [vmem:[#allocation6 + $0x98] sm:$0xf]
          %v938 = vld [vmem:[#allocation6 + $0x9c] sm:$0xff]
          %v939 = vld [vmem:[#allocation6 + $0xa4] sm:$0xf]
          %v940 = vld [vmem:[#allocation6 + $0xa8] sm:$0xff]
          %v941 = vld [vmem:[#allocation6 + $0xb0] sm:$0xf]
          %v942 = vld [vmem:[#allocation6 + $0xb4] sm:$0xff]
          %v943 = vld [vmem:[#allocation6 + $0xbc] sm:$0xf]
          %v944 = vld [vmem:[#allocation6 + $0xc0] sm:$0xff]
          %v945 = vld [vmem:[#allocation6 + $0xc8] sm:$0xf]
          %v946 = vld [vmem:[#allocation6 + $0xcc] sm:$0xff]
          %v947 = vld [vmem:[#allocation6 + $0xd4] sm:$0xf]
          %v948 = vld [vmem:[#allocation6 + $0xd8] sm:$0xff]
          %v949 = vld [vmem:[#allocation6 + $0xe0] sm:$0xf]
          %v950 = vld [vmem:[#allocation6 + $0xe4] sm:$0xff]
          %v951 = vld [vmem:[#allocation6 + $0xec] sm:$0xf]
          %v952 = vld [vmem:[#allocation6 + $0xf0] sm:$0xff]
          %v953 = vld [vmem:[#allocation6 + $0xf8] sm:$0xf]
          %v954 = vld [vmem:[#allocation6 + $0xfc] sm:$0xff]
          %v955 = vld [vmem:[#allocation6 + $0x104] sm:$0xf]
          %v956 = vld [vmem:[#allocation6 + $0x108] sm:$0xff]
          %v957 = vld [vmem:[#allocation6 + $0x110] sm:$0xf]
          %v958 = vld [vmem:[#allocation6 + $0x114] sm:$0xff]
          %v959 = vld [vmem:[#allocation6 + $0x11c] sm:$0xf]
          %v960 = vld [vmem:[#allocation6 + $0x120] sm:$0xff]
          %v961 = vld [vmem:[#allocation6 + $0x128] sm:$0xf]
          %v962 = vld [vmem:[#allocation6 + $0x12c] sm:$0xff]
          %v963 = vld [vmem:[#allocation6 + $0x134] sm:$0xf]
          %v964 = vld [vmem:[#allocation6 + $0x138] sm:$0xff]
          %v965 = vld [vmem:[#allocation6 + $0x140] sm:$0xf]
          %v966 = vld [vmem:[#allocation6 + $0x144] sm:$0xff]
          %v967 = vld [vmem:[#allocation6 + $0x14c] sm:$0xf]
          %v968 = vld [vmem:[#allocation6 + $0x150] sm:$0xff]
          %v969 = vld [vmem:[#allocation6 + $0x158] sm:$0xf]
          %v970 = vld [vmem:[#allocation6 + $0x15c] sm:$0xff]
          %v971 = vld [vmem:[#allocation6 + $0x164] sm:$0xf]
          %v972 = vld [vmem:[#allocation6 + $0x168] sm:$0xff]
          %v973 = vld [vmem:[#allocation6 + $0x170] sm:$0xf]
          %v974 = vld [vmem:[#allocation6 + $0x174] sm:$0xff]
          %v975 = vld [vmem:[#allocation6 + $0x17c] sm:$0xf]
          %v976 = vld [vmem:[#allocation6 + $0x180] sm:$0xff]
          %v977 = vld [vmem:[#allocation6 + $0x188] sm:$0xf]
          %v978 = vld [vmem:[#allocation6 + $0x18c] sm:$0xff]
          %v979 = vld [vmem:[#allocation6 + $0x194] sm:$0xf]
          %v980 = vld [vmem:[#allocation6 + $0x198] sm:$0xff]
          %v981 = vld [vmem:[#allocation6 + $0x1a0] sm:$0xf]
          %v982 = vld [vmem:[#allocation6 + $0x1a4] sm:$0xff]
          %v983 = vld [vmem:[#allocation6 + $0x1ac] sm:$0xf]
          %v984 = vld [vmem:[#allocation6 + $0x1b0] sm:$0xff]
          %v985 = vld [vmem:[#allocation6 + $0x1b8] sm:$0xf]
          %v986 = vld [vmem:[#allocation6 + $0x1bc] sm:$0xff]
          %v987 = vld [vmem:[#allocation6 + $0x1c4] sm:$0xf]
          %v988 = vld [vmem:[#allocation6 + $0x1c8] sm:$0xff]
          %v989 = vld [vmem:[#allocation6 + $0x1d0] sm:$0xf]
          %v990 = vld [vmem:[#allocation6 + $0x1d4] sm:$0xff]
          %v991 = vld [vmem:[#allocation6 + $0x1dc] sm:$0xf]
          %v992 = vld [vmem:[#allocation6 + $0x1e0] sm:$0xff]
          %v993 = vld [vmem:[#allocation6 + $0x1e8] sm:$0xf]
          %v994 = vld [vmem:[#allocation6 + $0x1ec] sm:$0xff]
          %v995 = vld [vmem:[#allocation6 + $0x1f4] sm:$0xf]
          %v996 = vld [vmem:[#allocation6 + $0x1f8] sm:$0xff]
          %v997 = vld [vmem:[#allocation6 + $0x200] sm:$0xf]
          %v998 = vld [vmem:[#allocation6 + $0x204] sm:$0xff]
          %v999 = vld [vmem:[#allocation6 + $0x20c] sm:$0xf]
          %v1000 = vld [vmem:[#allocation6 + $0x210] sm:$0xff]
          %v1001 = vld [vmem:[#allocation6 + $0x218] sm:$0xf]
          %v1002 = vld [vmem:[#allocation6 + $0x21c] sm:$0xff]
          %v1003 = vld [vmem:[#allocation6 + $0x224] sm:$0xf]
          %v1004 = vld [vmem:[#allocation6 + $0x228] sm:$0xff]
          %v1005 = vld [vmem:[#allocation6 + $0x230] sm:$0xf]
          %v1006 = vld [vmem:[#allocation6 + $0x234] sm:$0xff]
          %v1007 = vld [vmem:[#allocation6 + $0x23c] sm:$0xf]
          %v1008 = vld [vmem:[#allocation6 + $0x240] sm:$0xff]
          %v1009 = vld [vmem:[#allocation6 + $0x248] sm:$0xf]
          %v1010 = vld [vmem:[#allocation6 + $0x24c] sm:$0xff]
          %v1011 = vld [vmem:[#allocation6 + $0x254] sm:$0xf]
          %v1012 = vld [vmem:[#allocation6 + $0x258] sm:$0xff]
          %v1013 = vld [vmem:[#allocation6 + $0x260] sm:$0xf]
          %v1014 = vld [vmem:[#allocation6 + $0x264] sm:$0xff]
          %v1015 = vld [vmem:[#allocation6 + $0x26c] sm:$0xf]
          %v1016 = vld [vmem:[#allocation6 + $0x270] sm:$0xff]
          %v1017 = vld [vmem:[#allocation6 + $0x278] sm:$0xf]
          %v1018 = vld [vmem:[#allocation6 + $0x27c] sm:$0xff]
          %v1019 = vld [vmem:[#allocation6 + $0x284] sm:$0xf]
          %v1020 = vld [vmem:[#allocation6 + $0x288] sm:$0xff]
          %v1021 = vld [vmem:[#allocation6 + $0x290] sm:$0xf]
          %v1022 = vld [vmem:[#allocation6 + $0x294] sm:$0xff]
          %v1023 = vld [vmem:[#allocation6 + $0x29c] sm:$0xf]
          %v1024 = vld [vmem:[#allocation6 + $0x2a0] sm:$0xff]
          %v1025 = vld [vmem:[#allocation6 + $0x2a8] sm:$0xf]
          %v1026 = vld [vmem:[#allocation6 + $0x2ac] sm:$0xff]
          %v1027 = vld [vmem:[#allocation6 + $0x2b4] sm:$0xf]
          %v1028 = vld [vmem:[#allocation6 + $0x2b8] sm:$0xff]
          %v1029 = vld [vmem:[#allocation6 + $0x2c0] sm:$0xf]
          %v1030 = vld [vmem:[#allocation6 + $0x2c4] sm:$0xff]
          %v1031 = vld [vmem:[#allocation6 + $0x2cc] sm:$0xf]
          %v1032 = vld [vmem:[#allocation6 + $0x2d0] sm:$0xff]
          %v1033 = vld [vmem:[#allocation6 + $0x2d8] sm:$0xf]
          %v1034 = vld [vmem:[#allocation6 + $0x2dc] sm:$0xff]
          %v1035 = vld [vmem:[#allocation6 + $0x2e4] sm:$0xf]
          %v1036 = vld [vmem:[#allocation6 + $0x2e8] sm:$0xff]
          %v1037 = vld [vmem:[#allocation6 + $0x2f0] sm:$0xf]
          %v1038 = vld [vmem:[#allocation6 + $0x2f4] sm:$0xff]
          %v1039 = vld [vmem:[#allocation6 + $0x2fc] sm:$0xf]
          %v1040 = vld [vmem:[#allocation6 + $0x300] sm:$0xff]
          %v1041 = vld [vmem:[#allocation6 + $0x308] sm:$0xf]
          %v1042 = vld [vmem:[#allocation6 + $0x30c] sm:$0xff]
          %v1043 = vld [vmem:[#allocation6 + $0x314] sm:$0xf]
          %v1044 = vld [vmem:[#allocation6 + $0x318] sm:$0xff]
          %v1045 = vld [vmem:[#allocation6 + $0x320] sm:$0xf]
          %v1046 = vld [vmem:[#allocation6 + $0x324] sm:$0xff]
          %v1047 = vld [vmem:[#allocation6 + $0x32c] sm:$0xf]
          %v1048 = vld [vmem:[#allocation6 + $0x330] sm:$0xff]
          %v1049 = vld [vmem:[#allocation6 + $0x338] sm:$0xf]
          %v1050 = vld [vmem:[#allocation6 + $0x33c] sm:$0xff]
          %v1051 = vld [vmem:[#allocation6 + $0x344] sm:$0xf]
          %v1052 = vld [vmem:[#allocation6 + $0x348] sm:$0xff]
          %v1053 = vld [vmem:[#allocation6 + $0x350] sm:$0xf]
          %v1054 = vld [vmem:[#allocation6 + $0x354] sm:$0xff]
          %v1055 = vld [vmem:[#allocation6 + $0x35c] sm:$0xf]
          %v1056 = vld [vmem:[#allocation6 + $0x360] sm:$0xff]
          %v1057 = vld [vmem:[#allocation6 + $0x368] sm:$0xf]
          %v1058 = vld [vmem:[#allocation6 + $0x36c] sm:$0xff]
          %v1059 = vld [vmem:[#allocation6 + $0x374] sm:$0xf]
          %v1060 = vld [vmem:[#allocation6 + $0x378] sm:$0xff]
          %v1061 = vld [vmem:[#allocation6 + $0x380] sm:$0xf]
          %v1062 = vld [vmem:[#allocation6 + $0x384] sm:$0xff]
          %v1063 = vld [vmem:[#allocation6 + $0x38c] sm:$0xf]
          %v1064 = vld [vmem:[#allocation6 + $0x390] sm:$0xff]
          %v1065 = vld [vmem:[#allocation6 + $0x398] sm:$0xf]
          %v1066 = vld [vmem:[#allocation6 + $0x39c] sm:$0xff]
          %v1067 = vld [vmem:[#allocation6 + $0x3a4] sm:$0xf]
          %v1068 = vld [vmem:[#allocation6 + $0x3a8] sm:$0xff]
          %v1069 = vld [vmem:[#allocation6 + $0x3b0] sm:$0xf]
          %v1070 = vld [vmem:[#allocation6 + $0x3b4] sm:$0xff]
          %v1071 = vld [vmem:[#allocation6 + $0x3bc] sm:$0xf]
          %v1072 = vld [vmem:[#allocation6 + $0x3c0] sm:$0xff]
          %v1073 = vld [vmem:[#allocation6 + $0x3c8] sm:$0xf]
          %v1074 = vld [vmem:[#allocation6 + $0x3cc] sm:$0xff]
          %v1075 = vld [vmem:[#allocation6 + $0x3d4] sm:$0xf]
          %v1076 = vld [vmem:[#allocation6 + $0x3d8] sm:$0xff]
          %v1077 = vld [vmem:[#allocation6 + $0x3e0] sm:$0xf]
          %v1078 = vld [vmem:[#allocation6 + $0x3e4] sm:$0xff]
          %v1079 = vld [vmem:[#allocation6 + $0x3ec] sm:$0xf]
          %v1080 = vld [vmem:[#allocation6 + $0x3f0] sm:$0xff]
          %v1081 = vld [vmem:[#allocation6 + $0x3f8] sm:$0xf]
          %v1082 = vld [vmem:[#allocation6 + $0x3fc] sm:$0xff]
          %v1083 = vld [vmem:[#allocation6 + $0x404] sm:$0xf]
          %v1084 = vld [vmem:[#allocation6 + $0x408] sm:$0xff]
          %v1085 = vld [vmem:[#allocation6 + $0x410] sm:$0xf]
          %v1086 = vld [vmem:[#allocation6 + $0x414] sm:$0xff]
          %v1087 = vld [vmem:[#allocation6 + $0x41c] sm:$0xf]
          %v1088 = vld [vmem:[#allocation6 + $0x420] sm:$0xff]
          %v1089 = vld [vmem:[#allocation6 + $0x428] sm:$0xf]
          %v1090 = vld [vmem:[#allocation6 + $0x42c] sm:$0xff]
          %v1091 = vld [vmem:[#allocation6 + $0x434] sm:$0xf]
          %v1092 = vld [vmem:[#allocation6 + $0x438] sm:$0xff]
          %v1093 = vld [vmem:[#allocation6 + $0x440] sm:$0xf]
          %v1094 = vld [vmem:[#allocation6 + $0x444] sm:$0xff]
          %v1095 = vld [vmem:[#allocation6 + $0x44c] sm:$0xf]
          %v1096 = vld [vmem:[#allocation6 + $0x450] sm:$0xff]
          %v1097 = vld [vmem:[#allocation6 + $0x458] sm:$0xf]
          %v1098 = vld [vmem:[#allocation6 + $0x45c] sm:$0xff]
          %v1099 = vld [vmem:[#allocation6 + $0x464] sm:$0xf]
          %v1100 = vld [vmem:[#allocation6 + $0x468] sm:$0xff]
          %v1101 = vld [vmem:[#allocation6 + $0x470] sm:$0xf]
          %v1102 = vld [vmem:[#allocation6 + $0x474] sm:$0xff]
          %v1103 = vld [vmem:[#allocation6 + $0x47c] sm:$0xf]
          %v1110 = vunpack.c.l.b16 %v906
          %v1111 = vunpack.c.h.b16 %v906
          %v1112 = vunpack.c.l.b16 %v907
          %v1113 = vunpack.c.h.b16 %v907
          %v1114 = vunpack.c.l.b16 %v908
          %v1115 = vunpack.c.h.b16 %v908
          %v1116 = vunpack.c.l.b16 %v909
          %v1117 = vunpack.c.h.b16 %v909
          %v1118 = vunpack.c.l.b16 %v910
          %v1119 = vunpack.c.h.b16 %v910
          %v1120 = vunpack.c.l.b16 %v911
          %v1121 = vunpack.c.h.b16 %v911
          %v1122 = vpack.c.b16 %v1116, %v1110
          %v1123 = vpack.c.b16 %v1117, %v1111
          %v1124 = vpack.c.b16 %v1118, %v1112
          %v1125 = vpack.c.b16 %v1119, %v1113
          %v1126 = vpack.c.b16 %v1120, %v1114
          %v1127 = vpack.c.b16 %v1121, %v1115
          %v1326 = vunpack.c.l.b16 %v912
          %v1327 = vunpack.c.h.b16 %v912
          %v1328 = vunpack.c.l.b16 %v913
          %v1329 = vunpack.c.l.b16 %v914
          %v1330 = vunpack.c.h.b16 %v914
          %v1331 = vunpack.c.l.b16 %v915
          %v1332 = vunpack.c.l.b16 %v916
          %v1333 = vunpack.c.h.b16 %v916
          %v1334 = vunpack.c.l.b16 %v917
          %v1335 = vunpack.c.l.b16 %v918
          %v1336 = vunpack.c.h.b16 %v918
          %v1337 = vunpack.c.l.b16 %v919
          %v1338 = vunpack.c.l.b16 %v920
          %v1339 = vunpack.c.h.b16 %v920
          %v1340 = vunpack.c.l.b16 %v921
          %v1341 = vunpack.c.l.b16 %v922
          %v1342 = vunpack.c.h.b16 %v922
          %v1343 = vunpack.c.l.b16 %v923
          %v1344 = vunpack.c.l.b16 %v924
          %v1345 = vunpack.c.h.b16 %v924
          %v1346 = vunpack.c.l.b16 %v925
          %v1347 = vunpack.c.l.b16 %v926
          %v1348 = vunpack.c.h.b16 %v926
          %v1349 = vunpack.c.l.b16 %v927
          %v1350 = vunpack.c.l.b16 %v928
          %v1351 = vunpack.c.h.b16 %v928
          %v1352 = vunpack.c.l.b16 %v929
          %v1353 = vunpack.c.l.b16 %v930
          %v1354 = vunpack.c.h.b16 %v930
          %v1355 = vunpack.c.l.b16 %v931
          %v1356 = vunpack.c.l.b16 %v932
          %v1357 = vunpack.c.h.b16 %v932
          %v1358 = vunpack.c.l.b16 %v933
          %v1359 = vunpack.c.l.b16 %v934
          %v1360 = vunpack.c.h.b16 %v934
          %v1361 = vunpack.c.l.b16 %v935
          %v1362 = vunpack.c.l.b16 %v936
          %v1363 = vunpack.c.h.b16 %v936
          %v1364 = vunpack.c.l.b16 %v937
          %v1365 = vunpack.c.l.b16 %v938
          %v1366 = vunpack.c.h.b16 %v938
          %v1367 = vunpack.c.l.b16 %v939
          %v1368 = vunpack.c.l.b16 %v940
          %v1369 = vunpack.c.h.b16 %v940
          %v1370 = vunpack.c.l.b16 %v941
          %v1371 = vunpack.c.l.b16 %v942
          %v1372 = vunpack.c.h.b16 %v942
          %v1373 = vunpack.c.l.b16 %v943
          %v1374 = vunpack.c.l.b16 %v944
          %v1375 = vunpack.c.h.b16 %v944
          %v1376 = vunpack.c.l.b16 %v945
          %v1377 = vunpack.c.l.b16 %v946
          %v1378 = vunpack.c.h.b16 %v946
          %v1379 = vunpack.c.l.b16 %v947
          %v1380 = vunpack.c.l.b16 %v948
          %v1381 = vunpack.c.h.b16 %v948
          %v1382 = vunpack.c.l.b16 %v949
          %v1383 = vunpack.c.l.b16 %v950
          %v1384 = vunpack.c.h.b16 %v950
          %v1385 = vunpack.c.l.b16 %v951
          %v1386 = vunpack.c.l.b16 %v952
          %v1387 = vunpack.c.h.b16 %v952
          %v1388 = vunpack.c.l.b16 %v953
          %v1389 = vunpack.c.l.b16 %v954
          %v1390 = vunpack.c.h.b16 %v954
          %v1391 = vunpack.c.l.b16 %v955
          %v1392 = vunpack.c.l.b16 %v956
          %v1393 = vunpack.c.h.b16 %v956
          %v1394 = vunpack.c.l.b16 %v957
          %v1395 = vunpack.c.l.b16 %v958
          %v1396 = vunpack.c.h.b16 %v958
          %v1397 = vunpack.c.l.b16 %v959
          %v1398 = vunpack.c.l.b16 %v960
          %v1399 = vunpack.c.h.b16 %v960
          %v1400 = vunpack.c.l.b16 %v961
          %v1401 = vunpack.c.l.b16 %v962
          %v1402 = vunpack.c.h.b16 %v962
          %v1403 = vunpack.c.l.b16 %v963
          %v1404 = vunpack.c.l.b16 %v964
          %v1405 = vunpack.c.h.b16 %v964
          %v1406 = vunpack.c.l.b16 %v965
          %v1407 = vunpack.c.l.b16 %v966
          %v1408 = vunpack.c.h.b16 %v966
          %v1409 = vunpack.c.l.b16 %v967
          %v1410 = vunpack.c.l.b16 %v968
          %v1411 = vunpack.c.h.b16 %v968
          %v1412 = vunpack.c.l.b16 %v969
          %v1413 = vunpack.c.l.b16 %v970
          %v1414 = vunpack.c.h.b16 %v970
          %v1415 = vunpack.c.l.b16 %v971
          %v1416 = vunpack.c.l.b16 %v972
          %v1417 = vunpack.c.h.b16 %v972
          %v1418 = vunpack.c.l.b16 %v973
          %v1419 = vunpack.c.l.b16 %v974
          %v1420 = vunpack.c.h.b16 %v974
          %v1421 = vunpack.c.l.b16 %v975
          %v1422 = vunpack.c.l.b16 %v976
          %v1423 = vunpack.c.h.b16 %v976
          %v1424 = vunpack.c.l.b16 %v977
          %v1425 = vunpack.c.l.b16 %v978
          %v1426 = vunpack.c.h.b16 %v978
          %v1427 = vunpack.c.l.b16 %v979
          %v1428 = vunpack.c.l.b16 %v980
          %v1429 = vunpack.c.h.b16 %v980
          %v1430 = vunpack.c.l.b16 %v981
          %v1431 = vunpack.c.l.b16 %v982
          %v1432 = vunpack.c.h.b16 %v982
          %v1433 = vunpack.c.l.b16 %v983
          %v1434 = vunpack.c.l.b16 %v984
          %v1435 = vunpack.c.h.b16 %v984
          %v1436 = vunpack.c.l.b16 %v985
          %v1437 = vunpack.c.l.b16 %v986
          %v1438 = vunpack.c.h.b16 %v986
          %v1439 = vunpack.c.l.b16 %v987
          %v1440 = vunpack.c.l.b16 %v988
          %v1441 = vunpack.c.h.b16 %v988
          %v1442 = vunpack.c.l.b16 %v989
          %v1443 = vunpack.c.l.b16 %v990
          %v1444 = vunpack.c.h.b16 %v990
          %v1445 = vunpack.c.l.b16 %v991
          %v1446 = vunpack.c.l.b16 %v992
          %v1447 = vunpack.c.h.b16 %v992
          %v1448 = vunpack.c.l.b16 %v993
          %v1449 = vunpack.c.l.b16 %v994
          %v1450 = vunpack.c.h.b16 %v994
          %v1451 = vunpack.c.l.b16 %v995
          %v1452 = vunpack.c.l.b16 %v996
          %v1453 = vunpack.c.h.b16 %v996
          %v1454 = vunpack.c.l.b16 %v997
          %v1455 = vunpack.c.l.b16 %v998
          %v1456 = vunpack.c.h.b16 %v998
          %v1457 = vunpack.c.l.b16 %v999
          %v1458 = vunpack.c.l.b16 %v1000
          %v1459 = vunpack.c.h.b16 %v1000
          %v1460 = vunpack.c.l.b16 %v1001
          %v1461 = vunpack.c.l.b16 %v1002
          %v1462 = vunpack.c.h.b16 %v1002
          %v1463 = vunpack.c.l.b16 %v1003
          %v1464 = vunpack.c.l.b16 %v1004
          %v1465 = vunpack.c.h.b16 %v1004
          %v1466 = vunpack.c.l.b16 %v1005
          %v1467 = vunpack.c.l.b16 %v1006
          %v1468 = vunpack.c.h.b16 %v1006
          %v1469 = vunpack.c.l.b16 %v1007
          %v1470 = vunpack.c.l.b16 %v1008
          %v1471 = vunpack.c.h.b16 %v1008
          %v1472 = vunpack.c.l.b16 %v1009
          %v1473 = vunpack.c.l.b16 %v1010
          %v1474 = vunpack.c.h.b16 %v1010
          %v1475 = vunpack.c.l.b16 %v1011
          %v1476 = vunpack.c.l.b16 %v1012
          %v1477 = vunpack.c.h.b16 %v1012
          %v1478 = vunpack.c.l.b16 %v1013
          %v1479 = vunpack.c.l.b16 %v1014
          %v1480 = vunpack.c.h.b16 %v1014
          %v1481 = vunpack.c.l.b16 %v1015
          %v1482 = vunpack.c.l.b16 %v1016
          %v1483 = vunpack.c.h.b16 %v1016
          %v1484 = vunpack.c.l.b16 %v1017
          %v1485 = vunpack.c.l.b16 %v1018
          %v1486 = vunpack.c.h.b16 %v1018
          %v1487 = vunpack.c.l.b16 %v1019
          %v1488 = vunpack.c.l.b16 %v1020
          %v1489 = vunpack.c.h.b16 %v1020
          %v1490 = vunpack.c.l.b16 %v1021
          %v1491 = vunpack.c.l.b16 %v1022
          %v1492 = vunpack.c.h.b16 %v1022
          %v1493 = vunpack.c.l.b16 %v1023
          %v1494 = vunpack.c.l.b16 %v1024
          %v1495 = vunpack.c.h.b16 %v1024
          %v1496 = vunpack.c.l.b16 %v1025
          %v1497 = vunpack.c.l.b16 %v1026
          %v1498 = vunpack.c.h.b16 %v1026
          %v1499 = vunpack.c.l.b16 %v1027
          %v1500 = vunpack.c.l.b16 %v1028
          %v1501 = vunpack.c.h.b16 %v1028
          %v1502 = vunpack.c.l.b16 %v1029
          %v1503 = vunpack.c.l.b16 %v1030
          %v1504 = vunpack.c.h.b16 %v1030
          %v1505 = vunpack.c.l.b16 %v1031
          %v1506 = vunpack.c.l.b16 %v1032
          %v1507 = vunpack.c.h.b16 %v1032
          %v1508 = vunpack.c.l.b16 %v1033
          %v1509 = vunpack.c.l.b16 %v1034
          %v1510 = vunpack.c.h.b16 %v1034
          %v1511 = vunpack.c.l.b16 %v1035
          %v1512 = vunpack.c.l.b16 %v1036
          %v1513 = vunpack.c.h.b16 %v1036
          %v1514 = vunpack.c.l.b16 %v1037
          %v1515 = vunpack.c.l.b16 %v1038
          %v1516 = vunpack.c.h.b16 %v1038
          %v1517 = vunpack.c.l.b16 %v1039
          %v1518 = vunpack.c.l.b16 %v1040
          %v1519 = vunpack.c.h.b16 %v1040
          %v1520 = vunpack.c.l.b16 %v1041
          %v1521 = vunpack.c.l.b16 %v1042
          %v1522 = vunpack.c.h.b16 %v1042
          %v1523 = vunpack.c.l.b16 %v1043
          %v1524 = vunpack.c.l.b16 %v1044
          %v1525 = vunpack.c.h.b16 %v1044
          %v1526 = vunpack.c.l.b16 %v1045
          %v1527 = vunpack.c.l.b16 %v1046
          %v1528 = vunpack.c.h.b16 %v1046
          %v1529 = vunpack.c.l.b16 %v1047
          %v1530 = vunpack.c.l.b16 %v1048
          %v1531 = vunpack.c.h.b16 %v1048
          %v1532 = vunpack.c.l.b16 %v1049
          %v1533 = vunpack.c.l.b16 %v1050
          %v1534 = vunpack.c.h.b16 %v1050
          %v1535 = vunpack.c.l.b16 %v1051
          %v1536 = vunpack.c.l.b16 %v1052
          %v1537 = vunpack.c.h.b16 %v1052
          %v1538 = vunpack.c.l.b16 %v1053
          %v1539 = vunpack.c.l.b16 %v1054
          %v1540 = vunpack.c.h.b16 %v1054
          %v1541 = vunpack.c.l.b16 %v1055
          %v1542 = vunpack.c.l.b16 %v1056
          %v1543 = vunpack.c.h.b16 %v1056
          %v1544 = vunpack.c.l.b16 %v1057
          %v1545 = vunpack.c.l.b16 %v1058
          %v1546 = vunpack.c.h.b16 %v1058
          %v1547 = vunpack.c.l.b16 %v1059
          %v1548 = vunpack.c.l.b16 %v1060
          %v1549 = vunpack.c.h.b16 %v1060
          %v1550 = vunpack.c.l.b16 %v1061
          %v1551 = vunpack.c.l.b16 %v1062
          %v1552 = vunpack.c.h.b16 %v1062
          %v1553 = vunpack.c.l.b16 %v1063
          %v1554 = vunpack.c.l.b16 %v1064
          %v1555 = vunpack.c.h.b16 %v1064
          %v1556 = vunpack.c.l.b16 %v1065
          %v1557 = vunpack.c.l.b16 %v1066
          %v1558 = vunpack.c.h.b16 %v1066
          %v1559 = vunpack.c.l.b16 %v1067
          %v1560 = vunpack.c.l.b16 %v1068
          %v1561 = vunpack.c.h.b16 %v1068
          %v1562 = vunpack.c.l.b16 %v1069
          %v1563 = vunpack.c.l.b16 %v1070
          %v1564 = vunpack.c.h.b16 %v1070
          %v1565 = vunpack.c.l.b16 %v1071
          %v1566 = vunpack.c.l.b16 %v1072
          %v1567 = vunpack.c.h.b16 %v1072
          %v1568 = vunpack.c.l.b16 %v1073
          %v1569 = vunpack.c.l.b16 %v1074
          %v1570 = vunpack.c.h.b16 %v1074
          %v1571 = vunpack.c.l.b16 %v1075
          %v1572 = vunpack.c.l.b16 %v1076
          %v1573 = vunpack.c.h.b16 %v1076
          %v1574 = vunpack.c.l.b16 %v1077
          %v1575 = vunpack.c.l.b16 %v1078
          %v1576 = vunpack.c.h.b16 %v1078
          %v1577 = vunpack.c.l.b16 %v1079
          %v1578 = vunpack.c.l.b16 %v1080
          %v1579 = vunpack.c.h.b16 %v1080
          %v1580 = vunpack.c.l.b16 %v1081
          %v1581 = vunpack.c.l.b16 %v1082
          %v1582 = vunpack.c.h.b16 %v1082
          %v1583 = vunpack.c.l.b16 %v1083
          %v1584 = vunpack.c.l.b16 %v1084
          %v1585 = vunpack.c.h.b16 %v1084
          %v1586 = vunpack.c.l.b16 %v1085
          %v1587 = vunpack.c.l.b16 %v1086
          %v1588 = vunpack.c.h.b16 %v1086
          %v1589 = vunpack.c.l.b16 %v1087
          %v1590 = vunpack.c.l.b16 %v1088
          %v1591 = vunpack.c.h.b16 %v1088
          %v1592 = vunpack.c.l.b16 %v1089
          %v1593 = vunpack.c.l.b16 %v1090
          %v1594 = vunpack.c.h.b16 %v1090
          %v1595 = vunpack.c.l.b16 %v1091
          %v1596 = vunpack.c.l.b16 %v1092
          %v1597 = vunpack.c.h.b16 %v1092
          %v1598 = vunpack.c.l.b16 %v1093
          %v1599 = vunpack.c.l.b16 %v1094
          %v1600 = vunpack.c.h.b16 %v1094
          %v1601 = vunpack.c.l.b16 %v1095
          %v1602 = vunpack.c.l.b16 %v1096
          %v1603 = vunpack.c.h.b16 %v1096
          %v1604 = vunpack.c.l.b16 %v1097
          %v1605 = vunpack.c.l.b16 %v1098
          %v1606 = vunpack.c.h.b16 %v1098
          %v1607 = vunpack.c.l.b16 %v1099
          %v1608 = vunpack.c.l.b16 %v1100
          %v1609 = vunpack.c.h.b16 %v1100
          %v1610 = vunpack.c.l.b16 %v1101
          %v1611 = vunpack.c.l.b16 %v1102
          %v1612 = vunpack.c.h.b16 %v1102
          %v1613 = vunpack.c.l.b16 %v1103
          %v1614 = vpack.c.b16 %v1329, %v1326
          %v1615 = vpack.c.b16 %v1330, %v1327
          %v1616 = vpack.c.b16 %v1331, %v1328
          %v1617 = vpack.c.b16 %v1335, %v1332
          %v1618 = vpack.c.b16 %v1336, %v1333
          %v1619 = vpack.c.b16 %v1337, %v1334
          %v1620 = vpack.c.b16 %v1341, %v1338
          %v1621 = vpack.c.b16 %v1342, %v1339
          %v1622 = vpack.c.b16 %v1343, %v1340
          %v1623 = vpack.c.b16 %v1347, %v1344
          %v1624 = vpack.c.b16 %v1348, %v1345
          %v1625 = vpack.c.b16 %v1349, %v1346
          %v1626 = vpack.c.b16 %v1353, %v1350
          %v1627 = vpack.c.b16 %v1354, %v1351
          %v1628 = vpack.c.b16 %v1355, %v1352
          %v1629 = vpack.c.b16 %v1359, %v1356
          %v1630 = vpack.c.b16 %v1360, %v1357
          %v1631 = vpack.c.b16 %v1361, %v1358
          %v1632 = vpack.c.b16 %v1365, %v1362
          %v1633 = vpack.c.b16 %v1366, %v1363
          %v1634 = vpack.c.b16 %v1367, %v1364
          %v1635 = vpack.c.b16 %v1371, %v1368
          %v1636 = vpack.c.b16 %v1372, %v1369
          %v1637 = vpack.c.b16 %v1373, %v1370
          %v1638 = vpack.c.b16 %v1377, %v1374
          %v1639 = vpack.c.b16 %v1378, %v1375
          %v1640 = vpack.c.b16 %v1379, %v1376
          %v1641 = vpack.c.b16 %v1383, %v1380
          %v1642 = vpack.c.b16 %v1384, %v1381
          %v1643 = vpack.c.b16 %v1385, %v1382
          %v1644 = vpack.c.b16 %v1389, %v1386
          %v1645 = vpack.c.b16 %v1390, %v1387
          %v1646 = vpack.c.b16 %v1391, %v1388
          %v1647 = vpack.c.b16 %v1395, %v1392
          %v1648 = vpack.c.b16 %v1396, %v1393
          %v1649 = vpack.c.b16 %v1397, %v1394
          %v1650 = vpack.c.b16 %v1401, %v1398
          %v1651 = vpack.c.b16 %v1402, %v1399
          %v1652 = vpack.c.b16 %v1403, %v1400
          %v1653 = vpack.c.b16 %v1407, %v1404
          %v1654 = vpack.c.b16 %v1408, %v1405
          %v1655 = vpack.c.b16 %v1409, %v1406
          %v1656 = vpack.c.b16 %v1413, %v1410
          %v1657 = vpack.c.b16 %v1414, %v1411
          %v1658 = vpack.c.b16 %v1415, %v1412
          %v1659 = vpack.c.b16 %v1419, %v1416
          %v1660 = vpack.c.b16 %v1420, %v1417
          %v1661 = vpack.c.b16 %v1421, %v1418
          %v1662 = vpack.c.b16 %v1425, %v1422
          %v1663 = vpack.c.b16 %v1426, %v1423
          %v1664 = vpack.c.b16 %v1427, %v1424
          %v1665 = vpack.c.b16 %v1431, %v1428
          %v1666 = vpack.c.b16 %v1432, %v1429
          %v1667 = vpack.c.b16 %v1433, %v1430
          %v1668 = vpack.c.b16 %v1437, %v1434
          %v1669 = vpack.c.b16 %v1438, %v1435
          %v1670 = vpack.c.b16 %v1439, %v1436
          %v1671 = vpack.c.b16 %v1443, %v1440
          %v1672 = vpack.c.b16 %v1444, %v1441
          %v1673 = vpack.c.b16 %v1445, %v1442
          %v1674 = vpack.c.b16 %v1449, %v1446
          %v1675 = vpack.c.b16 %v1450, %v1447
          %v1676 = vpack.c.b16 %v1451, %v1448
          %v1677 = vpack.c.b16 %v1455, %v1452
          %v1678 = vpack.c.b16 %v1456, %v1453
          %v1679 = vpack.c.b16 %v1457, %v1454
          %v1680 = vpack.c.b16 %v1461, %v1458
          %v1681 = vpack.c.b16 %v1462, %v1459
          %v1682 = vpack.c.b16 %v1463, %v1460
          %v1683 = vpack.c.b16 %v1467, %v1464
          %v1684 = vpack.c.b16 %v1468, %v1465
          %v1685 = vpack.c.b16 %v1469, %v1466
          %v1686 = vpack.c.b16 %v1473, %v1470
          %v1687 = vpack.c.b16 %v1474, %v1471
          %v1688 = vpack.c.b16 %v1475, %v1472
          %v1689 = vpack.c.b16 %v1479, %v1476
          %v1690 = vpack.c.b16 %v1480, %v1477
          %v1691 = vpack.c.b16 %v1481, %v1478
          %v1692 = vpack.c.b16 %v1485, %v1482
          %v1693 = vpack.c.b16 %v1486, %v1483
          %v1694 = vpack.c.b16 %v1487, %v1484
          %v1695 = vpack.c.b16 %v1491, %v1488
          %v1696 = vpack.c.b16 %v1492, %v1489
          %v1697 = vpack.c.b16 %v1493, %v1490
          %v1698 = vpack.c.b16 %v1497, %v1494
          %v1699 = vpack.c.b16 %v1498, %v1495
          %v1700 = vpack.c.b16 %v1499, %v1496
          %v1701 = vpack.c.b16 %v1503, %v1500
          %v1702 = vpack.c.b16 %v1504, %v1501
          %v1703 = vpack.c.b16 %v1505, %v1502
          %v1704 = vpack.c.b16 %v1509, %v1506
          %v1705 = vpack.c.b16 %v1510, %v1507
          %v1706 = vpack.c.b16 %v1511, %v1508
          %v1707 = vpack.c.b16 %v1515, %v1512
          %v1708 = vpack.c.b16 %v1516, %v1513
          %v1709 = vpack.c.b16 %v1517, %v1514
          %v1710 = vpack.c.b16 %v1521, %v1518
          %v1711 = vpack.c.b16 %v1522, %v1519
          %v1712 = vpack.c.b16 %v1523, %v1520
          %v1713 = vpack.c.b16 %v1527, %v1524
          %v1714 = vpack.c.b16 %v1528, %v1525
          %v1715 = vpack.c.b16 %v1529, %v1526
          %v1716 = vpack.c.b16 %v1533, %v1530
          %v1717 = vpack.c.b16 %v1534, %v1531
          %v1718 = vpack.c.b16 %v1535, %v1532
          %v1719 = vpack.c.b16 %v1539, %v1536
          %v1720 = vpack.c.b16 %v1540, %v1537
          %v1721 = vpack.c.b16 %v1541, %v1538
          %v1722 = vpack.c.b16 %v1545, %v1542
          %v1723 = vpack.c.b16 %v1546, %v1543
          %v1724 = vpack.c.b16 %v1547, %v1544
          %v1725 = vpack.c.b16 %v1551, %v1548
          %v1726 = vpack.c.b16 %v1552, %v1549
          %v1727 = vpack.c.b16 %v1553, %v1550
          %v1728 = vpack.c.b16 %v1557, %v1554
          %v1729 = vpack.c.b16 %v1558, %v1555
          %v1730 = vpack.c.b16 %v1559, %v1556
          %v1731 = vpack.c.b16 %v1563, %v1560
          %v1732 = vpack.c.b16 %v1564, %v1561
          %v1733 = vpack.c.b16 %v1565, %v1562
          %v1734 = vpack.c.b16 %v1569, %v1566
          %v1735 = vpack.c.b16 %v1570, %v1567
          %v1736 = vpack.c.b16 %v1571, %v1568
          %v1737 = vpack.c.b16 %v1575, %v1572
          %v1738 = vpack.c.b16 %v1576, %v1573
          %v1739 = vpack.c.b16 %v1577, %v1574
          %v1740 = vpack.c.b16 %v1581, %v1578
          %v1741 = vpack.c.b16 %v1582, %v1579
          %v1742 = vpack.c.b16 %v1583, %v1580
          %v1743 = vpack.c.b16 %v1587, %v1584
          %v1744 = vpack.c.b16 %v1588, %v1585
          %v1745 = vpack.c.b16 %v1589, %v1586
          %v1746 = vpack.c.b16 %v1593, %v1590
          %v1747 = vpack.c.b16 %v1594, %v1591
          %v1748 = vpack.c.b16 %v1595, %v1592
          %v1749 = vpack.c.b16 %v1599, %v1596
          %v1750 = vpack.c.b16 %v1600, %v1597
          %v1751 = vpack.c.b16 %v1601, %v1598
          %v1752 = vpack.c.b16 %v1605, %v1602
          %v1753 = vpack.c.b16 %v1606, %v1603
          %v1754 = vpack.c.b16 %v1607, %v1604
          %v1755 = vpack.c.b16 %v1611, %v1608
          %v1756 = vpack.c.b16 %v1612, %v1609
          %v1757 = vpack.c.b16 %v1613, %v1610
          %1902 = vmatpush.bf16.msra.mxu0 %v1635
          %1903 = vmatpush.bf16.msra.mxu0 %v1632
          %1904 = vmatpush.bf16.msra.mxu0 %v1629
          %1905 = vmatpush.bf16.msra.mxu0 %v1626
          %1906 = vmatpush.bf16.msra.mxu0 %v1623
          %1907 = vmatpush.bf16.msra.mxu0 %v1620
          %1908 = vmatpush.bf16.msra.mxu0 %v1617
          %1909 = vmatpush.bf16.msra.mxu0 %v1614
          %1910 = vmatmul.bf16.gmra.mxu0 %v1122
          %v1911 = vpop.f32.mrf.mxu0
          %v1912 = vadd.f32 0.0, %v1911
          %v1913 = vpop.f32.mrf.mxu0
          %v1914 = vadd.f32 0.0, %v1913
          %1915 = vdwg.mxu0
          %1916 = vmatpush.bf16.msra.mxu0 %v1659
          %1917 = vmatpush.bf16.msra.mxu0 %v1656
          %1918 = vmatpush.bf16.msra.mxu0 %v1653
          %1919 = vmatpush.bf16.msra.mxu0 %v1650
          %1920 = vmatpush.bf16.msra.mxu0 %v1647
          %1921 = vmatpush.bf16.msra.mxu0 %v1644
          %1922 = vmatpush.bf16.msra.mxu0 %v1641
          %1923 = vmatpush.bf16.msra.mxu0 %v1638
          %1924 = vmatmul.bf16.gmra.mxu0 %v1123
          %v1925 = vpop.f32.mrf.mxu0
          %v1926 = vadd.f32 %v1912, %v1925
          %v1927 = vpop.f32.mrf.mxu0
          %v1928 = vadd.f32 %v1914, %v1927
          %1929 = vdwg.mxu0
          %1930 = vmatpush.bf16.msra.mxu0 %v1683
          %1931 = vmatpush.bf16.msra.mxu0 %v1680
          %1932 = vmatpush.bf16.msra.mxu0 %v1677
          %1933 = vmatpush.bf16.msra.mxu0 %v1674
          %1934 = vmatpush.bf16.msra.mxu0 %v1671
          %1935 = vmatpush.bf16.msra.mxu0 %v1668
          %1936 = vmatpush.bf16.msra.mxu0 %v1665
          %1937 = vmatpush.bf16.msra.mxu0 %v1662
          %1938 = vmatmul.bf16.gmra.mxu0 %v1124
          %v1939 = vpop.f32.mrf.mxu0
          %v1940 = vadd.f32 %v1926, %v1939
          %v1941 = vpop.f32.mrf.mxu0
          %v1942 = vadd.f32 %v1928, %v1941
          %1943 = vdwg.mxu0
          %1944 = vmatpush.bf16.msra.mxu0 %v1707
          %1945 = vmatpush.bf16.msra.mxu0 %v1704
          %1946 = vmatpush.bf16.msra.mxu0 %v1701
          %1947 = vmatpush.bf16.msra.mxu0 %v1698
          %1948 = vmatpush.bf16.msra.mxu0 %v1695
          %1949 = vmatpush.bf16.msra.mxu0 %v1692
          %1950 = vmatpush.bf16.msra.mxu0 %v1689
          %1951 = vmatpush.bf16.msra.mxu0 %v1686
          %1952 = vmatmul.bf16.gmra.mxu0 %v1125
          %v1953 = vpop.f32.mrf.mxu0
          %v1954 = vadd.f32 %v1940, %v1953
          %v1955 = vpop.f32.mrf.mxu0
          %v1956 = vadd.f32 %v1942, %v1955
          %1957 = vdwg.mxu0
          %1958 = vmatpush.bf16.msra.mxu0 %v1731
          %1959 = vmatpush.bf16.msra.mxu0 %v1728
          %1960 = vmatpush.bf16.msra.mxu0 %v1725
          %1961 = vmatpush.bf16.msra.mxu0 %v1722
          %1962 = vmatpush.bf16.msra.mxu0 %v1719
          %1963 = vmatpush.bf16.msra.mxu0 %v1716
          %1964 = vmatpush.bf16.msra.mxu0 %v1713
          %1965 = vmatpush.bf16.msra.mxu0 %v1710
          %1966 = vmatmul.bf16.gmra.mxu0 %v1126
          %v1967 = vpop.f32.mrf.mxu0
          %v1968 = vadd.f32 %v1954, %v1967
          %v1969 = vpop.f32.mrf.mxu0
          %v1970 = vadd.f32 %v1956, %v1969
          %1971 = vdwg.mxu0
          %1972 = vmatpush.bf16.msra.mxu0 %v1755
          %1973 = vmatpush.bf16.msra.mxu0 %v1752
          %1974 = vmatpush.bf16.msra.mxu0 %v1749
          %1975 = vmatpush.bf16.msra.mxu0 %v1746
          %1976 = vmatpush.bf16.msra.mxu0 %v1743
          %1977 = vmatpush.bf16.msra.mxu0 %v1740
          %1978 = vmatpush.bf16.msra.mxu0 %v1737
          %1979 = vmatpush.bf16.msra.mxu0 %v1734
          %1980 = vmatmul.bf16.gmra.mxu0 %v1127
          %v1981 = vpop.f32.mrf.mxu0
          %v1982 = vadd.f32 %v1968, %v1981
          %v1983 = vpop.f32.mrf.mxu0
          %v1984 = vadd.f32 %v1970, %v1983
          %1985 = vdwg.mxu0
          %1986 = vmatpush.bf16.msra.mxu0 %v1636
          %1987 = vmatpush.bf16.msra.mxu0 %v1633
          %1988 = vmatpush.bf16.msra.mxu0 %v1630
          %1989 = vmatpush.bf16.msra.mxu0 %v1627
          %1990 = vmatpush.bf16.msra.mxu0 %v1624
          %1991 = vmatpush.bf16.msra.mxu0 %v1621
          %1992 = vmatpush.bf16.msra.mxu0 %v1618
          %1993 = vmatpush.bf16.msra.mxu0 %v1615
          %1994 = vmatmul.bf16.gmra.mxu0 %v1122
          %v1995 = vpop.f32.mrf.mxu0
          %v1996 = vadd.f32 0.0, %v1995
          %v1997 = vpop.f32.mrf.mxu0
          %v1998 = vadd.f32 0.0, %v1997
          %1999 = vdwg.mxu0
          %2000 = vmatpush.bf16.msra.mxu0 %v1660
          %2001 = vmatpush.bf16.msra.mxu0 %v1657
          %2002 = vmatpush.bf16.msra.mxu0 %v1654
          %2003 = vmatpush.bf16.msra.mxu0 %v1651
          %2004 = vmatpush.bf16.msra.mxu0 %v1648
          %2005 = vmatpush.bf16.msra.mxu0 %v1645
          %2006 = vmatpush.bf16.msra.mxu0 %v1642
          %2007 = vmatpush.bf16.msra.mxu0 %v1639
          %2008 = vmatmul.bf16.gmra.mxu0 %v1123
          %v2009 = vpop.f32.mrf.mxu0
          %v2010 = vadd.f32 %v1996, %v2009
          %v2011 = vpop.f32.mrf.mxu0
          %v2012 = vadd.f32 %v1998, %v2011
          %2013 = vdwg.mxu0
          %2014 = vmatpush.bf16.msra.mxu0 %v1684
          %2015 = vmatpush.bf16.msra.mxu0 %v1681
          %2016 = vmatpush.bf16.msra.mxu0 %v1678
          %2017 = vmatpush.bf16.msra.mxu0 %v1675
          %2018 = vmatpush.bf16.msra.mxu0 %v1672
          %2019 = vmatpush.bf16.msra.mxu0 %v1669
          %2020 = vmatpush.bf16.msra.mxu0 %v1666
          %2021 = vmatpush.bf16.msra.mxu0 %v1663
          %2022 = vmatmul.bf16.gmra.mxu0 %v1124
          %v2023 = vpop.f32.mrf.mxu0
          %v2024 = vadd.f32 %v2010, %v2023
          %v2025 = vpop.f32.mrf.mxu0
          %v2026 = vadd.f32 %v2012, %v2025
          %2027 = vdwg.mxu0
          %2028 = vmatpush.bf16.msra.mxu0 %v1708
          %2029 = vmatpush.bf16.msra.mxu0 %v1705
          %2030 = vmatpush.bf16.msra.mxu0 %v1702
          %2031 = vmatpush.bf16.msra.mxu0 %v1699
          %2032 = vmatpush.bf16.msra.mxu0 %v1696
          %2033 = vmatpush.bf16.msra.mxu0 %v1693
          %2034 = vmatpush.bf16.msra.mxu0 %v1690
          %2035 = vmatpush.bf16.msra.mxu0 %v1687
          %2036 = vmatmul.bf16.gmra.mxu0 %v1125
          %v2037 = vpop.f32.mrf.mxu0
          %v2038 = vadd.f32 %v2024, %v2037
          %v2039 = vpop.f32.mrf.mxu0
          %v2040 = vadd.f32 %v2026, %v2039
          %2041 = vdwg.mxu0
          %2042 = vmatpush.bf16.msra.mxu0 %v1732
          %2043 = vmatpush.bf16.msra.mxu0 %v1729
          %2044 = vmatpush.bf16.msra.mxu0 %v1726
          %2045 = vmatpush.bf16.msra.mxu0 %v1723
          %2046 = vmatpush.bf16.msra.mxu0 %v1720
          %2047 = vmatpush.bf16.msra.mxu0 %v1717
          %2048 = vmatpush.bf16.msra.mxu0 %v1714
          %2049 = vmatpush.bf16.msra.mxu0 %v1711
          %2050 = vmatmul.bf16.gmra.mxu0 %v1126
          %v2051 = vpop.f32.mrf.mxu0
          %v2052 = vadd.f32 %v2038, %v2051
          %v2053 = vpop.f32.mrf.mxu0
          %v2054 = vadd.f32 %v2040, %v2053
          %2055 = vdwg.mxu0
          %2056 = vmatpush.bf16.msra.mxu0 %v1756
          %2057 = vmatpush.bf16.msra.mxu0 %v1753
          %2058 = vmatpush.bf16.msra.mxu0 %v1750
          %2059 = vmatpush.bf16.msra.mxu0 %v1747
          %2060 = vmatpush.bf16.msra.mxu0 %v1744
          %2061 = vmatpush.bf16.msra.mxu0 %v1741
          %2062 = vmatpush.bf16.msra.mxu0 %v1738
          %2063 = vmatpush.bf16.msra.mxu0 %v1735
          %2064 = vmatmul.bf16.gmra.mxu0 %v1127
          %v2065 = vpop.f32.mrf.mxu0
          %v2066 = vadd.f32 %v2052, %v2065
          %v2067 = vpop.f32.mrf.mxu0
          %v2068 = vadd.f32 %v2054, %v2067
          %2069 = vdwg.mxu0
          %2070 = vmatpush.bf16.msra.mxu0 %v1637
          %2071 = vmatpush.bf16.msra.mxu0 %v1634
          %2072 = vmatpush.bf16.msra.mxu0 %v1631
          %2073 = vmatpush.bf16.msra.mxu0 %v1628
          %2074 = vmatpush.bf16.msra.mxu0 %v1625
          %2075 = vmatpush.bf16.msra.mxu0 %v1622
          %2076 = vmatpush.bf16.msra.mxu0 %v1619
          %2077 = vmatpush.bf16.msra.mxu0 %v1616
          %2078 = vmatmul.bf16.gmra.mxu0 %v1122
          %v2079 = vpop.f32.mrf.mxu0
          %v2080 = vadd.f32 0.0, %v2079
          %v2081 = vpop.f32.mrf.mxu0
          %v2082 = vadd.f32 0.0, %v2081
          %2083 = vdwg.mxu0
          %2084 = vmatpush.bf16.msra.mxu0 %v1661
          %2085 = vmatpush.bf16.msra.mxu0 %v1658
          %2086 = vmatpush.bf16.msra.mxu0 %v1655
          %2087 = vmatpush.bf16.msra.mxu0 %v1652
          %2088 = vmatpush.bf16.msra.mxu0 %v1649
          %2089 = vmatpush.bf16.msra.mxu0 %v1646
          %2090 = vmatpush.bf16.msra.mxu0 %v1643
          %2091 = vmatpush.bf16.msra.mxu0 %v1640
          %2092 = vmatmul.bf16.gmra.mxu0 %v1123
          %v2093 = vpop.f32.mrf.mxu0
          %v2094 = vadd.f32 %v2080, %v2093
          %v2095 = vpop.f32.mrf.mxu0
          %v2096 = vadd.f32 %v2082, %v2095
          %2097 = vdwg.mxu0
          %2098 = vmatpush.bf16.msra.mxu0 %v1685
          %2099 = vmatpush.bf16.msra.mxu0 %v1682
          %2100 = vmatpush.bf16.msra.mxu0 %v1679
          %2101 = vmatpush.bf16.msra.mxu0 %v1676
          %2102 = vmatpush.bf16.msra.mxu0 %v1673
          %2103 = vmatpush.bf16.msra.mxu0 %v1670
          %2104 = vmatpush.bf16.msra.mxu0 %v1667
          %2105 = vmatpush.bf16.msra.mxu0 %v1664
          %2106 = vmatmul.bf16.gmra.mxu0 %v1124
          %v2107 = vpop.f32.mrf.mxu0
          %v2108 = vadd.f32 %v2094, %v2107
          %v2109 = vpop.f32.mrf.mxu0
          %v2110 = vadd.f32 %v2096, %v2109
          %2111 = vdwg.mxu0
          %2112 = vmatpush.bf16.msra.mxu0 %v1709
          %2113 = vmatpush.bf16.msra.mxu0 %v1706
          %2114 = vmatpush.bf16.msra.mxu0 %v1703
          %2115 = vmatpush.bf16.msra.mxu0 %v1700
          %2116 = vmatpush.bf16.msra.mxu0 %v1697
          %2117 = vmatpush.bf16.msra.mxu0 %v1694
          %2118 = vmatpush.bf16.msra.mxu0 %v1691
          %2119 = vmatpush.bf16.msra.mxu0 %v1688
          %2120 = vmatmul.bf16.gmra.mxu0 %v1125
          %v2121 = vpop.f32.mrf.mxu0
          %v2122 = vadd.f32 %v2108, %v2121
          %v2123 = vpop.f32.mrf.mxu0
          %v2124 = vadd.f32 %v2110, %v2123
          %2125 = vdwg.mxu0
          %2126 = vmatpush.bf16.msra.mxu0 %v1733
          %2127 = vmatpush.bf16.msra.mxu0 %v1730
          %2128 = vmatpush.bf16.msra.mxu0 %v1727
          %2129 = vmatpush.bf16.msra.mxu0 %v1724
          %2130 = vmatpush.bf16.msra.mxu0 %v1721
          %2131 = vmatpush.bf16.msra.mxu0 %v1718
          %2132 = vmatpush.bf16.msra.mxu0 %v1715
          %2133 = vmatpush.bf16.msra.mxu0 %v1712
          %2134 = vmatmul.bf16.gmra.mxu0 %v1126
          %v2135 = vpop.f32.mrf.mxu0
          %v2136 = vadd.f32 %v2122, %v2135
          %v2137 = vpop.f32.mrf.mxu0
          %v2138 = vadd.f32 %v2124, %v2137
          %2139 = vdwg.mxu0
          %2140 = vmatpush.bf16.msra.mxu0 %v1757
          %2141 = vmatpush.bf16.msra.mxu0 %v1754
          %2142 = vmatpush.bf16.msra.mxu0 %v1751
          %2143 = vmatpush.bf16.msra.mxu0 %v1748
          %2144 = vmatpush.bf16.msra.mxu0 %v1745
          %2145 = vmatpush.bf16.msra.mxu0 %v1742
          %2146 = vmatpush.bf16.msra.mxu0 %v1739
          %2147 = vmatpush.bf16.msra.mxu0 %v1736
          %2148 = vmatmul.bf16.gmra.mxu0 %v1127
          %v2149 = vpop.f32.mrf.mxu0
          %v2150 = vadd.f32 %v2136, %v2149
          %v2151 = vpop.f32.mrf.mxu0
          %v2152 = vadd.f32 %v2138, %v2151
          %2153 = vdwg.mxu0
          %v2154 = vld [vmem:[%s1] sm:$0xff]
          %v2155 = vld [vmem:[%s1 + $0x8] sm:$0xff]
          %v2156 = vld [vmem:[%s1 + $0x10] sm:$0xff]
          %v2157 = vadd.f32 %v1982, %v2154
          %v2158 = vadd.f32 %v2066, %v2155
          %v2159 = vadd.f32 %v2150, %v2156
          %v2160 = vadd.f32 %v1984, %v2154
          %v2161 = vadd.f32 %v2068, %v2155
          %v2162 = vadd.f32 %v2152, %v2156
          %s2163 = smul.u32 %s52, 6
          %s2164 = smul.addr %s2163, 8
          %s2165 = scalar_lea.vmem [#allocation2], %s2164
          %2166 = vst [vmem:[%s2165] sm:$0xff] %v2157
          %2167 = vst [vmem:[%s2165 + $0x8] sm:$0xff] %v2158
          %2168 = vst [vmem:[%s2165 + $0x10] sm:$0xff] %v2159
          %2169 = vst [vmem:[%s2165 + $0x18] sm:$0xff] %v2160
          %2170 = vst [vmem:[%s2165 + $0x20] sm:$0xff] %v2161
          %2171 = vst [vmem:[%s2165 + $0x28] sm:$0xff] %v2162
        $region148: #{backbone_forward.1} parent=83 // pred_fallthru
          _
        %s2172 = smul.u32 %s52, 6
        %s2173 = smul.addr %s2172, 8
        %s2174 = scalar_lea.vmem [#allocation2], %s2173
        %v2175 = vld [vmem:[%s2174] sm:$0xff]
        %v2176 = vld [vmem:[%s2174 + $0x8] sm:$0xff]
        %v2177 = vld [vmem:[%s2174 + $0x10] sm:$0xff]
        %v2178 = vld [vmem:[%s2174 + $0x18] sm:$0xff]
        %v2179 = vld [vmem:[%s2174 + $0x20] sm:$0xff]
        %v2180 = vld [vmem:[%s2174 + $0x28] sm:$0xff]
        %v2181 = vld [vmem:[%s648] sm:$0x7]
        %v2182 = vld [vmem:[%s658] sm:$0x7]
        %v2183 = vadd.f32 %v2175, %v2176
        %v2184 = vadd.f32 %v2183, %v2177
        %2185 = vadd.xlane.f32.xlu0 %v2184
        %v2186 = vpop.xlane.xlu0 %2185
        %v2187 = vadd.f32 %v2178, %v2179
        %v2188 = vadd.f32 %v2187, %v2180
        %2189 = vadd.xlane.f32.xlu0 %v2188
        %v2190 = vpop.xlane.xlu0 %2189
        %v2191 = vrcp.pop 384.0
        %v2192 = vmul.f32 384.0, %v2191
        %v2193 = vsub.f32 1.0, %v2192
        %v2194 = vmul.f32 %v2191, %v2193
        %v2195 = vadd.f32 %v2191, %v2194
        %vm2196 = vweird.f32 %v2191
        %v2197 = vsel %vm2196, %v2191, %v2195
        %v2198 = vmul.f32 %v2186, %v2197
        %v2199 = vmul.f32 %v2190, %v2197
        %v2200 = vsub.f32 %v2175, %v2198
        %v2201 = vsub.f32 %v2176, %v2198
        %v2202 = vsub.f32 %v2177, %v2198
        %v2203 = vsub.f32 %v2178, %v2199
        %v2204 = vsub.f32 %v2179, %v2199
        %v2205 = vsub.f32 %v2180, %v2199
        %v2206 = vmul.f32 %v2200, %v2200
        %v2207 = vmul.f32 %v2201, %v2201
        %v2208 = vmul.f32 %v2202, %v2202
        %v2209 = vmul.f32 %v2203, %v2203
        %v2210 = vmul.f32 %v2204, %v2204
        %v2211 = vmul.f32 %v2205, %v2205
        %v2212 = vadd.f32 %v2206, %v2207
        %v2213 = vadd.f32 %v2212, %v2208
        %2214 = vadd.xlane.f32.xlu0 %v2213
        %v2215 = vpop.xlane.xlu0 %2214
        %v2216 = vadd.f32 %v2209, %v2210
        %v2217 = vadd.f32 %v2216, %v2211
        %2218 = vadd.xlane.f32.xlu0 %v2217
        %v2219 = vpop.xlane.xlu0 %2218
        %v2220 = vmul.f32 %v2215, %v2197
        %v2221 = vmul.f32 %v2219, %v2197
        %v2222 = vadd.f32 %v2220, 1e-06
        %v2223 = vadd.f32 %v2221, 1e-06
        %v2224 = vrsqrt.pop %v2222
        %v2225 = vmul.f32 %v2224, %v2222
        %v2226 = vmul.f32 %v2225, %v2224
        %v2227 = vmul.f32 0.5, %v2226
        %v2228 = vsub.f32 1.5, %v2227
        %v2229 = vmul.f32 %v2224, %v2228
        %vm2230 = vweird.f32 %v2222
        %vm2231 = vweird.f32 %v2224
        %vm2232 = vmor %vm2230, %vm2231
        %v2233 = vsel %vm2232, %v2224, %v2229
        %v2234 = vrsqrt.pop %v2223
        %v2235 = vmul.f32 %v2234, %v2223
        %v2236 = vmul.f32 %v2235, %v2234
        %v2237 = vmul.f32 0.5, %v2236
        %v2238 = vsub.f32 1.5, %v2237
        %v2239 = vmul.f32 %v2234, %v2238
        %vm2240 = vweird.f32 %v2223
        %vm2241 = vweird.f32 %v2234
        %vm2242 = vmor %vm2240, %vm2241
        %v2243 = vsel %vm2242, %v2234, %v2239
        %v2244 = vmul.f32 %v2200, %v2233
        %v2245 = vmul.f32 %v2201, %v2233
        %v2246 = vmul.f32 %v2202, %v2233
        %v2247 = vmul.f32 %v2203, %v2243
        %v2248 = vmul.f32 %v2204, %v2243
        %v2249 = vmul.f32 %v2205, %v2243
        %v2251 = vperm.slane %v2181, 0
        %v2252 = vperm.slane %v2181, 1
        %v2253 = vperm.slane %v2181, 2
        %v2257 = vmul.f32 %v2244, %v2251
        %v2258 = vmul.f32 %v2245, %v2252
        %v2259 = vmul.f32 %v2246, %v2253
        %v2260 = vmul.f32 %v2247, %v2251
        %v2261 = vmul.f32 %v2248, %v2252
        %v2262 = vmul.f32 %v2249, %v2253
        %v2264 = vperm.slane %v2182, 0
        %v2265 = vperm.slane %v2182, 1
        %v2266 = vperm.slane %v2182, 2
        %v2270 = vadd.f32 %v2257, %v2264
        %v2271 = vadd.f32 %v2258, %v2265
        %v2272 = vadd.f32 %v2259, %v2266
        %v2273 = vadd.f32 %v2260, %v2264
        %v2274 = vadd.f32 %v2261, %v2265
        %v2275 = vadd.f32 %v2262, %v2266
        %v2276 = vpack.c.bf16 %v2273, %v2270
        %v2277 = vpack.c.bf16 %v2274, %v2271
        %v2278 = vpack.c.bf16 %v2275, %v2272
        %v2279 = vld [vmem:[%s668] sm:$0xff]
        %v2280 = vld [vmem:[%s668 + $0x8] sm:$0xff]
        %v2281 = vld [vmem:[%s668 + $0x10] sm:$0xff]
        %v2282 = vld [vmem:[%s668 + $0x18] sm:$0xff]
        %v2283 = vld [vmem:[%s668 + $0x20] sm:$0xf]
        %v2284 = vld [vmem:[%s668 + $0x24] sm:$0xff]
        %v2285 = vld [vmem:[%s668 + $0x2c] sm:$0xff]
        %v2286 = vld [vmem:[%s668 + $0x34] sm:$0xff]
        %v2287 = vld [vmem:[%s668 + $0x3c] sm:$0xff]
        %v2288 = vld [vmem:[%s668 + $0x44] sm:$0xf]
        %v2289 = vld [vmem:[%s668 + $0x48] sm:$0xff]
        %v2290 = vld [vmem:[%s668 + $0x50] sm:$0xff]
        %v2291 = vld [vmem:[%s668 + $0x58] sm:$0xff]
        %v2292 = vld [vmem:[%s668 + $0x60] sm:$0xff]
        %v2293 = vld [vmem:[%s668 + $0x68] sm:$0xf]
        %v2294 = vld [vmem:[%s668 + $0x6c] sm:$0xff]
        %v2295 = vld [vmem:[%s668 + $0x74] sm:$0xff]
        %v2296 = vld [vmem:[%s668 + $0x7c] sm:$0xff]
        %v2297 = vld [vmem:[%s668 + $0x84] sm:$0xff]
        %v2298 = vld [vmem:[%s668 + $0x8c] sm:$0xf]
        %v2299 = vld [vmem:[%s668 + $0x90] sm:$0xff]
        %v2300 = vld [vmem:[%s668 + $0x98] sm:$0xff]
        %v2301 = vld [vmem:[%s668 + $0xa0] sm:$0xff]
        %v2302 = vld [vmem:[%s668 + $0xa8] sm:$0xff]
        %v2303 = vld [vmem:[%s668 + $0xb0] sm:$0xf]
        %v2304 = vld [vmem:[%s668 + $0xb4] sm:$0xff]
        %v2305 = vld [vmem:[%s668 + $0xbc] sm:$0xff]
        %v2306 = vld [vmem:[%s668 + $0xc4] sm:$0xff]
        %v2307 = vld [vmem:[%s668 + $0xcc] sm:$0xff]
        %v2308 = vld [vmem:[%s668 + $0xd4] sm:$0xf]
        %v2309 = vld [vmem:[%s668 + $0xd8] sm:$0xff]
        %v2310 = vld [vmem:[%s668 + $0xe0] sm:$0xff]
        %v2311 = vld [vmem:[%s668 + $0xe8] sm:$0xff]
        %v2312 = vld [vmem:[%s668 + $0xf0] sm:$0xff]
        %v2313 = vld [vmem:[%s668 + $0xf8] sm:$0xf]
        %v2314 = vld [vmem:[%s668 + $0xfc] sm:$0xff]
        %v2315 = vld [vmem:[%s668 + $0x104] sm:$0xff]
        %v2316 = vld [vmem:[%s668 + $0x10c] sm:$0xff]
        %v2317 = vld [vmem:[%s668 + $0x114] sm:$0xff]
        %v2318 = vld [vmem:[%s668 + $0x11c] sm:$0xf]
        %v2319 = vld [vmem:[%s668 + $0x120] sm:$0xff]
        %v2320 = vld [vmem:[%s668 + $0x128] sm:$0xff]
        %v2321 = vld [vmem:[%s668 + $0x130] sm:$0xff]
        %v2322 = vld [vmem:[%s668 + $0x138] sm:$0xff]
        %v2323 = vld [vmem:[%s668 + $0x140] sm:$0xf]
        %v2324 = vld [vmem:[%s668 + $0x144] sm:$0xff]
        %v2325 = vld [vmem:[%s668 + $0x14c] sm:$0xff]
        %v2326 = vld [vmem:[%s668 + $0x154] sm:$0xff]
        %v2327 = vld [vmem:[%s668 + $0x15c] sm:$0xff]
        %v2328 = vld [vmem:[%s668 + $0x164] sm:$0xf]
        %v2329 = vld [vmem:[%s668 + $0x168] sm:$0xff]
        %v2330 = vld [vmem:[%s668 + $0x170] sm:$0xff]
        %v2331 = vld [vmem:[%s668 + $0x178] sm:$0xff]
        %v2332 = vld [vmem:[%s668 + $0x180] sm:$0xff]
        %v2333 = vld [vmem:[%s668 + $0x188] sm:$0xf]
        %v2334 = vld [vmem:[%s668 + $0x18c] sm:$0xff]
        %v2335 = vld [vmem:[%s668 + $0x194] sm:$0xff]
        %v2336 = vld [vmem:[%s668 + $0x19c] sm:$0xff]
        %v2337 = vld [vmem:[%s668 + $0x1a4] sm:$0xff]
        %v2338 = vld [vmem:[%s668 + $0x1ac] sm:$0xf]
        %v2339 = vld [vmem:[%s668 + $0x1b0] sm:$0xff]
        %v2340 = vld [vmem:[%s668 + $0x1b8] sm:$0xff]
        %v2341 = vld [vmem:[%s668 + $0x1c0] sm:$0xff]
        %v2342 = vld [vmem:[%s668 + $0x1c8] sm:$0xff]
        %v2343 = vld [vmem:[%s668 + $0x1d0] sm:$0xf]
        %v2344 = vld [vmem:[%s668 + $0x1d4] sm:$0xff]
        %v2345 = vld [vmem:[%s668 + $0x1dc] sm:$0xff]
        %v2346 = vld [vmem:[%s668 + $0x1e4] sm:$0xff]
        %v2347 = vld [vmem:[%s668 + $0x1ec] sm:$0xff]
        %v2348 = vld [vmem:[%s668 + $0x1f4] sm:$0xf]
        %v2349 = vld [vmem:[%s668 + $0x1f8] sm:$0xff]
        %v2350 = vld [vmem:[%s668 + $0x200] sm:$0xff]
        %v2351 = vld [vmem:[%s668 + $0x208] sm:$0xff]
        %v2352 = vld [vmem:[%s668 + $0x210] sm:$0xff]
        %v2353 = vld [vmem:[%s668 + $0x218] sm:$0xf]
        %v2354 = vld [vmem:[%s668 + $0x21c] sm:$0xff]
        %v2355 = vld [vmem:[%s668 + $0x224] sm:$0xff]
        %v2356 = vld [vmem:[%s668 + $0x22c] sm:$0xff]
        %v2357 = vld [vmem:[%s668 + $0x234] sm:$0xff]
        %v2358 = vld [vmem:[%s668 + $0x23c] sm:$0xf]
        %v2359 = vld [vmem:[%s668 + $0x240] sm:$0xff]
        %v2360 = vld [vmem:[%s668 + $0x248] sm:$0xff]
        %v2361 = vld [vmem:[%s668 + $0x250] sm:$0xff]
        %v2362 = vld [vmem:[%s668 + $0x258] sm:$0xff]
        %v2363 = vld [vmem:[%s668 + $0x260] sm:$0xf]
        %v2364 = vld [vmem:[%s668 + $0x264] sm:$0xff]
        %v2365 = vld [vmem:[%s668 + $0x26c] sm:$0xff]
        %v2366 = vld [vmem:[%s668 + $0x274] sm:$0xff]
        %v2367 = vld [vmem:[%s668 + $0x27c] sm:$0xff]
        %v2368 = vld [vmem:[%s668 + $0x284] sm:$0xf]
        %v2369 = vld [vmem:[%s668 + $0x288] sm:$0xff]
        %v2370 = vld [vmem:[%s668 + $0x290] sm:$0xff]
        %v2371 = vld [vmem:[%s668 + $0x298] sm:$0xff]
        %v2372 = vld [vmem:[%s668 + $0x2a0] sm:$0xff]
        %v2373 = vld [vmem:[%s668 + $0x2a8] sm:$0xf]
        %v2374 = vld [vmem:[%s668 + $0x2ac] sm:$0xff]
        %v2375 = vld [vmem:[%s668 + $0x2b4] sm:$0xff]
        %v2376 = vld [vmem:[%s668 + $0x2bc] sm:$0xff]
        %v2377 = vld [vmem:[%s668 + $0x2c4] sm:$0xff]
        %v2378 = vld [vmem:[%s668 + $0x2cc] sm:$0xf]
        %v2379 = vld [vmem:[%s668 + $0x2d0] sm:$0xff]
        %v2380 = vld [vmem:[%s668 + $0x2d8] sm:$0xff]
        %v2381 = vld [vmem:[%s668 + $0x2e0] sm:$0xff]
        %v2382 = vld [vmem:[%s668 + $0x2e8] sm:$0xff]
        %v2383 = vld [vmem:[%s668 + $0x2f0] sm:$0xf]
        %v2384 = vld [vmem:[%s668 + $0x2f4] sm:$0xff]
        %v2385 = vld [vmem:[%s668 + $0x2fc] sm:$0xff]
        %v2386 = vld [vmem:[%s668 + $0x304] sm:$0xff]
        %v2387 = vld [vmem:[%s668 + $0x30c] sm:$0xff]
        %v2388 = vld [vmem:[%s668 + $0x314] sm:$0xf]
        %v2389 = vld [vmem:[%s668 + $0x318] sm:$0xff]
        %v2390 = vld [vmem:[%s668 + $0x320] sm:$0xff]
        %v2391 = vld [vmem:[%s668 + $0x328] sm:$0xff]
        %v2392 = vld [vmem:[%s668 + $0x330] sm:$0xff]
        %v2393 = vld [vmem:[%s668 + $0x338] sm:$0xf]
        %v2394 = vld [vmem:[%s668 + $0x33c] sm:$0xff]
        %v2395 = vld [vmem:[%s668 + $0x344] sm:$0xff]
        %v2396 = vld [vmem:[%s668 + $0x34c] sm:$0xff]
        %v2397 = vld [vmem:[%s668 + $0x354] sm:$0xff]
        %v2398 = vld [vmem:[%s668 + $0x35c] sm:$0xf]
        %v2399 = vld [vmem:[%s668 + $0x360] sm:$0xff]
        %v2400 = vld [vmem:[%s668 + $0x368] sm:$0xff]
        %v2401 = vld [vmem:[%s668 + $0x370] sm:$0xff]
        %v2402 = vld [vmem:[%s668 + $0x378] sm:$0xff]
        %v2403 = vld [vmem:[%s668 + $0x380] sm:$0xf]
        %v2404 = vld [vmem:[%s668 + $0x384] sm:$0xff]
        %v2405 = vld [vmem:[%s668 + $0x38c] sm:$0xff]
        %v2406 = vld [vmem:[%s668 + $0x394] sm:$0xff]
        %v2407 = vld [vmem:[%s668 + $0x39c] sm:$0xff]
        %v2408 = vld [vmem:[%s668 + $0x3a4] sm:$0xf]
        %v2409 = vld [vmem:[%s668 + $0x3a8] sm:$0xff]
        %v2410 = vld [vmem:[%s668 + $0x3b0] sm:$0xff]
        %v2411 = vld [vmem:[%s668 + $0x3b8] sm:$0xff]
        %v2412 = vld [vmem:[%s668 + $0x3c0] sm:$0xff]
        %v2413 = vld [vmem:[%s668 + $0x3c8] sm:$0xf]
        %v2414 = vld [vmem:[%s668 + $0x3cc] sm:$0xff]
        %v2415 = vld [vmem:[%s668 + $0x3d4] sm:$0xff]
        %v2416 = vld [vmem:[%s668 + $0x3dc] sm:$0xff]
        %v2417 = vld [vmem:[%s668 + $0x3e4] sm:$0xff]
        %v2418 = vld [vmem:[%s668 + $0x3ec] sm:$0xf]
        %v2419 = vld [vmem:[%s668 + $0x3f0] sm:$0xff]
        %v2420 = vld [vmem:[%s668 + $0x3f8] sm:$0xff]
        %v2421 = vld [vmem:[%s668 + $0x400] sm:$0xff]
        %v2422 = vld [vmem:[%s668 + $0x408] sm:$0xff]
        %v2423 = vld [vmem:[%s668 + $0x410] sm:$0xf]
        %v2424 = vld [vmem:[%s668 + $0x414] sm:$0xff]
        %v2425 = vld [vmem:[%s668 + $0x41c] sm:$0xff]
        %v2426 = vld [vmem:[%s668 + $0x424] sm:$0xff]
        %v2427 = vld [vmem:[%s668 + $0x42c] sm:$0xff]
        %v2428 = vld [vmem:[%s668 + $0x434] sm:$0xf]
        %v2429 = vld [vmem:[%s668 + $0x438] sm:$0xff]
        %v2430 = vld [vmem:[%s668 + $0x440] sm:$0xff]
        %v2431 = vld [vmem:[%s668 + $0x448] sm:$0xff]
        %v2432 = vld [vmem:[%s668 + $0x450] sm:$0xff]
        %v2433 = vld [vmem:[%s668 + $0x458] sm:$0xf]
        %v2434 = vld [vmem:[%s668 + $0x45c] sm:$0xff]
        %v2435 = vld [vmem:[%s668 + $0x464] sm:$0xff]
        %v2436 = vld [vmem:[%s668 + $0x46c] sm:$0xff]
        %v2437 = vld [vmem:[%s668 + $0x474] sm:$0xff]
        %v2438 = vld [vmem:[%s668 + $0x47c] sm:$0xf]
        %v2439 = vld [vmem:[%s668 + $0x480] sm:$0xff]
        %v2440 = vld [vmem:[%s668 + $0x488] sm:$0xff]
        %v2441 = vld [vmem:[%s668 + $0x490] sm:$0xff]
        %v2442 = vld [vmem:[%s668 + $0x498] sm:$0xff]
        %v2443 = vld [vmem:[%s668 + $0x4a0] sm:$0xf]
        %v2444 = vld [vmem:[%s668 + $0x4a4] sm:$0xff]
        %v2445 = vld [vmem:[%s668 + $0x4ac] sm:$0xff]
        %v2446 = vld [vmem:[%s668 + $0x4b4] sm:$0xff]
        %v2447 = vld [vmem:[%s668 + $0x4bc] sm:$0xff]
        %v2448 = vld [vmem:[%s668 + $0x4c4] sm:$0xf]
        %v2449 = vld [vmem:[%s668 + $0x4c8] sm:$0xff]
        %v2450 = vld [vmem:[%s668 + $0x4d0] sm:$0xff]
        %v2451 = vld [vmem:[%s668 + $0x4d8] sm:$0xff]
        %v2452 = vld [vmem:[%s668 + $0x4e0] sm:$0xff]
        %v2453 = vld [vmem:[%s668 + $0x4e8] sm:$0xf]
        %v2454 = vld [vmem:[%s668 + $0x4ec] sm:$0xff]
        %v2455 = vld [vmem:[%s668 + $0x4f4] sm:$0xff]
        %v2456 = vld [vmem:[%s668 + $0x4fc] sm:$0xff]
        %v2457 = vld [vmem:[%s668 + $0x504] sm:$0xff]
        %v2458 = vld [vmem:[%s668 + $0x50c] sm:$0xf]
        %v2459 = vld [vmem:[%s668 + $0x510] sm:$0xff]
        %v2460 = vld [vmem:[%s668 + $0x518] sm:$0xff]
        %v2461 = vld [vmem:[%s668 + $0x520] sm:$0xff]
        %v2462 = vld [vmem:[%s668 + $0x528] sm:$0xff]
        %v2463 = vld [vmem:[%s668 + $0x530] sm:$0xf]
        %v2464 = vld [vmem:[%s668 + $0x534] sm:$0xff]
        %v2465 = vld [vmem:[%s668 + $0x53c] sm:$0xff]
        %v2466 = vld [vmem:[%s668 + $0x544] sm:$0xff]
        %v2467 = vld [vmem:[%s668 + $0x54c] sm:$0xff]
        %v2468 = vld [vmem:[%s668 + $0x554] sm:$0xf]
        %v2469 = vld [vmem:[%s668 + $0x558] sm:$0xff]
        %v2470 = vld [vmem:[%s668 + $0x560] sm:$0xff]
        %v2471 = vld [vmem:[%s668 + $0x568] sm:$0xff]
        %v2472 = vld [vmem:[%s668 + $0x570] sm:$0xff]
        %v2473 = vld [vmem:[%s668 + $0x578] sm:$0xf]
        %v2474 = vld [vmem:[%s668 + $0x57c] sm:$0xff]
        %v2475 = vld [vmem:[%s668 + $0x584] sm:$0xff]
        %v2476 = vld [vmem:[%s668 + $0x58c] sm:$0xff]
        %v2477 = vld [vmem:[%s668 + $0x594] sm:$0xff]
        %v2478 = vld [vmem:[%s668 + $0x59c] sm:$0xf]
        %v2479 = vld [vmem:[%s668 + $0x5a0] sm:$0xff]
        %v2480 = vld [vmem:[%s668 + $0x5a8] sm:$0xff]
        %v2481 = vld [vmem:[%s668 + $0x5b0] sm:$0xff]
        %v2482 = vld [vmem:[%s668 + $0x5b8] sm:$0xff]
        %v2483 = vld [vmem:[%s668 + $0x5c0] sm:$0xf]
        %v2484 = vld [vmem:[%s668 + $0x5c4] sm:$0xff]
        %v2485 = vld [vmem:[%s668 + $0x5cc] sm:$0xff]
        %v2486 = vld [vmem:[%s668 + $0x5d4] sm:$0xff]
        %v2487 = vld [vmem:[%s668 + $0x5dc] sm:$0xff]
        %v2488 = vld [vmem:[%s668 + $0x5e4] sm:$0xf]
        %v2489 = vld [vmem:[%s668 + $0x5e8] sm:$0xff]
        %v2490 = vld [vmem:[%s668 + $0x5f0] sm:$0xff]
        %v2491 = vld [vmem:[%s668 + $0x5f8] sm:$0xff]
        %v2492 = vld [vmem:[%s668 + $0x600] sm:$0xff]
        %v2493 = vld [vmem:[%s668 + $0x608] sm:$0xf]
        %v2494 = vld [vmem:[%s668 + $0x60c] sm:$0xff]
        %v2495 = vld [vmem:[%s668 + $0x614] sm:$0xff]
        %v2496 = vld [vmem:[%s668 + $0x61c] sm:$0xff]
        %v2497 = vld [vmem:[%s668 + $0x624] sm:$0xff]
        %v2498 = vld [vmem:[%s668 + $0x62c] sm:$0xf]
        %v2499 = vld [vmem:[%s668 + $0x630] sm:$0xff]
        %v2500 = vld [vmem:[%s668 + $0x638] sm:$0xff]
        %v2501 = vld [vmem:[%s668 + $0x640] sm:$0xff]
        %v2502 = vld [vmem:[%s668 + $0x648] sm:$0xff]
        %v2503 = vld [vmem:[%s668 + $0x650] sm:$0xf]
        %v2504 = vld [vmem:[%s668 + $0x654] sm:$0xff]
        %v2505 = vld [vmem:[%s668 + $0x65c] sm:$0xff]
        %v2506 = vld [vmem:[%s668 + $0x664] sm:$0xff]
        %v2507 = vld [vmem:[%s668 + $0x66c] sm:$0xff]
        %v2508 = vld [vmem:[%s668 + $0x674] sm:$0xf]
        %v2509 = vld [vmem:[%s668 + $0x678] sm:$0xff]
        %v2510 = vld [vmem:[%s668 + $0x680] sm:$0xff]
        %v2511 = vld [vmem:[%s668 + $0x688] sm:$0xff]
        %v2512 = vld [vmem:[%s668 + $0x690] sm:$0xff]
        %v2513 = vld [vmem:[%s668 + $0x698] sm:$0xf]
        %v2514 = vld [vmem:[%s668 + $0x69c] sm:$0xff]
        %v2515 = vld [vmem:[%s668 + $0x6a4] sm:$0xff]
        %v2516 = vld [vmem:[%s668 + $0x6ac] sm:$0xff]
        %v2517 = vld [vmem:[%s668 + $0x6b4] sm:$0xff]
        %v2518 = vld [vmem:[%s668 + $0x6bc] sm:$0xf]
        %v2519 = vld [vmem:[%s678] sm:$0xff]
        %v2520 = vld [vmem:[%s678 + $0x8] sm:$0x1]
        %v2523 = vperm.slane %v2519, 0
        %v2524 = vperm.slane %v2519, 1
        %v2525 = vperm.slane %v2519, 2
        %v2526 = vperm.slane %v2519, 3
        %v2527 = vperm.slane %v2519, 4
        %v2528 = vperm.slane %v2519, 5
        %v2529 = vperm.slane %v2519, 6
        %v2530 = vperm.slane %v2519, 7
        %v2531 = vperm.slane %v2520, 0
        %v2781 = vunpack.c.l.b16 %v2279
        %v2782 = vunpack.c.h.b16 %v2279
        %v2783 = vunpack.c.l.b16 %v2280
        %v2784 = vunpack.c.h.b16 %v2280
        %v2785 = vunpack.c.l.b16 %v2281
        %v2786 = vunpack.c.h.b16 %v2281
        %v2787 = vunpack.c.l.b16 %v2282
        %v2788 = vunpack.c.h.b16 %v2282
        %v2789 = vunpack.c.l.b16 %v2283
        %v2790 = vunpack.c.l.b16 %v2284
        %v2791 = vunpack.c.h.b16 %v2284
        %v2792 = vunpack.c.l.b16 %v2285
        %v2793 = vunpack.c.h.b16 %v2285
        %v2794 = vunpack.c.l.b16 %v2286
        %v2795 = vunpack.c.h.b16 %v2286
        %v2796 = vunpack.c.l.b16 %v2287
        %v2797 = vunpack.c.h.b16 %v2287
        %v2798 = vunpack.c.l.b16 %v2288
        %v2799 = vunpack.c.l.b16 %v2289
        %v2800 = vunpack.c.h.b16 %v2289
        %v2801 = vunpack.c.l.b16 %v2290
        %v2802 = vunpack.c.h.b16 %v2290
        %v2803 = vunpack.c.l.b16 %v2291
        %v2804 = vunpack.c.h.b16 %v2291
        %v2805 = vunpack.c.l.b16 %v2292
        %v2806 = vunpack.c.h.b16 %v2292
        %v2807 = vunpack.c.l.b16 %v2293
        %v2808 = vunpack.c.l.b16 %v2294
        %v2809 = vunpack.c.h.b16 %v2294
        %v2810 = vunpack.c.l.b16 %v2295
        %v2811 = vunpack.c.h.b16 %v2295
        %v2812 = vunpack.c.l.b16 %v2296
        %v2813 = vunpack.c.h.b16 %v2296
        %v2814 = vunpack.c.l.b16 %v2297
        %v2815 = vunpack.c.h.b16 %v2297
        %v2816 = vunpack.c.l.b16 %v2298
        %v2817 = vunpack.c.l.b16 %v2299
        %v2818 = vunpack.c.h.b16 %v2299
        %v2819 = vunpack.c.l.b16 %v2300
        %v2820 = vunpack.c.h.b16 %v2300
        %v2821 = vunpack.c.l.b16 %v2301
        %v2822 = vunpack.c.h.b16 %v2301
        %v2823 = vunpack.c.l.b16 %v2302
        %v2824 = vunpack.c.h.b16 %v2302
        %v2825 = vunpack.c.l.b16 %v2303
        %v2826 = vunpack.c.l.b16 %v2304
        %v2827 = vunpack.c.h.b16 %v2304
        %v2828 = vunpack.c.l.b16 %v2305
        %v2829 = vunpack.c.h.b16 %v2305
        %v2830 = vunpack.c.l.b16 %v2306
        %v2831 = vunpack.c.h.b16 %v2306
        %v2832 = vunpack.c.l.b16 %v2307
        %v2833 = vunpack.c.h.b16 %v2307
        %v2834 = vunpack.c.l.b16 %v2308
        %v2835 = vunpack.c.l.b16 %v2309
        %v2836 = vunpack.c.h.b16 %v2309
        %v2837 = vunpack.c.l.b16 %v2310
        %v2838 = vunpack.c.h.b16 %v2310
        %v2839 = vunpack.c.l.b16 %v2311
        %v2840 = vunpack.c.h.b16 %v2311
        %v2841 = vunpack.c.l.b16 %v2312
        %v2842 = vunpack.c.h.b16 %v2312
        %v2843 = vunpack.c.l.b16 %v2313
        %v2844 = vunpack.c.l.b16 %v2314
        %v2845 = vunpack.c.h.b16 %v2314
        %v2846 = vunpack.c.l.b16 %v2315
        %v2847 = vunpack.c.h.b16 %v2315
        %v2848 = vunpack.c.l.b16 %v2316
        %v2849 = vunpack.c.h.b16 %v2316
        %v2850 = vunpack.c.l.b16 %v2317
        %v2851 = vunpack.c.h.b16 %v2317
        %v2852 = vunpack.c.l.b16 %v2318
        %v2853 = vunpack.c.l.b16 %v2319
        %v2854 = vunpack.c.h.b16 %v2319
        %v2855 = vunpack.c.l.b16 %v2320
        %v2856 = vunpack.c.h.b16 %v2320
        %v2857 = vunpack.c.l.b16 %v2321
        %v2858 = vunpack.c.h.b16 %v2321
        %v2859 = vunpack.c.l.b16 %v2322
        %v2860 = vunpack.c.h.b16 %v2322
        %v2861 = vunpack.c.l.b16 %v2323
        %v2862 = vunpack.c.l.b16 %v2324
        %v2863 = vunpack.c.h.b16 %v2324
        %v2864 = vunpack.c.l.b16 %v2325
        %v2865 = vunpack.c.h.b16 %v2325
        %v2866 = vunpack.c.l.b16 %v2326
        %v2867 = vunpack.c.h.b16 %v2326
        %v2868 = vunpack.c.l.b16 %v2327
        %v2869 = vunpack.c.h.b16 %v2327
        %v2870 = vunpack.c.l.b16 %v2328
        %v2871 = vunpack.c.l.b16 %v2329
        %v2872 = vunpack.c.h.b16 %v2329
        %v2873 = vunpack.c.l.b16 %v2330
        %v2874 = vunpack.c.h.b16 %v2330
        %v2875 = vunpack.c.l.b16 %v2331
        %v2876 = vunpack.c.h.b16 %v2331
        %v2877 = vunpack.c.l.b16 %v2332
        %v2878 = vunpack.c.h.b16 %v2332
        %v2879 = vunpack.c.l.b16 %v2333
        %v2880 = vunpack.c.l.b16 %v2334
        %v2881 = vunpack.c.h.b16 %v2334
        %v2882 = vunpack.c.l.b16 %v2335
        %v2883 = vunpack.c.h.b16 %v2335
        %v2884 = vunpack.c.l.b16 %v2336
        %v2885 = vunpack.c.h.b16 %v2336
        %v2886 = vunpack.c.l.b16 %v2337
        %v2887 = vunpack.c.h.b16 %v2337
        %v2888 = vunpack.c.l.b16 %v2338
        %v2889 = vunpack.c.l.b16 %v2339
        %v2890 = vunpack.c.h.b16 %v2339
        %v2891 = vunpack.c.l.b16 %v2340
        %v2892 = vunpack.c.h.b16 %v2340
        %v2893 = vunpack.c.l.b16 %v2341
        %v2894 = vunpack.c.h.b16 %v2341
        %v2895 = vunpack.c.l.b16 %v2342
        %v2896 = vunpack.c.h.b16 %v2342
        %v2897 = vunpack.c.l.b16 %v2343
        %v2898 = vunpack.c.l.b16 %v2344
        %v2899 = vunpack.c.h.b16 %v2344
        %v2900 = vunpack.c.l.b16 %v2345
        %v2901 = vunpack.c.h.b16 %v2345
        %v2902 = vunpack.c.l.b16 %v2346
        %v2903 = vunpack.c.h.b16 %v2346
        %v2904 = vunpack.c.l.b16 %v2347
        %v2905 = vunpack.c.h.b16 %v2347
        %v2906 = vunpack.c.l.b16 %v2348
        %v2907 = vunpack.c.l.b16 %v2349
        %v2908 = vunpack.c.h.b16 %v2349
        %v2909 = vunpack.c.l.b16 %v2350
        %v2910 = vunpack.c.h.b16 %v2350
        %v2911 = vunpack.c.l.b16 %v2351
        %v2912 = vunpack.c.h.b16 %v2351
        %v2913 = vunpack.c.l.b16 %v2352
        %v2914 = vunpack.c.h.b16 %v2352
        %v2915 = vunpack.c.l.b16 %v2353
        %v2916 = vunpack.c.l.b16 %v2354
        %v2917 = vunpack.c.h.b16 %v2354
        %v2918 = vunpack.c.l.b16 %v2355
        %v2919 = vunpack.c.h.b16 %v2355
        %v2920 = vunpack.c.l.b16 %v2356
        %v2921 = vunpack.c.h.b16 %v2356
        %v2922 = vunpack.c.l.b16 %v2357
        %v2923 = vunpack.c.h.b16 %v2357
        %v2924 = vunpack.c.l.b16 %v2358
        %v2925 = vunpack.c.l.b16 %v2359
        %v2926 = vunpack.c.h.b16 %v2359
        %v2927 = vunpack.c.l.b16 %v2360
        %v2928 = vunpack.c.h.b16 %v2360
        %v2929 = vunpack.c.l.b16 %v2361
        %v2930 = vunpack.c.h.b16 %v2361
        %v2931 = vunpack.c.l.b16 %v2362
        %v2932 = vunpack.c.h.b16 %v2362
        %v2933 = vunpack.c.l.b16 %v2363
        %v2934 = vunpack.c.l.b16 %v2364
        %v2935 = vunpack.c.h.b16 %v2364
        %v2936 = vunpack.c.l.b16 %v2365
        %v2937 = vunpack.c.h.b16 %v2365
        %v2938 = vunpack.c.l.b16 %v2366
        %v2939 = vunpack.c.h.b16 %v2366
        %v2940 = vunpack.c.l.b16 %v2367
        %v2941 = vunpack.c.h.b16 %v2367
        %v2942 = vunpack.c.l.b16 %v2368
        %v2943 = vunpack.c.l.b16 %v2369
        %v2944 = vunpack.c.h.b16 %v2369
        %v2945 = vunpack.c.l.b16 %v2370
        %v2946 = vunpack.c.h.b16 %v2370
        %v2947 = vunpack.c.l.b16 %v2371
        %v2948 = vunpack.c.h.b16 %v2371
        %v2949 = vunpack.c.l.b16 %v2372
        %v2950 = vunpack.c.h.b16 %v2372
        %v2951 = vunpack.c.l.b16 %v2373
        %v2952 = vunpack.c.l.b16 %v2374
        %v2953 = vunpack.c.h.b16 %v2374
        %v2954 = vunpack.c.l.b16 %v2375
        %v2955 = vunpack.c.h.b16 %v2375
        %v2956 = vunpack.c.l.b16 %v2376
        %v2957 = vunpack.c.h.b16 %v2376
        %v2958 = vunpack.c.l.b16 %v2377
        %v2959 = vunpack.c.h.b16 %v2377
        %v2960 = vunpack.c.l.b16 %v2378
        %v2961 = vunpack.c.l.b16 %v2379
        %v2962 = vunpack.c.h.b16 %v2379
        %v2963 = vunpack.c.l.b16 %v2380
        %v2964 = vunpack.c.h.b16 %v2380
        %v2965 = vunpack.c.l.b16 %v2381
        %v2966 = vunpack.c.h.b16 %v2381
        %v2967 = vunpack.c.l.b16 %v2382
        %v2968 = vunpack.c.h.b16 %v2382
        %v2969 = vunpack.c.l.b16 %v2383
        %v2970 = vunpack.c.l.b16 %v2384
        %v2971 = vunpack.c.h.b16 %v2384
        %v2972 = vunpack.c.l.b16 %v2385
        %v2973 = vunpack.c.h.b16 %v2385
        %v2974 = vunpack.c.l.b16 %v2386
        %v2975 = vunpack.c.h.b16 %v2386
        %v2976 = vunpack.c.l.b16 %v2387
        %v2977 = vunpack.c.h.b16 %v2387
        %v2978 = vunpack.c.l.b16 %v2388
        %v2979 = vunpack.c.l.b16 %v2389
        %v2980 = vunpack.c.h.b16 %v2389
        %v2981 = vunpack.c.l.b16 %v2390
        %v2982 = vunpack.c.h.b16 %v2390
        %v2983 = vunpack.c.l.b16 %v2391
        %v2984 = vunpack.c.h.b16 %v2391
        %v2985 = vunpack.c.l.b16 %v2392
        %v2986 = vunpack.c.h.b16 %v2392
        %v2987 = vunpack.c.l.b16 %v2393
        %v2988 = vunpack.c.l.b16 %v2394
        %v2989 = vunpack.c.h.b16 %v2394
        %v2990 = vunpack.c.l.b16 %v2395
        %v2991 = vunpack.c.h.b16 %v2395
        %v2992 = vunpack.c.l.b16 %v2396
        %v2993 = vunpack.c.h.b16 %v2396
        %v2994 = vunpack.c.l.b16 %v2397
        %v2995 = vunpack.c.h.b16 %v2397
        %v2996 = vunpack.c.l.b16 %v2398
        %v2997 = vunpack.c.l.b16 %v2399
        %v2998 = vunpack.c.h.b16 %v2399
        %v2999 = vunpack.c.l.b16 %v2400
        %v3000 = vunpack.c.h.b16 %v2400
        %v3001 = vunpack.c.l.b16 %v2401
        %v3002 = vunpack.c.h.b16 %v2401
        %v3003 = vunpack.c.l.b16 %v2402
        %v3004 = vunpack.c.h.b16 %v2402
        %v3005 = vunpack.c.l.b16 %v2403
        %v3006 = vunpack.c.l.b16 %v2404
        %v3007 = vunpack.c.h.b16 %v2404
        %v3008 = vunpack.c.l.b16 %v2405
        %v3009 = vunpack.c.h.b16 %v2405
        %v3010 = vunpack.c.l.b16 %v2406
        %v3011 = vunpack.c.h.b16 %v2406
        %v3012 = vunpack.c.l.b16 %v2407
        %v3013 = vunpack.c.h.b16 %v2407
        %v3014 = vunpack.c.l.b16 %v2408
        %v3015 = vunpack.c.l.b16 %v2409
        %v3016 = vunpack.c.h.b16 %v2409
        %v3017 = vunpack.c.l.b16 %v2410
        %v3018 = vunpack.c.h.b16 %v2410
        %v3019 = vunpack.c.l.b16 %v2411
        %v3020 = vunpack.c.h.b16 %v2411
        %v3021 = vunpack.c.l.b16 %v2412
        %v3022 = vunpack.c.h.b16 %v2412
        %v3023 = vunpack.c.l.b16 %v2413
        %v3024 = vunpack.c.l.b16 %v2414
        %v3025 = vunpack.c.h.b16 %v2414
        %v3026 = vunpack.c.l.b16 %v2415
        %v3027 = vunpack.c.h.b16 %v2415
        %v3028 = vunpack.c.l.b16 %v2416
        %v3029 = vunpack.c.h.b16 %v2416
        %v3030 = vunpack.c.l.b16 %v2417
        %v3031 = vunpack.c.h.b16 %v2417
        %v3032 = vunpack.c.l.b16 %v2418
        %v3033 = vunpack.c.l.b16 %v2419
        %v3034 = vunpack.c.h.b16 %v2419
        %v3035 = vunpack.c.l.b16 %v2420
        %v3036 = vunpack.c.h.b16 %v2420
        %v3037 = vunpack.c.l.b16 %v2421
        %v3038 = vunpack.c.h.b16 %v2421
        %v3039 = vunpack.c.l.b16 %v2422
        %v3040 = vunpack.c.h.b16 %v2422
        %v3041 = vunpack.c.l.b16 %v2423
        %v3042 = vunpack.c.l.b16 %v2424
        %v3043 = vunpack.c.h.b16 %v2424
        %v3044 = vunpack.c.l.b16 %v2425
        %v3045 = vunpack.c.h.b16 %v2425
        %v3046 = vunpack.c.l.b16 %v2426
        %v3047 = vunpack.c.h.b16 %v2426
        %v3048 = vunpack.c.l.b16 %v2427
        %v3049 = vunpack.c.h.b16 %v2427
        %v3050 = vunpack.c.l.b16 %v2428
        %v3051 = vunpack.c.l.b16 %v2429
        %v3052 = vunpack.c.h.b16 %v2429
        %v3053 = vunpack.c.l.b16 %v2430
        %v3054 = vunpack.c.h.b16 %v2430
        %v3055 = vunpack.c.l.b16 %v2431
        %v3056 = vunpack.c.h.b16 %v2431
        %v3057 = vunpack.c.l.b16 %v2432
        %v3058 = vunpack.c.h.b16 %v2432
        %v3059 = vunpack.c.l.b16 %v2433
        %v3060 = vunpack.c.l.b16 %v2434
        %v3061 = vunpack.c.h.b16 %v2434
        %v3062 = vunpack.c.l.b16 %v2435
        %v3063 = vunpack.c.h.b16 %v2435
        %v3064 = vunpack.c.l.b16 %v2436
        %v3065 = vunpack.c.h.b16 %v2436
        %v3066 = vunpack.c.l.b16 %v2437
        %v3067 = vunpack.c.h.b16 %v2437
        %v3068 = vunpack.c.l.b16 %v2438
        %v3069 = vunpack.c.l.b16 %v2439
        %v3070 = vunpack.c.h.b16 %v2439
        %v3071 = vunpack.c.l.b16 %v2440
        %v3072 = vunpack.c.h.b16 %v2440
        %v3073 = vunpack.c.l.b16 %v2441
        %v3074 = vunpack.c.h.b16 %v2441
        %v3075 = vunpack.c.l.b16 %v2442
        %v3076 = vunpack.c.h.b16 %v2442
        %v3077 = vunpack.c.l.b16 %v2443
        %v3078 = vunpack.c.l.b16 %v2444
        %v3079 = vunpack.c.h.b16 %v2444
        %v3080 = vunpack.c.l.b16 %v2445
        %v3081 = vunpack.c.h.b16 %v2445
        %v3082 = vunpack.c.l.b16 %v2446
        %v3083 = vunpack.c.h.b16 %v2446
        %v3084 = vunpack.c.l.b16 %v2447
        %v3085 = vunpack.c.h.b16 %v2447
        %v3086 = vunpack.c.l.b16 %v2448
        %v3087 = vunpack.c.l.b16 %v2449
        %v3088 = vunpack.c.h.b16 %v2449
        %v3089 = vunpack.c.l.b16 %v2450
        %v3090 = vunpack.c.h.b16 %v2450
        %v3091 = vunpack.c.l.b16 %v2451
        %v3092 = vunpack.c.h.b16 %v2451
        %v3093 = vunpack.c.l.b16 %v2452
        %v3094 = vunpack.c.h.b16 %v2452
        %v3095 = vunpack.c.l.b16 %v2453
        %v3096 = vunpack.c.l.b16 %v2454
        %v3097 = vunpack.c.h.b16 %v2454
        %v3098 = vunpack.c.l.b16 %v2455
        %v3099 = vunpack.c.h.b16 %v2455
        %v3100 = vunpack.c.l.b16 %v2456
        %v3101 = vunpack.c.h.b16 %v2456
        %v3102 = vunpack.c.l.b16 %v2457
        %v3103 = vunpack.c.h.b16 %v2457
        %v3104 = vunpack.c.l.b16 %v2458
        %v3105 = vunpack.c.l.b16 %v2459
        %v3106 = vunpack.c.h.b16 %v2459
        %v3107 = vunpack.c.l.b16 %v2460
        %v3108 = vunpack.c.h.b16 %v2460
        %v3109 = vunpack.c.l.b16 %v2461
        %v3110 = vunpack.c.h.b16 %v2461
        %v3111 = vunpack.c.l.b16 %v2462
        %v3112 = vunpack.c.h.b16 %v2462
        %v3113 = vunpack.c.l.b16 %v2463
        %v3114 = vunpack.c.l.b16 %v2464
        %v3115 = vunpack.c.h.b16 %v2464
        %v3116 = vunpack.c.l.b16 %v2465
        %v3117 = vunpack.c.h.b16 %v2465
        %v3118 = vunpack.c.l.b16 %v2466
        %v3119 = vunpack.c.h.b16 %v2466
        %v3120 = vunpack.c.l.b16 %v2467
        %v3121 = vunpack.c.h.b16 %v2467
        %v3122 = vunpack.c.l.b16 %v2468
        %v3123 = vunpack.c.l.b16 %v2469
        %v3124 = vunpack.c.h.b16 %v2469
        %v3125 = vunpack.c.l.b16 %v2470
        %v3126 = vunpack.c.h.b16 %v2470
        %v3127 = vunpack.c.l.b16 %v2471
        %v3128 = vunpack.c.h.b16 %v2471
        %v3129 = vunpack.c.l.b16 %v2472
        %v3130 = vunpack.c.h.b16 %v2472
        %v3131 = vunpack.c.l.b16 %v2473
        %v3132 = vunpack.c.l.b16 %v2474
        %v3133 = vunpack.c.h.b16 %v2474
        %v3134 = vunpack.c.l.b16 %v2475
        %v3135 = vunpack.c.h.b16 %v2475
        %v3136 = vunpack.c.l.b16 %v2476
        %v3137 = vunpack.c.h.b16 %v2476
        %v3138 = vunpack.c.l.b16 %v2477
        %v3139 = vunpack.c.h.b16 %v2477
        %v3140 = vunpack.c.l.b16 %v2478
        %v3141 = vunpack.c.l.b16 %v2479
        %v3142 = vunpack.c.h.b16 %v2479
        %v3143 = vunpack.c.l.b16 %v2480
        %v3144 = vunpack.c.h.b16 %v2480
        %v3145 = vunpack.c.l.b16 %v2481
        %v3146 = vunpack.c.h.b16 %v2481
        %v3147 = vunpack.c.l.b16 %v2482
        %v3148 = vunpack.c.h.b16 %v2482
        %v3149 = vunpack.c.l.b16 %v2483
        %v3150 = vunpack.c.l.b16 %v2484
        %v3151 = vunpack.c.h.b16 %v2484
        %v3152 = vunpack.c.l.b16 %v2485
        %v3153 = vunpack.c.h.b16 %v2485
        %v3154 = vunpack.c.l.b16 %v2486
        %v3155 = vunpack.c.h.b16 %v2486
        %v3156 = vunpack.c.l.b16 %v2487
        %v3157 = vunpack.c.h.b16 %v2487
        %v3158 = vunpack.c.l.b16 %v2488
        %v3159 = vunpack.c.l.b16 %v2489
        %v3160 = vunpack.c.h.b16 %v2489
        %v3161 = vunpack.c.l.b16 %v2490
        %v3162 = vunpack.c.h.b16 %v2490
        %v3163 = vunpack.c.l.b16 %v2491
        %v3164 = vunpack.c.h.b16 %v2491
        %v3165 = vunpack.c.l.b16 %v2492
        %v3166 = vunpack.c.h.b16 %v2492
        %v3167 = vunpack.c.l.b16 %v2493
        %v3168 = vunpack.c.l.b16 %v2494
        %v3169 = vunpack.c.h.b16 %v2494
        %v3170 = vunpack.c.l.b16 %v2495
        %v3171 = vunpack.c.h.b16 %v2495
        %v3172 = vunpack.c.l.b16 %v2496
        %v3173 = vunpack.c.h.b16 %v2496
        %v3174 = vunpack.c.l.b16 %v2497
        %v3175 = vunpack.c.h.b16 %v2497
        %v3176 = vunpack.c.l.b16 %v2498
        %v3177 = vunpack.c.l.b16 %v2499
        %v3178 = vunpack.c.h.b16 %v2499
        %v3179 = vunpack.c.l.b16 %v2500
        %v3180 = vunpack.c.h.b16 %v2500
        %v3181 = vunpack.c.l.b16 %v2501
        %v3182 = vunpack.c.h.b16 %v2501
        %v3183 = vunpack.c.l.b16 %v2502
        %v3184 = vunpack.c.h.b16 %v2502
        %v3185 = vunpack.c.l.b16 %v2503
        %v3186 = vunpack.c.l.b16 %v2504
        %v3187 = vunpack.c.h.b16 %v2504
        %v3188 = vunpack.c.l.b16 %v2505
        %v3189 = vunpack.c.h.b16 %v2505
        %v3190 = vunpack.c.l.b16 %v2506
        %v3191 = vunpack.c.h.b16 %v2506
        %v3192 = vunpack.c.l.b16 %v2507
        %v3193 = vunpack.c.h.b16 %v2507
        %v3194 = vunpack.c.l.b16 %v2508
        %v3195 = vunpack.c.l.b16 %v2509
        %v3196 = vunpack.c.h.b16 %v2509
        %v3197 = vunpack.c.l.b16 %v2510
        %v3198 = vunpack.c.h.b16 %v2510
        %v3199 = vunpack.c.l.b16 %v2511
        %v3200 = vunpack.c.h.b16 %v2511
        %v3201 = vunpack.c.l.b16 %v2512
        %v3202 = vunpack.c.h.b16 %v2512
        %v3203 = vunpack.c.l.b16 %v2513
        %v3204 = vunpack.c.l.b16 %v2514
        %v3205 = vunpack.c.h.b16 %v2514
        %v3206 = vunpack.c.l.b16 %v2515
        %v3207 = vunpack.c.h.b16 %v2515
        %v3208 = vunpack.c.l.b16 %v2516
        %v3209 = vunpack.c.h.b16 %v2516
        %v3210 = vunpack.c.l.b16 %v2517
        %v3211 = vunpack.c.h.b16 %v2517
        %v3212 = vunpack.c.l.b16 %v2518
        %v3213 = vpack.c.b16 %v2790, %v2781
        %v3214 = vpack.c.b16 %v2791, %v2782
        %v3215 = vpack.c.b16 %v2792, %v2783
        %v3216 = vpack.c.b16 %v2793, %v2784
        %v3217 = vpack.c.b16 %v2794, %v2785
        %v3218 = vpack.c.b16 %v2795, %v2786
        %v3219 = vpack.c.b16 %v2796, %v2787
        %v3220 = vpack.c.b16 %v2797, %v2788
        %v3221 = vpack.c.b16 %v2798, %v2789
        %v3222 = vpack.c.b16 %v2808, %v2799
        %v3223 = vpack.c.b16 %v2809, %v2800
        %v3224 = vpack.c.b16 %v2810, %v2801
        %v3225 = vpack.c.b16 %v2811, %v2802
        %v3226 = vpack.c.b16 %v2812, %v2803
        %v3227 = vpack.c.b16 %v2813, %v2804
        %v3228 = vpack.c.b16 %v2814, %v2805
        %v3229 = vpack.c.b16 %v2815, %v2806
        %v3230 = vpack.c.b16 %v2816, %v2807
        %v3231 = vpack.c.b16 %v2826, %v2817
        %v3232 = vpack.c.b16 %v2827, %v2818
        %v3233 = vpack.c.b16 %v2828, %v2819
        %v3234 = vpack.c.b16 %v2829, %v2820
        %v3235 = vpack.c.b16 %v2830, %v2821
        %v3236 = vpack.c.b16 %v2831, %v2822
        %v3237 = vpack.c.b16 %v2832, %v2823
        %v3238 = vpack.c.b16 %v2833, %v2824
        %v3239 = vpack.c.b16 %v2834, %v2825
        %v3240 = vpack.c.b16 %v2844, %v2835
        %v3241 = vpack.c.b16 %v2845, %v2836
        %v3242 = vpack.c.b16 %v2846, %v2837
        %v3243 = vpack.c.b16 %v2847, %v2838
        %v3244 = vpack.c.b16 %v2848, %v2839
        %v3245 = vpack.c.b16 %v2849, %v2840
        %v3246 = vpack.c.b16 %v2850, %v2841
        %v3247 = vpack.c.b16 %v2851, %v2842
        %v3248 = vpack.c.b16 %v2852, %v2843
        %v3249 = vpack.c.b16 %v2862, %v2853
        %v3250 = vpack.c.b16 %v2863, %v2854
        %v3251 = vpack.c.b16 %v2864, %v2855
        %v3252 = vpack.c.b16 %v2865, %v2856
        %v3253 = vpack.c.b16 %v2866, %v2857
        %v3254 = vpack.c.b16 %v2867, %v2858
        %v3255 = vpack.c.b16 %v2868, %v2859
        %v3256 = vpack.c.b16 %v2869, %v2860
        %v3257 = vpack.c.b16 %v2870, %v2861
        %v3258 = vpack.c.b16 %v2880, %v2871
        %v3259 = vpack.c.b16 %v2881, %v2872
        %v3260 = vpack.c.b16 %v2882, %v2873
        %v3261 = vpack.c.b16 %v2883, %v2874
        %v3262 = vpack.c.b16 %v2884, %v2875
        %v3263 = vpack.c.b16 %v2885, %v2876
        %v3264 = vpack.c.b16 %v2886, %v2877
        %v3265 = vpack.c.b16 %v2887, %v2878
        %v3266 = vpack.c.b16 %v2888, %v2879
        %v3267 = vpack.c.b16 %v2898, %v2889
        %v3268 = vpack.c.b16 %v2899, %v2890
        %v3269 = vpack.c.b16 %v2900, %v2891
        %v3270 = vpack.c.b16 %v2901, %v2892
        %v3271 = vpack.c.b16 %v2902, %v2893
        %v3272 = vpack.c.b16 %v2903, %v2894
        %v3273 = vpack.c.b16 %v2904, %v2895
        %v3274 = vpack.c.b16 %v2905, %v2896
        %v3275 = vpack.c.b16 %v2906, %v2897
        %v3276 = vpack.c.b16 %v2916, %v2907
        %v3277 = vpack.c.b16 %v2917, %v2908
        %v3278 = vpack.c.b16 %v2918, %v2909
        %v3279 = vpack.c.b16 %v2919, %v2910
        %v3280 = vpack.c.b16 %v2920, %v2911
        %v3281 = vpack.c.b16 %v2921, %v2912
        %v3282 = vpack.c.b16 %v2922, %v2913
        %v3283 = vpack.c.b16 %v2923, %v2914
        %v3284 = vpack.c.b16 %v2924, %v2915
        %v3285 = vpack.c.b16 %v2934, %v2925
        %v3286 = vpack.c.b16 %v2935, %v2926
        %v3287 = vpack.c.b16 %v2936, %v2927
        %v3288 = vpack.c.b16 %v2937, %v2928
        %v3289 = vpack.c.b16 %v2938, %v2929
        %v3290 = vpack.c.b16 %v2939, %v2930
        %v3291 = vpack.c.b16 %v2940, %v2931
        %v3292 = vpack.c.b16 %v2941, %v2932
        %v3293 = vpack.c.b16 %v2942, %v2933
        %v3294 = vpack.c.b16 %v2952, %v2943
        %v3295 = vpack.c.b16 %v2953, %v2944
        %v3296 = vpack.c.b16 %v2954, %v2945
        %v3297 = vpack.c.b16 %v2955, %v2946
        %v3298 = vpack.c.b16 %v2956, %v2947
        %v3299 = vpack.c.b16 %v2957, %v2948
        %v3300 = vpack.c.b16 %v2958, %v2949
        %v3301 = vpack.c.b16 %v2959, %v2950
        %v3302 = vpack.c.b16 %v2960, %v2951
        %v3303 = vpack.c.b16 %v2970, %v2961
        %v3304 = vpack.c.b16 %v2971, %v2962
        %v3305 = vpack.c.b16 %v2972, %v2963
        %v3306 = vpack.c.b16 %v2973, %v2964
        %v3307 = vpack.c.b16 %v2974, %v2965
        %v3308 = vpack.c.b16 %v2975, %v2966
        %v3309 = vpack.c.b16 %v2976, %v2967
        %v3310 = vpack.c.b16 %v2977, %v2968
        %v3311 = vpack.c.b16 %v2978, %v2969
        %v3312 = vpack.c.b16 %v2988, %v2979
        %v3313 = vpack.c.b16 %v2989, %v2980
        %v3314 = vpack.c.b16 %v2990, %v2981
        %v3315 = vpack.c.b16 %v2991, %v2982
        %v3316 = vpack.c.b16 %v2992, %v2983
        %v3317 = vpack.c.b16 %v2993, %v2984
        %v3318 = vpack.c.b16 %v2994, %v2985
        %v3319 = vpack.c.b16 %v2995, %v2986
        %v3320 = vpack.c.b16 %v2996, %v2987
        %v3321 = vpack.c.b16 %v3006, %v2997
        %v3322 = vpack.c.b16 %v3007, %v2998
        %v3323 = vpack.c.b16 %v3008, %v2999
        %v3324 = vpack.c.b16 %v3009, %v3000
        %v3325 = vpack.c.b16 %v3010, %v3001
        %v3326 = vpack.c.b16 %v3011, %v3002
        %v3327 = vpack.c.b16 %v3012, %v3003
        %v3328 = vpack.c.b16 %v3013, %v3004
        %v3329 = vpack.c.b16 %v3014, %v3005
        %v3330 = vpack.c.b16 %v3024, %v3015
        %v3331 = vpack.c.b16 %v3025, %v3016
        %v3332 = vpack.c.b16 %v3026, %v3017
        %v3333 = vpack.c.b16 %v3027, %v3018
        %v3334 = vpack.c.b16 %v3028, %v3019
        %v3335 = vpack.c.b16 %v3029, %v3020
        %v3336 = vpack.c.b16 %v3030, %v3021
        %v3337 = vpack.c.b16 %v3031, %v3022
        %v3338 = vpack.c.b16 %v3032, %v3023
        %v3339 = vpack.c.b16 %v3042, %v3033
        %v3340 = vpack.c.b16 %v3043, %v3034
        %v3341 = vpack.c.b16 %v3044, %v3035
        %v3342 = vpack.c.b16 %v3045, %v3036
        %v3343 = vpack.c.b16 %v3046, %v3037
        %v3344 = vpack.c.b16 %v3047, %v3038
        %v3345 = vpack.c.b16 %v3048, %v3039
        %v3346 = vpack.c.b16 %v3049, %v3040
        %v3347 = vpack.c.b16 %v3050, %v3041
        %v3348 = vpack.c.b16 %v3060, %v3051
        %v3349 = vpack.c.b16 %v3061, %v3052
        %v3350 = vpack.c.b16 %v3062, %v3053
        %v3351 = vpack.c.b16 %v3063, %v3054
        %v3352 = vpack.c.b16 %v3064, %v3055
        %v3353 = vpack.c.b16 %v3065, %v3056
        %v3354 = vpack.c.b16 %v3066, %v3057
        %v3355 = vpack.c.b16 %v3067, %v3058
        %v3356 = vpack.c.b16 %v3068, %v3059
        %v3357 = vpack.c.b16 %v3078, %v3069
        %v3358 = vpack.c.b16 %v3079, %v3070
        %v3359 = vpack.c.b16 %v3080, %v3071
        %v3360 = vpack.c.b16 %v3081, %v3072
        %v3361 = vpack.c.b16 %v3082, %v3073
        %v3362 = vpack.c.b16 %v3083, %v3074
        %v3363 = vpack.c.b16 %v3084, %v3075
        %v3364 = vpack.c.b16 %v3085, %v3076
        %v3365 = vpack.c.b16 %v3086, %v3077
        %v3366 = vpack.c.b16 %v3096, %v3087
        %v3367 = vpack.c.b16 %v3097, %v3088
        %v3368 = vpack.c.b16 %v3098, %v3089
        %v3369 = vpack.c.b16 %v3099, %v3090
        %v3370 = vpack.c.b16 %v3100, %v3091
        %v3371 = vpack.c.b16 %v3101, %v3092
        %v3372 = vpack.c.b16 %v3102, %v3093
        %v3373 = vpack.c.b16 %v3103, %v3094
        %v3374 = vpack.c.b16 %v3104, %v3095
        %v3375 = vpack.c.b16 %v3114, %v3105
        %v3376 = vpack.c.b16 %v3115, %v3106
        %v3377 = vpack.c.b16 %v3116, %v3107
        %v3378 = vpack.c.b16 %v3117, %v3108
        %v3379 = vpack.c.b16 %v3118, %v3109
        %v3380 = vpack.c.b16 %v3119, %v3110
        %v3381 = vpack.c.b16 %v3120, %v3111
        %v3382 = vpack.c.b16 %v3121, %v3112
        %v3383 = vpack.c.b16 %v3122, %v3113
        %v3384 = vpack.c.b16 %v3132, %v3123
        %v3385 = vpack.c.b16 %v3133, %v3124
        %v3386 = vpack.c.b16 %v3134, %v3125
        %v3387 = vpack.c.b16 %v3135, %v3126
        %v3388 = vpack.c.b16 %v3136, %v3127
        %v3389 = vpack.c.b16 %v3137, %v3128
        %v3390 = vpack.c.b16 %v3138, %v3129
        %v3391 = vpack.c.b16 %v3139, %v3130
        %v3392 = vpack.c.b16 %v3140, %v3131
        %v3393 = vpack.c.b16 %v3150, %v3141
        %v3394 = vpack.c.b16 %v3151, %v3142
        %v3395 = vpack.c.b16 %v3152, %v3143
        %v3396 = vpack.c.b16 %v3153, %v3144
        %v3397 = vpack.c.b16 %v3154, %v3145
        %v3398 = vpack.c.b16 %v3155, %v3146
        %v3399 = vpack.c.b16 %v3156, %v3147
        %v3400 = vpack.c.b16 %v3157, %v3148
        %v3401 = vpack.c.b16 %v3158, %v3149
        %v3402 = vpack.c.b16 %v3168, %v3159
        %v3403 = vpack.c.b16 %v3169, %v3160
        %v3404 = vpack.c.b16 %v3170, %v3161
        %v3405 = vpack.c.b16 %v3171, %v3162
        %v3406 = vpack.c.b16 %v3172, %v3163
        %v3407 = vpack.c.b16 %v3173, %v3164
        %v3408 = vpack.c.b16 %v3174, %v3165
        %v3409 = vpack.c.b16 %v3175, %v3166
        %v3410 = vpack.c.b16 %v3176, %v3167
        %v3411 = vpack.c.b16 %v3186, %v3177
        %v3412 = vpack.c.b16 %v3187, %v3178
        %v3413 = vpack.c.b16 %v3188, %v3179
        %v3414 = vpack.c.b16 %v3189, %v3180
        %v3415 = vpack.c.b16 %v3190, %v3181
        %v3416 = vpack.c.b16 %v3191, %v3182
        %v3417 = vpack.c.b16 %v3192, %v3183
        %v3418 = vpack.c.b16 %v3193, %v3184
        %v3419 = vpack.c.b16 %v3194, %v3185
        %v3420 = vpack.c.b16 %v3204, %v3195
        %v3421 = vpack.c.b16 %v3205, %v3196
        %v3422 = vpack.c.b16 %v3206, %v3197
        %v3423 = vpack.c.b16 %v3207, %v3198
        %v3424 = vpack.c.b16 %v3208, %v3199
        %v3425 = vpack.c.b16 %v3209, %v3200
        %v3426 = vpack.c.b16 %v3210, %v3201
        %v3427 = vpack.c.b16 %v3211, %v3202
        %v3428 = vpack.c.b16 %v3212, %v3203
        %3645 = vmatpush.bf16.msra.mxu0 %v3276
        %3646 = vmatpush.bf16.msra.mxu0 %v3267
        %3647 = vmatpush.bf16.msra.mxu0 %v3258
        %3648 = vmatpush.bf16.msra.mxu0 %v3249
        %3649 = vmatpush.bf16.msra.mxu0 %v3240
        %3650 = vmatpush.bf16.msra.mxu0 %v3231
        %3651 = vmatpush.bf16.msra.mxu0 %v3222
        %3652 = vmatpush.bf16.msra.mxu0 %v3213
        %3653 = vmatmul.bf16.gmra.mxu0 %v2276
        %v3654 = vpop.f32.mrf.mxu0
        %v3655 = vadd.f32 %v2523, %v3654
        %v3656 = vpop.f32.mrf.mxu0
        %v3657 = vadd.f32 %v2523, %v3656
        %3658 = vdwg.mxu0
        %3659 = vmatpush.bf16.msra.mxu0 %v3348
        %3660 = vmatpush.bf16.msra.mxu0 %v3339
        %3661 = vmatpush.bf16.msra.mxu0 %v3330
        %3662 = vmatpush.bf16.msra.mxu0 %v3321
        %3663 = vmatpush.bf16.msra.mxu0 %v3312
        %3664 = vmatpush.bf16.msra.mxu0 %v3303
        %3665 = vmatpush.bf16.msra.mxu0 %v3294
        %3666 = vmatpush.bf16.msra.mxu0 %v3285
        %3667 = vmatmul.bf16.gmra.mxu0 %v2277
        %v3668 = vpop.f32.mrf.mxu0
        %v3669 = vadd.f32 %v3655, %v3668
        %v3670 = vpop.f32.mrf.mxu0
        %v3671 = vadd.f32 %v3657, %v3670
        %3672 = vdwg.mxu0
        %3673 = vmatpush.bf16.msra.mxu0 %v3420
        %3674 = vmatpush.bf16.msra.mxu0 %v3411
        %3675 = vmatpush.bf16.msra.mxu0 %v3402
        %3676 = vmatpush.bf16.msra.mxu0 %v3393
        %3677 = vmatpush.bf16.msra.mxu0 %v3384
        %3678 = vmatpush.bf16.msra.mxu0 %v3375
        %3679 = vmatpush.bf16.msra.mxu0 %v3366
        %3680 = vmatpush.bf16.msra.mxu0 %v3357
        %3681 = vmatmul.bf16.gmra.mxu0 %v2278
        %v3682 = vpop.f32.mrf.mxu0
        %v3683 = vadd.f32 %v3669, %v3682
        %v3684 = vpop.f32.mrf.mxu0
        %v3685 = vadd.f32 %v3671, %v3684
        %3686 = vdwg.mxu0
        %3687 = vmatpush.bf16.msra.mxu0 %v3277
        %3688 = vmatpush.bf16.msra.mxu0 %v3268
        %3689 = vmatpush.bf16.msra.mxu0 %v3259
        %3690 = vmatpush.bf16.msra.mxu0 %v3250
        %3691 = vmatpush.bf16.msra.mxu0 %v3241
        %3692 = vmatpush.bf16.msra.mxu0 %v3232
        %3693 = vmatpush.bf16.msra.mxu0 %v3223
        %3694 = vmatpush.bf16.msra.mxu0 %v3214
        %3695 = vmatmul.bf16.gmra.mxu0 %v2276
        %v3696 = vpop.f32.mrf.mxu0
        %v3697 = vadd.f32 %v2524, %v3696
        %v3698 = vpop.f32.mrf.mxu0
        %v3699 = vadd.f32 %v2524, %v3698
        %3700 = vdwg.mxu0
        %3701 = vmatpush.bf16.msra.mxu0 %v3349
        %3702 = vmatpush.bf16.msra.mxu0 %v3340
        %3703 = vmatpush.bf16.msra.mxu0 %v3331
        %3704 = vmatpush.bf16.msra.mxu0 %v3322
        %3705 = vmatpush.bf16.msra.mxu0 %v3313
        %3706 = vmatpush.bf16.msra.mxu0 %v3304
        %3707 = vmatpush.bf16.msra.mxu0 %v3295
        %3708 = vmatpush.bf16.msra.mxu0 %v3286
        %3709 = vmatmul.bf16.gmra.mxu0 %v2277
        %v3710 = vpop.f32.mrf.mxu0
        %v3711 = vadd.f32 %v3697, %v3710
        %v3712 = vpop.f32.mrf.mxu0
        %v3713 = vadd.f32 %v3699, %v3712
        %3714 = vdwg.mxu0
        %3715 = vmatpush.bf16.msra.mxu0 %v3421
        %3716 = vmatpush.bf16.msra.mxu0 %v3412
        %3717 = vmatpush.bf16.msra.mxu0 %v3403
        %3718 = vmatpush.bf16.msra.mxu0 %v3394
        %3719 = vmatpush.bf16.msra.mxu0 %v3385
        %3720 = vmatpush.bf16.msra.mxu0 %v3376
        %3721 = vmatpush.bf16.msra.mxu0 %v3367
        %3722 = vmatpush.bf16.msra.mxu0 %v3358
        %3723 = vmatmul.bf16.gmra.mxu0 %v2278
        %v3724 = vpop.f32.mrf.mxu0
        %v3725 = vadd.f32 %v3711, %v3724
        %v3726 = vpop.f32.mrf.mxu0
        %v3727 = vadd.f32 %v3713, %v3726
        %3728 = vdwg.mxu0
        %3729 = vmatpush.bf16.msra.mxu0 %v3278
        %3730 = vmatpush.bf16.msra.mxu0 %v3269
        %3731 = vmatpush.bf16.msra.mxu0 %v3260
        %3732 = vmatpush.bf16.msra.mxu0 %v3251
        %3733 = vmatpush.bf16.msra.mxu0 %v3242
        %3734 = vmatpush.bf16.msra.mxu0 %v3233
        %3735 = vmatpush.bf16.msra.mxu0 %v3224
        %3736 = vmatpush.bf16.msra.mxu0 %v3215
        %3737 = vmatmul.bf16.gmra.mxu0 %v2276
        %v3738 = vpop.f32.mrf.mxu0
        %v3739 = vadd.f32 %v2525, %v3738
        %v3740 = vpop.f32.mrf.mxu0
        %v3741 = vadd.f32 %v2525, %v3740
        %3742 = vdwg.mxu0
        %3743 = vmatpush.bf16.msra.mxu0 %v3350
        %3744 = vmatpush.bf16.msra.mxu0 %v3341
        %3745 = vmatpush.bf16.msra.mxu0 %v3332
        %3746 = vmatpush.bf16.msra.mxu0 %v3323
        %3747 = vmatpush.bf16.msra.mxu0 %v3314
        %3748 = vmatpush.bf16.msra.mxu0 %v3305
        %3749 = vmatpush.bf16.msra.mxu0 %v3296
        %3750 = vmatpush.bf16.msra.mxu0 %v3287
        %3751 = vmatmul.bf16.gmra.mxu0 %v2277
        %v3752 = vpop.f32.mrf.mxu0
        %v3753 = vadd.f32 %v3739, %v3752
        %v3754 = vpop.f32.mrf.mxu0
        %v3755 = vadd.f32 %v3741, %v3754
        %3756 = vdwg.mxu0
        %3757 = vmatpush.bf16.msra.mxu0 %v3422
        %3758 = vmatpush.bf16.msra.mxu0 %v3413
        %3759 = vmatpush.bf16.msra.mxu0 %v3404
        %3760 = vmatpush.bf16.msra.mxu0 %v3395
        %3761 = vmatpush.bf16.msra.mxu0 %v3386
        %3762 = vmatpush.bf16.msra.mxu0 %v3377
        %3763 = vmatpush.bf16.msra.mxu0 %v3368
        %3764 = vmatpush.bf16.msra.mxu0 %v3359
        %3765 = vmatmul.bf16.gmra.mxu0 %v2278
        %v3766 = vpop.f32.mrf.mxu0
        %v3767 = vadd.f32 %v3753, %v3766
        %v3768 = vpop.f32.mrf.mxu0
        %v3769 = vadd.f32 %v3755, %v3768
        %3770 = vdwg.mxu0
        %3771 = vmatpush.bf16.msra.mxu0 %v3279
        %3772 = vmatpush.bf16.msra.mxu0 %v3270
        %3773 = vmatpush.bf16.msra.mxu0 %v3261
        %3774 = vmatpush.bf16.msra.mxu0 %v3252
        %3775 = vmatpush.bf16.msra.mxu0 %v3243
        %3776 = vmatpush.bf16.msra.mxu0 %v3234
        %3777 = vmatpush.bf16.msra.mxu0 %v3225
        %3778 = vmatpush.bf16.msra.mxu0 %v3216
        %3779 = vmatmul.bf16.gmra.mxu0 %v2276
        %v3780 = vpop.f32.mrf.mxu0
        %v3781 = vadd.f32 %v2526, %v3780
        %v3782 = vpop.f32.mrf.mxu0
        %v3783 = vadd.f32 %v2526, %v3782
        %3784 = vdwg.mxu0
        %3785 = vmatpush.bf16.msra.mxu0 %v3351
        %3786 = vmatpush.bf16.msra.mxu0 %v3342
        %3787 = vmatpush.bf16.msra.mxu0 %v3333
        %3788 = vmatpush.bf16.msra.mxu0 %v3324
        %3789 = vmatpush.bf16.msra.mxu0 %v3315
        %3790 = vmatpush.bf16.msra.mxu0 %v3306
        %3791 = vmatpush.bf16.msra.mxu0 %v3297
        %3792 = vmatpush.bf16.msra.mxu0 %v3288
        %3793 = vmatmul.bf16.gmra.mxu0 %v2277
        %v3794 = vpop.f32.mrf.mxu0
        %v3795 = vadd.f32 %v3781, %v3794
        %v3796 = vpop.f32.mrf.mxu0
        %v3797 = vadd.f32 %v3783, %v3796
        %3798 = vdwg.mxu0
        %3799 = vmatpush.bf16.msra.mxu0 %v3423
        %3800 = vmatpush.bf16.msra.mxu0 %v3414
        %3801 = vmatpush.bf16.msra.mxu0 %v3405
        %3802 = vmatpush.bf16.msra.mxu0 %v3396
        %3803 = vmatpush.bf16.msra.mxu0 %v3387
        %3804 = vmatpush.bf16.msra.mxu0 %v3378
        %3805 = vmatpush.bf16.msra.mxu0 %v3369
        %3806 = vmatpush.bf16.msra.mxu0 %v3360
        %3807 = vmatmul.bf16.gmra.mxu0 %v2278
        %v3808 = vpop.f32.mrf.mxu0
        %v3809 = vadd.f32 %v3795, %v3808
        %v3810 = vpop.f32.mrf.mxu0
        %v3811 = vadd.f32 %v3797, %v3810
        %3812 = vdwg.mxu0
        %3813 = vmatpush.bf16.msra.mxu0 %v3280
        %3814 = vmatpush.bf16.msra.mxu0 %v3271
        %3815 = vmatpush.bf16.msra.mxu0 %v3262
        %3816 = vmatpush.bf16.msra.mxu0 %v3253
        %3817 = vmatpush.bf16.msra.mxu0 %v3244
        %3818 = vmatpush.bf16.msra.mxu0 %v3235
        %3819 = vmatpush.bf16.msra.mxu0 %v3226
        %3820 = vmatpush.bf16.msra.mxu0 %v3217
        %3821 = vmatmul.bf16.gmra.mxu0 %v2276
        %v3822 = vpop.f32.mrf.mxu0
        %v3823 = vadd.f32 %v2527, %v3822
        %v3824 = vpop.f32.mrf.mxu0
        %v3825 = vadd.f32 %v2527, %v3824
        %3826 = vdwg.mxu0
        %3827 = vmatpush.bf16.msra.mxu0 %v3352
        %3828 = vmatpush.bf16.msra.mxu0 %v3343
        %3829 = vmatpush.bf16.msra.mxu0 %v3334
        %3830 = vmatpush.bf16.msra.mxu0 %v3325
        %3831 = vmatpush.bf16.msra.mxu0 %v3316
        %3832 = vmatpush.bf16.msra.mxu0 %v3307
        %3833 = vmatpush.bf16.msra.mxu0 %v3298
        %3834 = vmatpush.bf16.msra.mxu0 %v3289
        %3835 = vmatmul.bf16.gmra.mxu0 %v2277
        %v3836 = vpop.f32.mrf.mxu0
        %v3837 = vadd.f32 %v3823, %v3836
        %v3838 = vpop.f32.mrf.mxu0
        %v3839 = vadd.f32 %v3825, %v3838
        %3840 = vdwg.mxu0
        %3841 = vmatpush.bf16.msra.mxu0 %v3424
        %3842 = vmatpush.bf16.msra.mxu0 %v3415
        %3843 = vmatpush.bf16.msra.mxu0 %v3406
        %3844 = vmatpush.bf16.msra.mxu0 %v3397
        %3845 = vmatpush.bf16.msra.mxu0 %v3388
        %3846 = vmatpush.bf16.msra.mxu0 %v3379
        %3847 = vmatpush.bf16.msra.mxu0 %v3370
        %3848 = vmatpush.bf16.msra.mxu0 %v3361
        %3849 = vmatmul.bf16.gmra.mxu0 %v2278
        %v3850 = vpop.f32.mrf.mxu0
        %v3851 = vadd.f32 %v3837, %v3850
        %v3852 = vpop.f32.mrf.mxu0
        %v3853 = vadd.f32 %v3839, %v3852
        %3854 = vdwg.mxu0
        %3855 = vmatpush.bf16.msra.mxu0 %v3281
        %3856 = vmatpush.bf16.msra.mxu0 %v3272
        %3857 = vmatpush.bf16.msra.mxu0 %v3263
        %3858 = vmatpush.bf16.msra.mxu0 %v3254
        %3859 = vmatpush.bf16.msra.mxu0 %v3245
        %3860 = vmatpush.bf16.msra.mxu0 %v3236
        %3861 = vmatpush.bf16.msra.mxu0 %v3227
        %3862 = vmatpush.bf16.msra.mxu0 %v3218
        %3863 = vmatmul.bf16.gmra.mxu0 %v2276
        %v3864 = vpop.f32.mrf.mxu0
        %v3865 = vadd.f32 %v2528, %v3864
        %v3866 = vpop.f32.mrf.mxu0
        %v3867 = vadd.f32 %v2528, %v3866
        %3868 = vdwg.mxu0
        %3869 = vmatpush.bf16.msra.mxu0 %v3353
        %3870 = vmatpush.bf16.msra.mxu0 %v3344
        %3871 = vmatpush.bf16.msra.mxu0 %v3335
        %3872 = vmatpush.bf16.msra.mxu0 %v3326
        %3873 = vmatpush.bf16.msra.mxu0 %v3317
        %3874 = vmatpush.bf16.msra.mxu0 %v3308
        %3875 = vmatpush.bf16.msra.mxu0 %v3299
        %3876 = vmatpush.bf16.msra.mxu0 %v3290
        %3877 = vmatmul.bf16.gmra.mxu0 %v2277
        %v3878 = vpop.f32.mrf.mxu0
        %v3879 = vadd.f32 %v3865, %v3878
        %v3880 = vpop.f32.mrf.mxu0
        %v3881 = vadd.f32 %v3867, %v3880
        %3882 = vdwg.mxu0
        %3883 = vmatpush.bf16.msra.mxu0 %v3425
        %3884 = vmatpush.bf16.msra.mxu0 %v3416
        %3885 = vmatpush.bf16.msra.mxu0 %v3407
        %3886 = vmatpush.bf16.msra.mxu0 %v3398
        %3887 = vmatpush.bf16.msra.mxu0 %v3389
        %3888 = vmatpush.bf16.msra.mxu0 %v3380
        %3889 = vmatpush.bf16.msra.mxu0 %v3371
        %3890 = vmatpush.bf16.msra.mxu0 %v3362
        %3891 = vmatmul.bf16.gmra.mxu0 %v2278
        %v3892 = vpop.f32.mrf.mxu0
        %v3893 = vadd.f32 %v3879, %v3892
        %v3894 = vpop.f32.mrf.mxu0
        %v3895 = vadd.f32 %v3881, %v3894
        %3896 = vdwg.mxu0
        %3897 = vmatpush.bf16.msra.mxu0 %v3282
        %3898 = vmatpush.bf16.msra.mxu0 %v3273
        %3899 = vmatpush.bf16.msra.mxu0 %v3264
        %3900 = vmatpush.bf16.msra.mxu0 %v3255
        %3901 = vmatpush.bf16.msra.mxu0 %v3246
        %3902 = vmatpush.bf16.msra.mxu0 %v3237
        %3903 = vmatpush.bf16.msra.mxu0 %v3228
        %3904 = vmatpush.bf16.msra.mxu0 %v3219
        %3905 = vmatmul.bf16.gmra.mxu0 %v2276
        %v3906 = vpop.f32.mrf.mxu0
        %v3907 = vadd.f32 %v2529, %v3906
        %v3908 = vpop.f32.mrf.mxu0
        %v3909 = vadd.f32 %v2529, %v3908
        %3910 = vdwg.mxu0
        %3911 = vmatpush.bf16.msra.mxu0 %v3354
        %3912 = vmatpush.bf16.msra.mxu0 %v3345
        %3913 = vmatpush.bf16.msra.mxu0 %v3336
        %3914 = vmatpush.bf16.msra.mxu0 %v3327
        %3915 = vmatpush.bf16.msra.mxu0 %v3318
        %3916 = vmatpush.bf16.msra.mxu0 %v3309
        %3917 = vmatpush.bf16.msra.mxu0 %v3300
        %3918 = vmatpush.bf16.msra.mxu0 %v3291
        %3919 = vmatmul.bf16.gmra.mxu0 %v2277
        %v3920 = vpop.f32.mrf.mxu0
        %v3921 = vadd.f32 %v3907, %v3920
        %v3922 = vpop.f32.mrf.mxu0
        %v3923 = vadd.f32 %v3909, %v3922
        %3924 = vdwg.mxu0
        %3925 = vmatpush.bf16.msra.mxu0 %v3426
        %3926 = vmatpush.bf16.msra.mxu0 %v3417
        %3927 = vmatpush.bf16.msra.mxu0 %v3408
        %3928 = vmatpush.bf16.msra.mxu0 %v3399
        %3929 = vmatpush.bf16.msra.mxu0 %v3390
        %3930 = vmatpush.bf16.msra.mxu0 %v3381
        %3931 = vmatpush.bf16.msra.mxu0 %v3372
        %3932 = vmatpush.bf16.msra.mxu0 %v3363
        %3933 = vmatmul.bf16.gmra.mxu0 %v2278
        %v3934 = vpop.f32.mrf.mxu0
        %v3935 = vadd.f32 %v3921, %v3934
        %v3936 = vpop.f32.mrf.mxu0
        %v3937 = vadd.f32 %v3923, %v3936
        %3938 = vdwg.mxu0
        %3939 = vmatpush.bf16.msra.mxu0 %v3283
        %3940 = vmatpush.bf16.msra.mxu0 %v3274
        %3941 = vmatpush.bf16.msra.mxu0 %v3265
        %3942 = vmatpush.bf16.msra.mxu0 %v3256
        %3943 = vmatpush.bf16.msra.mxu0 %v3247
        %3944 = vmatpush.bf16.msra.mxu0 %v3238
        %3945 = vmatpush.bf16.msra.mxu0 %v3229
        %3946 = vmatpush.bf16.msra.mxu0 %v3220
        %3947 = vmatmul.bf16.gmra.mxu0 %v2276
        %v3948 = vpop.f32.mrf.mxu0
        %v3949 = vadd.f32 %v2530, %v3948
        %v3950 = vpop.f32.mrf.mxu0
        %v3951 = vadd.f32 %v2530, %v3950
        %3952 = vdwg.mxu0
        %3953 = vmatpush.bf16.msra.mxu0 %v3355
        %3954 = vmatpush.bf16.msra.mxu0 %v3346
        %3955 = vmatpush.bf16.msra.mxu0 %v3337
        %3956 = vmatpush.bf16.msra.mxu0 %v3328
        %3957 = vmatpush.bf16.msra.mxu0 %v3319
        %3958 = vmatpush.bf16.msra.mxu0 %v3310
        %3959 = vmatpush.bf16.msra.mxu0 %v3301
        %3960 = vmatpush.bf16.msra.mxu0 %v3292
        %3961 = vmatmul.bf16.gmra.mxu0 %v2277
        %v3962 = vpop.f32.mrf.mxu0
        %v3963 = vadd.f32 %v3949, %v3962
        %v3964 = vpop.f32.mrf.mxu0
        %v3965 = vadd.f32 %v3951, %v3964
        %3966 = vdwg.mxu0
        %3967 = vmatpush.bf16.msra.mxu0 %v3427
        %3968 = vmatpush.bf16.msra.mxu0 %v3418
        %3969 = vmatpush.bf16.msra.mxu0 %v3409
        %3970 = vmatpush.bf16.msra.mxu0 %v3400
        %3971 = vmatpush.bf16.msra.mxu0 %v3391
        %3972 = vmatpush.bf16.msra.mxu0 %v3382
        %3973 = vmatpush.bf16.msra.mxu0 %v3373
        %3974 = vmatpush.bf16.msra.mxu0 %v3364
        %3975 = vmatmul.bf16.gmra.mxu0 %v2278
        %v3976 = vpop.f32.mrf.mxu0
        %v3977 = vadd.f32 %v3963, %v3976
        %v3978 = vpop.f32.mrf.mxu0
        %v3979 = vadd.f32 %v3965, %v3978
        %3980 = vdwg.mxu0
        %3981 = vmatpush.bf16.msra.mxu0 %v3284
        %3982 = vmatpush.bf16.msra.mxu0 %v3275
        %3983 = vmatpush.bf16.msra.mxu0 %v3266
        %3984 = vmatpush.bf16.msra.mxu0 %v3257
        %3985 = vmatpush.bf16.msra.mxu0 %v3248
        %3986 = vmatpush.bf16.msra.mxu0 %v3239
        %3987 = vmatpush.bf16.msra.mxu0 %v3230
        %3988 = vmatpush.bf16.msra.mxu0 %v3221
        %3989 = vmatmul.bf16.gmra.mxu0 %v2276
        %v3990 = vpop.f32.mrf.mxu0
        %v3991 = vadd.f32 %v2531, %v3990
        %v3992 = vpop.f32.mrf.mxu0
        %v3993 = vadd.f32 %v2531, %v3992
        %3994 = vdwg.mxu0
        %3995 = vmatpush.bf16.msra.mxu0 %v3356
        %3996 = vmatpush.bf16.msra.mxu0 %v3347
        %3997 = vmatpush.bf16.msra.mxu0 %v3338
        %3998 = vmatpush.bf16.msra.mxu0 %v3329
        %3999 = vmatpush.bf16.msra.mxu0 %v3320
        %4000 = vmatpush.bf16.msra.mxu0 %v3311
        %4001 = vmatpush.bf16.msra.mxu0 %v3302
        %4002 = vmatpush.bf16.msra.mxu0 %v3293
        %4003 = vmatmul.bf16.gmra.mxu0 %v2277
        %v4004 = vpop.f32.mrf.mxu0
        %v4005 = vadd.f32 %v3991, %v4004
        %v4006 = vpop.f32.mrf.mxu0
        %v4007 = vadd.f32 %v3993, %v4006
        %4008 = vdwg.mxu0
        %4009 = vmatpush.bf16.msra.mxu0 %v3428
        %4010 = vmatpush.bf16.msra.mxu0 %v3419
        %4011 = vmatpush.bf16.msra.mxu0 %v3410
        %4012 = vmatpush.bf16.msra.mxu0 %v3401
        %4013 = vmatpush.bf16.msra.mxu0 %v3392
        %4014 = vmatpush.bf16.msra.mxu0 %v3383
        %4015 = vmatpush.bf16.msra.mxu0 %v3374
        %4016 = vmatpush.bf16.msra.mxu0 %v3365
        %4017 = vmatmul.bf16.gmra.mxu0 %v2278
        %v4018 = vpop.f32.mrf.mxu0
        %v4019 = vadd.f32 %v4005, %v4018
        %v4020 = vpop.f32.mrf.mxu0
        %v4021 = vadd.f32 %v4007, %v4020
        %4022 = vdwg.mxu0
        %4023 = vst [vmem:[#allocation4] sm:$0xff] %v3683
        %4024 = vst [vmem:[#allocation4 + $0x8] sm:$0xff] %v3725
        %4025 = vst [vmem:[#allocation4 + $0x10] sm:$0xff] %v3767
        %4026 = vst [vmem:[#allocation4 + $0x18] sm:$0xff] %v3809
        %4027 = vst [vmem:[#allocation4 + $0x20] sm:$0xff] %v3851
        %4028 = vst [vmem:[#allocation4 + $0x28] sm:$0xff] %v3893
        %4029 = vst [vmem:[#allocation4 + $0x30] sm:$0xff] %v3935
        %4030 = vst [vmem:[#allocation4 + $0x38] sm:$0xff] %v3977
        %4031 = vst [vmem:[#allocation4 + $0x40] sm:$0xff] %v4019
        %4032 = vst [vmem:[#allocation4 + $0x48] sm:$0xff] %v3685
        %4033 = vst [vmem:[#allocation4 + $0x50] sm:$0xff] %v3727
        %4034 = vst [vmem:[#allocation4 + $0x58] sm:$0xff] %v3769
        %4035 = vst [vmem:[#allocation4 + $0x60] sm:$0xff] %v3811
        %4036 = vst [vmem:[#allocation4 + $0x68] sm:$0xff] %v3853
        %4037 = vst [vmem:[#allocation4 + $0x70] sm:$0xff] %v3895
        %4038 = vst [vmem:[#allocation4 + $0x78] sm:$0xff] %v3937
        %4039 = vst [vmem:[#allocation4 + $0x80] sm:$0xff] %v3979
        %4040 = vst [vmem:[#allocation4 + $0x88] sm:$0xff] %v4021
        %v4041 = vlaneseq
        %v4042 = vand.u32 %v4041, 127
        %vm4043 = vcmp.lt.s32.totalorder %v4042, 5
        %v4044 = vsel %vm4043, 0.0, -1e+30
        %v4045 = vld [vmem:[#allocation4] sm:$0xff]
        %v4046 = vld [vmem:[#allocation4 + $0x48] sm:$0xff]
        %v4047 = vld [vmem:[#allocation4 + $0x18] sm:$0xff]
        %v4048 = vld [vmem:[#allocation4 + $0x60] sm:$0xff]
        %v4049 = vld [vmem:[#allocation4 + $0x30] sm:$0xff]
        %v4050 = vld [vmem:[#allocation4 + $0x78] sm:$0xff]
        %v4051 = vpack.c.bf16 %v4045, %v4045
        %v4052 = vpack.c.bf16 %v4046, %v4046
        %v4053 = vpack.c.bf16 %v4047, %v4047
        %v4054 = vpack.c.bf16 %v4048, %v4048
        %vm4055 = vcmask 523264
        %v4057 = vsel %vm4055, %v4051, 0
        %v4060 = vsel %vm4055, %v4053, 0
        %4062 = vmatpush.bf16.xpose.msra.mxu0 0
        %4063 = vmatpush.bf16.xpose.msra.mxu0 0
        %4064 = vmatpush.bf16.xpose.msra.mxu0 0
        %4065 = vmatpush.bf16.xpose.msra.mxu0 0
        %4066 = vmatpush.bf16.xpose.msra.mxu0 0
        %4067 = vmatpush.bf16.xpose.msra.mxu0 0
        %4068 = vmatpush.bf16.xpose.msra.mxu0 0
        %4069 = vmatpush.bf16.xpose.msra.mxu0 %v4060
        %4070 = vmatmul.bf16.gmra.mxu0 %v4057
        %v4071 = vpop.f32.mrf.mxu0
        %v4072 = vadd.f32 %v4044, %v4071
        %v4073 = vpop.f32.mrf.mxu0
        %4074 = vdwg.mxu0
        %v4076 = vsel %vm4055, %v4052, 0
        %v4079 = vsel %vm4055, %v4054, 0
        %4081 = vmatpush.bf16.xpose.msra.mxu0 0
        %4082 = vmatpush.bf16.xpose.msra.mxu0 0
        %4083 = vmatpush.bf16.xpose.msra.mxu0 0
        %4084 = vmatpush.bf16.xpose.msra.mxu0 0
        %4085 = vmatpush.bf16.xpose.msra.mxu0 0
        %4086 = vmatpush.bf16.xpose.msra.mxu0 0
        %4087 = vmatpush.bf16.xpose.msra.mxu0 0
        %4088 = vmatpush.bf16.xpose.msra.mxu0 %v4079
        %4089 = vmatmul.bf16.gmra.mxu0 %v4076
        %v4090 = vpop.f32.mrf.mxu0
        %v4091 = vadd.f32 %v4044, %v4090
        %v4092 = vpop.f32.mrf.mxu0
        %4093 = vdwg.mxu0
        %vm4094 = vcmask 64512
        %v4095 = vsel %vm4094, %v4072, -inf
        %4096 = vmax.xlane.f32.xlu0 %v4095
        %v4097 = vpop.xlane.xlu0 %4096
        %v4098 = vsel %vm4094, %v4091, -inf
        %4099 = vmax.xlane.f32.xlu0 %v4098
        %v4100 = vpop.xlane.xlu0 %4099
        %v4101 = vsub.f32 %v4072, %v4097
        %v4102 = vsub.f32 %v4091, %v4100
        %v4103 = vmul.f32 %v4101, 1.442695
        %v4104 = vpow.pop %v4103
        %v4105 = vmul.f32 %v4102, 1.442695
        %v4106 = vpow.pop %v4105
        %v4107 = vsel %vm4094, %v4104, 0.0
        %4108 = vadd.xlane.f32.xlu0 %v4107
        %v4109 = vpop.xlane.xlu0 %4108
        %v4110 = vsel %vm4094, %v4106, 0.0
        %4111 = vadd.xlane.f32.xlu0 %v4110
        %v4112 = vpop.xlane.xlu0 %4111
        %v4113 = vrcp.pop %v4109
        %v4114 = vrcp.pop %v4112
        %v4115 = vmul.f32 %v4104, %v4113
        %v4116 = vmul.f32 %v4106, %v4114
        %v4117 = vpack.c.bf16 %v4115, %v4115
        %v4118 = vpack.c.bf16 %v4116, %v4116
        %v4119 = vpack.c.bf16 %v4049, %v4049
        %v4120 = vpack.c.bf16 %v4050, %v4050
        %v4122 = vsel %vm4094, %v4117, 0
        %vm4124 = vcmask 1043456
        %v4126 = vsel %vm4124, %v4119, 0
        %4128 = vmatpush.bf16.msra.mxu0 0
        %4129 = vmatpush.bf16.msra.mxu0 0
        %4130 = vmatpush.bf16.msra.mxu0 0
        %4131 = vmatpush.bf16.msra.mxu0 0
        %4132 = vmatpush.bf16.msra.mxu0 0
        %4133 = vmatpush.bf16.msra.mxu0 0
        %4134 = vmatpush.bf16.msra.mxu0 0
        %4135 = vmatpush.bf16.msra.mxu0 %v4126
        %4136 = vmatmul.bf16.gmra.mxu0 %v4122
        %v4137 = vpop.f32.mrf.mxu0
        %v4138 = vadd.f32 0.0, %v4137
        %v4139 = vpop.f32.mrf.mxu0
        %4140 = vdwg.mxu0
        %v4142 = vsel %vm4094, %v4118, 0
        %v4145 = vsel %vm4124, %v4120, 0
        %4147 = vmatpush.bf16.msra.mxu0 0
        %4148 = vmatpush.bf16.msra.mxu0 0
        %4149 = vmatpush.bf16.msra.mxu0 0
        %4150 = vmatpush.bf16.msra.mxu0 0
        %4151 = vmatpush.bf16.msra.mxu0 0
        %4152 = vmatpush.bf16.msra.mxu0 0
        %4153 = vmatpush.bf16.msra.mxu0 0
        %4154 = vmatpush.bf16.msra.mxu0 %v4145
        %4155 = vmatmul.bf16.gmra.mxu0 %v4142
        %v4156 = vpop.f32.mrf.mxu0
        %v4157 = vadd.f32 0.0, %v4156
        %v4158 = vpop.f32.mrf.mxu0
        %4159 = vdwg.mxu0
        %v4160 = vpack.c.bf16 %v4157, %v4138
        %v4161 = vld [vmem:[%s688] sm:$0xff]
        %v4162 = vld [vmem:[%s688 + $0x8] sm:$0xf]
        %v4163 = vld [vmem:[%s688 + $0xc] sm:$0xff]
        %v4164 = vld [vmem:[%s688 + $0x14] sm:$0xf]
        %v4165 = vld [vmem:[%s688 + $0x18] sm:$0xff]
        %v4166 = vld [vmem:[%s688 + $0x20] sm:$0xf]
        %v4167 = vld [vmem:[%s688 + $0x24] sm:$0xff]
        %v4168 = vld [vmem:[%s688 + $0x2c] sm:$0xf]
        %v4169 = vld [vmem:[%s688 + $0x30] sm:$0xff]
        %v4170 = vld [vmem:[%s688 + $0x38] sm:$0xf]
        %v4171 = vld [vmem:[%s688 + $0x3c] sm:$0xff]
        %v4172 = vld [vmem:[%s688 + $0x44] sm:$0xf]
        %v4173 = vld [vmem:[%s688 + $0x48] sm:$0xff]
        %v4174 = vld [vmem:[%s688 + $0x50] sm:$0xf]
        %v4175 = vld [vmem:[%s688 + $0x54] sm:$0xff]
        %v4176 = vld [vmem:[%s688 + $0x5c] sm:$0xf]
        %v4177 = vld [vmem:[#allocation4] sm:$0xff]
        %v4178 = vld [vmem:[#allocation4 + $0x48] sm:$0xff]
        %v4179 = vld [vmem:[#allocation4 + $0x18] sm:$0xff]
        %v4180 = vld [vmem:[#allocation4 + $0x60] sm:$0xff]
        %v4181 = vld [vmem:[#allocation4 + $0x30] sm:$0xff]
        %v4182 = vld [vmem:[#allocation4 + $0x78] sm:$0xff]
        %v4183 = vpack.c.bf16 %v4177, %v4177
        %v4184 = vpack.c.bf16 %v4178, %v4178
        %v4185 = vpack.c.bf16 %v4179, %v4179
        %v4186 = vpack.c.bf16 %v4180, %v4180
        %v4188 = vunpack.c.l.b16 %v4183
        %v4189 = vpack.c.b16 %v4188, %v4188
        %4190 = vrot.lane.b32.xlu0 %v4189, 64
        %v4191 = vpop.permute.xlu0 %4190
        %v4193 = vunpack.c.l.b16 %v4185
        %v4194 = vpack.c.b16 %v4193, %v4193
        %4195 = vrot.lane.b32.xlu0 %v4194, 64
        %v4196 = vpop.permute.xlu0 %4195
        %v4198 = vsel %vm4055, %v4191, 0
        %v4201 = vsel %vm4055, %v4196, 0
        %4203 = vmatpush.bf16.xpose.msra.mxu0 0
        %4204 = vmatpush.bf16.xpose.msra.mxu0 0
        %4205 = vmatpush.bf16.xpose.msra.mxu0 0
        %4206 = vmatpush.bf16.xpose.msra.mxu0 0
        %4207 = vmatpush.bf16.xpose.msra.mxu0 0
        %4208 = vmatpush.bf16.xpose.msra.mxu0 0
        %4209 = vmatpush.bf16.xpose.msra.mxu0 0
        %4210 = vmatpush.bf16.xpose.msra.mxu0 %v4201
        %4211 = vmatmul.bf16.gmra.mxu0 %v4198
        %v4212 = vpop.f32.mrf.mxu0
        %v4213 = vadd.f32 %v4044, %v4212
        %v4214 = vpop.f32.mrf.mxu0
        %4215 = vdwg.mxu0
        %v4217 = vunpack.c.l.b16 %v4184
        %v4218 = vpack.c.b16 %v4217, %v4217
        %4219 = vrot.lane.b32.xlu0 %v4218, 64
        %v4220 = vpop.permute.xlu0 %4219
        %v4222 = vunpack.c.l.b16 %v4186
        %v4223 = vpack.c.b16 %v4222, %v4222
        %4224 = vrot.lane.b32.xlu0 %v4223, 64
        %v4225 = vpop.permute.xlu0 %4224
        %v4227 = vsel %vm4055, %v4220, 0
        %v4230 = vsel %vm4055, %v4225, 0
        %4232 = vmatpush.bf16.xpose.msra.mxu0 0
        %4233 = vmatpush.bf16.xpose.msra.mxu0 0
        %4234 = vmatpush.bf16.xpose.msra.mxu0 0
        %4235 = vmatpush.bf16.xpose.msra.mxu0 0
        %4236 = vmatpush.bf16.xpose.msra.mxu0 0
        %4237 = vmatpush.bf16.xpose.msra.mxu0 0
        %4238 = vmatpush.bf16.xpose.msra.mxu0 0
        %4239 = vmatpush.bf16.xpose.msra.mxu0 %v4230
        %4240 = vmatmul.bf16.gmra.mxu0 %v4227
        %v4241 = vpop.f32.mrf.mxu0
        %v4242 = vadd.f32 %v4044, %v4241
        %v4243 = vpop.f32.mrf.mxu0
        %4244 = vdwg.mxu0
        %v4245 = vsel %vm4094, %v4213, -inf
        %4246 = vmax.xlane.f32.xlu0 %v4245
        %v4247 = vpop.xlane.xlu0 %4246
        %v4248 = vsel %vm4094, %v4242, -inf
        %4249 = vmax.xlane.f32.xlu0 %v4248
        %v4250 = vpop.xlane.xlu0 %4249
        %v4251 = vsub.f32 %v4213, %v4247
        %v4252 = vsub.f32 %v4242, %v4250
        %v4253 = vmul.f32 %v4251, 1.442695
        %v4254 = vpow.pop %v4253
        %v4255 = vmul.f32 %v4252, 1.442695
        %v4256 = vpow.pop %v4255
        %v4257 = vsel %vm4094, %v4254, 0.0
        %4258 = vadd.xlane.f32.xlu0 %v4257
        %v4259 = vpop.xlane.xlu0 %4258
        %v4260 = vsel %vm4094, %v4256, 0.0
        %4261 = vadd.xlane.f32.xlu0 %v4260
        %v4262 = vpop.xlane.xlu0 %4261
        %v4263 = vrcp.pop %v4259
        %v4264 = vrcp.pop %v4262
        %v4265 = vmul.f32 %v4254, %v4263
        %v4266 = vmul.f32 %v4256, %v4264
        %v4267 = vpack.c.bf16 %v4265, %v4265
        %v4268 = vpack.c.bf16 %v4266, %v4266
        %v4269 = vpack.c.bf16 %v4181, %v4181
        %v4270 = vpack.c.bf16 %v4182, %v4182
        %v4272 = vunpack.c.l.b16 %v4269
        %v4273 = vpack.c.b16 %v4272, %v4272
        %4274 = vrot.lane.b32.xlu0 %v4273, 64
        %v4275 = vpop.permute.xlu0 %4274
        %v4277 = vsel %vm4094, %v4267, 0
        %v4280 = vsel %vm4124, %v4275, 0
        %4282 = vmatpush.bf16.msra.mxu0 0
        %4283 = vmatpush.bf16.msra.mxu0 0
        %4284 = vmatpush.bf16.msra.mxu0 0
        %4285 = vmatpush.bf16.msra.mxu0 0
        %4286 = vmatpush.bf16.msra.mxu0 0
        %4287 = vmatpush.bf16.msra.mxu0 0
        %4288 = vmatpush.bf16.msra.mxu0 0
        %4289 = vmatpush.bf16.msra.mxu0 %v4280
        %4290 = vmatmul.bf16.gmra.mxu0 %v4277
        %v4291 = vpop.f32.mrf.mxu0
        %v4292 = vadd.f32 0.0, %v4291
        %v4293 = vpop.f32.mrf.mxu0
        %4294 = vdwg.mxu0
        %v4296 = vunpack.c.l.b16 %v4270
        %v4297 = vpack.c.b16 %v4296, %v4296
        %4298 = vrot.lane.b32.xlu0 %v4297, 64
        %v4299 = vpop.permute.xlu0 %4298
        %v4301 = vsel %vm4094, %v4268, 0
        %v4304 = vsel %vm4124, %v4299, 0
        %4306 = vmatpush.bf16.msra.mxu0 0
        %4307 = vmatpush.bf16.msra.mxu0 0
        %4308 = vmatpush.bf16.msra.mxu0 0
        %4309 = vmatpush.bf16.msra.mxu0 0
        %4310 = vmatpush.bf16.msra.mxu0 0
        %4311 = vmatpush.bf16.msra.mxu0 0
        %4312 = vmatpush.bf16.msra.mxu0 0
        %4313 = vmatpush.bf16.msra.mxu0 %v4304
        %4314 = vmatmul.bf16.gmra.mxu0 %v4301
        %v4315 = vpop.f32.mrf.mxu0
        %v4316 = vadd.f32 0.0, %v4315
        %v4317 = vpop.f32.mrf.mxu0
        %4318 = vdwg.mxu0
        %v4319 = vpack.c.bf16 %v4316, %v4292
        %s4320 = scalar_lea.vmem %s688, 96 [#allocation14]
        %v4321 = vld [vmem:[%s4320] sm:$0xff]
        %v4322 = vld [vmem:[%s4320 + $0x8] sm:$0xf]
        %v4323 = vld [vmem:[%s4320 + $0xc] sm:$0xff]
        %v4324 = vld [vmem:[%s4320 + $0x14] sm:$0xf]
        %v4325 = vld [vmem:[%s4320 + $0x18] sm:$0xff]
        %v4326 = vld [vmem:[%s4320 + $0x20] sm:$0xf]
        %v4327 = vld [vmem:[%s4320 + $0x24] sm:$0xff]
        %v4328 = vld [vmem:[%s4320 + $0x2c] sm:$0xf]
        %v4329 = vld [vmem:[%s4320 + $0x30] sm:$0xff]
        %v4330 = vld [vmem:[%s4320 + $0x38] sm:$0xf]
        %v4331 = vld [vmem:[%s4320 + $0x3c] sm:$0xff]
        %v4332 = vld [vmem:[%s4320 + $0x44] sm:$0xf]
        %v4333 = vld [vmem:[%s4320 + $0x48] sm:$0xff]
        %v4334 = vld [vmem:[%s4320 + $0x50] sm:$0xf]
        %v4335 = vld [vmem:[%s4320 + $0x54] sm:$0xff]
        %v4336 = vld [vmem:[%s4320 + $0x5c] sm:$0xf]
        %v4353 = vunpack.c.l.b16 %v4321
        %v4354 = vunpack.c.h.b16 %v4321
        %v4355 = vunpack.c.l.b16 %v4322
        %v4356 = vunpack.c.l.b16 %v4323
        %v4357 = vunpack.c.h.b16 %v4323
        %v4358 = vunpack.c.l.b16 %v4324
        %v4359 = vunpack.c.l.b16 %v4325
        %v4360 = vunpack.c.h.b16 %v4325
        %v4361 = vunpack.c.l.b16 %v4326
        %v4362 = vunpack.c.l.b16 %v4327
        %v4363 = vunpack.c.h.b16 %v4327
        %v4364 = vunpack.c.l.b16 %v4328
        %v4365 = vunpack.c.l.b16 %v4329
        %v4366 = vunpack.c.h.b16 %v4329
        %v4367 = vunpack.c.l.b16 %v4330
        %v4368 = vunpack.c.l.b16 %v4331
        %v4369 = vunpack.c.h.b16 %v4331
        %v4370 = vunpack.c.l.b16 %v4332
        %v4371 = vunpack.c.l.b16 %v4333
        %v4372 = vunpack.c.h.b16 %v4333
        %v4373 = vunpack.c.l.b16 %v4334
        %v4374 = vunpack.c.l.b16 %v4335
        %v4375 = vunpack.c.h.b16 %v4335
        %v4376 = vunpack.c.l.b16 %v4336
        %v4377 = vpack.c.b16 %v4356, %v4353
        %v4378 = vpack.c.b16 %v4357, %v4354
        %v4379 = vpack.c.b16 %v4358, %v4355
        %v4380 = vpack.c.b16 %v4362, %v4359
        %v4381 = vpack.c.b16 %v4363, %v4360
        %v4382 = vpack.c.b16 %v4364, %v4361
        %v4383 = vpack.c.b16 %v4368, %v4365
        %v4384 = vpack.c.b16 %v4369, %v4366
        %v4385 = vpack.c.b16 %v4370, %v4367
        %v4386 = vpack.c.b16 %v4374, %v4371
        %v4387 = vpack.c.b16 %v4375, %v4372
        %v4388 = vpack.c.b16 %v4376, %v4373
        %v4402 = vsel %vm4055, %v4319, 0
        %4404 = vmatpush.bf16.msra.mxu0 0
        %4405 = vmatpush.bf16.msra.mxu0 0
        %4406 = vmatpush.bf16.msra.mxu0 0
        %4407 = vmatpush.bf16.msra.mxu0 0
        %4408 = vmatpush.bf16.msra.mxu0 %v4386
        %4409 = vmatpush.bf16.msra.mxu0 %v4383
        %4410 = vmatpush.bf16.msra.mxu0 %v4380
        %4411 = vmatpush.bf16.msra.mxu0 %v4377
        %4412 = vmatmul.bf16.gmra.mxu0 %v4402
        %v4413 = vpop.f32.mrf.mxu0
        %v4414 = vadd.f32 0.0, %v4413
        %v4415 = vpop.f32.mrf.mxu0
        %v4416 = vadd.f32 0.0, %v4415
        %4417 = vdwg.mxu0
        %4418 = vmatpush.bf16.msra.mxu0 0
        %4419 = vmatpush.bf16.msra.mxu0 0
        %4420 = vmatpush.bf16.msra.mxu0 0
        %4421 = vmatpush.bf16.msra.mxu0 0
        %4422 = vmatpush.bf16.msra.mxu0 %v4387
        %4423 = vmatpush.bf16.msra.mxu0 %v4384
        %4424 = vmatpush.bf16.msra.mxu0 %v4381
        %4425 = vmatpush.bf16.msra.mxu0 %v4378
        %4426 = vmatmul.bf16.gmra.mxu0 %v4402
        %v4427 = vpop.f32.mrf.mxu0
        %v4428 = vadd.f32 0.0, %v4427
        %v4429 = vpop.f32.mrf.mxu0
        %v4430 = vadd.f32 0.0, %v4429
        %4431 = vdwg.mxu0
        %4432 = vmatpush.bf16.msra.mxu0 0
        %4433 = vmatpush.bf16.msra.mxu0 0
        %4434 = vmatpush.bf16.msra.mxu0 0
        %4435 = vmatpush.bf16.msra.mxu0 0
        %4436 = vmatpush.bf16.msra.mxu0 %v4388
        %4437 = vmatpush.bf16.msra.mxu0 %v4385
        %4438 = vmatpush.bf16.msra.mxu0 %v4382
        %4439 = vmatpush.bf16.msra.mxu0 %v4379
        %4440 = vmatmul.bf16.gmra.mxu0 %v4402
        %v4441 = vpop.f32.mrf.mxu0
        %v4442 = vadd.f32 0.0, %v4441
        %v4443 = vpop.f32.mrf.mxu0
        %v4444 = vadd.f32 0.0, %v4443
        %4445 = vdwg.mxu0
        %v4462 = vunpack.c.l.b16 %v4161
        %v4463 = vunpack.c.h.b16 %v4161
        %v4464 = vunpack.c.l.b16 %v4162
        %v4465 = vunpack.c.l.b16 %v4163
        %v4466 = vunpack.c.h.b16 %v4163
        %v4467 = vunpack.c.l.b16 %v4164
        %v4468 = vunpack.c.l.b16 %v4165
        %v4469 = vunpack.c.h.b16 %v4165
        %v4470 = vunpack.c.l.b16 %v4166
        %v4471 = vunpack.c.l.b16 %v4167
        %v4472 = vunpack.c.h.b16 %v4167
        %v4473 = vunpack.c.l.b16 %v4168
        %v4474 = vunpack.c.l.b16 %v4169
        %v4475 = vunpack.c.h.b16 %v4169
        %v4476 = vunpack.c.l.b16 %v4170
        %v4477 = vunpack.c.l.b16 %v4171
        %v4478 = vunpack.c.h.b16 %v4171
        %v4479 = vunpack.c.l.b16 %v4172
        %v4480 = vunpack.c.l.b16 %v4173
        %v4481 = vunpack.c.h.b16 %v4173
        %v4482 = vunpack.c.l.b16 %v4174
        %v4483 = vunpack.c.l.b16 %v4175
        %v4484 = vunpack.c.h.b16 %v4175
        %v4485 = vunpack.c.l.b16 %v4176
        %v4486 = vpack.c.b16 %v4465, %v4462
        %v4487 = vpack.c.b16 %v4466, %v4463
        %v4488 = vpack.c.b16 %v4467, %v4464
        %v4489 = vpack.c.b16 %v4471, %v4468
        %v4490 = vpack.c.b16 %v4472, %v4469
        %v4491 = vpack.c.b16 %v4473, %v4470
        %v4492 = vpack.c.b16 %v4477, %v4474
        %v4493 = vpack.c.b16 %v4478, %v4475
        %v4494 = vpack.c.b16 %v4479, %v4476
        %v4495 = vpack.c.b16 %v4483, %v4480
        %v4496 = vpack.c.b16 %v4484, %v4481
        %v4497 = vpack.c.b16 %v4485, %v4482
        %v4511 = vsel %vm4055, %v4160, 0
        %4513 = vmatpush.bf16.msra.mxu0 0
        %4514 = vmatpush.bf16.msra.mxu0 0
        %4515 = vmatpush.bf16.msra.mxu0 0
        %4516 = vmatpush.bf16.msra.mxu0 0
        %4517 = vmatpush.bf16.msra.mxu0 %v4495
        %4518 = vmatpush.bf16.msra.mxu0 %v4492
        %4519 = vmatpush.bf16.msra.mxu0 %v4489
        %4520 = vmatpush.bf16.msra.mxu0 %v4486
        %4521 = vmatmul.bf16.gmra.mxu0 %v4511
        %v4522 = vpop.f32.mrf.mxu0
        %v4523 = vadd.f32 %v4414, %v4522
        %v4524 = vpop.f32.mrf.mxu0
        %v4525 = vadd.f32 %v4416, %v4524
        %4526 = vdwg.mxu0
        %4527 = vmatpush.bf16.msra.mxu0 0
        %4528 = vmatpush.bf16.msra.mxu0 0
        %4529 = vmatpush.bf16.msra.mxu0 0
        %4530 = vmatpush.bf16.msra.mxu0 0
        %4531 = vmatpush.bf16.msra.mxu0 %v4496
        %4532 = vmatpush.bf16.msra.mxu0 %v4493
        %4533 = vmatpush.bf16.msra.mxu0 %v4490
        %4534 = vmatpush.bf16.msra.mxu0 %v4487
        %4535 = vmatmul.bf16.gmra.mxu0 %v4511
        %v4536 = vpop.f32.mrf.mxu0
        %v4537 = vadd.f32 %v4428, %v4536
        %v4538 = vpop.f32.mrf.mxu0
        %v4539 = vadd.f32 %v4430, %v4538
        %4540 = vdwg.mxu0
        %4541 = vmatpush.bf16.msra.mxu0 0
        %4542 = vmatpush.bf16.msra.mxu0 0
        %4543 = vmatpush.bf16.msra.mxu0 0
        %4544 = vmatpush.bf16.msra.mxu0 0
        %4545 = vmatpush.bf16.msra.mxu0 %v4497
        %4546 = vmatpush.bf16.msra.mxu0 %v4494
        %4547 = vmatpush.bf16.msra.mxu0 %v4491
        %4548 = vmatpush.bf16.msra.mxu0 %v4488
        %4549 = vmatmul.bf16.gmra.mxu0 %v4511
        %v4550 = vpop.f32.mrf.mxu0
        %v4551 = vadd.f32 %v4442, %v4550
        %v4552 = vpop.f32.mrf.mxu0
        %v4553 = vadd.f32 %v4444, %v4552
        %4554 = vdwg.mxu0
        %v4555 = vld [vmem:[#allocation4 + $0x8] sm:$0xff]
        %v4556 = vld [vmem:[#allocation4 + $0x50] sm:$0xff]
        %v4557 = vld [vmem:[#allocation4 + $0x20] sm:$0xff]
        %v4558 = vld [vmem:[#allocation4 + $0x68] sm:$0xff]
        %v4559 = vld [vmem:[#allocation4 + $0x38] sm:$0xff]
        %v4560 = vld [vmem:[#allocation4 + $0x80] sm:$0xff]
        %v4561 = vpack.c.bf16 %v4555, %v4555
        %v4562 = vpack.c.bf16 %v4556, %v4556
        %v4563 = vpack.c.bf16 %v4557, %v4557
        %v4564 = vpack.c.bf16 %v4558, %v4558
        %v4566 = vsel %vm4055, %v4561, 0
        %v4569 = vsel %vm4055, %v4563, 0
        %4571 = vmatpush.bf16.xpose.msra.mxu0 0
        %4572 = vmatpush.bf16.xpose.msra.mxu0 0
        %4573 = vmatpush.bf16.xpose.msra.mxu0 0
        %4574 = vmatpush.bf16.xpose.msra.mxu0 0
        %4575 = vmatpush.bf16.xpose.msra.mxu0 0
        %4576 = vmatpush.bf16.xpose.msra.mxu0 0
        %4577 = vmatpush.bf16.xpose.msra.mxu0 0
        %4578 = vmatpush.bf16.xpose.msra.mxu0 %v4569
        %4579 = vmatmul.bf16.gmra.mxu0 %v4566
        %v4580 = vpop.f32.mrf.mxu0
        %v4581 = vadd.f32 %v4044, %v4580
        %v4582 = vpop.f32.mrf.mxu0
        %4583 = vdwg.mxu0
        %v4585 = vsel %vm4055, %v4562, 0
        %v4588 = vsel %vm4055, %v4564, 0
        %4590 = vmatpush.bf16.xpose.msra.mxu0 0
        %4591 = vmatpush.bf16.xpose.msra.mxu0 0
        %4592 = vmatpush.bf16.xpose.msra.mxu0 0
        %4593 = vmatpush.bf16.xpose.msra.mxu0 0
        %4594 = vmatpush.bf16.xpose.msra.mxu0 0
        %4595 = vmatpush.bf16.xpose.msra.mxu0 0
        %4596 = vmatpush.bf16.xpose.msra.mxu0 0
        %4597 = vmatpush.bf16.xpose.msra.mxu0 %v4588
        %4598 = vmatmul.bf16.gmra.mxu0 %v4585
        %v4599 = vpop.f32.mrf.mxu0
        %v4600 = vadd.f32 %v4044, %v4599
        %v4601 = vpop.f32.mrf.mxu0
        %4602 = vdwg.mxu0
        %v4603 = vsel %vm4094, %v4581, -inf
        %4604 = vmax.xlane.f32.xlu0 %v4603
        %v4605 = vpop.xlane.xlu0 %4604
        %v4606 = vsel %vm4094, %v4600, -inf
        %4607 = vmax.xlane.f32.xlu0 %v4606
        %v4608 = vpop.xlane.xlu0 %4607
        %v4609 = vsub.f32 %v4581, %v4605
        %v4610 = vsub.f32 %v4600, %v4608
        %v4611 = vmul.f32 %v4609, 1.442695
        %v4612 = vpow.pop %v4611
        %v4613 = vmul.f32 %v4610, 1.442695
        %v4614 = vpow.pop %v4613
        %v4615 = vsel %vm4094, %v4612, 0.0
        %4616 = vadd.xlane.f32.xlu0 %v4615
        %v4617 = vpop.xlane.xlu0 %4616
        %v4618 = vsel %vm4094, %v4614, 0.0
        %4619 = vadd.xlane.f32.xlu0 %v4618
        %v4620 = vpop.xlane.xlu0 %4619
        %v4621 = vrcp.pop %v4617
        %v4622 = vrcp.pop %v4620
        %v4623 = vmul.f32 %v4612, %v4621
        %v4624 = vmul.f32 %v4614, %v4622
        %v4625 = vpack.c.bf16 %v4623, %v4623
        %v4626 = vpack.c.bf16 %v4624, %v4624
        %v4627 = vpack.c.bf16 %v4559, %v4559
        %v4628 = vpack.c.bf16 %v4560, %v4560
        %v4630 = vsel %vm4094, %v4625, 0
        %v4633 = vsel %vm4124, %v4627, 0
        %4635 = vmatpush.bf16.msra.mxu0 0
        %4636 = vmatpush.bf16.msra.mxu0 0
        %4637 = vmatpush.bf16.msra.mxu0 0
        %4638 = vmatpush.bf16.msra.mxu0 0
        %4639 = vmatpush.bf16.msra.mxu0 0
        %4640 = vmatpush.bf16.msra.mxu0 0
        %4641 = vmatpush.bf16.msra.mxu0 0
        %4642 = vmatpush.bf16.msra.mxu0 %v4633
        %4643 = vmatmul.bf16.gmra.mxu0 %v4630
        %v4644 = vpop.f32.mrf.mxu0
        %v4645 = vadd.f32 0.0, %v4644
        %v4646 = vpop.f32.mrf.mxu0
        %4647 = vdwg.mxu0
        %v4649 = vsel %vm4094, %v4626, 0
        %v4652 = vsel %vm4124, %v4628, 0
        %4654 = vmatpush.bf16.msra.mxu0 0
        %4655 = vmatpush.bf16.msra.mxu0 0
        %4656 = vmatpush.bf16.msra.mxu0 0
        %4657 = vmatpush.bf16.msra.mxu0 0
        %4658 = vmatpush.bf16.msra.mxu0 0
        %4659 = vmatpush.bf16.msra.mxu0 0
        %4660 = vmatpush.bf16.msra.mxu0 0
        %4661 = vmatpush.bf16.msra.mxu0 %v4652
        %4662 = vmatmul.bf16.gmra.mxu0 %v4649
        %v4663 = vpop.f32.mrf.mxu0
        %v4664 = vadd.f32 0.0, %v4663
        %v4665 = vpop.f32.mrf.mxu0
        %4666 = vdwg.mxu0
        %v4667 = vpack.c.bf16 %v4664, %v4645
        %s4668 = scalar_lea.vmem %s688, 192 [#allocation14]
        %v4669 = vld [vmem:[%s4668] sm:$0xff]
        %v4670 = vld [vmem:[%s4668 + $0x8] sm:$0xf]
        %v4671 = vld [vmem:[%s4668 + $0xc] sm:$0xff]
        %v4672 = vld [vmem:[%s4668 + $0x14] sm:$0xf]
        %v4673 = vld [vmem:[%s4668 + $0x18] sm:$0xff]
        %v4674 = vld [vmem:[%s4668 + $0x20] sm:$0xf]
        %v4675 = vld [vmem:[%s4668 + $0x24] sm:$0xff]
        %v4676 = vld [vmem:[%s4668 + $0x2c] sm:$0xf]
        %v4677 = vld [vmem:[%s4668 + $0x30] sm:$0xff]
        %v4678 = vld [vmem:[%s4668 + $0x38] sm:$0xf]
        %v4679 = vld [vmem:[%s4668 + $0x3c] sm:$0xff]
        %v4680 = vld [vmem:[%s4668 + $0x44] sm:$0xf]
        %v4681 = vld [vmem:[%s4668 + $0x48] sm:$0xff]
        %v4682 = vld [vmem:[%s4668 + $0x50] sm:$0xf]
        %v4683 = vld [vmem:[%s4668 + $0x54] sm:$0xff]
        %v4684 = vld [vmem:[%s4668 + $0x5c] sm:$0xf]
        %v4701 = vunpack.c.l.b16 %v4669
        %v4702 = vunpack.c.h.b16 %v4669
        %v4703 = vunpack.c.l.b16 %v4670
        %v4704 = vunpack.c.l.b16 %v4671
        %v4705 = vunpack.c.h.b16 %v4671
        %v4706 = vunpack.c.l.b16 %v4672
        %v4707 = vunpack.c.l.b16 %v4673
        %v4708 = vunpack.c.h.b16 %v4673
        %v4709 = vunpack.c.l.b16 %v4674
        %v4710 = vunpack.c.l.b16 %v4675
        %v4711 = vunpack.c.h.b16 %v4675
        %v4712 = vunpack.c.l.b16 %v4676
        %v4713 = vunpack.c.l.b16 %v4677
        %v4714 = vunpack.c.h.b16 %v4677
        %v4715 = vunpack.c.l.b16 %v4678
        %v4716 = vunpack.c.l.b16 %v4679
        %v4717 = vunpack.c.h.b16 %v4679
        %v4718 = vunpack.c.l.b16 %v4680
        %v4719 = vunpack.c.l.b16 %v4681
        %v4720 = vunpack.c.h.b16 %v4681
        %v4721 = vunpack.c.l.b16 %v4682
        %v4722 = vunpack.c.l.b16 %v4683
        %v4723 = vunpack.c.h.b16 %v4683
        %v4724 = vunpack.c.l.b16 %v4684
        %v4725 = vpack.c.b16 %v4704, %v4701
        %v4726 = vpack.c.b16 %v4705, %v4702
        %v4727 = vpack.c.b16 %v4706, %v4703
        %v4728 = vpack.c.b16 %v4710, %v4707
        %v4729 = vpack.c.b16 %v4711, %v4708
        %v4730 = vpack.c.b16 %v4712, %v4709
        %v4731 = vpack.c.b16 %v4716, %v4713
        %v4732 = vpack.c.b16 %v4717, %v4714
        %v4733 = vpack.c.b16 %v4718, %v4715
        %v4734 = vpack.c.b16 %v4722, %v4719
        %v4735 = vpack.c.b16 %v4723, %v4720
        %v4736 = vpack.c.b16 %v4724, %v4721
        %v4750 = vsel %vm4055, %v4667, 0
        %4752 = vmatpush.bf16.msra.mxu0 0
        %4753 = vmatpush.bf16.msra.mxu0 0
        %4754 = vmatpush.bf16.msra.mxu0 0
        %4755 = vmatpush.bf16.msra.mxu0 0
        %4756 = vmatpush.bf16.msra.mxu0 %v4734
        %4757 = vmatpush.bf16.msra.mxu0 %v4731
        %4758 = vmatpush.bf16.msra.mxu0 %v4728
        %4759 = vmatpush.bf16.msra.mxu0 %v4725
        %4760 = vmatmul.bf16.gmra.mxu0 %v4750
        %v4761 = vpop.f32.mrf.mxu0
        %v4762 = vadd.f32 0.0, %v4761
        %v4763 = vpop.f32.mrf.mxu0
        %v4764 = vadd.f32 0.0, %v4763
        %4765 = vdwg.mxu0
        %4766 = vmatpush.bf16.msra.mxu0 0
        %4767 = vmatpush.bf16.msra.mxu0 0
        %4768 = vmatpush.bf16.msra.mxu0 0
        %4769 = vmatpush.bf16.msra.mxu0 0
        %4770 = vmatpush.bf16.msra.mxu0 %v4735
        %4771 = vmatpush.bf16.msra.mxu0 %v4732
        %4772 = vmatpush.bf16.msra.mxu0 %v4729
        %4773 = vmatpush.bf16.msra.mxu0 %v4726
        %4774 = vmatmul.bf16.gmra.mxu0 %v4750
        %v4775 = vpop.f32.mrf.mxu0
        %v4776 = vadd.f32 0.0, %v4775
        %v4777 = vpop.f32.mrf.mxu0
        %v4778 = vadd.f32 0.0, %v4777
        %4779 = vdwg.mxu0
        %4780 = vmatpush.bf16.msra.mxu0 0
        %4781 = vmatpush.bf16.msra.mxu0 0
        %4782 = vmatpush.bf16.msra.mxu0 0
        %4783 = vmatpush.bf16.msra.mxu0 0
        %4784 = vmatpush.bf16.msra.mxu0 %v4736
        %4785 = vmatpush.bf16.msra.mxu0 %v4733
        %4786 = vmatpush.bf16.msra.mxu0 %v4730
        %4787 = vmatpush.bf16.msra.mxu0 %v4727
        %4788 = vmatmul.bf16.gmra.mxu0 %v4750
        %v4789 = vpop.f32.mrf.mxu0
        %v4790 = vadd.f32 0.0, %v4789
        %v4791 = vpop.f32.mrf.mxu0
        %v4792 = vadd.f32 0.0, %v4791
        %4793 = vdwg.mxu0
        %v4794 = vadd.f32 %v4523, %v4762
        %v4795 = vadd.f32 %v4537, %v4776
        %v4796 = vadd.f32 %v4551, %v4790
        %v4797 = vadd.f32 %v4525, %v4764
        %v4798 = vadd.f32 %v4539, %v4778
        %v4799 = vadd.f32 %v4553, %v4792
        %v4800 = vld [vmem:[#allocation4 + $0x8] sm:$0xff]
        %v4801 = vld [vmem:[#allocation4 + $0x50] sm:$0xff]
        %v4802 = vld [vmem:[#allocation4 + $0x20] sm:$0xff]
        %v4803 = vld [vmem:[#allocation4 + $0x68] sm:$0xff]
        %v4804 = vld [vmem:[#allocation4 + $0x38] sm:$0xff]
        %v4805 = vld [vmem:[#allocation4 + $0x80] sm:$0xff]
        %v4806 = vpack.c.bf16 %v4800, %v4800
        %v4807 = vpack.c.bf16 %v4801, %v4801
        %v4808 = vpack.c.bf16 %v4802, %v4802
        %v4809 = vpack.c.bf16 %v4803, %v4803
        %v4811 = vunpack.c.l.b16 %v4806
        %v4812 = vpack.c.b16 %v4811, %v4811
        %4813 = vrot.lane.b32.xlu0 %v4812, 64
        %v4814 = vpop.permute.xlu0 %4813
        %v4816 = vunpack.c.l.b16 %v4808
        %v4817 = vpack.c.b16 %v4816, %v4816
        %4818 = vrot.lane.b32.xlu0 %v4817, 64
        %v4819 = vpop.permute.xlu0 %4818
        %v4821 = vsel %vm4055, %v4814, 0
        %v4824 = vsel %vm4055, %v4819, 0
        %4826 = vmatpush.bf16.xpose.msra.mxu0 0
        %4827 = vmatpush.bf16.xpose.msra.mxu0 0
        %4828 = vmatpush.bf16.xpose.msra.mxu0 0
        %4829 = vmatpush.bf16.xpose.msra.mxu0 0
        %4830 = vmatpush.bf16.xpose.msra.mxu0 0
        %4831 = vmatpush.bf16.xpose.msra.mxu0 0
        %4832 = vmatpush.bf16.xpose.msra.mxu0 0
        %4833 = vmatpush.bf16.xpose.msra.mxu0 %v4824
        %4834 = vmatmul.bf16.gmra.mxu0 %v4821
        %v4835 = vpop.f32.mrf.mxu0
        %v4836 = vadd.f32 %v4044, %v4835
        %v4837 = vpop.f32.mrf.mxu0
        %4838 = vdwg.mxu0
        %v4840 = vunpack.c.l.b16 %v4807
        %v4841 = vpack.c.b16 %v4840, %v4840
        %4842 = vrot.lane.b32.xlu0 %v4841, 64
        %v4843 = vpop.permute.xlu0 %4842
        %v4845 = vunpack.c.l.b16 %v4809
        %v4846 = vpack.c.b16 %v4845, %v4845
        %4847 = vrot.lane.b32.xlu0 %v4846, 64
        %v4848 = vpop.permute.xlu0 %4847
        %v4850 = vsel %vm4055, %v4843, 0
        %v4853 = vsel %vm4055, %v4848, 0
        %4855 = vmatpush.bf16.xpose.msra.mxu0 0
        %4856 = vmatpush.bf16.xpose.msra.mxu0 0
        %4857 = vmatpush.bf16.xpose.msra.mxu0 0
        %4858 = vmatpush.bf16.xpose.msra.mxu0 0
        %4859 = vmatpush.bf16.xpose.msra.mxu0 0
        %4860 = vmatpush.bf16.xpose.msra.mxu0 0
        %4861 = vmatpush.bf16.xpose.msra.mxu0 0
        %4862 = vmatpush.bf16.xpose.msra.mxu0 %v4853
        %4863 = vmatmul.bf16.gmra.mxu0 %v4850
        %v4864 = vpop.f32.mrf.mxu0
        %v4865 = vadd.f32 %v4044, %v4864
        %v4866 = vpop.f32.mrf.mxu0
        %4867 = vdwg.mxu0
        %v4868 = vsel %vm4094, %v4836, -inf
        %4869 = vmax.xlane.f32.xlu0 %v4868
        %v4870 = vpop.xlane.xlu0 %4869
        %v4871 = vsel %vm4094, %v4865, -inf
        %4872 = vmax.xlane.f32.xlu0 %v4871
        %v4873 = vpop.xlane.xlu0 %4872
        %v4874 = vsub.f32 %v4836, %v4870
        %v4875 = vsub.f32 %v4865, %v4873
        %v4876 = vmul.f32 %v4874, 1.442695
        %v4877 = vpow.pop %v4876
        %v4878 = vmul.f32 %v4875, 1.442695
        %v4879 = vpow.pop %v4878
        %v4880 = vsel %vm4094, %v4877, 0.0
        %4881 = vadd.xlane.f32.xlu0 %v4880
        %v4882 = vpop.xlane.xlu0 %4881
        %v4883 = vsel %vm4094, %v4879, 0.0
        %4884 = vadd.xlane.f32.xlu0 %v4883
        %v4885 = vpop.xlane.xlu0 %4884
        %v4886 = vrcp.pop %v4882
        %v4887 = vrcp.pop %v4885
        %v4888 = vmul.f32 %v4877, %v4886
        %v4889 = vmul.f32 %v4879, %v4887
        %v4890 = vpack.c.bf16 %v4888, %v4888
        %v4891 = vpack.c.bf16 %v4889, %v4889
        %v4892 = vpack.c.bf16 %v4804, %v4804
        %v4893 = vpack.c.bf16 %v4805, %v4805
        %v4895 = vunpack.c.l.b16 %v4892
        %v4896 = vpack.c.b16 %v4895, %v4895
        %4897 = vrot.lane.b32.xlu0 %v4896, 64
        %v4898 = vpop.permute.xlu0 %4897
        %v4900 = vsel %vm4094, %v4890, 0
        %v4903 = vsel %vm4124, %v4898, 0
        %4905 = vmatpush.bf16.msra.mxu0 0
        %4906 = vmatpush.bf16.msra.mxu0 0
        %4907 = vmatpush.bf16.msra.mxu0 0
        %4908 = vmatpush.bf16.msra.mxu0 0
        %4909 = vmatpush.bf16.msra.mxu0 0
        %4910 = vmatpush.bf16.msra.mxu0 0
        %4911 = vmatpush.bf16.msra.mxu0 0
        %4912 = vmatpush.bf16.msra.mxu0 %v4903
        %4913 = vmatmul.bf16.gmra.mxu0 %v4900
        %v4914 = vpop.f32.mrf.mxu0
        %v4915 = vadd.f32 0.0, %v4914
        %v4916 = vpop.f32.mrf.mxu0
        %4917 = vdwg.mxu0
        %v4919 = vunpack.c.l.b16 %v4893
        %v4920 = vpack.c.b16 %v4919, %v4919
        %4921 = vrot.lane.b32.xlu0 %v4920, 64
        %v4922 = vpop.permute.xlu0 %4921
        %v4924 = vsel %vm4094, %v4891, 0
        %v4927 = vsel %vm4124, %v4922, 0
        %4929 = vmatpush.bf16.msra.mxu0 0
        %4930 = vmatpush.bf16.msra.mxu0 0
        %4931 = vmatpush.bf16.msra.mxu0 0
        %4932 = vmatpush.bf16.msra.mxu0 0
        %4933 = vmatpush.bf16.msra.mxu0 0
        %4934 = vmatpush.bf16.msra.mxu0 0
        %4935 = vmatpush.bf16.msra.mxu0 0
        %4936 = vmatpush.bf16.msra.mxu0 %v4927
        %4937 = vmatmul.bf16.gmra.mxu0 %v4924
        %v4938 = vpop.f32.mrf.mxu0
        %v4939 = vadd.f32 0.0, %v4938
        %v4940 = vpop.f32.mrf.mxu0
        %4941 = vdwg.mxu0
        %v4942 = vpack.c.bf16 %v4939, %v4915
        %s4943 = scalar_lea.vmem %s688, 288 [#allocation14]
        %v4944 = vld [vmem:[%s4943] sm:$0xff]
        %v4945 = vld [vmem:[%s4943 + $0x8] sm:$0xf]
        %v4946 = vld [vmem:[%s4943 + $0xc] sm:$0xff]
        %v4947 = vld [vmem:[%s4943 + $0x14] sm:$0xf]
        %v4948 = vld [vmem:[%s4943 + $0x18] sm:$0xff]
        %v4949 = vld [vmem:[%s4943 + $0x20] sm:$0xf]
        %v4950 = vld [vmem:[%s4943 + $0x24] sm:$0xff]
        %v4951 = vld [vmem:[%s4943 + $0x2c] sm:$0xf]
        %v4952 = vld [vmem:[%s4943 + $0x30] sm:$0xff]
        %v4953 = vld [vmem:[%s4943 + $0x38] sm:$0xf]
        %v4954 = vld [vmem:[%s4943 + $0x3c] sm:$0xff]
        %v4955 = vld [vmem:[%s4943 + $0x44] sm:$0xf]
        %v4956 = vld [vmem:[%s4943 + $0x48] sm:$0xff]
        %v4957 = vld [vmem:[%s4943 + $0x50] sm:$0xf]
        %v4958 = vld [vmem:[%s4943 + $0x54] sm:$0xff]
        %v4959 = vld [vmem:[%s4943 + $0x5c] sm:$0xf]
        %v4976 = vunpack.c.l.b16 %v4944
        %v4977 = vunpack.c.h.b16 %v4944
        %v4978 = vunpack.c.l.b16 %v4945
        %v4979 = vunpack.c.l.b16 %v4946
        %v4980 = vunpack.c.h.b16 %v4946
        %v4981 = vunpack.c.l.b16 %v4947
        %v4982 = vunpack.c.l.b16 %v4948
        %v4983 = vunpack.c.h.b16 %v4948
        %v4984 = vunpack.c.l.b16 %v4949
        %v4985 = vunpack.c.l.b16 %v4950
        %v4986 = vunpack.c.h.b16 %v4950
        %v4987 = vunpack.c.l.b16 %v4951
        %v4988 = vunpack.c.l.b16 %v4952
        %v4989 = vunpack.c.h.b16 %v4952
        %v4990 = vunpack.c.l.b16 %v4953
        %v4991 = vunpack.c.l.b16 %v4954
        %v4992 = vunpack.c.h.b16 %v4954
        %v4993 = vunpack.c.l.b16 %v4955
        %v4994 = vunpack.c.l.b16 %v4956
        %v4995 = vunpack.c.h.b16 %v4956
        %v4996 = vunpack.c.l.b16 %v4957
        %v4997 = vunpack.c.l.b16 %v4958
        %v4998 = vunpack.c.h.b16 %v4958
        %v4999 = vunpack.c.l.b16 %v4959
        %v5000 = vpack.c.b16 %v4979, %v4976
        %v5001 = vpack.c.b16 %v4980, %v4977
        %v5002 = vpack.c.b16 %v4981, %v4978
        %v5003 = vpack.c.b16 %v4985, %v4982
        %v5004 = vpack.c.b16 %v4986, %v4983
        %v5005 = vpack.c.b16 %v4987, %v4984
        %v5006 = vpack.c.b16 %v4991, %v4988
        %v5007 = vpack.c.b16 %v4992, %v4989
        %v5008 = vpack.c.b16 %v4993, %v4990
        %v5009 = vpack.c.b16 %v4997, %v4994
        %v5010 = vpack.c.b16 %v4998, %v4995
        %v5011 = vpack.c.b16 %v4999, %v4996
        %v5025 = vsel %vm4055, %v4942, 0
        %5027 = vmatpush.bf16.msra.mxu0 0
        %5028 = vmatpush.bf16.msra.mxu0 0
        %5029 = vmatpush.bf16.msra.mxu0 0
        %5030 = vmatpush.bf16.msra.mxu0 0
        %5031 = vmatpush.bf16.msra.mxu0 %v5009
        %5032 = vmatpush.bf16.msra.mxu0 %v5006
        %5033 = vmatpush.bf16.msra.mxu0 %v5003
        %5034 = vmatpush.bf16.msra.mxu0 %v5000
        %5035 = vmatmul.bf16.gmra.mxu0 %v5025
        %v5036 = vpop.f32.mrf.mxu0
        %v5037 = vadd.f32 0.0, %v5036
        %v5038 = vpop.f32.mrf.mxu0
        %v5039 = vadd.f32 0.0, %v5038
        %5040 = vdwg.mxu0
        %5041 = vmatpush.bf16.msra.mxu0 0
        %5042 = vmatpush.bf16.msra.mxu0 0
        %5043 = vmatpush.bf16.msra.mxu0 0
        %5044 = vmatpush.bf16.msra.mxu0 0
        %5045 = vmatpush.bf16.msra.mxu0 %v5010
        %5046 = vmatpush.bf16.msra.mxu0 %v5007
        %5047 = vmatpush.bf16.msra.mxu0 %v5004
        %5048 = vmatpush.bf16.msra.mxu0 %v5001
        %5049 = vmatmul.bf16.gmra.mxu0 %v5025
        %v5050 = vpop.f32.mrf.mxu0
        %v5051 = vadd.f32 0.0, %v5050
        %v5052 = vpop.f32.mrf.mxu0
        %v5053 = vadd.f32 0.0, %v5052
        %5054 = vdwg.mxu0
        %5055 = vmatpush.bf16.msra.mxu0 0
        %5056 = vmatpush.bf16.msra.mxu0 0
        %5057 = vmatpush.bf16.msra.mxu0 0
        %5058 = vmatpush.bf16.msra.mxu0 0
        %5059 = vmatpush.bf16.msra.mxu0 %v5011
        %5060 = vmatpush.bf16.msra.mxu0 %v5008
        %5061 = vmatpush.bf16.msra.mxu0 %v5005
        %5062 = vmatpush.bf16.msra.mxu0 %v5002
        %5063 = vmatmul.bf16.gmra.mxu0 %v5025
        %v5064 = vpop.f32.mrf.mxu0
        %v5065 = vadd.f32 0.0, %v5064
        %v5066 = vpop.f32.mrf.mxu0
        %v5067 = vadd.f32 0.0, %v5066
        %5068 = vdwg.mxu0
        %v5069 = vadd.f32 %v4794, %v5037
        %v5070 = vadd.f32 %v4795, %v5051
        %v5071 = vadd.f32 %v4796, %v5065
        %v5072 = vadd.f32 %v4797, %v5039
        %v5073 = vadd.f32 %v4798, %v5053
        %v5074 = vadd.f32 %v4799, %v5067
        %v5075 = vld [vmem:[#allocation4 + $0x10] sm:$0xff]
        %v5076 = vld [vmem:[#allocation4 + $0x58] sm:$0xff]
        %v5077 = vld [vmem:[#allocation4 + $0x28] sm:$0xff]
        %v5078 = vld [vmem:[#allocation4 + $0x70] sm:$0xff]
        %v5079 = vld [vmem:[#allocation4 + $0x40] sm:$0xff]
        %v5080 = vld [vmem:[#allocation4 + $0x88] sm:$0xff]
        %v5081 = vpack.c.bf16 %v5075, %v5075
        %v5082 = vpack.c.bf16 %v5076, %v5076
        %v5083 = vpack.c.bf16 %v5077, %v5077
        %v5084 = vpack.c.bf16 %v5078, %v5078
        %v5086 = vsel %vm4055, %v5081, 0
        %v5089 = vsel %vm4055, %v5083, 0
        %5091 = vmatpush.bf16.xpose.msra.mxu0 0
        %5092 = vmatpush.bf16.xpose.msra.mxu0 0
        %5093 = vmatpush.bf16.xpose.msra.mxu0 0
        %5094 = vmatpush.bf16.xpose.msra.mxu0 0
        %5095 = vmatpush.bf16.xpose.msra.mxu0 0
        %5096 = vmatpush.bf16.xpose.msra.mxu0 0
        %5097 = vmatpush.bf16.xpose.msra.mxu0 0
        %5098 = vmatpush.bf16.xpose.msra.mxu0 %v5089
        %5099 = vmatmul.bf16.gmra.mxu0 %v5086
        %v5100 = vpop.f32.mrf.mxu0
        %v5101 = vadd.f32 %v4044, %v5100
        %v5102 = vpop.f32.mrf.mxu0
        %5103 = vdwg.mxu0
        %v5105 = vsel %vm4055, %v5082, 0
        %v5108 = vsel %vm4055, %v5084, 0
        %5110 = vmatpush.bf16.xpose.msra.mxu0 0
        %5111 = vmatpush.bf16.xpose.msra.mxu0 0
        %5112 = vmatpush.bf16.xpose.msra.mxu0 0
        %5113 = vmatpush.bf16.xpose.msra.mxu0 0
        %5114 = vmatpush.bf16.xpose.msra.mxu0 0
        %5115 = vmatpush.bf16.xpose.msra.mxu0 0
        %5116 = vmatpush.bf16.xpose.msra.mxu0 0
        %5117 = vmatpush.bf16.xpose.msra.mxu0 %v5108
        %5118 = vmatmul.bf16.gmra.mxu0 %v5105
        %v5119 = vpop.f32.mrf.mxu0
        %v5120 = vadd.f32 %v4044, %v5119
        %v5121 = vpop.f32.mrf.mxu0
        %5122 = vdwg.mxu0
        %v5123 = vsel %vm4094, %v5101, -inf
        %5124 = vmax.xlane.f32.xlu0 %v5123
        %v5125 = vpop.xlane.xlu0 %5124
        %v5126 = vsel %vm4094, %v5120, -inf
        %5127 = vmax.xlane.f32.xlu0 %v5126
        %v5128 = vpop.xlane.xlu0 %5127
        %v5129 = vsub.f32 %v5101, %v5125
        %v5130 = vsub.f32 %v5120, %v5128
        %v5131 = vmul.f32 %v5129, 1.442695
        %v5132 = vpow.pop %v5131
        %v5133 = vmul.f32 %v5130, 1.442695
        %v5134 = vpow.pop %v5133
        %v5135 = vsel %vm4094, %v5132, 0.0
        %5136 = vadd.xlane.f32.xlu0 %v5135
        %v5137 = vpop.xlane.xlu0 %5136
        %v5138 = vsel %vm4094, %v5134, 0.0
        %5139 = vadd.xlane.f32.xlu0 %v5138
        %v5140 = vpop.xlane.xlu0 %5139
        %v5141 = vrcp.pop %v5137
        %v5142 = vrcp.pop %v5140
        %v5143 = vmul.f32 %v5132, %v5141
        %v5144 = vmul.f32 %v5134, %v5142
        %v5145 = vpack.c.bf16 %v5143, %v5143
        %v5146 = vpack.c.bf16 %v5144, %v5144
        %v5147 = vpack.c.bf16 %v5079, %v5079
        %v5148 = vpack.c.bf16 %v5080, %v5080
        %v5150 = vsel %vm4094, %v5145, 0
        %v5153 = vsel %vm4124, %v5147, 0
        %5155 = vmatpush.bf16.msra.mxu0 0
        %5156 = vmatpush.bf16.msra.mxu0 0
        %5157 = vmatpush.bf16.msra.mxu0 0
        %5158 = vmatpush.bf16.msra.mxu0 0
        %5159 = vmatpush.bf16.msra.mxu0 0
        %5160 = vmatpush.bf16.msra.mxu0 0
        %5161 = vmatpush.bf16.msra.mxu0 0
        %5162 = vmatpush.bf16.msra.mxu0 %v5153
        %5163 = vmatmul.bf16.gmra.mxu0 %v5150
        %v5164 = vpop.f32.mrf.mxu0
        %v5165 = vadd.f32 0.0, %v5164
        %v5166 = vpop.f32.mrf.mxu0
        %5167 = vdwg.mxu0
        %v5169 = vsel %vm4094, %v5146, 0
        %v5172 = vsel %vm4124, %v5148, 0
        %5174 = vmatpush.bf16.msra.mxu0 0
        %5175 = vmatpush.bf16.msra.mxu0 0
        %5176 = vmatpush.bf16.msra.mxu0 0
        %5177 = vmatpush.bf16.msra.mxu0 0
        %5178 = vmatpush.bf16.msra.mxu0 0
        %5179 = vmatpush.bf16.msra.mxu0 0
        %5180 = vmatpush.bf16.msra.mxu0 0
        %5181 = vmatpush.bf16.msra.mxu0 %v5172
        %5182 = vmatmul.bf16.gmra.mxu0 %v5169
        %v5183 = vpop.f32.mrf.mxu0
        %v5184 = vadd.f32 0.0, %v5183
        %v5185 = vpop.f32.mrf.mxu0
        %5186 = vdwg.mxu0
        %v5187 = vpack.c.bf16 %v5184, %v5165
        %s5188 = scalar_lea.vmem %s688, 384 [#allocation14]
        %v5189 = vld [vmem:[%s5188] sm:$0xff]
        %v5190 = vld [vmem:[%s5188 + $0x8] sm:$0xf]
        %v5191 = vld [vmem:[%s5188 + $0xc] sm:$0xff]
        %v5192 = vld [vmem:[%s5188 + $0x14] sm:$0xf]
        %v5193 = vld [vmem:[%s5188 + $0x18] sm:$0xff]
        %v5194 = vld [vmem:[%s5188 + $0x20] sm:$0xf]
        %v5195 = vld [vmem:[%s5188 + $0x24] sm:$0xff]
        %v5196 = vld [vmem:[%s5188 + $0x2c] sm:$0xf]
        %v5197 = vld [vmem:[%s5188 + $0x30] sm:$0xff]
        %v5198 = vld [vmem:[%s5188 + $0x38] sm:$0xf]
        %v5199 = vld [vmem:[%s5188 + $0x3c] sm:$0xff]
        %v5200 = vld [vmem:[%s5188 + $0x44] sm:$0xf]
        %v5201 = vld [vmem:[%s5188 + $0x48] sm:$0xff]
        %v5202 = vld [vmem:[%s5188 + $0x50] sm:$0xf]
        %v5203 = vld [vmem:[%s5188 + $0x54] sm:$0xff]
        %v5204 = vld [vmem:[%s5188 + $0x5c] sm:$0xf]
        %v5221 = vunpack.c.l.b16 %v5189
        %v5222 = vunpack.c.h.b16 %v5189
        %v5223 = vunpack.c.l.b16 %v5190
        %v5224 = vunpack.c.l.b16 %v5191
        %v5225 = vunpack.c.h.b16 %v5191
        %v5226 = vunpack.c.l.b16 %v5192
        %v5227 = vunpack.c.l.b16 %v5193
        %v5228 = vunpack.c.h.b16 %v5193
        %v5229 = vunpack.c.l.b16 %v5194
        %v5230 = vunpack.c.l.b16 %v5195
        %v5231 = vunpack.c.h.b16 %v5195
        %v5232 = vunpack.c.l.b16 %v5196
        %v5233 = vunpack.c.l.b16 %v5197
        %v5234 = vunpack.c.h.b16 %v5197
        %v5235 = vunpack.c.l.b16 %v5198
        %v5236 = vunpack.c.l.b16 %v5199
        %v5237 = vunpack.c.h.b16 %v5199
        %v5238 = vunpack.c.l.b16 %v5200
        %v5239 = vunpack.c.l.b16 %v5201
        %v5240 = vunpack.c.h.b16 %v5201
        %v5241 = vunpack.c.l.b16 %v5202
        %v5242 = vunpack.c.l.b16 %v5203
        %v5243 = vunpack.c.h.b16 %v5203
        %v5244 = vunpack.c.l.b16 %v5204
        %v5245 = vpack.c.b16 %v5224, %v5221
        %v5246 = vpack.c.b16 %v5225, %v5222
        %v5247 = vpack.c.b16 %v5226, %v5223
        %v5248 = vpack.c.b16 %v5230, %v5227
        %v5249 = vpack.c.b16 %v5231, %v5228
        %v5250 = vpack.c.b16 %v5232, %v5229
        %v5251 = vpack.c.b16 %v5236, %v5233
        %v5252 = vpack.c.b16 %v5237, %v5234
        %v5253 = vpack.c.b16 %v5238, %v5235
        %v5254 = vpack.c.b16 %v5242, %v5239
        %v5255 = vpack.c.b16 %v5243, %v5240
        %v5256 = vpack.c.b16 %v5244, %v5241
        %v5270 = vsel %vm4055, %v5187, 0
        %5272 = vmatpush.bf16.msra.mxu0 0
        %5273 = vmatpush.bf16.msra.mxu0 0
        %5274 = vmatpush.bf16.msra.mxu0 0
        %5275 = vmatpush.bf16.msra.mxu0 0
        %5276 = vmatpush.bf16.msra.mxu0 %v5254
        %5277 = vmatpush.bf16.msra.mxu0 %v5251
        %5278 = vmatpush.bf16.msra.mxu0 %v5248
        %5279 = vmatpush.bf16.msra.mxu0 %v5245
        %5280 = vmatmul.bf16.gmra.mxu0 %v5270
        %v5281 = vpop.f32.mrf.mxu0
        %v5282 = vadd.f32 0.0, %v5281
        %v5283 = vpop.f32.mrf.mxu0
        %v5284 = vadd.f32 0.0, %v5283
        %5285 = vdwg.mxu0
        %5286 = vmatpush.bf16.msra.mxu0 0
        %5287 = vmatpush.bf16.msra.mxu0 0
        %5288 = vmatpush.bf16.msra.mxu0 0
        %5289 = vmatpush.bf16.msra.mxu0 0
        %5290 = vmatpush.bf16.msra.mxu0 %v5255
        %5291 = vmatpush.bf16.msra.mxu0 %v5252
        %5292 = vmatpush.bf16.msra.mxu0 %v5249
        %5293 = vmatpush.bf16.msra.mxu0 %v5246
        %5294 = vmatmul.bf16.gmra.mxu0 %v5270
        %v5295 = vpop.f32.mrf.mxu0
        %v5296 = vadd.f32 0.0, %v5295
        %v5297 = vpop.f32.mrf.mxu0
        %v5298 = vadd.f32 0.0, %v5297
        %5299 = vdwg.mxu0
        %5300 = vmatpush.bf16.msra.mxu0 0
        %5301 = vmatpush.bf16.msra.mxu0 0
        %5302 = vmatpush.bf16.msra.mxu0 0
        %5303 = vmatpush.bf16.msra.mxu0 0
        %5304 = vmatpush.bf16.msra.mxu0 %v5256
        %5305 = vmatpush.bf16.msra.mxu0 %v5253
        %5306 = vmatpush.bf16.msra.mxu0 %v5250
        %5307 = vmatpush.bf16.msra.mxu0 %v5247
        %5308 = vmatmul.bf16.gmra.mxu0 %v5270
        %v5309 = vpop.f32.mrf.mxu0
        %v5310 = vadd.f32 0.0, %v5309
        %v5311 = vpop.f32.mrf.mxu0
        %v5312 = vadd.f32 0.0, %v5311
        %5313 = vdwg.mxu0
        %v5314 = vadd.f32 %v5069, %v5282
        %v5315 = vadd.f32 %v5070, %v5296
        %v5316 = vadd.f32 %v5071, %v5310
        %v5317 = vadd.f32 %v5072, %v5284
        %v5318 = vadd.f32 %v5073, %v5298
        %v5319 = vadd.f32 %v5074, %v5312
        %v5320 = vld [vmem:[#allocation4 + $0x10] sm:$0xff]
        %v5321 = vld [vmem:[#allocation4 + $0x58] sm:$0xff]
        %v5322 = vld [vmem:[#allocation4 + $0x28] sm:$0xff]
        %v5323 = vld [vmem:[#allocation4 + $0x70] sm:$0xff]
        %v5324 = vld [vmem:[#allocation4 + $0x40] sm:$0xff]
        %v5325 = vld [vmem:[#allocation4 + $0x88] sm:$0xff]
        %v5326 = vpack.c.bf16 %v5320, %v5320
        %v5327 = vpack.c.bf16 %v5321, %v5321
        %v5328 = vpack.c.bf16 %v5322, %v5322
        %v5329 = vpack.c.bf16 %v5323, %v5323
        %v5331 = vunpack.c.l.b16 %v5326
        %v5332 = vpack.c.b16 %v5331, %v5331
        %5333 = vrot.lane.b32.xlu0 %v5332, 64
        %v5334 = vpop.permute.xlu0 %5333
        %v5336 = vunpack.c.l.b16 %v5328
        %v5337 = vpack.c.b16 %v5336, %v5336
        %5338 = vrot.lane.b32.xlu0 %v5337, 64
        %v5339 = vpop.permute.xlu0 %5338
        %v5341 = vsel %vm4055, %v5334, 0
        %v5344 = vsel %vm4055, %v5339, 0
        %5346 = vmatpush.bf16.xpose.msra.mxu0 0
        %5347 = vmatpush.bf16.xpose.msra.mxu0 0
        %5348 = vmatpush.bf16.xpose.msra.mxu0 0
        %5349 = vmatpush.bf16.xpose.msra.mxu0 0
        %5350 = vmatpush.bf16.xpose.msra.mxu0 0
        %5351 = vmatpush.bf16.xpose.msra.mxu0 0
        %5352 = vmatpush.bf16.xpose.msra.mxu0 0
        %5353 = vmatpush.bf16.xpose.msra.mxu0 %v5344
        %5354 = vmatmul.bf16.gmra.mxu0 %v5341
        %v5355 = vpop.f32.mrf.mxu0
        %v5356 = vadd.f32 %v4044, %v5355
        %v5357 = vpop.f32.mrf.mxu0
        %5358 = vdwg.mxu0
        %v5360 = vunpack.c.l.b16 %v5327
        %v5361 = vpack.c.b16 %v5360, %v5360
        %5362 = vrot.lane.b32.xlu0 %v5361, 64
        %v5363 = vpop.permute.xlu0 %5362
        %v5365 = vunpack.c.l.b16 %v5329
        %v5366 = vpack.c.b16 %v5365, %v5365
        %5367 = vrot.lane.b32.xlu0 %v5366, 64
        %v5368 = vpop.permute.xlu0 %5367
        %v5370 = vsel %vm4055, %v5363, 0
        %v5373 = vsel %vm4055, %v5368, 0
        %5375 = vmatpush.bf16.xpose.msra.mxu0 0
        %5376 = vmatpush.bf16.xpose.msra.mxu0 0
        %5377 = vmatpush.bf16.xpose.msra.mxu0 0
        %5378 = vmatpush.bf16.xpose.msra.mxu0 0
        %5379 = vmatpush.bf16.xpose.msra.mxu0 0
        %5380 = vmatpush.bf16.xpose.msra.mxu0 0
        %5381 = vmatpush.bf16.xpose.msra.mxu0 0
        %5382 = vmatpush.bf16.xpose.msra.mxu0 %v5373
        %5383 = vmatmul.bf16.gmra.mxu0 %v5370
        %v5384 = vpop.f32.mrf.mxu0
        %v5385 = vadd.f32 %v4044, %v5384
        %v5386 = vpop.f32.mrf.mxu0
        %5387 = vdwg.mxu0
        %v5388 = vsel %vm4094, %v5356, -inf
        %5389 = vmax.xlane.f32.xlu0 %v5388
        %v5390 = vpop.xlane.xlu0 %5389
        %v5391 = vsel %vm4094, %v5385, -inf
        %5392 = vmax.xlane.f32.xlu0 %v5391
        %v5393 = vpop.xlane.xlu0 %5392
        %v5394 = vsub.f32 %v5356, %v5390
        %v5395 = vsub.f32 %v5385, %v5393
        %v5396 = vmul.f32 %v5394, 1.442695
        %v5397 = vpow.pop %v5396
        %v5398 = vmul.f32 %v5395, 1.442695
        %v5399 = vpow.pop %v5398
        %v5400 = vsel %vm4094, %v5397, 0.0
        %5401 = vadd.xlane.f32.xlu0 %v5400
        %v5402 = vpop.xlane.xlu0 %5401
        %v5403 = vsel %vm4094, %v5399, 0.0
        %5404 = vadd.xlane.f32.xlu0 %v5403
        %v5405 = vpop.xlane.xlu0 %5404
        %v5406 = vrcp.pop %v5402
        %v5407 = vrcp.pop %v5405
        %v5408 = vmul.f32 %v5397, %v5406
        %v5409 = vmul.f32 %v5399, %v5407
        %v5410 = vpack.c.bf16 %v5408, %v5408
        %v5411 = vpack.c.bf16 %v5409, %v5409
        %v5412 = vpack.c.bf16 %v5324, %v5324
        %v5413 = vpack.c.bf16 %v5325, %v5325
        %v5415 = vunpack.c.l.b16 %v5412
        %v5416 = vpack.c.b16 %v5415, %v5415
        %5417 = vrot.lane.b32.xlu0 %v5416, 64
        %v5418 = vpop.permute.xlu0 %5417
        %v5420 = vsel %vm4094, %v5410, 0
        %v5423 = vsel %vm4124, %v5418, 0
        %5425 = vmatpush.bf16.msra.mxu0 0
        %5426 = vmatpush.bf16.msra.mxu0 0
        %5427 = vmatpush.bf16.msra.mxu0 0
        %5428 = vmatpush.bf16.msra.mxu0 0
        %5429 = vmatpush.bf16.msra.mxu0 0
        %5430 = vmatpush.bf16.msra.mxu0 0
        %5431 = vmatpush.bf16.msra.mxu0 0
        %5432 = vmatpush.bf16.msra.mxu0 %v5423
        %5433 = vmatmul.bf16.gmra.mxu0 %v5420
        %v5434 = vpop.f32.mrf.mxu0
        %v5435 = vadd.f32 0.0, %v5434
        %v5436 = vpop.f32.mrf.mxu0
        %5437 = vdwg.mxu0
        %v5439 = vunpack.c.l.b16 %v5413
        %v5440 = vpack.c.b16 %v5439, %v5439
        %5441 = vrot.lane.b32.xlu0 %v5440, 64
        %v5442 = vpop.permute.xlu0 %5441
        %v5444 = vsel %vm4094, %v5411, 0
        %v5447 = vsel %vm4124, %v5442, 0
        %5449 = vmatpush.bf16.msra.mxu0 0
        %5450 = vmatpush.bf16.msra.mxu0 0
        %5451 = vmatpush.bf16.msra.mxu0 0
        %5452 = vmatpush.bf16.msra.mxu0 0
        %5453 = vmatpush.bf16.msra.mxu0 0
        %5454 = vmatpush.bf16.msra.mxu0 0
        %5455 = vmatpush.bf16.msra.mxu0 0
        %5456 = vmatpush.bf16.msra.mxu0 %v5447
        %5457 = vmatmul.bf16.gmra.mxu0 %v5444
        %v5458 = vpop.f32.mrf.mxu0
        %v5459 = vadd.f32 0.0, %v5458
        %v5460 = vpop.f32.mrf.mxu0
        %5461 = vdwg.mxu0
        %v5462 = vpack.c.bf16 %v5459, %v5435
        %s5463 = scalar_lea.vmem %s688, 480 [#allocation14]
        %v5464 = vld [vmem:[%s5463] sm:$0xff]
        %v5465 = vld [vmem:[%s5463 + $0x8] sm:$0xf]
        %v5466 = vld [vmem:[%s5463 + $0xc] sm:$0xff]
        %v5467 = vld [vmem:[%s5463 + $0x14] sm:$0xf]
        %v5468 = vld [vmem:[%s5463 + $0x18] sm:$0xff]
        %v5469 = vld [vmem:[%s5463 + $0x20] sm:$0xf]
        %v5470 = vld [vmem:[%s5463 + $0x24] sm:$0xff]
        %v5471 = vld [vmem:[%s5463 + $0x2c] sm:$0xf]
        %v5472 = vld [vmem:[%s5463 + $0x30] sm:$0xff]
        %v5473 = vld [vmem:[%s5463 + $0x38] sm:$0xf]
        %v5474 = vld [vmem:[%s5463 + $0x3c] sm:$0xff]
        %v5475 = vld [vmem:[%s5463 + $0x44] sm:$0xf]
        %v5476 = vld [vmem:[%s5463 + $0x48] sm:$0xff]
        %v5477 = vld [vmem:[%s5463 + $0x50] sm:$0xf]
        %v5478 = vld [vmem:[%s5463 + $0x54] sm:$0xff]
        %v5479 = vld [vmem:[%s5463 + $0x5c] sm:$0xf]
        %v5496 = vunpack.c.l.b16 %v5464
        %v5497 = vunpack.c.h.b16 %v5464
        %v5498 = vunpack.c.l.b16 %v5465
        %v5499 = vunpack.c.l.b16 %v5466
        %v5500 = vunpack.c.h.b16 %v5466
        %v5501 = vunpack.c.l.b16 %v5467
        %v5502 = vunpack.c.l.b16 %v5468
        %v5503 = vunpack.c.h.b16 %v5468
        %v5504 = vunpack.c.l.b16 %v5469
        %v5505 = vunpack.c.l.b16 %v5470
        %v5506 = vunpack.c.h.b16 %v5470
        %v5507 = vunpack.c.l.b16 %v5471
        %v5508 = vunpack.c.l.b16 %v5472
        %v5509 = vunpack.c.h.b16 %v5472
        %v5510 = vunpack.c.l.b16 %v5473
        %v5511 = vunpack.c.l.b16 %v5474
        %v5512 = vunpack.c.h.b16 %v5474
        %v5513 = vunpack.c.l.b16 %v5475
        %v5514 = vunpack.c.l.b16 %v5476
        %v5515 = vunpack.c.h.b16 %v5476
        %v5516 = vunpack.c.l.b16 %v5477
        %v5517 = vunpack.c.l.b16 %v5478
        %v5518 = vunpack.c.h.b16 %v5478
        %v5519 = vunpack.c.l.b16 %v5479
        %v5520 = vpack.c.b16 %v5499, %v5496
        %v5521 = vpack.c.b16 %v5500, %v5497
        %v5522 = vpack.c.b16 %v5501, %v5498
        %v5523 = vpack.c.b16 %v5505, %v5502
        %v5524 = vpack.c.b16 %v5506, %v5503
        %v5525 = vpack.c.b16 %v5507, %v5504
        %v5526 = vpack.c.b16 %v5511, %v5508
        %v5527 = vpack.c.b16 %v5512, %v5509
        %v5528 = vpack.c.b16 %v5513, %v5510
        %v5529 = vpack.c.b16 %v5517, %v5514
        %v5530 = vpack.c.b16 %v5518, %v5515
        %v5531 = vpack.c.b16 %v5519, %v5516
        %v5545 = vsel %vm4055, %v5462, 0
        %5547 = vmatpush.bf16.msra.mxu0 0
        %5548 = vmatpush.bf16.msra.mxu0 0
        %5549 = vmatpush.bf16.msra.mxu0 0
        %5550 = vmatpush.bf16.msra.mxu0 0
        %5551 = vmatpush.bf16.msra.mxu0 %v5529
        %5552 = vmatpush.bf16.msra.mxu0 %v5526
        %5553 = vmatpush.bf16.msra.mxu0 %v5523
        %5554 = vmatpush.bf16.msra.mxu0 %v5520
        %5555 = vmatmul.bf16.gmra.mxu0 %v5545
        %v5556 = vpop.f32.mrf.mxu0
        %v5557 = vadd.f32 0.0, %v5556
        %v5558 = vpop.f32.mrf.mxu0
        %v5559 = vadd.f32 0.0, %v5558
        %5560 = vdwg.mxu0
        %5561 = vmatpush.bf16.msra.mxu0 0
        %5562 = vmatpush.bf16.msra.mxu0 0
        %5563 = vmatpush.bf16.msra.mxu0 0
        %5564 = vmatpush.bf16.msra.mxu0 0
        %5565 = vmatpush.bf16.msra.mxu0 %v5530
        %5566 = vmatpush.bf16.msra.mxu0 %v5527
        %5567 = vmatpush.bf16.msra.mxu0 %v5524
        %5568 = vmatpush.bf16.msra.mxu0 %v5521
        %5569 = vmatmul.bf16.gmra.mxu0 %v5545
        %v5570 = vpop.f32.mrf.mxu0
        %v5571 = vadd.f32 0.0, %v5570
        %v5572 = vpop.f32.mrf.mxu0
        %v5573 = vadd.f32 0.0, %v5572
        %5574 = vdwg.mxu0
        %5575 = vmatpush.bf16.msra.mxu0 0
        %5576 = vmatpush.bf16.msra.mxu0 0
        %5577 = vmatpush.bf16.msra.mxu0 0
        %5578 = vmatpush.bf16.msra.mxu0 0
        %5579 = vmatpush.bf16.msra.mxu0 %v5531
        %5580 = vmatpush.bf16.msra.mxu0 %v5528
        %5581 = vmatpush.bf16.msra.mxu0 %v5525
        %5582 = vmatpush.bf16.msra.mxu0 %v5522
        %5583 = vmatmul.bf16.gmra.mxu0 %v5545
        %v5584 = vpop.f32.mrf.mxu0
        %v5585 = vadd.f32 0.0, %v5584
        %v5586 = vpop.f32.mrf.mxu0
        %v5587 = vadd.f32 0.0, %v5586
        %5588 = vdwg.mxu0
        %v5589 = vadd.f32 %v5314, %v5557
        %v5590 = vadd.f32 %v5315, %v5571
        %v5591 = vadd.f32 %v5316, %v5585
        %v5592 = vadd.f32 %v5317, %v5559
        %v5593 = vadd.f32 %v5318, %v5573
        %v5594 = vadd.f32 %v5319, %v5587
        %v5595 = vadd.f32 %v2175, %v5589
        %v5596 = vadd.f32 %v2176, %v5590
        %v5597 = vadd.f32 %v2177, %v5591
        %v5598 = vadd.f32 %v2178, %v5592
        %v5599 = vadd.f32 %v2179, %v5593
        %v5600 = vadd.f32 %v2180, %v5594
        %v5601 = vld [vmem:[%s698] sm:$0x7]
        %v5603 = vperm.slane %v5601, 0
        %v5604 = vperm.slane %v5601, 1
        %v5605 = vperm.slane %v5601, 2
        %v5609 = vadd.f32 %v5595, %v5603
        %v5610 = vadd.f32 %v5596, %v5604
        %v5611 = vadd.f32 %v5597, %v5605
        %v5612 = vadd.f32 %v5598, %v5603
        %v5613 = vadd.f32 %v5599, %v5604
        %v5614 = vadd.f32 %v5600, %v5605
        %v5615 = vld [vmem:[%s708] sm:$0x7]
        %v5616 = vld [vmem:[%s718] sm:$0x7]
        %v5617 = vadd.f32 %v5609, %v5610
        %v5618 = vadd.f32 %v5617, %v5611
        %5619 = vadd.xlane.f32.xlu0 %v5618
        %v5620 = vpop.xlane.xlu0 %5619
        %v5621 = vadd.f32 %v5612, %v5613
        %v5622 = vadd.f32 %v5621, %v5614
        %5623 = vadd.xlane.f32.xlu0 %v5622
        %v5624 = vpop.xlane.xlu0 %5623
        %v5625 = vmul.f32 %v5620, %v2197
        %v5626 = vmul.f32 %v5624, %v2197
        %v5627 = vsub.f32 %v5609, %v5625
        %v5628 = vsub.f32 %v5610, %v5625
        %v5629 = vsub.f32 %v5611, %v5625
        %v5630 = vsub.f32 %v5612, %v5626
        %v5631 = vsub.f32 %v5613, %v5626
        %v5632 = vsub.f32 %v5614, %v5626
        %v5633 = vmul.f32 %v5627, %v5627
        %v5634 = vmul.f32 %v5628, %v5628
        %v5635 = vmul.f32 %v5629, %v5629
        %v5636 = vmul.f32 %v5630, %v5630
        %v5637 = vmul.f32 %v5631, %v5631
        %v5638 = vmul.f32 %v5632, %v5632
        %v5639 = vadd.f32 %v5633, %v5634
        %v5640 = vadd.f32 %v5639, %v5635
        %5641 = vadd.xlane.f32.xlu0 %v5640
        %v5642 = vpop.xlane.xlu0 %5641
        %v5643 = vadd.f32 %v5636, %v5637
        %v5644 = vadd.f32 %v5643, %v5638
        %5645 = vadd.xlane.f32.xlu0 %v5644
        %v5646 = vpop.xlane.xlu0 %5645
        %v5647 = vmul.f32 %v5642, %v2197
        %v5648 = vmul.f32 %v5646, %v2197
        %v5649 = vadd.f32 %v5647, 1e-06
        %v5650 = vadd.f32 %v5648, 1e-06
        %v5651 = vrsqrt.pop %v5649
        %v5652 = vmul.f32 %v5651, %v5649
        %v5653 = vmul.f32 %v5652, %v5651
        %v5654 = vmul.f32 0.5, %v5653
        %v5655 = vsub.f32 1.5, %v5654
        %v5656 = vmul.f32 %v5651, %v5655
        %vm5657 = vweird.f32 %v5649
        %vm5658 = vweird.f32 %v5651
        %vm5659 = vmor %vm5657, %vm5658
        %v5660 = vsel %vm5659, %v5651, %v5656
        %v5661 = vrsqrt.pop %v5650
        %v5662 = vmul.f32 %v5661, %v5650
        %v5663 = vmul.f32 %v5662, %v5661
        %v5664 = vmul.f32 0.5, %v5663
        %v5665 = vsub.f32 1.5, %v5664
        %v5666 = vmul.f32 %v5661, %v5665
        %vm5667 = vweird.f32 %v5650
        %vm5668 = vweird.f32 %v5661
        %vm5669 = vmor %vm5667, %vm5668
        %v5670 = vsel %vm5669, %v5661, %v5666
        %v5671 = vmul.f32 %v5627, %v5660
        %v5672 = vmul.f32 %v5628, %v5660
        %v5673 = vmul.f32 %v5629, %v5660
        %v5674 = vmul.f32 %v5630, %v5670
        %v5675 = vmul.f32 %v5631, %v5670
        %v5676 = vmul.f32 %v5632, %v5670
        %v5678 = vperm.slane %v5615, 0
        %v5679 = vperm.slane %v5615, 1
        %v5680 = vperm.slane %v5615, 2
        %v5684 = vmul.f32 %v5671, %v5678
        %v5685 = vmul.f32 %v5672, %v5679
        %v5686 = vmul.f32 %v5673, %v5680
        %v5687 = vmul.f32 %v5674, %v5678
        %v5688 = vmul.f32 %v5675, %v5679
        %v5689 = vmul.f32 %v5676, %v5680
        %v5691 = vperm.slane %v5616, 0
        %v5692 = vperm.slane %v5616, 1
        %v5693 = vperm.slane %v5616, 2
        %v5697 = vadd.f32 %v5684, %v5691
        %v5698 = vadd.f32 %v5685, %v5692
        %v5699 = vadd.f32 %v5686, %v5693
        %v5700 = vadd.f32 %v5687, %v5691
        %v5701 = vadd.f32 %v5688, %v5692
        %v5702 = vadd.f32 %v5689, %v5693
        %v5703 = vpack.c.bf16 %v5700, %v5697
        %v5704 = vpack.c.bf16 %v5701, %v5698
        %v5705 = vpack.c.bf16 %v5702, %v5699
        %v5706 = vld [vmem:[%s728] sm:$0xff]
        %v5707 = vld [vmem:[%s728 + $0x8] sm:$0xff]
        %v5708 = vld [vmem:[%s728 + $0x10] sm:$0xff]
        %v5709 = vld [vmem:[%s728 + $0x18] sm:$0xff]
        %v5710 = vld [vmem:[%s728 + $0x20] sm:$0xff]
        %v5711 = vld [vmem:[%s728 + $0x28] sm:$0xff]
        %v5712 = vld [vmem:[%s728 + $0x30] sm:$0xff]
        %v5713 = vld [vmem:[%s728 + $0x38] sm:$0xff]
        %v5714 = vld [vmem:[%s728 + $0x40] sm:$0xff]
        %v5715 = vld [vmem:[%s728 + $0x48] sm:$0xff]
        %v5716 = vld [vmem:[%s728 + $0x50] sm:$0xff]
        %v5717 = vld [vmem:[%s728 + $0x58] sm:$0xff]
        %v5718 = vld [vmem:[%s728 + $0x60] sm:$0xff]
        %v5719 = vld [vmem:[%s728 + $0x68] sm:$0xff]
        %v5720 = vld [vmem:[%s728 + $0x70] sm:$0xff]
        %v5721 = vld [vmem:[%s728 + $0x78] sm:$0xff]
        %v5722 = vld [vmem:[%s728 + $0x80] sm:$0xff]
        %v5723 = vld [vmem:[%s728 + $0x88] sm:$0xff]
        %v5724 = vld [vmem:[%s728 + $0x90] sm:$0xff]
        %v5725 = vld [vmem:[%s728 + $0x98] sm:$0xff]
        %v5726 = vld [vmem:[%s728 + $0xa0] sm:$0xff]
        %v5727 = vld [vmem:[%s728 + $0xa8] sm:$0xff]
        %v5728 = vld [vmem:[%s728 + $0xb0] sm:$0xff]
        %v5729 = vld [vmem:[%s728 + $0xb8] sm:$0xff]
        %v5730 = vld [vmem:[%s728 + $0xc0] sm:$0xff]
        %v5731 = vld [vmem:[%s728 + $0xc8] sm:$0xff]
        %v5732 = vld [vmem:[%s728 + $0xd0] sm:$0xff]
        %v5733 = vld [vmem:[%s728 + $0xd8] sm:$0xff]
        %v5734 = vld [vmem:[%s728 + $0xe0] sm:$0xff]
        %v5735 = vld [vmem:[%s728 + $0xe8] sm:$0xff]
        %v5736 = vld [vmem:[%s728 + $0xf0] sm:$0xff]
        %v5737 = vld [vmem:[%s728 + $0xf8] sm:$0xff]
        %v5738 = vld [vmem:[%s728 + $0x100] sm:$0xff]
        %v5739 = vld [vmem:[%s728 + $0x108] sm:$0xff]
        %v5740 = vld [vmem:[%s728 + $0x110] sm:$0xff]
        %v5741 = vld [vmem:[%s728 + $0x118] sm:$0xff]
        %v5742 = vld [vmem:[%s728 + $0x120] sm:$0xff]
        %v5743 = vld [vmem:[%s728 + $0x128] sm:$0xff]
        %v5744 = vld [vmem:[%s728 + $0x130] sm:$0xff]
        %v5745 = vld [vmem:[%s728 + $0x138] sm:$0xff]
        %v5746 = vld [vmem:[%s728 + $0x140] sm:$0xff]
        %v5747 = vld [vmem:[%s728 + $0x148] sm:$0xff]
        %v5748 = vld [vmem:[%s728 + $0x150] sm:$0xff]
        %v5749 = vld [vmem:[%s728 + $0x158] sm:$0xff]
        %v5750 = vld [vmem:[%s728 + $0x160] sm:$0xff]
        %v5751 = vld [vmem:[%s728 + $0x168] sm:$0xff]
        %v5752 = vld [vmem:[%s728 + $0x170] sm:$0xff]
        %v5753 = vld [vmem:[%s728 + $0x178] sm:$0xff]
        %v5754 = vld [vmem:[%s728 + $0x180] sm:$0xff]
        %v5755 = vld [vmem:[%s728 + $0x188] sm:$0xff]
        %v5756 = vld [vmem:[%s728 + $0x190] sm:$0xff]
        %v5757 = vld [vmem:[%s728 + $0x198] sm:$0xff]
        %v5758 = vld [vmem:[%s728 + $0x1a0] sm:$0xff]
        %v5759 = vld [vmem:[%s728 + $0x1a8] sm:$0xff]
        %v5760 = vld [vmem:[%s728 + $0x1b0] sm:$0xff]
        %v5761 = vld [vmem:[%s728 + $0x1b8] sm:$0xff]
        %v5762 = vld [vmem:[%s728 + $0x1c0] sm:$0xff]
        %v5763 = vld [vmem:[%s728 + $0x1c8] sm:$0xff]
        %v5764 = vld [vmem:[%s728 + $0x1d0] sm:$0xff]
        %v5765 = vld [vmem:[%s728 + $0x1d8] sm:$0xff]
        %v5766 = vld [vmem:[%s728 + $0x1e0] sm:$0xff]
        %v5767 = vld [vmem:[%s728 + $0x1e8] sm:$0xff]
        %v5768 = vld [vmem:[%s728 + $0x1f0] sm:$0xff]
        %v5769 = vld [vmem:[%s728 + $0x1f8] sm:$0xff]
        %v5770 = vld [vmem:[%s728 + $0x200] sm:$0xff]
        %v5771 = vld [vmem:[%s728 + $0x208] sm:$0xff]
        %v5772 = vld [vmem:[%s728 + $0x210] sm:$0xff]
        %v5773 = vld [vmem:[%s728 + $0x218] sm:$0xff]
        %v5774 = vld [vmem:[%s728 + $0x220] sm:$0xff]
        %v5775 = vld [vmem:[%s728 + $0x228] sm:$0xff]
        %v5776 = vld [vmem:[%s728 + $0x230] sm:$0xff]
        %v5777 = vld [vmem:[%s728 + $0x238] sm:$0xff]
        %v5778 = vld [vmem:[%s728 + $0x240] sm:$0xff]
        %v5779 = vld [vmem:[%s728 + $0x248] sm:$0xff]
        %v5780 = vld [vmem:[%s728 + $0x250] sm:$0xff]
        %v5781 = vld [vmem:[%s728 + $0x258] sm:$0xff]
        %v5782 = vld [vmem:[%s728 + $0x260] sm:$0xff]
        %v5783 = vld [vmem:[%s728 + $0x268] sm:$0xff]
        %v5784 = vld [vmem:[%s728 + $0x270] sm:$0xff]
        %v5785 = vld [vmem:[%s728 + $0x278] sm:$0xff]
        %v5786 = vld [vmem:[%s728 + $0x280] sm:$0xff]
        %v5787 = vld [vmem:[%s728 + $0x288] sm:$0xff]
        %v5788 = vld [vmem:[%s728 + $0x290] sm:$0xff]
        %v5789 = vld [vmem:[%s728 + $0x298] sm:$0xff]
        %v5790 = vld [vmem:[%s728 + $0x2a0] sm:$0xff]
        %v5791 = vld [vmem:[%s728 + $0x2a8] sm:$0xff]
        %v5792 = vld [vmem:[%s728 + $0x2b0] sm:$0xff]
        %v5793 = vld [vmem:[%s728 + $0x2b8] sm:$0xff]
        %v5794 = vld [vmem:[%s728 + $0x2c0] sm:$0xff]
        %v5795 = vld [vmem:[%s728 + $0x2c8] sm:$0xff]
        %v5796 = vld [vmem:[%s728 + $0x2d0] sm:$0xff]
        %v5797 = vld [vmem:[%s728 + $0x2d8] sm:$0xff]
        %v5798 = vld [vmem:[%s728 + $0x2e0] sm:$0xff]
        %v5799 = vld [vmem:[%s728 + $0x2e8] sm:$0xff]
        %v5800 = vld [vmem:[%s728 + $0x2f0] sm:$0xff]
        %v5801 = vld [vmem:[%s728 + $0x2f8] sm:$0xff]
        %v5802 = vld [vmem:[%s728 + $0x300] sm:$0xff]
        %v5803 = vld [vmem:[%s728 + $0x308] sm:$0xff]
        %v5804 = vld [vmem:[%s728 + $0x310] sm:$0xff]
        %v5805 = vld [vmem:[%s728 + $0x318] sm:$0xff]
        %v5806 = vld [vmem:[%s728 + $0x320] sm:$0xff]
        %v5807 = vld [vmem:[%s728 + $0x328] sm:$0xff]
        %v5808 = vld [vmem:[%s728 + $0x330] sm:$0xff]
        %v5809 = vld [vmem:[%s728 + $0x338] sm:$0xff]
        %v5810 = vld [vmem:[%s728 + $0x340] sm:$0xff]
        %v5811 = vld [vmem:[%s728 + $0x348] sm:$0xff]
        %v5812 = vld [vmem:[%s728 + $0x350] sm:$0xff]
        %v5813 = vld [vmem:[%s728 + $0x358] sm:$0xff]
        %v5814 = vld [vmem:[%s728 + $0x360] sm:$0xff]
        %v5815 = vld [vmem:[%s728 + $0x368] sm:$0xff]
        %v5816 = vld [vmem:[%s728 + $0x370] sm:$0xff]
        %v5817 = vld [vmem:[%s728 + $0x378] sm:$0xff]
        %v5818 = vld [vmem:[%s728 + $0x380] sm:$0xff]
        %v5819 = vld [vmem:[%s728 + $0x388] sm:$0xff]
        %v5820 = vld [vmem:[%s728 + $0x390] sm:$0xff]
        %v5821 = vld [vmem:[%s728 + $0x398] sm:$0xff]
        %v5822 = vld [vmem:[%s728 + $0x3a0] sm:$0xff]
        %v5823 = vld [vmem:[%s728 + $0x3a8] sm:$0xff]
        %v5824 = vld [vmem:[%s728 + $0x3b0] sm:$0xff]
        %v5825 = vld [vmem:[%s728 + $0x3b8] sm:$0xff]
        %v5826 = vld [vmem:[%s728 + $0x3c0] sm:$0xff]
        %v5827 = vld [vmem:[%s728 + $0x3c8] sm:$0xff]
        %v5828 = vld [vmem:[%s728 + $0x3d0] sm:$0xff]
        %v5829 = vld [vmem:[%s728 + $0x3d8] sm:$0xff]
        %v5830 = vld [vmem:[%s728 + $0x3e0] sm:$0xff]
        %v5831 = vld [vmem:[%s728 + $0x3e8] sm:$0xff]
        %v5832 = vld [vmem:[%s728 + $0x3f0] sm:$0xff]
        %v5833 = vld [vmem:[%s728 + $0x3f8] sm:$0xff]
        %v5834 = vld [vmem:[%s728 + $0x400] sm:$0xff]
        %v5835 = vld [vmem:[%s728 + $0x408] sm:$0xff]
        %v5836 = vld [vmem:[%s728 + $0x410] sm:$0xff]
        %v5837 = vld [vmem:[%s728 + $0x418] sm:$0xff]
        %v5838 = vld [vmem:[%s728 + $0x420] sm:$0xff]
        %v5839 = vld [vmem:[%s728 + $0x428] sm:$0xff]
        %v5840 = vld [vmem:[%s728 + $0x430] sm:$0xff]
        %v5841 = vld [vmem:[%s728 + $0x438] sm:$0xff]
        %v5842 = vld [vmem:[%s728 + $0x440] sm:$0xff]
        %v5843 = vld [vmem:[%s728 + $0x448] sm:$0xff]
        %v5844 = vld [vmem:[%s728 + $0x450] sm:$0xff]
        %v5845 = vld [vmem:[%s728 + $0x458] sm:$0xff]
        %v5846 = vld [vmem:[%s728 + $0x460] sm:$0xff]
        %v5847 = vld [vmem:[%s728 + $0x468] sm:$0xff]
        %v5848 = vld [vmem:[%s728 + $0x470] sm:$0xff]
        %v5849 = vld [vmem:[%s728 + $0x478] sm:$0xff]
        %v5850 = vld [vmem:[%s728 + $0x480] sm:$0xff]
        %v5851 = vld [vmem:[%s728 + $0x488] sm:$0xff]
        %v5852 = vld [vmem:[%s728 + $0x490] sm:$0xff]
        %v5853 = vld [vmem:[%s728 + $0x498] sm:$0xff]
        %v5854 = vld [vmem:[%s728 + $0x4a0] sm:$0xff]
        %v5855 = vld [vmem:[%s728 + $0x4a8] sm:$0xff]
        %v5856 = vld [vmem:[%s728 + $0x4b0] sm:$0xff]
        %v5857 = vld [vmem:[%s728 + $0x4b8] sm:$0xff]
        %v5858 = vld [vmem:[%s728 + $0x4c0] sm:$0xff]
        %v5859 = vld [vmem:[%s728 + $0x4c8] sm:$0xff]
        %v5860 = vld [vmem:[%s728 + $0x4d0] sm:$0xff]
        %v5861 = vld [vmem:[%s728 + $0x4d8] sm:$0xff]
        %v5862 = vld [vmem:[%s728 + $0x4e0] sm:$0xff]
        %v5863 = vld [vmem:[%s728 + $0x4e8] sm:$0xff]
        %v5864 = vld [vmem:[%s728 + $0x4f0] sm:$0xff]
        %v5865 = vld [vmem:[%s728 + $0x4f8] sm:$0xff]
        %v5866 = vld [vmem:[%s728 + $0x500] sm:$0xff]
        %v5867 = vld [vmem:[%s728 + $0x508] sm:$0xff]
        %v5868 = vld [vmem:[%s728 + $0x510] sm:$0xff]
        %v5869 = vld [vmem:[%s728 + $0x518] sm:$0xff]
        %v5870 = vld [vmem:[%s728 + $0x520] sm:$0xff]
        %v5871 = vld [vmem:[%s728 + $0x528] sm:$0xff]
        %v5872 = vld [vmem:[%s728 + $0x530] sm:$0xff]
        %v5873 = vld [vmem:[%s728 + $0x538] sm:$0xff]
        %v5874 = vld [vmem:[%s728 + $0x540] sm:$0xff]
        %v5875 = vld [vmem:[%s728 + $0x548] sm:$0xff]
        %v5876 = vld [vmem:[%s728 + $0x550] sm:$0xff]
        %v5877 = vld [vmem:[%s728 + $0x558] sm:$0xff]
        %v5878 = vld [vmem:[%s728 + $0x560] sm:$0xff]
        %v5879 = vld [vmem:[%s728 + $0x568] sm:$0xff]
        %v5880 = vld [vmem:[%s728 + $0x570] sm:$0xff]
        %v5881 = vld [vmem:[%s728 + $0x578] sm:$0xff]
        %v5882 = vld [vmem:[%s728 + $0x580] sm:$0xff]
        %v5883 = vld [vmem:[%s728 + $0x588] sm:$0xff]
        %v5884 = vld [vmem:[%s728 + $0x590] sm:$0xff]
        %v5885 = vld [vmem:[%s728 + $0x598] sm:$0xff]
        %v5886 = vld [vmem:[%s728 + $0x5a0] sm:$0xff]
        %v5887 = vld [vmem:[%s728 + $0x5a8] sm:$0xff]
        %v5888 = vld [vmem:[%s728 + $0x5b0] sm:$0xff]
        %v5889 = vld [vmem:[%s728 + $0x5b8] sm:$0xff]
        %v5890 = vld [vmem:[%s728 + $0x5c0] sm:$0xff]
        %v5891 = vld [vmem:[%s728 + $0x5c8] sm:$0xff]
        %v5892 = vld [vmem:[%s728 + $0x5d0] sm:$0xff]
        %v5893 = vld [vmem:[%s728 + $0x5d8] sm:$0xff]
        %v5894 = vld [vmem:[%s728 + $0x5e0] sm:$0xff]
        %v5895 = vld [vmem:[%s728 + $0x5e8] sm:$0xff]
        %v5896 = vld [vmem:[%s728 + $0x5f0] sm:$0xff]
        %v5897 = vld [vmem:[%s728 + $0x5f8] sm:$0xff]
        %v5898 = vld [vmem:[%s728 + $0x600] sm:$0xff]
        %v5899 = vld [vmem:[%s728 + $0x608] sm:$0xff]
        %v5900 = vld [vmem:[%s728 + $0x610] sm:$0xff]
        %v5901 = vld [vmem:[%s728 + $0x618] sm:$0xff]
        %v5902 = vld [vmem:[%s728 + $0x620] sm:$0xff]
        %v5903 = vld [vmem:[%s728 + $0x628] sm:$0xff]
        %v5904 = vld [vmem:[%s728 + $0x630] sm:$0xff]
        %v5905 = vld [vmem:[%s728 + $0x638] sm:$0xff]
        %v5906 = vld [vmem:[%s728 + $0x640] sm:$0xff]
        %v5907 = vld [vmem:[%s728 + $0x648] sm:$0xff]
        %v5908 = vld [vmem:[%s728 + $0x650] sm:$0xff]
        %v5909 = vld [vmem:[%s728 + $0x658] sm:$0xff]
        %v5910 = vld [vmem:[%s728 + $0x660] sm:$0xff]
        %v5911 = vld [vmem:[%s728 + $0x668] sm:$0xff]
        %v5912 = vld [vmem:[%s728 + $0x670] sm:$0xff]
        %v5913 = vld [vmem:[%s728 + $0x678] sm:$0xff]
        %v5914 = vld [vmem:[%s728 + $0x680] sm:$0xff]
        %v5915 = vld [vmem:[%s728 + $0x688] sm:$0xff]
        %v5916 = vld [vmem:[%s728 + $0x690] sm:$0xff]
        %v5917 = vld [vmem:[%s728 + $0x698] sm:$0xff]
        %v5918 = vld [vmem:[%s728 + $0x6a0] sm:$0xff]
        %v5919 = vld [vmem:[%s728 + $0x6a8] sm:$0xff]
        %v5920 = vld [vmem:[%s728 + $0x6b0] sm:$0xff]
        %v5921 = vld [vmem:[%s728 + $0x6b8] sm:$0xff]
        %v5922 = vld [vmem:[%s728 + $0x6c0] sm:$0xff]
        %v5923 = vld [vmem:[%s728 + $0x6c8] sm:$0xff]
        %v5924 = vld [vmem:[%s728 + $0x6d0] sm:$0xff]
        %v5925 = vld [vmem:[%s728 + $0x6d8] sm:$0xff]
        %v5926 = vld [vmem:[%s728 + $0x6e0] sm:$0xff]
        %v5927 = vld [vmem:[%s728 + $0x6e8] sm:$0xff]
        %v5928 = vld [vmem:[%s728 + $0x6f0] sm:$0xff]
        %v5929 = vld [vmem:[%s728 + $0x6f8] sm:$0xff]
        %v5930 = vld [vmem:[%s728 + $0x700] sm:$0xff]
        %v5931 = vld [vmem:[%s728 + $0x708] sm:$0xff]
        %v5932 = vld [vmem:[%s728 + $0x710] sm:$0xff]
        %v5933 = vld [vmem:[%s728 + $0x718] sm:$0xff]
        %v5934 = vld [vmem:[%s728 + $0x720] sm:$0xff]
        %v5935 = vld [vmem:[%s728 + $0x728] sm:$0xff]
        %v5936 = vld [vmem:[%s728 + $0x730] sm:$0xff]
        %v5937 = vld [vmem:[%s728 + $0x738] sm:$0xff]
        %v5938 = vld [vmem:[%s728 + $0x740] sm:$0xff]
        %v5939 = vld [vmem:[%s728 + $0x748] sm:$0xff]
        %v5940 = vld [vmem:[%s728 + $0x750] sm:$0xff]
        %v5941 = vld [vmem:[%s728 + $0x758] sm:$0xff]
        %v5942 = vld [vmem:[%s728 + $0x760] sm:$0xff]
        %v5943 = vld [vmem:[%s728 + $0x768] sm:$0xff]
        %v5944 = vld [vmem:[%s728 + $0x770] sm:$0xff]
        %v5945 = vld [vmem:[%s728 + $0x778] sm:$0xff]
        %v5946 = vld [vmem:[%s728 + $0x780] sm:$0xff]
        %v5947 = vld [vmem:[%s728 + $0x788] sm:$0xff]
        %v5948 = vld [vmem:[%s728 + $0x790] sm:$0xff]
        %v5949 = vld [vmem:[%s728 + $0x798] sm:$0xff]
        %v5950 = vld [vmem:[%s728 + $0x7a0] sm:$0xff]
        %v5951 = vld [vmem:[%s728 + $0x7a8] sm:$0xff]
        %v5952 = vld [vmem:[%s728 + $0x7b0] sm:$0xff]
        %v5953 = vld [vmem:[%s728 + $0x7b8] sm:$0xff]
        %v5954 = vld [vmem:[%s728 + $0x7c0] sm:$0xff]
        %v5955 = vld [vmem:[%s728 + $0x7c8] sm:$0xff]
        %v5956 = vld [vmem:[%s728 + $0x7d0] sm:$0xff]
        %v5957 = vld [vmem:[%s728 + $0x7d8] sm:$0xff]
        %v5958 = vld [vmem:[%s728 + $0x7e0] sm:$0xff]
        %v5959 = vld [vmem:[%s728 + $0x7e8] sm:$0xff]
        %v5960 = vld [vmem:[%s728 + $0x7f0] sm:$0xff]
        %v5961 = vld [vmem:[%s728 + $0x7f8] sm:$0xff]
        %v5962 = vld [vmem:[%s728 + $0x800] sm:$0xff]
        %v5963 = vld [vmem:[%s728 + $0x808] sm:$0xff]
        %v5964 = vld [vmem:[%s728 + $0x810] sm:$0xff]
        %v5965 = vld [vmem:[%s728 + $0x818] sm:$0xff]
        %v5966 = vld [vmem:[%s728 + $0x820] sm:$0xff]
        %v5967 = vld [vmem:[%s728 + $0x828] sm:$0xff]
        %v5968 = vld [vmem:[%s728 + $0x830] sm:$0xff]
        %v5969 = vld [vmem:[%s728 + $0x838] sm:$0xff]
        %v5970 = vld [vmem:[%s728 + $0x840] sm:$0xff]
        %v5971 = vld [vmem:[%s728 + $0x848] sm:$0xff]
        %v5972 = vld [vmem:[%s728 + $0x850] sm:$0xff]
        %v5973 = vld [vmem:[%s728 + $0x858] sm:$0xff]
        %v5974 = vld [vmem:[%s728 + $0x860] sm:$0xff]
        %v5975 = vld [vmem:[%s728 + $0x868] sm:$0xff]
        %v5976 = vld [vmem:[%s728 + $0x870] sm:$0xff]
        %v5977 = vld [vmem:[%s728 + $0x878] sm:$0xff]
        %v5978 = vld [vmem:[%s728 + $0x880] sm:$0xff]
        %v5979 = vld [vmem:[%s728 + $0x888] sm:$0xff]
        %v5980 = vld [vmem:[%s728 + $0x890] sm:$0xff]
        %v5981 = vld [vmem:[%s728 + $0x898] sm:$0xff]
        %v5982 = vld [vmem:[%s728 + $0x8a0] sm:$0xff]
        %v5983 = vld [vmem:[%s728 + $0x8a8] sm:$0xff]
        %v5984 = vld [vmem:[%s728 + $0x8b0] sm:$0xff]
        %v5985 = vld [vmem:[%s728 + $0x8b8] sm:$0xff]
        %v5986 = vld [vmem:[%s728 + $0x8c0] sm:$0xff]
        %v5987 = vld [vmem:[%s728 + $0x8c8] sm:$0xff]
        %v5988 = vld [vmem:[%s728 + $0x8d0] sm:$0xff]
        %v5989 = vld [vmem:[%s728 + $0x8d8] sm:$0xff]
        %v5990 = vld [vmem:[%s728 + $0x8e0] sm:$0xff]
        %v5991 = vld [vmem:[%s728 + $0x8e8] sm:$0xff]
        %v5992 = vld [vmem:[%s728 + $0x8f0] sm:$0xff]
        %v5993 = vld [vmem:[%s728 + $0x8f8] sm:$0xff]
        %v5994 = vld [vmem:[%s738] sm:$0xff]
        %v5995 = vld [vmem:[%s738 + $0x8] sm:$0xf]
        %v5998 = vperm.slane %v5994, 0
        %v5999 = vperm.slane %v5994, 1
        %v6000 = vperm.slane %v5994, 2
        %v6001 = vperm.slane %v5994, 3
        %v6002 = vperm.slane %v5994, 4
        %v6003 = vperm.slane %v5994, 5
        %v6004 = vperm.slane %v5994, 6
        %v6005 = vperm.slane %v5994, 7
        %v6006 = vperm.slane %v5995, 0
        %v6007 = vperm.slane %v5995, 1
        %v6008 = vperm.slane %v5995, 2
        %v6009 = vperm.slane %v5995, 3
        %v6310 = vunpack.c.l.b16 %v5706
        %v6311 = vunpack.c.h.b16 %v5706
        %v6312 = vunpack.c.l.b16 %v5707
        %v6313 = vunpack.c.h.b16 %v5707
        %v6314 = vunpack.c.l.b16 %v5708
        %v6315 = vunpack.c.h.b16 %v5708
        %v6316 = vunpack.c.l.b16 %v5709
        %v6317 = vunpack.c.h.b16 %v5709
        %v6318 = vunpack.c.l.b16 %v5710
        %v6319 = vunpack.c.h.b16 %v5710
        %v6320 = vunpack.c.l.b16 %v5711
        %v6321 = vunpack.c.h.b16 %v5711
        %v6322 = vunpack.c.l.b16 %v5712
        %v6323 = vunpack.c.h.b16 %v5712
        %v6324 = vunpack.c.l.b16 %v5713
        %v6325 = vunpack.c.h.b16 %v5713
        %v6326 = vunpack.c.l.b16 %v5714
        %v6327 = vunpack.c.h.b16 %v5714
        %v6328 = vunpack.c.l.b16 %v5715
        %v6329 = vunpack.c.h.b16 %v5715
        %v6330 = vunpack.c.l.b16 %v5716
        %v6331 = vunpack.c.h.b16 %v5716
        %v6332 = vunpack.c.l.b16 %v5717
        %v6333 = vunpack.c.h.b16 %v5717
        %v6334 = vunpack.c.l.b16 %v5718
        %v6335 = vunpack.c.h.b16 %v5718
        %v6336 = vunpack.c.l.b16 %v5719
        %v6337 = vunpack.c.h.b16 %v5719
        %v6338 = vunpack.c.l.b16 %v5720
        %v6339 = vunpack.c.h.b16 %v5720
        %v6340 = vunpack.c.l.b16 %v5721
        %v6341 = vunpack.c.h.b16 %v5721
        %v6342 = vunpack.c.l.b16 %v5722
        %v6343 = vunpack.c.h.b16 %v5722
        %v6344 = vunpack.c.l.b16 %v5723
        %v6345 = vunpack.c.h.b16 %v5723
        %v6346 = vunpack.c.l.b16 %v5724
        %v6347 = vunpack.c.h.b16 %v5724
        %v6348 = vunpack.c.l.b16 %v5725
        %v6349 = vunpack.c.h.b16 %v5725
        %v6350 = vunpack.c.l.b16 %v5726
        %v6351 = vunpack.c.h.b16 %v5726
        %v6352 = vunpack.c.l.b16 %v5727
        %v6353 = vunpack.c.h.b16 %v5727
        %v6354 = vunpack.c.l.b16 %v5728
        %v6355 = vunpack.c.h.b16 %v5728
        %v6356 = vunpack.c.l.b16 %v5729
        %v6357 = vunpack.c.h.b16 %v5729
        %v6358 = vunpack.c.l.b16 %v5730
        %v6359 = vunpack.c.h.b16 %v5730
        %v6360 = vunpack.c.l.b16 %v5731
        %v6361 = vunpack.c.h.b16 %v5731
        %v6362 = vunpack.c.l.b16 %v5732
        %v6363 = vunpack.c.h.b16 %v5732
        %v6364 = vunpack.c.l.b16 %v5733
        %v6365 = vunpack.c.h.b16 %v5733
        %v6366 = vunpack.c.l.b16 %v5734
        %v6367 = vunpack.c.h.b16 %v5734
        %v6368 = vunpack.c.l.b16 %v5735
        %v6369 = vunpack.c.h.b16 %v5735
        %v6370 = vunpack.c.l.b16 %v5736
        %v6371 = vunpack.c.h.b16 %v5736
        %v6372 = vunpack.c.l.b16 %v5737
        %v6373 = vunpack.c.h.b16 %v5737
        %v6374 = vunpack.c.l.b16 %v5738
        %v6375 = vunpack.c.h.b16 %v5738
        %v6376 = vunpack.c.l.b16 %v5739
        %v6377 = vunpack.c.h.b16 %v5739
        %v6378 = vunpack.c.l.b16 %v5740
        %v6379 = vunpack.c.h.b16 %v5740
        %v6380 = vunpack.c.l.b16 %v5741
        %v6381 = vunpack.c.h.b16 %v5741
        %v6382 = vunpack.c.l.b16 %v5742
        %v6383 = vunpack.c.h.b16 %v5742
        %v6384 = vunpack.c.l.b16 %v5743
        %v6385 = vunpack.c.h.b16 %v5743
        %v6386 = vunpack.c.l.b16 %v5744
        %v6387 = vunpack.c.h.b16 %v5744
        %v6388 = vunpack.c.l.b16 %v5745
        %v6389 = vunpack.c.h.b16 %v5745
        %v6390 = vunpack.c.l.b16 %v5746
        %v6391 = vunpack.c.h.b16 %v5746
        %v6392 = vunpack.c.l.b16 %v5747
        %v6393 = vunpack.c.h.b16 %v5747
        %v6394 = vunpack.c.l.b16 %v5748
        %v6395 = vunpack.c.h.b16 %v5748
        %v6396 = vunpack.c.l.b16 %v5749
        %v6397 = vunpack.c.h.b16 %v5749
        %v6398 = vunpack.c.l.b16 %v5750
        %v6399 = vunpack.c.h.b16 %v5750
        %v6400 = vunpack.c.l.b16 %v5751
        %v6401 = vunpack.c.h.b16 %v5751
        %v6402 = vunpack.c.l.b16 %v5752
        %v6403 = vunpack.c.h.b16 %v5752
        %v6404 = vunpack.c.l.b16 %v5753
        %v6405 = vunpack.c.h.b16 %v5753
        %v6406 = vunpack.c.l.b16 %v5754
        %v6407 = vunpack.c.h.b16 %v5754
        %v6408 = vunpack.c.l.b16 %v5755
        %v6409 = vunpack.c.h.b16 %v5755
        %v6410 = vunpack.c.l.b16 %v5756
        %v6411 = vunpack.c.h.b16 %v5756
        %v6412 = vunpack.c.l.b16 %v5757
        %v6413 = vunpack.c.h.b16 %v5757
        %v6414 = vunpack.c.l.b16 %v5758
        %v6415 = vunpack.c.h.b16 %v5758
        %v6416 = vunpack.c.l.b16 %v5759
        %v6417 = vunpack.c.h.b16 %v5759
        %v6418 = vunpack.c.l.b16 %v5760
        %v6419 = vunpack.c.h.b16 %v5760
        %v6420 = vunpack.c.l.b16 %v5761
        %v6421 = vunpack.c.h.b16 %v5761
        %v6422 = vunpack.c.l.b16 %v5762
        %v6423 = vunpack.c.h.b16 %v5762
        %v6424 = vunpack.c.l.b16 %v5763
        %v6425 = vunpack.c.h.b16 %v5763
        %v6426 = vunpack.c.l.b16 %v5764
        %v6427 = vunpack.c.h.b16 %v5764
        %v6428 = vunpack.c.l.b16 %v5765
        %v6429 = vunpack.c.h.b16 %v5765
        %v6430 = vunpack.c.l.b16 %v5766
        %v6431 = vunpack.c.h.b16 %v5766
        %v6432 = vunpack.c.l.b16 %v5767
        %v6433 = vunpack.c.h.b16 %v5767
        %v6434 = vunpack.c.l.b16 %v5768
        %v6435 = vunpack.c.h.b16 %v5768
        %v6436 = vunpack.c.l.b16 %v5769
        %v6437 = vunpack.c.h.b16 %v5769
        %v6438 = vunpack.c.l.b16 %v5770
        %v6439 = vunpack.c.h.b16 %v5770
        %v6440 = vunpack.c.l.b16 %v5771
        %v6441 = vunpack.c.h.b16 %v5771
        %v6442 = vunpack.c.l.b16 %v5772
        %v6443 = vunpack.c.h.b16 %v5772
        %v6444 = vunpack.c.l.b16 %v5773
        %v6445 = vunpack.c.h.b16 %v5773
        %v6446 = vunpack.c.l.b16 %v5774
        %v6447 = vunpack.c.h.b16 %v5774
        %v6448 = vunpack.c.l.b16 %v5775
        %v6449 = vunpack.c.h.b16 %v5775
        %v6450 = vunpack.c.l.b16 %v5776
        %v6451 = vunpack.c.h.b16 %v5776
        %v6452 = vunpack.c.l.b16 %v5777
        %v6453 = vunpack.c.h.b16 %v5777
        %v6454 = vunpack.c.l.b16 %v5778
        %v6455 = vunpack.c.h.b16 %v5778
        %v6456 = vunpack.c.l.b16 %v5779
        %v6457 = vunpack.c.h.b16 %v5779
        %v6458 = vunpack.c.l.b16 %v5780
        %v6459 = vunpack.c.h.b16 %v5780
        %v6460 = vunpack.c.l.b16 %v5781
        %v6461 = vunpack.c.h.b16 %v5781
        %v6462 = vunpack.c.l.b16 %v5782
        %v6463 = vunpack.c.h.b16 %v5782
        %v6464 = vunpack.c.l.b16 %v5783
        %v6465 = vunpack.c.h.b16 %v5783
        %v6466 = vunpack.c.l.b16 %v5784
        %v6467 = vunpack.c.h.b16 %v5784
        %v6468 = vunpack.c.l.b16 %v5785
        %v6469 = vunpack.c.h.b16 %v5785
        %v6470 = vunpack.c.l.b16 %v5786
        %v6471 = vunpack.c.h.b16 %v5786
        %v6472 = vunpack.c.l.b16 %v5787
        %v6473 = vunpack.c.h.b16 %v5787
        %v6474 = vunpack.c.l.b16 %v5788
        %v6475 = vunpack.c.h.b16 %v5788
        %v6476 = vunpack.c.l.b16 %v5789
        %v6477 = vunpack.c.h.b16 %v5789
        %v6478 = vunpack.c.l.b16 %v5790
        %v6479 = vunpack.c.h.b16 %v5790
        %v6480 = vunpack.c.l.b16 %v5791
        %v6481 = vunpack.c.h.b16 %v5791
        %v6482 = vunpack.c.l.b16 %v5792
        %v6483 = vunpack.c.h.b16 %v5792
        %v6484 = vunpack.c.l.b16 %v5793
        %v6485 = vunpack.c.h.b16 %v5793
        %v6486 = vunpack.c.l.b16 %v5794
        %v6487 = vunpack.c.h.b16 %v5794
        %v6488 = vunpack.c.l.b16 %v5795
        %v6489 = vunpack.c.h.b16 %v5795
        %v6490 = vunpack.c.l.b16 %v5796
        %v6491 = vunpack.c.h.b16 %v5796
        %v6492 = vunpack.c.l.b16 %v5797
        %v6493 = vunpack.c.h.b16 %v5797
        %v6494 = vunpack.c.l.b16 %v5798
        %v6495 = vunpack.c.h.b16 %v5798
        %v6496 = vunpack.c.l.b16 %v5799
        %v6497 = vunpack.c.h.b16 %v5799
        %v6498 = vunpack.c.l.b16 %v5800
        %v6499 = vunpack.c.h.b16 %v5800
        %v6500 = vunpack.c.l.b16 %v5801
        %v6501 = vunpack.c.h.b16 %v5801
        %v6502 = vunpack.c.l.b16 %v5802
        %v6503 = vunpack.c.h.b16 %v5802
        %v6504 = vunpack.c.l.b16 %v5803
        %v6505 = vunpack.c.h.b16 %v5803
        %v6506 = vunpack.c.l.b16 %v5804
        %v6507 = vunpack.c.h.b16 %v5804
        %v6508 = vunpack.c.l.b16 %v5805
        %v6509 = vunpack.c.h.b16 %v5805
        %v6510 = vunpack.c.l.b16 %v5806
        %v6511 = vunpack.c.h.b16 %v5806
        %v6512 = vunpack.c.l.b16 %v5807
        %v6513 = vunpack.c.h.b16 %v5807
        %v6514 = vunpack.c.l.b16 %v5808
        %v6515 = vunpack.c.h.b16 %v5808
        %v6516 = vunpack.c.l.b16 %v5809
        %v6517 = vunpack.c.h.b16 %v5809
        %v6518 = vunpack.c.l.b16 %v5810
        %v6519 = vunpack.c.h.b16 %v5810
        %v6520 = vunpack.c.l.b16 %v5811
        %v6521 = vunpack.c.h.b16 %v5811
        %v6522 = vunpack.c.l.b16 %v5812
        %v6523 = vunpack.c.h.b16 %v5812
        %v6524 = vunpack.c.l.b16 %v5813
        %v6525 = vunpack.c.h.b16 %v5813
        %v6526 = vunpack.c.l.b16 %v5814
        %v6527 = vunpack.c.h.b16 %v5814
        %v6528 = vunpack.c.l.b16 %v5815
        %v6529 = vunpack.c.h.b16 %v5815
        %v6530 = vunpack.c.l.b16 %v5816
        %v6531 = vunpack.c.h.b16 %v5816
        %v6532 = vunpack.c.l.b16 %v5817
        %v6533 = vunpack.c.h.b16 %v5817
        %v6534 = vunpack.c.l.b16 %v5818
        %v6535 = vunpack.c.h.b16 %v5818
        %v6536 = vunpack.c.l.b16 %v5819
        %v6537 = vunpack.c.h.b16 %v5819
        %v6538 = vunpack.c.l.b16 %v5820
        %v6539 = vunpack.c.h.b16 %v5820
        %v6540 = vunpack.c.l.b16 %v5821
        %v6541 = vunpack.c.h.b16 %v5821
        %v6542 = vunpack.c.l.b16 %v5822
        %v6543 = vunpack.c.h.b16 %v5822
        %v6544 = vunpack.c.l.b16 %v5823
        %v6545 = vunpack.c.h.b16 %v5823
        %v6546 = vunpack.c.l.b16 %v5824
        %v6547 = vunpack.c.h.b16 %v5824
        %v6548 = vunpack.c.l.b16 %v5825
        %v6549 = vunpack.c.h.b16 %v5825
        %v6550 = vunpack.c.l.b16 %v5826
        %v6551 = vunpack.c.h.b16 %v5826
        %v6552 = vunpack.c.l.b16 %v5827
        %v6553 = vunpack.c.h.b16 %v5827
        %v6554 = vunpack.c.l.b16 %v5828
        %v6555 = vunpack.c.h.b16 %v5828
        %v6556 = vunpack.c.l.b16 %v5829
        %v6557 = vunpack.c.h.b16 %v5829
        %v6558 = vunpack.c.l.b16 %v5830
        %v6559 = vunpack.c.h.b16 %v5830
        %v6560 = vunpack.c.l.b16 %v5831
        %v6561 = vunpack.c.h.b16 %v5831
        %v6562 = vunpack.c.l.b16 %v5832
        %v6563 = vunpack.c.h.b16 %v5832
        %v6564 = vunpack.c.l.b16 %v5833
        %v6565 = vunpack.c.h.b16 %v5833
        %v6566 = vunpack.c.l.b16 %v5834
        %v6567 = vunpack.c.h.b16 %v5834
        %v6568 = vunpack.c.l.b16 %v5835
        %v6569 = vunpack.c.h.b16 %v5835
        %v6570 = vunpack.c.l.b16 %v5836
        %v6571 = vunpack.c.h.b16 %v5836
        %v6572 = vunpack.c.l.b16 %v5837
        %v6573 = vunpack.c.h.b16 %v5837
        %v6574 = vunpack.c.l.b16 %v5838
        %v6575 = vunpack.c.h.b16 %v5838
        %v6576 = vunpack.c.l.b16 %v5839
        %v6577 = vunpack.c.h.b16 %v5839
        %v6578 = vunpack.c.l.b16 %v5840
        %v6579 = vunpack.c.h.b16 %v5840
        %v6580 = vunpack.c.l.b16 %v5841
        %v6581 = vunpack.c.h.b16 %v5841
        %v6582 = vunpack.c.l.b16 %v5842
        %v6583 = vunpack.c.h.b16 %v5842
        %v6584 = vunpack.c.l.b16 %v5843
        %v6585 = vunpack.c.h.b16 %v5843
        %v6586 = vunpack.c.l.b16 %v5844
        %v6587 = vunpack.c.h.b16 %v5844
        %v6588 = vunpack.c.l.b16 %v5845
        %v6589 = vunpack.c.h.b16 %v5845
        %v6590 = vunpack.c.l.b16 %v5846
        %v6591 = vunpack.c.h.b16 %v5846
        %v6592 = vunpack.c.l.b16 %v5847
        %v6593 = vunpack.c.h.b16 %v5847
        %v6594 = vunpack.c.l.b16 %v5848
        %v6595 = vunpack.c.h.b16 %v5848
        %v6596 = vunpack.c.l.b16 %v5849
        %v6597 = vunpack.c.h.b16 %v5849
        %v6598 = vunpack.c.l.b16 %v5850
        %v6599 = vunpack.c.h.b16 %v5850
        %v6600 = vunpack.c.l.b16 %v5851
        %v6601 = vunpack.c.h.b16 %v5851
        %v6602 = vunpack.c.l.b16 %v5852
        %v6603 = vunpack.c.h.b16 %v5852
        %v6604 = vunpack.c.l.b16 %v5853
        %v6605 = vunpack.c.h.b16 %v5853
        %v6606 = vunpack.c.l.b16 %v5854
        %v6607 = vunpack.c.h.b16 %v5854
        %v6608 = vunpack.c.l.b16 %v5855
        %v6609 = vunpack.c.h.b16 %v5855
        %v6610 = vunpack.c.l.b16 %v5856
        %v6611 = vunpack.c.h.b16 %v5856
        %v6612 = vunpack.c.l.b16 %v5857
        %v6613 = vunpack.c.h.b16 %v5857
        %v6614 = vunpack.c.l.b16 %v5858
        %v6615 = vunpack.c.h.b16 %v5858
        %v6616 = vunpack.c.l.b16 %v5859
        %v6617 = vunpack.c.h.b16 %v5859
        %v6618 = vunpack.c.l.b16 %v5860
        %v6619 = vunpack.c.h.b16 %v5860
        %v6620 = vunpack.c.l.b16 %v5861
        %v6621 = vunpack.c.h.b16 %v5861
        %v6622 = vunpack.c.l.b16 %v5862
        %v6623 = vunpack.c.h.b16 %v5862
        %v6624 = vunpack.c.l.b16 %v5863
        %v6625 = vunpack.c.h.b16 %v5863
        %v6626 = vunpack.c.l.b16 %v5864
        %v6627 = vunpack.c.h.b16 %v5864
        %v6628 = vunpack.c.l.b16 %v5865
        %v6629 = vunpack.c.h.b16 %v5865
        %v6630 = vunpack.c.l.b16 %v5866
        %v6631 = vunpack.c.h.b16 %v5866
        %v6632 = vunpack.c.l.b16 %v5867
        %v6633 = vunpack.c.h.b16 %v5867
        %v6634 = vunpack.c.l.b16 %v5868
        %v6635 = vunpack.c.h.b16 %v5868
        %v6636 = vunpack.c.l.b16 %v5869
        %v6637 = vunpack.c.h.b16 %v5869
        %v6638 = vunpack.c.l.b16 %v5870
        %v6639 = vunpack.c.h.b16 %v5870
        %v6640 = vunpack.c.l.b16 %v5871
        %v6641 = vunpack.c.h.b16 %v5871
        %v6642 = vunpack.c.l.b16 %v5872
        %v6643 = vunpack.c.h.b16 %v5872
        %v6644 = vunpack.c.l.b16 %v5873
        %v6645 = vunpack.c.h.b16 %v5873
        %v6646 = vunpack.c.l.b16 %v5874
        %v6647 = vunpack.c.h.b16 %v5874
        %v6648 = vunpack.c.l.b16 %v5875
        %v6649 = vunpack.c.h.b16 %v5875
        %v6650 = vunpack.c.l.b16 %v5876
        %v6651 = vunpack.c.h.b16 %v5876
        %v6652 = vunpack.c.l.b16 %v5877
        %v6653 = vunpack.c.h.b16 %v5877
        %v6654 = vunpack.c.l.b16 %v5878
        %v6655 = vunpack.c.h.b16 %v5878
        %v6656 = vunpack.c.l.b16 %v5879
        %v6657 = vunpack.c.h.b16 %v5879
        %v6658 = vunpack.c.l.b16 %v5880
        %v6659 = vunpack.c.h.b16 %v5880
        %v6660 = vunpack.c.l.b16 %v5881
        %v6661 = vunpack.c.h.b16 %v5881
        %v6662 = vunpack.c.l.b16 %v5882
        %v6663 = vunpack.c.h.b16 %v5882
        %v6664 = vunpack.c.l.b16 %v5883
        %v6665 = vunpack.c.h.b16 %v5883
        %v6666 = vunpack.c.l.b16 %v5884
        %v6667 = vunpack.c.h.b16 %v5884
        %v6668 = vunpack.c.l.b16 %v5885
        %v6669 = vunpack.c.h.b16 %v5885
        %v6670 = vunpack.c.l.b16 %v5886
        %v6671 = vunpack.c.h.b16 %v5886
        %v6672 = vunpack.c.l.b16 %v5887
        %v6673 = vunpack.c.h.b16 %v5887
        %v6674 = vunpack.c.l.b16 %v5888
        %v6675 = vunpack.c.h.b16 %v5888
        %v6676 = vunpack.c.l.b16 %v5889
        %v6677 = vunpack.c.h.b16 %v5889
        %v6678 = vunpack.c.l.b16 %v5890
        %v6679 = vunpack.c.h.b16 %v5890
        %v6680 = vunpack.c.l.b16 %v5891
        %v6681 = vunpack.c.h.b16 %v5891
        %v6682 = vunpack.c.l.b16 %v5892
        %v6683 = vunpack.c.h.b16 %v5892
        %v6684 = vunpack.c.l.b16 %v5893
        %v6685 = vunpack.c.h.b16 %v5893
        %v6686 = vunpack.c.l.b16 %v5894
        %v6687 = vunpack.c.h.b16 %v5894
        %v6688 = vunpack.c.l.b16 %v5895
        %v6689 = vunpack.c.h.b16 %v5895
        %v6690 = vunpack.c.l.b16 %v5896
        %v6691 = vunpack.c.h.b16 %v5896
        %v6692 = vunpack.c.l.b16 %v5897
        %v6693 = vunpack.c.h.b16 %v5897
        %v6694 = vunpack.c.l.b16 %v5898
        %v6695 = vunpack.c.h.b16 %v5898
        %v6696 = vunpack.c.l.b16 %v5899
        %v6697 = vunpack.c.h.b16 %v5899
        %v6698 = vunpack.c.l.b16 %v5900
        %v6699 = vunpack.c.h.b16 %v5900
        %v6700 = vunpack.c.l.b16 %v5901
        %v6701 = vunpack.c.h.b16 %v5901
        %v6702 = vunpack.c.l.b16 %v5902
        %v6703 = vunpack.c.h.b16 %v5902
        %v6704 = vunpack.c.l.b16 %v5903
        %v6705 = vunpack.c.h.b16 %v5903
        %v6706 = vunpack.c.l.b16 %v5904
        %v6707 = vunpack.c.h.b16 %v5904
        %v6708 = vunpack.c.l.b16 %v5905
        %v6709 = vunpack.c.h.b16 %v5905
        %v6710 = vunpack.c.l.b16 %v5906
        %v6711 = vunpack.c.h.b16 %v5906
        %v6712 = vunpack.c.l.b16 %v5907
        %v6713 = vunpack.c.h.b16 %v5907
        %v6714 = vunpack.c.l.b16 %v5908
        %v6715 = vunpack.c.h.b16 %v5908
        %v6716 = vunpack.c.l.b16 %v5909
        %v6717 = vunpack.c.h.b16 %v5909
        %v6718 = vunpack.c.l.b16 %v5910
        %v6719 = vunpack.c.h.b16 %v5910
        %v6720 = vunpack.c.l.b16 %v5911
        %v6721 = vunpack.c.h.b16 %v5911
        %v6722 = vunpack.c.l.b16 %v5912
        %v6723 = vunpack.c.h.b16 %v5912
        %v6724 = vunpack.c.l.b16 %v5913
        %v6725 = vunpack.c.h.b16 %v5913
        %v6726 = vunpack.c.l.b16 %v5914
        %v6727 = vunpack.c.h.b16 %v5914
        %v6728 = vunpack.c.l.b16 %v5915
        %v6729 = vunpack.c.h.b16 %v5915
        %v6730 = vunpack.c.l.b16 %v5916
        %v6731 = vunpack.c.h.b16 %v5916
        %v6732 = vunpack.c.l.b16 %v5917
        %v6733 = vunpack.c.h.b16 %v5917
        %v6734 = vunpack.c.l.b16 %v5918
        %v6735 = vunpack.c.h.b16 %v5918
        %v6736 = vunpack.c.l.b16 %v5919
        %v6737 = vunpack.c.h.b16 %v5919
        %v6738 = vunpack.c.l.b16 %v5920
        %v6739 = vunpack.c.h.b16 %v5920
        %v6740 = vunpack.c.l.b16 %v5921
        %v6741 = vunpack.c.h.b16 %v5921
        %v6742 = vunpack.c.l.b16 %v5922
        %v6743 = vunpack.c.h.b16 %v5922
        %v6744 = vunpack.c.l.b16 %v5923
        %v6745 = vunpack.c.h.b16 %v5923
        %v6746 = vunpack.c.l.b16 %v5924
        %v6747 = vunpack.c.h.b16 %v5924
        %v6748 = vunpack.c.l.b16 %v5925
        %v6749 = vunpack.c.h.b16 %v5925
        %v6750 = vunpack.c.l.b16 %v5926
        %v6751 = vunpack.c.h.b16 %v5926
        %v6752 = vunpack.c.l.b16 %v5927
        %v6753 = vunpack.c.h.b16 %v5927
        %v6754 = vunpack.c.l.b16 %v5928
        %v6755 = vunpack.c.h.b16 %v5928
        %v6756 = vunpack.c.l.b16 %v5929
        %v6757 = vunpack.c.h.b16 %v5929
        %v6758 = vunpack.c.l.b16 %v5930
        %v6759 = vunpack.c.h.b16 %v5930
        %v6760 = vunpack.c.l.b16 %v5931
        %v6761 = vunpack.c.h.b16 %v5931
        %v6762 = vunpack.c.l.b16 %v5932
        %v6763 = vunpack.c.h.b16 %v5932
        %v6764 = vunpack.c.l.b16 %v5933
        %v6765 = vunpack.c.h.b16 %v5933
        %v6766 = vunpack.c.l.b16 %v5934
        %v6767 = vunpack.c.h.b16 %v5934
        %v6768 = vunpack.c.l.b16 %v5935
        %v6769 = vunpack.c.h.b16 %v5935
        %v6770 = vunpack.c.l.b16 %v5936
        %v6771 = vunpack.c.h.b16 %v5936
        %v6772 = vunpack.c.l.b16 %v5937
        %v6773 = vunpack.c.h.b16 %v5937
        %v6774 = vunpack.c.l.b16 %v5938
        %v6775 = vunpack.c.h.b16 %v5938
        %v6776 = vunpack.c.l.b16 %v5939
        %v6777 = vunpack.c.h.b16 %v5939
        %v6778 = vunpack.c.l.b16 %v5940
        %v6779 = vunpack.c.h.b16 %v5940
        %v6780 = vunpack.c.l.b16 %v5941
        %v6781 = vunpack.c.h.b16 %v5941
        %v6782 = vunpack.c.l.b16 %v5942
        %v6783 = vunpack.c.h.b16 %v5942
        %v6784 = vunpack.c.l.b16 %v5943
        %v6785 = vunpack.c.h.b16 %v5943
        %v6786 = vunpack.c.l.b16 %v5944
        %v6787 = vunpack.c.h.b16 %v5944
        %v6788 = vunpack.c.l.b16 %v5945
        %v6789 = vunpack.c.h.b16 %v5945
        %v6790 = vunpack.c.l.b16 %v5946
        %v6791 = vunpack.c.h.b16 %v5946
        %v6792 = vunpack.c.l.b16 %v5947
        %v6793 = vunpack.c.h.b16 %v5947
        %v6794 = vunpack.c.l.b16 %v5948
        %v6795 = vunpack.c.h.b16 %v5948
        %v6796 = vunpack.c.l.b16 %v5949
        %v6797 = vunpack.c.h.b16 %v5949
        %v6798 = vunpack.c.l.b16 %v5950
        %v6799 = vunpack.c.h.b16 %v5950
        %v6800 = vunpack.c.l.b16 %v5951
        %v6801 = vunpack.c.h.b16 %v5951
        %v6802 = vunpack.c.l.b16 %v5952
        %v6803 = vunpack.c.h.b16 %v5952
        %v6804 = vunpack.c.l.b16 %v5953
        %v6805 = vunpack.c.h.b16 %v5953
        %v6806 = vunpack.c.l.b16 %v5954
        %v6807 = vunpack.c.h.b16 %v5954
        %v6808 = vunpack.c.l.b16 %v5955
        %v6809 = vunpack.c.h.b16 %v5955
        %v6810 = vunpack.c.l.b16 %v5956
        %v6811 = vunpack.c.h.b16 %v5956
        %v6812 = vunpack.c.l.b16 %v5957
        %v6813 = vunpack.c.h.b16 %v5957
        %v6814 = vunpack.c.l.b16 %v5958
        %v6815 = vunpack.c.h.b16 %v5958
        %v6816 = vunpack.c.l.b16 %v5959
        %v6817 = vunpack.c.h.b16 %v5959
        %v6818 = vunpack.c.l.b16 %v5960
        %v6819 = vunpack.c.h.b16 %v5960
        %v6820 = vunpack.c.l.b16 %v5961
        %v6821 = vunpack.c.h.b16 %v5961
        %v6822 = vunpack.c.l.b16 %v5962
        %v6823 = vunpack.c.h.b16 %v5962
        %v6824 = vunpack.c.l.b16 %v5963
        %v6825 = vunpack.c.h.b16 %v5963
        %v6826 = vunpack.c.l.b16 %v5964
        %v6827 = vunpack.c.h.b16 %v5964
        %v6828 = vunpack.c.l.b16 %v5965
        %v6829 = vunpack.c.h.b16 %v5965
        %v6830 = vunpack.c.l.b16 %v5966
        %v6831 = vunpack.c.h.b16 %v5966
        %v6832 = vunpack.c.l.b16 %v5967
        %v6833 = vunpack.c.h.b16 %v5967
        %v6834 = vunpack.c.l.b16 %v5968
        %v6835 = vunpack.c.h.b16 %v5968
        %v6836 = vunpack.c.l.b16 %v5969
        %v6837 = vunpack.c.h.b16 %v5969
        %v6838 = vunpack.c.l.b16 %v5970
        %v6839 = vunpack.c.h.b16 %v5970
        %v6840 = vunpack.c.l.b16 %v5971
        %v6841 = vunpack.c.h.b16 %v5971
        %v6842 = vunpack.c.l.b16 %v5972
        %v6843 = vunpack.c.h.b16 %v5972
        %v6844 = vunpack.c.l.b16 %v5973
        %v6845 = vunpack.c.h.b16 %v5973
        %v6846 = vunpack.c.l.b16 %v5974
        %v6847 = vunpack.c.h.b16 %v5974
        %v6848 = vunpack.c.l.b16 %v5975
        %v6849 = vunpack.c.h.b16 %v5975
        %v6850 = vunpack.c.l.b16 %v5976
        %v6851 = vunpack.c.h.b16 %v5976
        %v6852 = vunpack.c.l.b16 %v5977
        %v6853 = vunpack.c.h.b16 %v5977
        %v6854 = vunpack.c.l.b16 %v5978
        %v6855 = vunpack.c.h.b16 %v5978
        %v6856 = vunpack.c.l.b16 %v5979
        %v6857 = vunpack.c.h.b16 %v5979
        %v6858 = vunpack.c.l.b16 %v5980
        %v6859 = vunpack.c.h.b16 %v5980
        %v6860 = vunpack.c.l.b16 %v5981
        %v6861 = vunpack.c.h.b16 %v5981
        %v6862 = vunpack.c.l.b16 %v5982
        %v6863 = vunpack.c.h.b16 %v5982
        %v6864 = vunpack.c.l.b16 %v5983
        %v6865 = vunpack.c.h.b16 %v5983
        %v6866 = vunpack.c.l.b16 %v5984
        %v6867 = vunpack.c.h.b16 %v5984
        %v6868 = vunpack.c.l.b16 %v5985
        %v6869 = vunpack.c.h.b16 %v5985
        %v6870 = vunpack.c.l.b16 %v5986
        %v6871 = vunpack.c.h.b16 %v5986
        %v6872 = vunpack.c.l.b16 %v5987
        %v6873 = vunpack.c.h.b16 %v5987
        %v6874 = vunpack.c.l.b16 %v5988
        %v6875 = vunpack.c.h.b16 %v5988
        %v6876 = vunpack.c.l.b16 %v5989
        %v6877 = vunpack.c.h.b16 %v5989
        %v6878 = vunpack.c.l.b16 %v5990
        %v6879 = vunpack.c.h.b16 %v5990
        %v6880 = vunpack.c.l.b16 %v5991
        %v6881 = vunpack.c.h.b16 %v5991
        %v6882 = vunpack.c.l.b16 %v5992
        %v6883 = vunpack.c.h.b16 %v5992
        %v6884 = vunpack.c.l.b16 %v5993
        %v6885 = vunpack.c.h.b16 %v5993
        %v6886 = vpack.c.b16 %v6322, %v6310
        %v6887 = vpack.c.b16 %v6323, %v6311
        %v6888 = vpack.c.b16 %v6324, %v6312
        %v6889 = vpack.c.b16 %v6325, %v6313
        %v6890 = vpack.c.b16 %v6326, %v6314
        %v6891 = vpack.c.b16 %v6327, %v6315
        %v6892 = vpack.c.b16 %v6328, %v6316
        %v6893 = vpack.c.b16 %v6329, %v6317
        %v6894 = vpack.c.b16 %v6330, %v6318
        %v6895 = vpack.c.b16 %v6331, %v6319
        %v6896 = vpack.c.b16 %v6332, %v6320
        %v6897 = vpack.c.b16 %v6333, %v6321
        %v6898 = vpack.c.b16 %v6346, %v6334
        %v6899 = vpack.c.b16 %v6347, %v6335
        %v6900 = vpack.c.b16 %v6348, %v6336
        %v6901 = vpack.c.b16 %v6349, %v6337
        %v6902 = vpack.c.b16 %v6350, %v6338
        %v6903 = vpack.c.b16 %v6351, %v6339
        %v6904 = vpack.c.b16 %v6352, %v6340
        %v6905 = vpack.c.b16 %v6353, %v6341
        %v6906 = vpack.c.b16 %v6354, %v6342
        %v6907 = vpack.c.b16 %v6355, %v6343
        %v6908 = vpack.c.b16 %v6356, %v6344
        %v6909 = vpack.c.b16 %v6357, %v6345
        %v6910 = vpack.c.b16 %v6370, %v6358
        %v6911 = vpack.c.b16 %v6371, %v6359
        %v6912 = vpack.c.b16 %v6372, %v6360
        %v6913 = vpack.c.b16 %v6373, %v6361
        %v6914 = vpack.c.b16 %v6374, %v6362
        %v6915 = vpack.c.b16 %v6375, %v6363
        %v6916 = vpack.c.b16 %v6376, %v6364
        %v6917 = vpack.c.b16 %v6377, %v6365
        %v6918 = vpack.c.b16 %v6378, %v6366
        %v6919 = vpack.c.b16 %v6379, %v6367
        %v6920 = vpack.c.b16 %v6380, %v6368
        %v6921 = vpack.c.b16 %v6381, %v6369
        %v6922 = vpack.c.b16 %v6394, %v6382
        %v6923 = vpack.c.b16 %v6395, %v6383
        %v6924 = vpack.c.b16 %v6396, %v6384
        %v6925 = vpack.c.b16 %v6397, %v6385
        %v6926 = vpack.c.b16 %v6398, %v6386
        %v6927 = vpack.c.b16 %v6399, %v6387
        %v6928 = vpack.c.b16 %v6400, %v6388
        %v6929 = vpack.c.b16 %v6401, %v6389
        %v6930 = vpack.c.b16 %v6402, %v6390
        %v6931 = vpack.c.b16 %v6403, %v6391
        %v6932 = vpack.c.b16 %v6404, %v6392
        %v6933 = vpack.c.b16 %v6405, %v6393
        %v6934 = vpack.c.b16 %v6418, %v6406
        %v6935 = vpack.c.b16 %v6419, %v6407
        %v6936 = vpack.c.b16 %v6420, %v6408
        %v6937 = vpack.c.b16 %v6421, %v6409
        %v6938 = vpack.c.b16 %v6422, %v6410
        %v6939 = vpack.c.b16 %v6423, %v6411
        %v6940 = vpack.c.b16 %v6424, %v6412
        %v6941 = vpack.c.b16 %v6425, %v6413
        %v6942 = vpack.c.b16 %v6426, %v6414
        %v6943 = vpack.c.b16 %v6427, %v6415
        %v6944 = vpack.c.b16 %v6428, %v6416
        %v6945 = vpack.c.b16 %v6429, %v6417
        %v6946 = vpack.c.b16 %v6442, %v6430
        %v6947 = vpack.c.b16 %v6443, %v6431
        %v6948 = vpack.c.b16 %v6444, %v6432
        %v6949 = vpack.c.b16 %v6445, %v6433
        %v6950 = vpack.c.b16 %v6446, %v6434
        %v6951 = vpack.c.b16 %v6447, %v6435
        %v6952 = vpack.c.b16 %v6448, %v6436
        %v6953 = vpack.c.b16 %v6449, %v6437
        %v6954 = vpack.c.b16 %v6450, %v6438
        %v6955 = vpack.c.b16 %v6451, %v6439
        %v6956 = vpack.c.b16 %v6452, %v6440
        %v6957 = vpack.c.b16 %v6453, %v6441
        %v6958 = vpack.c.b16 %v6466, %v6454
        %v6959 = vpack.c.b16 %v6467, %v6455
        %v6960 = vpack.c.b16 %v6468, %v6456
        %v6961 = vpack.c.b16 %v6469, %v6457
        %v6962 = vpack.c.b16 %v6470, %v6458
        %v6963 = vpack.c.b16 %v6471, %v6459
        %v6964 = vpack.c.b16 %v6472, %v6460
        %v6965 = vpack.c.b16 %v6473, %v6461
        %v6966 = vpack.c.b16 %v6474, %v6462
        %v6967 = vpack.c.b16 %v6475, %v6463
        %v6968 = vpack.c.b16 %v6476, %v6464
        %v6969 = vpack.c.b16 %v6477, %v6465
        %v6970 = vpack.c.b16 %v6490, %v6478
        %v6971 = vpack.c.b16 %v6491, %v6479
        %v6972 = vpack.c.b16 %v6492, %v6480
        %v6973 = vpack.c.b16 %v6493, %v6481
        %v6974 = vpack.c.b16 %v6494, %v6482
        %v6975 = vpack.c.b16 %v6495, %v6483
        %v6976 = vpack.c.b16 %v6496, %v6484
        %v6977 = vpack.c.b16 %v6497, %v6485
        %v6978 = vpack.c.b16 %v6498, %v6486
        %v6979 = vpack.c.b16 %v6499, %v6487
        %v6980 = vpack.c.b16 %v6500, %v6488
        %v6981 = vpack.c.b16 %v6501, %v6489
        %v6982 = vpack.c.b16 %v6514, %v6502
        %v6983 = vpack.c.b16 %v6515, %v6503
        %v6984 = vpack.c.b16 %v6516, %v6504
        %v6985 = vpack.c.b16 %v6517, %v6505
        %v6986 = vpack.c.b16 %v6518, %v6506
        %v6987 = vpack.c.b16 %v6519, %v6507
        %v6988 = vpack.c.b16 %v6520, %v6508
        %v6989 = vpack.c.b16 %v6521, %v6509
        %v6990 = vpack.c.b16 %v6522, %v6510
        %v6991 = vpack.c.b16 %v6523, %v6511
        %v6992 = vpack.c.b16 %v6524, %v6512
        %v6993 = vpack.c.b16 %v6525, %v6513
        %v6994 = vpack.c.b16 %v6538, %v6526
        %v6995 = vpack.c.b16 %v6539, %v6527
        %v6996 = vpack.c.b16 %v6540, %v6528
        %v6997 = vpack.c.b16 %v6541, %v6529
        %v6998 = vpack.c.b16 %v6542, %v6530
        %v6999 = vpack.c.b16 %v6543, %v6531
        %v7000 = vpack.c.b16 %v6544, %v6532
        %v7001 = vpack.c.b16 %v6545, %v6533
        %v7002 = vpack.c.b16 %v6546, %v6534
        %v7003 = vpack.c.b16 %v6547, %v6535
        %v7004 = vpack.c.b16 %v6548, %v6536
        %v7005 = vpack.c.b16 %v6549, %v6537
        %v7006 = vpack.c.b16 %v6562, %v6550
        %v7007 = vpack.c.b16 %v6563, %v6551
        %v7008 = vpack.c.b16 %v6564, %v6552
        %v7009 = vpack.c.b16 %v6565, %v6553
        %v7010 = vpack.c.b16 %v6566, %v6554
        %v7011 = vpack.c.b16 %v6567, %v6555
        %v7012 = vpack.c.b16 %v6568, %v6556
        %v7013 = vpack.c.b16 %v6569, %v6557
        %v7014 = vpack.c.b16 %v6570, %v6558
        %v7015 = vpack.c.b16 %v6571, %v6559
        %v7016 = vpack.c.b16 %v6572, %v6560
        %v7017 = vpack.c.b16 %v6573, %v6561
        %v7018 = vpack.c.b16 %v6586, %v6574
        %v7019 = vpack.c.b16 %v6587, %v6575
        %v7020 = vpack.c.b16 %v6588, %v6576
        %v7021 = vpack.c.b16 %v6589, %v6577
        %v7022 = vpack.c.b16 %v6590, %v6578
        %v7023 = vpack.c.b16 %v6591, %v6579
        %v7024 = vpack.c.b16 %v6592, %v6580
        %v7025 = vpack.c.b16 %v6593, %v6581
        %v7026 = vpack.c.b16 %v6594, %v6582
        %v7027 = vpack.c.b16 %v6595, %v6583
        %v7028 = vpack.c.b16 %v6596, %v6584
        %v7029 = vpack.c.b16 %v6597, %v6585
        %v7030 = vpack.c.b16 %v6610, %v6598
        %v7031 = vpack.c.b16 %v6611, %v6599
        %v7032 = vpack.c.b16 %v6612, %v6600
        %v7033 = vpack.c.b16 %v6613, %v6601
        %v7034 = vpack.c.b16 %v6614, %v6602
        %v7035 = vpack.c.b16 %v6615, %v6603
        %v7036 = vpack.c.b16 %v6616, %v6604
        %v7037 = vpack.c.b16 %v6617, %v6605
        %v7038 = vpack.c.b16 %v6618, %v6606
        %v7039 = vpack.c.b16 %v6619, %v6607
        %v7040 = vpack.c.b16 %v6620, %v6608
        %v7041 = vpack.c.b16 %v6621, %v6609
        %v7042 = vpack.c.b16 %v6634, %v6622
        %v7043 = vpack.c.b16 %v6635, %v6623
        %v7044 = vpack.c.b16 %v6636, %v6624
        %v7045 = vpack.c.b16 %v6637, %v6625
        %v7046 = vpack.c.b16 %v6638, %v6626
        %v7047 = vpack.c.b16 %v6639, %v6627
        %v7048 = vpack.c.b16 %v6640, %v6628
        %v7049 = vpack.c.b16 %v6641, %v6629
        %v7050 = vpack.c.b16 %v6642, %v6630
        %v7051 = vpack.c.b16 %v6643, %v6631
        %v7052 = vpack.c.b16 %v6644, %v6632
        %v7053 = vpack.c.b16 %v6645, %v6633
        %v7054 = vpack.c.b16 %v6658, %v6646
        %v7055 = vpack.c.b16 %v6659, %v6647
        %v7056 = vpack.c.b16 %v6660, %v6648
        %v7057 = vpack.c.b16 %v6661, %v6649
        %v7058 = vpack.c.b16 %v6662, %v6650
        %v7059 = vpack.c.b16 %v6663, %v6651
        %v7060 = vpack.c.b16 %v6664, %v6652
        %v7061 = vpack.c.b16 %v6665, %v6653
        %v7062 = vpack.c.b16 %v6666, %v6654
        %v7063 = vpack.c.b16 %v6667, %v6655
        %v7064 = vpack.c.b16 %v6668, %v6656
        %v7065 = vpack.c.b16 %v6669, %v6657
        %v7066 = vpack.c.b16 %v6682, %v6670
        %v7067 = vpack.c.b16 %v6683, %v6671
        %v7068 = vpack.c.b16 %v6684, %v6672
        %v7069 = vpack.c.b16 %v6685, %v6673
        %v7070 = vpack.c.b16 %v6686, %v6674
        %v7071 = vpack.c.b16 %v6687, %v6675
        %v7072 = vpack.c.b16 %v6688, %v6676
        %v7073 = vpack.c.b16 %v6689, %v6677
        %v7074 = vpack.c.b16 %v6690, %v6678
        %v7075 = vpack.c.b16 %v6691, %v6679
        %v7076 = vpack.c.b16 %v6692, %v6680
        %v7077 = vpack.c.b16 %v6693, %v6681
        %v7078 = vpack.c.b16 %v6706, %v6694
        %v7079 = vpack.c.b16 %v6707, %v6695
        %v7080 = vpack.c.b16 %v6708, %v6696
        %v7081 = vpack.c.b16 %v6709, %v6697
        %v7082 = vpack.c.b16 %v6710, %v6698
        %v7083 = vpack.c.b16 %v6711, %v6699
        %v7084 = vpack.c.b16 %v6712, %v6700
        %v7085 = vpack.c.b16 %v6713, %v6701
        %v7086 = vpack.c.b16 %v6714, %v6702
        %v7087 = vpack.c.b16 %v6715, %v6703
        %v7088 = vpack.c.b16 %v6716, %v6704
        %v7089 = vpack.c.b16 %v6717, %v6705
        %v7090 = vpack.c.b16 %v6730, %v6718
        %v7091 = vpack.c.b16 %v6731, %v6719
        %v7092 = vpack.c.b16 %v6732, %v6720
        %v7093 = vpack.c.b16 %v6733, %v6721
        %v7094 = vpack.c.b16 %v6734, %v6722
        %v7095 = vpack.c.b16 %v6735, %v6723
        %v7096 = vpack.c.b16 %v6736, %v6724
        %v7097 = vpack.c.b16 %v6737, %v6725
        %v7098 = vpack.c.b16 %v6738, %v6726
        %v7099 = vpack.c.b16 %v6739, %v6727
        %v7100 = vpack.c.b16 %v6740, %v6728
        %v7101 = vpack.c.b16 %v6741, %v6729
        %v7102 = vpack.c.b16 %v6754, %v6742
        %v7103 = vpack.c.b16 %v6755, %v6743
        %v7104 = vpack.c.b16 %v6756, %v6744
        %v7105 = vpack.c.b16 %v6757, %v6745
        %v7106 = vpack.c.b16 %v6758, %v6746
        %v7107 = vpack.c.b16 %v6759, %v6747
        %v7108 = vpack.c.b16 %v6760, %v6748
        %v7109 = vpack.c.b16 %v6761, %v6749
        %v7110 = vpack.c.b16 %v6762, %v6750
        %v7111 = vpack.c.b16 %v6763, %v6751
        %v7112 = vpack.c.b16 %v6764, %v6752
        %v7113 = vpack.c.b16 %v6765, %v6753
        %v7114 = vpack.c.b16 %v6778, %v6766
        %v7115 = vpack.c.b16 %v6779, %v6767
        %v7116 = vpack.c.b16 %v6780, %v6768
        %v7117 = vpack.c.b16 %v6781, %v6769
        %v7118 = vpack.c.b16 %v6782, %v6770
        %v7119 = vpack.c.b16 %v6783, %v6771
        %v7120 = vpack.c.b16 %v6784, %v6772
        %v7121 = vpack.c.b16 %v6785, %v6773
        %v7122 = vpack.c.b16 %v6786, %v6774
        %v7123 = vpack.c.b16 %v6787, %v6775
        %v7124 = vpack.c.b16 %v6788, %v6776
        %v7125 = vpack.c.b16 %v6789, %v6777
        %v7126 = vpack.c.b16 %v6802, %v6790
        %v7127 = vpack.c.b16 %v6803, %v6791
        %v7128 = vpack.c.b16 %v6804, %v6792
        %v7129 = vpack.c.b16 %v6805, %v6793
        %v7130 = vpack.c.b16 %v6806, %v6794
        %v7131 = vpack.c.b16 %v6807, %v6795
        %v7132 = vpack.c.b16 %v6808, %v6796
        %v7133 = vpack.c.b16 %v6809, %v6797
        %v7134 = vpack.c.b16 %v6810, %v6798
        %v7135 = vpack.c.b16 %v6811, %v6799
        %v7136 = vpack.c.b16 %v6812, %v6800
        %v7137 = vpack.c.b16 %v6813, %v6801
        %v7138 = vpack.c.b16 %v6826, %v6814
        %v7139 = vpack.c.b16 %v6827, %v6815
        %v7140 = vpack.c.b16 %v6828, %v6816
        %v7141 = vpack.c.b16 %v6829, %v6817
        %v7142 = vpack.c.b16 %v6830, %v6818
        %v7143 = vpack.c.b16 %v6831, %v6819
        %v7144 = vpack.c.b16 %v6832, %v6820
        %v7145 = vpack.c.b16 %v6833, %v6821
        %v7146 = vpack.c.b16 %v6834, %v6822
        %v7147 = vpack.c.b16 %v6835, %v6823
        %v7148 = vpack.c.b16 %v6836, %v6824
        %v7149 = vpack.c.b16 %v6837, %v6825
        %v7150 = vpack.c.b16 %v6850, %v6838
        %v7151 = vpack.c.b16 %v6851, %v6839
        %v7152 = vpack.c.b16 %v6852, %v6840
        %v7153 = vpack.c.b16 %v6853, %v6841
        %v7154 = vpack.c.b16 %v6854, %v6842
        %v7155 = vpack.c.b16 %v6855, %v6843
        %v7156 = vpack.c.b16 %v6856, %v6844
        %v7157 = vpack.c.b16 %v6857, %v6845
        %v7158 = vpack.c.b16 %v6858, %v6846
        %v7159 = vpack.c.b16 %v6859, %v6847
        %v7160 = vpack.c.b16 %v6860, %v6848
        %v7161 = vpack.c.b16 %v6861, %v6849
        %v7162 = vpack.c.b16 %v6874, %v6862
        %v7163 = vpack.c.b16 %v6875, %v6863
        %v7164 = vpack.c.b16 %v6876, %v6864
        %v7165 = vpack.c.b16 %v6877, %v6865
        %v7166 = vpack.c.b16 %v6878, %v6866
        %v7167 = vpack.c.b16 %v6879, %v6867
        %v7168 = vpack.c.b16 %v6880, %v6868
        %v7169 = vpack.c.b16 %v6881, %v6869
        %v7170 = vpack.c.b16 %v6882, %v6870
        %v7171 = vpack.c.b16 %v6883, %v6871
        %v7172 = vpack.c.b16 %v6884, %v6872
        %v7173 = vpack.c.b16 %v6885, %v6873
        %7462 = vmatpush.bf16.msra.mxu0 %v6970
        %7463 = vmatpush.bf16.msra.mxu0 %v6958
        %7464 = vmatpush.bf16.msra.mxu0 %v6946
        %7465 = vmatpush.bf16.msra.mxu0 %v6934
        %7466 = vmatpush.bf16.msra.mxu0 %v6922
        %7467 = vmatpush.bf16.msra.mxu0 %v6910
        %7468 = vmatpush.bf16.msra.mxu0 %v6898
        %7469 = vmatpush.bf16.msra.mxu0 %v6886
        %7470 = vmatmul.bf16.gmra.mxu0 %v5703
        %v7471 = vpop.f32.mrf.mxu0
        %v7472 = vadd.f32 %v5998, %v7471
        %v7473 = vpop.f32.mrf.mxu0
        %v7474 = vadd.f32 %v5998, %v7473
        %7475 = vdwg.mxu0
        %7476 = vmatpush.bf16.msra.mxu0 %v7066
        %7477 = vmatpush.bf16.msra.mxu0 %v7054
        %7478 = vmatpush.bf16.msra.mxu0 %v7042
        %7479 = vmatpush.bf16.msra.mxu0 %v7030
        %7480 = vmatpush.bf16.msra.mxu0 %v7018
        %7481 = vmatpush.bf16.msra.mxu0 %v7006
        %7482 = vmatpush.bf16.msra.mxu0 %v6994
        %7483 = vmatpush.bf16.msra.mxu0 %v6982
        %7484 = vmatmul.bf16.gmra.mxu0 %v5704
        %v7485 = vpop.f32.mrf.mxu0
        %v7486 = vadd.f32 %v7472, %v7485
        %v7487 = vpop.f32.mrf.mxu0
        %v7488 = vadd.f32 %v7474, %v7487
        %7489 = vdwg.mxu0
        %7490 = vmatpush.bf16.msra.mxu0 %v7162
        %7491 = vmatpush.bf16.msra.mxu0 %v7150
        %7492 = vmatpush.bf16.msra.mxu0 %v7138
        %7493 = vmatpush.bf16.msra.mxu0 %v7126
        %7494 = vmatpush.bf16.msra.mxu0 %v7114
        %7495 = vmatpush.bf16.msra.mxu0 %v7102
        %7496 = vmatpush.bf16.msra.mxu0 %v7090
        %7497 = vmatpush.bf16.msra.mxu0 %v7078
        %7498 = vmatmul.bf16.gmra.mxu0 %v5705
        %v7499 = vpop.f32.mrf.mxu0
        %v7500 = vadd.f32 %v7486, %v7499
        %v7501 = vpop.f32.mrf.mxu0
        %v7502 = vadd.f32 %v7488, %v7501
        %7503 = vdwg.mxu0
        %7504 = vmatpush.bf16.msra.mxu0 %v6971
        %7505 = vmatpush.bf16.msra.mxu0 %v6959
        %7506 = vmatpush.bf16.msra.mxu0 %v6947
        %7507 = vmatpush.bf16.msra.mxu0 %v6935
        %7508 = vmatpush.bf16.msra.mxu0 %v6923
        %7509 = vmatpush.bf16.msra.mxu0 %v6911
        %7510 = vmatpush.bf16.msra.mxu0 %v6899
        %7511 = vmatpush.bf16.msra.mxu0 %v6887
        %7512 = vmatmul.bf16.gmra.mxu0 %v5703
        %v7513 = vpop.f32.mrf.mxu0
        %v7514 = vadd.f32 %v5999, %v7513
        %v7515 = vpop.f32.mrf.mxu0
        %v7516 = vadd.f32 %v5999, %v7515
        %7517 = vdwg.mxu0
        %7518 = vmatpush.bf16.msra.mxu0 %v7067
        %7519 = vmatpush.bf16.msra.mxu0 %v7055
        %7520 = vmatpush.bf16.msra.mxu0 %v7043
        %7521 = vmatpush.bf16.msra.mxu0 %v7031
        %7522 = vmatpush.bf16.msra.mxu0 %v7019
        %7523 = vmatpush.bf16.msra.mxu0 %v7007
        %7524 = vmatpush.bf16.msra.mxu0 %v6995
        %7525 = vmatpush.bf16.msra.mxu0 %v6983
        %7526 = vmatmul.bf16.gmra.mxu0 %v5704
        %v7527 = vpop.f32.mrf.mxu0
        %v7528 = vadd.f32 %v7514, %v7527
        %v7529 = vpop.f32.mrf.mxu0
        %v7530 = vadd.f32 %v7516, %v7529
        %7531 = vdwg.mxu0
        %7532 = vmatpush.bf16.msra.mxu0 %v7163
        %7533 = vmatpush.bf16.msra.mxu0 %v7151
        %7534 = vmatpush.bf16.msra.mxu0 %v7139
        %7535 = vmatpush.bf16.msra.mxu0 %v7127
        %7536 = vmatpush.bf16.msra.mxu0 %v7115
        %7537 = vmatpush.bf16.msra.mxu0 %v7103
        %7538 = vmatpush.bf16.msra.mxu0 %v7091
        %7539 = vmatpush.bf16.msra.mxu0 %v7079
        %7540 = vmatmul.bf16.gmra.mxu0 %v5705
        %v7541 = vpop.f32.mrf.mxu0
        %v7542 = vadd.f32 %v7528, %v7541
        %v7543 = vpop.f32.mrf.mxu0
        %v7544 = vadd.f32 %v7530, %v7543
        %7545 = vdwg.mxu0
        %7546 = vmatpush.bf16.msra.mxu0 %v6972
        %7547 = vmatpush.bf16.msra.mxu0 %v6960
        %7548 = vmatpush.bf16.msra.mxu0 %v6948
        %7549 = vmatpush.bf16.msra.mxu0 %v6936
        %7550 = vmatpush.bf16.msra.mxu0 %v6924
        %7551 = vmatpush.bf16.msra.mxu0 %v6912
        %7552 = vmatpush.bf16.msra.mxu0 %v6900
        %7553 = vmatpush.bf16.msra.mxu0 %v6888
        %7554 = vmatmul.bf16.gmra.mxu0 %v5703
        %v7555 = vpop.f32.mrf.mxu0
        %v7556 = vadd.f32 %v6000, %v7555
        %v7557 = vpop.f32.mrf.mxu0
        %v7558 = vadd.f32 %v6000, %v7557
        %7559 = vdwg.mxu0
        %7560 = vmatpush.bf16.msra.mxu0 %v7068
        %7561 = vmatpush.bf16.msra.mxu0 %v7056
        %7562 = vmatpush.bf16.msra.mxu0 %v7044
        %7563 = vmatpush.bf16.msra.mxu0 %v7032
        %7564 = vmatpush.bf16.msra.mxu0 %v7020
        %7565 = vmatpush.bf16.msra.mxu0 %v7008
        %7566 = vmatpush.bf16.msra.mxu0 %v6996
        %7567 = vmatpush.bf16.msra.mxu0 %v6984
        %7568 = vmatmul.bf16.gmra.mxu0 %v5704
        %v7569 = vpop.f32.mrf.mxu0
        %v7570 = vadd.f32 %v7556, %v7569
        %v7571 = vpop.f32.mrf.mxu0
        %v7572 = vadd.f32 %v7558, %v7571
        %7573 = vdwg.mxu0
        %7574 = vmatpush.bf16.msra.mxu0 %v7164
        %7575 = vmatpush.bf16.msra.mxu0 %v7152
        %7576 = vmatpush.bf16.msra.mxu0 %v7140
        %7577 = vmatpush.bf16.msra.mxu0 %v7128
        %7578 = vmatpush.bf16.msra.mxu0 %v7116
        %7579 = vmatpush.bf16.msra.mxu0 %v7104
        %7580 = vmatpush.bf16.msra.mxu0 %v7092
        %7581 = vmatpush.bf16.msra.mxu0 %v7080
        %7582 = vmatmul.bf16.gmra.mxu0 %v5705
        %v7583 = vpop.f32.mrf.mxu0
        %v7584 = vadd.f32 %v7570, %v7583
        %v7585 = vpop.f32.mrf.mxu0
        %v7586 = vadd.f32 %v7572, %v7585
        %7587 = vdwg.mxu0
        %7588 = vmatpush.bf16.msra.mxu0 %v6973
        %7589 = vmatpush.bf16.msra.mxu0 %v6961
        %7590 = vmatpush.bf16.msra.mxu0 %v6949
        %7591 = vmatpush.bf16.msra.mxu0 %v6937
        %7592 = vmatpush.bf16.msra.mxu0 %v6925
        %7593 = vmatpush.bf16.msra.mxu0 %v6913
        %7594 = vmatpush.bf16.msra.mxu0 %v6901
        %7595 = vmatpush.bf16.msra.mxu0 %v6889
        %7596 = vmatmul.bf16.gmra.mxu0 %v5703
        %v7597 = vpop.f32.mrf.mxu0
        %v7598 = vadd.f32 %v6001, %v7597
        %v7599 = vpop.f32.mrf.mxu0
        %v7600 = vadd.f32 %v6001, %v7599
        %7601 = vdwg.mxu0
        %7602 = vmatpush.bf16.msra.mxu0 %v7069
        %7603 = vmatpush.bf16.msra.mxu0 %v7057
        %7604 = vmatpush.bf16.msra.mxu0 %v7045
        %7605 = vmatpush.bf16.msra.mxu0 %v7033
        %7606 = vmatpush.bf16.msra.mxu0 %v7021
        %7607 = vmatpush.bf16.msra.mxu0 %v7009
        %7608 = vmatpush.bf16.msra.mxu0 %v6997
        %7609 = vmatpush.bf16.msra.mxu0 %v6985
        %7610 = vmatmul.bf16.gmra.mxu0 %v5704
        %v7611 = vpop.f32.mrf.mxu0
        %v7612 = vadd.f32 %v7598, %v7611
        %v7613 = vpop.f32.mrf.mxu0
        %v7614 = vadd.f32 %v7600, %v7613
        %7615 = vdwg.mxu0
        %7616 = vmatpush.bf16.msra.mxu0 %v7165
        %7617 = vmatpush.bf16.msra.mxu0 %v7153
        %7618 = vmatpush.bf16.msra.mxu0 %v7141
        %7619 = vmatpush.bf16.msra.mxu0 %v7129
        %7620 = vmatpush.bf16.msra.mxu0 %v7117
        %7621 = vmatpush.bf16.msra.mxu0 %v7105
        %7622 = vmatpush.bf16.msra.mxu0 %v7093
        %7623 = vmatpush.bf16.msra.mxu0 %v7081
        %7624 = vmatmul.bf16.gmra.mxu0 %v5705
        %v7625 = vpop.f32.mrf.mxu0
        %v7626 = vadd.f32 %v7612, %v7625
        %v7627 = vpop.f32.mrf.mxu0
        %v7628 = vadd.f32 %v7614, %v7627
        %7629 = vdwg.mxu0
        %7630 = vmatpush.bf16.msra.mxu0 %v6974
        %7631 = vmatpush.bf16.msra.mxu0 %v6962
        %7632 = vmatpush.bf16.msra.mxu0 %v6950
        %7633 = vmatpush.bf16.msra.mxu0 %v6938
        %7634 = vmatpush.bf16.msra.mxu0 %v6926
        %7635 = vmatpush.bf16.msra.mxu0 %v6914
        %7636 = vmatpush.bf16.msra.mxu0 %v6902
        %7637 = vmatpush.bf16.msra.mxu0 %v6890
        %7638 = vmatmul.bf16.gmra.mxu0 %v5703
        %v7639 = vpop.f32.mrf.mxu0
        %v7640 = vadd.f32 %v6002, %v7639
        %v7641 = vpop.f32.mrf.mxu0
        %v7642 = vadd.f32 %v6002, %v7641
        %7643 = vdwg.mxu0
        %7644 = vmatpush.bf16.msra.mxu0 %v7070
        %7645 = vmatpush.bf16.msra.mxu0 %v7058
        %7646 = vmatpush.bf16.msra.mxu0 %v7046
        %7647 = vmatpush.bf16.msra.mxu0 %v7034
        %7648 = vmatpush.bf16.msra.mxu0 %v7022
        %7649 = vmatpush.bf16.msra.mxu0 %v7010
        %7650 = vmatpush.bf16.msra.mxu0 %v6998
        %7651 = vmatpush.bf16.msra.mxu0 %v6986
        %7652 = vmatmul.bf16.gmra.mxu0 %v5704
        %v7653 = vpop.f32.mrf.mxu0
        %v7654 = vadd.f32 %v7640, %v7653
        %v7655 = vpop.f32.mrf.mxu0
        %v7656 = vadd.f32 %v7642, %v7655
        %7657 = vdwg.mxu0
        %7658 = vmatpush.bf16.msra.mxu0 %v7166
        %7659 = vmatpush.bf16.msra.mxu0 %v7154
        %7660 = vmatpush.bf16.msra.mxu0 %v7142
        %7661 = vmatpush.bf16.msra.mxu0 %v7130
        %7662 = vmatpush.bf16.msra.mxu0 %v7118
        %7663 = vmatpush.bf16.msra.mxu0 %v7106
        %7664 = vmatpush.bf16.msra.mxu0 %v7094
        %7665 = vmatpush.bf16.msra.mxu0 %v7082
        %7666 = vmatmul.bf16.gmra.mxu0 %v5705
        %v7667 = vpop.f32.mrf.mxu0
        %v7668 = vadd.f32 %v7654, %v7667
        %v7669 = vpop.f32.mrf.mxu0
        %v7670 = vadd.f32 %v7656, %v7669
        %7671 = vdwg.mxu0
        %7672 = vmatpush.bf16.msra.mxu0 %v6975
        %7673 = vmatpush.bf16.msra.mxu0 %v6963
        %7674 = vmatpush.bf16.msra.mxu0 %v6951
        %7675 = vmatpush.bf16.msra.mxu0 %v6939
        %7676 = vmatpush.bf16.msra.mxu0 %v6927
        %7677 = vmatpush.bf16.msra.mxu0 %v6915
        %7678 = vmatpush.bf16.msra.mxu0 %v6903
        %7679 = vmatpush.bf16.msra.mxu0 %v6891
        %7680 = vmatmul.bf16.gmra.mxu0 %v5703
        %v7681 = vpop.f32.mrf.mxu0
        %v7682 = vadd.f32 %v6003, %v7681
        %v7683 = vpop.f32.mrf.mxu0
        %v7684 = vadd.f32 %v6003, %v7683
        %7685 = vdwg.mxu0
        %7686 = vmatpush.bf16.msra.mxu0 %v7071
        %7687 = vmatpush.bf16.msra.mxu0 %v7059
        %7688 = vmatpush.bf16.msra.mxu0 %v7047
        %7689 = vmatpush.bf16.msra.mxu0 %v7035
        %7690 = vmatpush.bf16.msra.mxu0 %v7023
        %7691 = vmatpush.bf16.msra.mxu0 %v7011
        %7692 = vmatpush.bf16.msra.mxu0 %v6999
        %7693 = vmatpush.bf16.msra.mxu0 %v6987
        %7694 = vmatmul.bf16.gmra.mxu0 %v5704
        %v7695 = vpop.f32.mrf.mxu0
        %v7696 = vadd.f32 %v7682, %v7695
        %v7697 = vpop.f32.mrf.mxu0
        %v7698 = vadd.f32 %v7684, %v7697
        %7699 = vdwg.mxu0
        %7700 = vmatpush.bf16.msra.mxu0 %v7167
        %7701 = vmatpush.bf16.msra.mxu0 %v7155
        %7702 = vmatpush.bf16.msra.mxu0 %v7143
        %7703 = vmatpush.bf16.msra.mxu0 %v7131
        %7704 = vmatpush.bf16.msra.mxu0 %v7119
        %7705 = vmatpush.bf16.msra.mxu0 %v7107
        %7706 = vmatpush.bf16.msra.mxu0 %v7095
        %7707 = vmatpush.bf16.msra.mxu0 %v7083
        %7708 = vmatmul.bf16.gmra.mxu0 %v5705
        %v7709 = vpop.f32.mrf.mxu0
        %v7710 = vadd.f32 %v7696, %v7709
        %v7711 = vpop.f32.mrf.mxu0
        %v7712 = vadd.f32 %v7698, %v7711
        %7713 = vdwg.mxu0
        %7714 = vmatpush.bf16.msra.mxu0 %v6976
        %7715 = vmatpush.bf16.msra.mxu0 %v6964
        %7716 = vmatpush.bf16.msra.mxu0 %v6952
        %7717 = vmatpush.bf16.msra.mxu0 %v6940
        %7718 = vmatpush.bf16.msra.mxu0 %v6928
        %7719 = vmatpush.bf16.msra.mxu0 %v6916
        %7720 = vmatpush.bf16.msra.mxu0 %v6904
        %7721 = vmatpush.bf16.msra.mxu0 %v6892
        %7722 = vmatmul.bf16.gmra.mxu0 %v5703
        %v7723 = vpop.f32.mrf.mxu0
        %v7724 = vadd.f32 %v6004, %v7723
        %v7725 = vpop.f32.mrf.mxu0
        %v7726 = vadd.f32 %v6004, %v7725
        %7727 = vdwg.mxu0
        %7728 = vmatpush.bf16.msra.mxu0 %v7072
        %7729 = vmatpush.bf16.msra.mxu0 %v7060
        %7730 = vmatpush.bf16.msra.mxu0 %v7048
        %7731 = vmatpush.bf16.msra.mxu0 %v7036
        %7732 = vmatpush.bf16.msra.mxu0 %v7024
        %7733 = vmatpush.bf16.msra.mxu0 %v7012
        %7734 = vmatpush.bf16.msra.mxu0 %v7000
        %7735 = vmatpush.bf16.msra.mxu0 %v6988
        %7736 = vmatmul.bf16.gmra.mxu0 %v5704
        %v7737 = vpop.f32.mrf.mxu0
        %v7738 = vadd.f32 %v7724, %v7737
        %v7739 = vpop.f32.mrf.mxu0
        %v7740 = vadd.f32 %v7726, %v7739
        %7741 = vdwg.mxu0
        %7742 = vmatpush.bf16.msra.mxu0 %v7168
        %7743 = vmatpush.bf16.msra.mxu0 %v7156
        %7744 = vmatpush.bf16.msra.mxu0 %v7144
        %7745 = vmatpush.bf16.msra.mxu0 %v7132
        %7746 = vmatpush.bf16.msra.mxu0 %v7120
        %7747 = vmatpush.bf16.msra.mxu0 %v7108
        %7748 = vmatpush.bf16.msra.mxu0 %v7096
        %7749 = vmatpush.bf16.msra.mxu0 %v7084
        %7750 = vmatmul.bf16.gmra.mxu0 %v5705
        %v7751 = vpop.f32.mrf.mxu0
        %v7752 = vadd.f32 %v7738, %v7751
        %v7753 = vpop.f32.mrf.mxu0
        %v7754 = vadd.f32 %v7740, %v7753
        %7755 = vdwg.mxu0
        %7756 = vmatpush.bf16.msra.mxu0 %v6977
        %7757 = vmatpush.bf16.msra.mxu0 %v6965
        %7758 = vmatpush.bf16.msra.mxu0 %v6953
        %7759 = vmatpush.bf16.msra.mxu0 %v6941
        %7760 = vmatpush.bf16.msra.mxu0 %v6929
        %7761 = vmatpush.bf16.msra.mxu0 %v6917
        %7762 = vmatpush.bf16.msra.mxu0 %v6905
        %7763 = vmatpush.bf16.msra.mxu0 %v6893
        %7764 = vmatmul.bf16.gmra.mxu0 %v5703
        %v7765 = vpop.f32.mrf.mxu0
        %v7766 = vadd.f32 %v6005, %v7765
        %v7767 = vpop.f32.mrf.mxu0
        %v7768 = vadd.f32 %v6005, %v7767
        %7769 = vdwg.mxu0
        %7770 = vmatpush.bf16.msra.mxu0 %v7073
        %7771 = vmatpush.bf16.msra.mxu0 %v7061
        %7772 = vmatpush.bf16.msra.mxu0 %v7049
        %7773 = vmatpush.bf16.msra.mxu0 %v7037
        %7774 = vmatpush.bf16.msra.mxu0 %v7025
        %7775 = vmatpush.bf16.msra.mxu0 %v7013
        %7776 = vmatpush.bf16.msra.mxu0 %v7001
        %7777 = vmatpush.bf16.msra.mxu0 %v6989
        %7778 = vmatmul.bf16.gmra.mxu0 %v5704
        %v7779 = vpop.f32.mrf.mxu0
        %v7780 = vadd.f32 %v7766, %v7779
        %v7781 = vpop.f32.mrf.mxu0
        %v7782 = vadd.f32 %v7768, %v7781
        %7783 = vdwg.mxu0
        %7784 = vmatpush.bf16.msra.mxu0 %v7169
        %7785 = vmatpush.bf16.msra.mxu0 %v7157
        %7786 = vmatpush.bf16.msra.mxu0 %v7145
        %7787 = vmatpush.bf16.msra.mxu0 %v7133
        %7788 = vmatpush.bf16.msra.mxu0 %v7121
        %7789 = vmatpush.bf16.msra.mxu0 %v7109
        %7790 = vmatpush.bf16.msra.mxu0 %v7097
        %7791 = vmatpush.bf16.msra.mxu0 %v7085
        %7792 = vmatmul.bf16.gmra.mxu0 %v5705
        %v7793 = vpop.f32.mrf.mxu0
        %v7794 = vadd.f32 %v7780, %v7793
        %v7795 = vpop.f32.mrf.mxu0
        %v7796 = vadd.f32 %v7782, %v7795
        %7797 = vdwg.mxu0
        %7798 = vmatpush.bf16.msra.mxu0 %v6978
        %7799 = vmatpush.bf16.msra.mxu0 %v6966
        %7800 = vmatpush.bf16.msra.mxu0 %v6954
        %7801 = vmatpush.bf16.msra.mxu0 %v6942
        %7802 = vmatpush.bf16.msra.mxu0 %v6930
        %7803 = vmatpush.bf16.msra.mxu0 %v6918
        %7804 = vmatpush.bf16.msra.mxu0 %v6906
        %7805 = vmatpush.bf16.msra.mxu0 %v6894
        %7806 = vmatmul.bf16.gmra.mxu0 %v5703
        %v7807 = vpop.f32.mrf.mxu0
        %v7808 = vadd.f32 %v6006, %v7807
        %v7809 = vpop.f32.mrf.mxu0
        %v7810 = vadd.f32 %v6006, %v7809
        %7811 = vdwg.mxu0
        %7812 = vmatpush.bf16.msra.mxu0 %v7074
        %7813 = vmatpush.bf16.msra.mxu0 %v7062
        %7814 = vmatpush.bf16.msra.mxu0 %v7050
        %7815 = vmatpush.bf16.msra.mxu0 %v7038
        %7816 = vmatpush.bf16.msra.mxu0 %v7026
        %7817 = vmatpush.bf16.msra.mxu0 %v7014
        %7818 = vmatpush.bf16.msra.mxu0 %v7002
        %7819 = vmatpush.bf16.msra.mxu0 %v6990
        %7820 = vmatmul.bf16.gmra.mxu0 %v5704
        %v7821 = vpop.f32.mrf.mxu0
        %v7822 = vadd.f32 %v7808, %v7821
        %v7823 = vpop.f32.mrf.mxu0
        %v7824 = vadd.f32 %v7810, %v7823
        %7825 = vdwg.mxu0
        %7826 = vmatpush.bf16.msra.mxu0 %v7170
        %7827 = vmatpush.bf16.msra.mxu0 %v7158
        %7828 = vmatpush.bf16.msra.mxu0 %v7146
        %7829 = vmatpush.bf16.msra.mxu0 %v7134
        %7830 = vmatpush.bf16.msra.mxu0 %v7122
        %7831 = vmatpush.bf16.msra.mxu0 %v7110
        %7832 = vmatpush.bf16.msra.mxu0 %v7098
        %7833 = vmatpush.bf16.msra.mxu0 %v7086
        %7834 = vmatmul.bf16.gmra.mxu0 %v5705
        %v7835 = vpop.f32.mrf.mxu0
        %v7836 = vadd.f32 %v7822, %v7835
        %v7837 = vpop.f32.mrf.mxu0
        %v7838 = vadd.f32 %v7824, %v7837
        %7839 = vdwg.mxu0
        %7840 = vmatpush.bf16.msra.mxu0 %v6979
        %7841 = vmatpush.bf16.msra.mxu0 %v6967
        %7842 = vmatpush.bf16.msra.mxu0 %v6955
        %7843 = vmatpush.bf16.msra.mxu0 %v6943
        %7844 = vmatpush.bf16.msra.mxu0 %v6931
        %7845 = vmatpush.bf16.msra.mxu0 %v6919
        %7846 = vmatpush.bf16.msra.mxu0 %v6907
        %7847 = vmatpush.bf16.msra.mxu0 %v6895
        %7848 = vmatmul.bf16.gmra.mxu0 %v5703
        %v7849 = vpop.f32.mrf.mxu0
        %v7850 = vadd.f32 %v6007, %v7849
        %v7851 = vpop.f32.mrf.mxu0
        %v7852 = vadd.f32 %v6007, %v7851
        %7853 = vdwg.mxu0
        %7854 = vmatpush.bf16.msra.mxu0 %v7075
        %7855 = vmatpush.bf16.msra.mxu0 %v7063
        %7856 = vmatpush.bf16.msra.mxu0 %v7051
        %7857 = vmatpush.bf16.msra.mxu0 %v7039
        %7858 = vmatpush.bf16.msra.mxu0 %v7027
        %7859 = vmatpush.bf16.msra.mxu0 %v7015
        %7860 = vmatpush.bf16.msra.mxu0 %v7003
        %7861 = vmatpush.bf16.msra.mxu0 %v6991
        %7862 = vmatmul.bf16.gmra.mxu0 %v5704
        %v7863 = vpop.f32.mrf.mxu0
        %v7864 = vadd.f32 %v7850, %v7863
        %v7865 = vpop.f32.mrf.mxu0
        %v7866 = vadd.f32 %v7852, %v7865
        %7867 = vdwg.mxu0
        %7868 = vmatpush.bf16.msra.mxu0 %v7171
        %7869 = vmatpush.bf16.msra.mxu0 %v7159
        %7870 = vmatpush.bf16.msra.mxu0 %v7147
        %7871 = vmatpush.bf16.msra.mxu0 %v7135
        %7872 = vmatpush.bf16.msra.mxu0 %v7123
        %7873 = vmatpush.bf16.msra.mxu0 %v7111
        %7874 = vmatpush.bf16.msra.mxu0 %v7099
        %7875 = vmatpush.bf16.msra.mxu0 %v7087
        %7876 = vmatmul.bf16.gmra.mxu0 %v5705
        %v7877 = vpop.f32.mrf.mxu0
        %v7878 = vadd.f32 %v7864, %v7877
        %v7879 = vpop.f32.mrf.mxu0
        %v7880 = vadd.f32 %v7866, %v7879
        %7881 = vdwg.mxu0
        %7882 = vmatpush.bf16.msra.mxu0 %v6980
        %7883 = vmatpush.bf16.msra.mxu0 %v6968
        %7884 = vmatpush.bf16.msra.mxu0 %v6956
        %7885 = vmatpush.bf16.msra.mxu0 %v6944
        %7886 = vmatpush.bf16.msra.mxu0 %v6932
        %7887 = vmatpush.bf16.msra.mxu0 %v6920
        %7888 = vmatpush.bf16.msra.mxu0 %v6908
        %7889 = vmatpush.bf16.msra.mxu0 %v6896
        %7890 = vmatmul.bf16.gmra.mxu0 %v5703
        %v7891 = vpop.f32.mrf.mxu0
        %v7892 = vadd.f32 %v6008, %v7891
        %v7893 = vpop.f32.mrf.mxu0
        %v7894 = vadd.f32 %v6008, %v7893
        %7895 = vdwg.mxu0
        %7896 = vmatpush.bf16.msra.mxu0 %v7076
        %7897 = vmatpush.bf16.msra.mxu0 %v7064
        %7898 = vmatpush.bf16.msra.mxu0 %v7052
        %7899 = vmatpush.bf16.msra.mxu0 %v7040
        %7900 = vmatpush.bf16.msra.mxu0 %v7028
        %7901 = vmatpush.bf16.msra.mxu0 %v7016
        %7902 = vmatpush.bf16.msra.mxu0 %v7004
        %7903 = vmatpush.bf16.msra.mxu0 %v6992
        %7904 = vmatmul.bf16.gmra.mxu0 %v5704
        %v7905 = vpop.f32.mrf.mxu0
        %v7906 = vadd.f32 %v7892, %v7905
        %v7907 = vpop.f32.mrf.mxu0
        %v7908 = vadd.f32 %v7894, %v7907
        %7909 = vdwg.mxu0
        %7910 = vmatpush.bf16.msra.mxu0 %v7172
        %7911 = vmatpush.bf16.msra.mxu0 %v7160
        %7912 = vmatpush.bf16.msra.mxu0 %v7148
        %7913 = vmatpush.bf16.msra.mxu0 %v7136
        %7914 = vmatpush.bf16.msra.mxu0 %v7124
        %7915 = vmatpush.bf16.msra.mxu0 %v7112
        %7916 = vmatpush.bf16.msra.mxu0 %v7100
        %7917 = vmatpush.bf16.msra.mxu0 %v7088
        %7918 = vmatmul.bf16.gmra.mxu0 %v5705
        %v7919 = vpop.f32.mrf.mxu0
        %v7920 = vadd.f32 %v7906, %v7919
        %v7921 = vpop.f32.mrf.mxu0
        %v7922 = vadd.f32 %v7908, %v7921
        %7923 = vdwg.mxu0
        %7924 = vmatpush.bf16.msra.mxu0 %v6981
        %7925 = vmatpush.bf16.msra.mxu0 %v6969
        %7926 = vmatpush.bf16.msra.mxu0 %v6957
        %7927 = vmatpush.bf16.msra.mxu0 %v6945
        %7928 = vmatpush.bf16.msra.mxu0 %v6933
        %7929 = vmatpush.bf16.msra.mxu0 %v6921
        %7930 = vmatpush.bf16.msra.mxu0 %v6909
        %7931 = vmatpush.bf16.msra.mxu0 %v6897
        %7932 = vmatmul.bf16.gmra.mxu0 %v5703
        %v7933 = vpop.f32.mrf.mxu0
        %v7934 = vadd.f32 %v6009, %v7933
        %v7935 = vpop.f32.mrf.mxu0
        %v7936 = vadd.f32 %v6009, %v7935
        %7937 = vdwg.mxu0
        %7938 = vmatpush.bf16.msra.mxu0 %v7077
        %7939 = vmatpush.bf16.msra.mxu0 %v7065
        %7940 = vmatpush.bf16.msra.mxu0 %v7053
        %7941 = vmatpush.bf16.msra.mxu0 %v7041
        %7942 = vmatpush.bf16.msra.mxu0 %v7029
        %7943 = vmatpush.bf16.msra.mxu0 %v7017
        %7944 = vmatpush.bf16.msra.mxu0 %v7005
        %7945 = vmatpush.bf16.msra.mxu0 %v6993
        %7946 = vmatmul.bf16.gmra.mxu0 %v5704
        %v7947 = vpop.f32.mrf.mxu0
        %v7948 = vadd.f32 %v7934, %v7947
        %v7949 = vpop.f32.mrf.mxu0
        %v7950 = vadd.f32 %v7936, %v7949
        %7951 = vdwg.mxu0
        %7952 = vmatpush.bf16.msra.mxu0 %v7173
        %7953 = vmatpush.bf16.msra.mxu0 %v7161
        %7954 = vmatpush.bf16.msra.mxu0 %v7149
        %7955 = vmatpush.bf16.msra.mxu0 %v7137
        %7956 = vmatpush.bf16.msra.mxu0 %v7125
        %7957 = vmatpush.bf16.msra.mxu0 %v7113
        %7958 = vmatpush.bf16.msra.mxu0 %v7101
        %7959 = vmatpush.bf16.msra.mxu0 %v7089
        %7960 = vmatmul.bf16.gmra.mxu0 %v5705
        %v7961 = vpop.f32.mrf.mxu0
        %v7962 = vadd.f32 %v7948, %v7961
        %v7963 = vpop.f32.mrf.mxu0
        %v7964 = vadd.f32 %v7950, %v7963
        %7965 = vdwg.mxu0
        %v7966 = vmul.f32 %v7500, 0.5
        %v7967 = vmul.f32 %v7542, 0.5
        %v7968 = vmul.f32 %v7584, 0.5
        %v7969 = vmul.f32 %v7626, 0.5
        %v7970 = vmul.f32 %v7668, 0.5
        %v7971 = vmul.f32 %v7710, 0.5
        %v7972 = vmul.f32 %v7752, 0.5
        %v7973 = vmul.f32 %v7794, 0.5
        %v7974 = vmul.f32 %v7836, 0.5
        %v7975 = vmul.f32 %v7878, 0.5
        %v7976 = vmul.f32 %v7920, 0.5
        %v7977 = vmul.f32 %v7962, 0.5
        %v7978 = vmul.f32 %v7502, 0.5
        %v7979 = vmul.f32 %v7544, 0.5
        %v7980 = vmul.f32 %v7586, 0.5
        %v7981 = vmul.f32 %v7628, 0.5
        %v7982 = vmul.f32 %v7670, 0.5
        %v7983 = vmul.f32 %v7712, 0.5
        %v7984 = vmul.f32 %v7754, 0.5
        %v7985 = vmul.f32 %v7796, 0.5
        %v7986 = vmul.f32 %v7838, 0.5
        %v7987 = vmul.f32 %v7880, 0.5
        %v7988 = vmul.f32 %v7922, 0.5
        %v7989 = vmul.f32 %v7964, 0.5
        %v7990 = vmul.f32 %v7500, 0.044715
        %v7991 = vmul.f32 %v7542, 0.044715
        %v7992 = vmul.f32 %v7584, 0.044715
        %v7993 = vmul.f32 %v7626, 0.044715
        %v7994 = vmul.f32 %v7668, 0.044715
        %v7995 = vmul.f32 %v7710, 0.044715
        %v7996 = vmul.f32 %v7752, 0.044715
        %v7997 = vmul.f32 %v7794, 0.044715
        %v7998 = vmul.f32 %v7836, 0.044715
        %v7999 = vmul.f32 %v7878, 0.044715
        %v8000 = vmul.f32 %v7920, 0.044715
        %v8001 = vmul.f32 %v7962, 0.044715
        %v8002 = vmul.f32 %v7502, 0.044715
        %v8003 = vmul.f32 %v7544, 0.044715
        %v8004 = vmul.f32 %v7586, 0.044715
        %v8005 = vmul.f32 %v7628, 0.044715
        %v8006 = vmul.f32 %v7670, 0.044715
        %v8007 = vmul.f32 %v7712, 0.044715
        %v8008 = vmul.f32 %v7754, 0.044715
        %v8009 = vmul.f32 %v7796, 0.044715
        %v8010 = vmul.f32 %v7838, 0.044715
        %v8011 = vmul.f32 %v7880, 0.044715
        %v8012 = vmul.f32 %v7922, 0.044715
        %v8013 = vmul.f32 %v7964, 0.044715
        %v8014 = vmul.f32 %v7990, %v7500
        %v8015 = vmul.f32 %v7991, %v7542
        %v8016 = vmul.f32 %v7992, %v7584
        %v8017 = vmul.f32 %v7993, %v7626
        %v8018 = vmul.f32 %v7994, %v7668
        %v8019 = vmul.f32 %v7995, %v7710
        %v8020 = vmul.f32 %v7996, %v7752
        %v8021 = vmul.f32 %v7997, %v7794
        %v8022 = vmul.f32 %v7998, %v7836
        %v8023 = vmul.f32 %v7999, %v7878
        %v8024 = vmul.f32 %v8000, %v7920
        %v8025 = vmul.f32 %v8001, %v7962
        %v8026 = vmul.f32 %v8002, %v7502
        %v8027 = vmul.f32 %v8003, %v7544
        %v8028 = vmul.f32 %v8004, %v7586
        %v8029 = vmul.f32 %v8005, %v7628
        %v8030 = vmul.f32 %v8006, %v7670
        %v8031 = vmul.f32 %v8007, %v7712
        %v8032 = vmul.f32 %v8008, %v7754
        %v8033 = vmul.f32 %v8009, %v7796
        %v8034 = vmul.f32 %v8010, %v7838
        %v8035 = vmul.f32 %v8011, %v7880
        %v8036 = vmul.f32 %v8012, %v7922
        %v8037 = vmul.f32 %v8013, %v7964
        %v8038 = vmul.f32 %v8014, %v7500
        %v8039 = vmul.f32 %v8015, %v7542
        %v8040 = vmul.f32 %v8016, %v7584
        %v8041 = vmul.f32 %v8017, %v7626
        %v8042 = vmul.f32 %v8018, %v7668
        %v8043 = vmul.f32 %v8019, %v7710
        %v8044 = vmul.f32 %v8020, %v7752
        %v8045 = vmul.f32 %v8021, %v7794
        %v8046 = vmul.f32 %v8022, %v7836
        %v8047 = vmul.f32 %v8023, %v7878
        %v8048 = vmul.f32 %v8024, %v7920
        %v8049 = vmul.f32 %v8025, %v7962
        %v8050 = vmul.f32 %v8026, %v7502
        %v8051 = vmul.f32 %v8027, %v7544
        %v8052 = vmul.f32 %v8028, %v7586
        %v8053 = vmul.f32 %v8029, %v7628
        %v8054 = vmul.f32 %v8030, %v7670
        %v8055 = vmul.f32 %v8031, %v7712
        %v8056 = vmul.f32 %v8032, %v7754
        %v8057 = vmul.f32 %v8033, %v7796
        %v8058 = vmul.f32 %v8034, %v7838
        %v8059 = vmul.f32 %v8035, %v7880
        %v8060 = vmul.f32 %v8036, %v7922
        %v8061 = vmul.f32 %v8037, %v7964
        %v8062 = vadd.f32 %v7500, %v8038
        %v8063 = vadd.f32 %v7542, %v8039
        %v8064 = vadd.f32 %v7584, %v8040
        %v8065 = vadd.f32 %v7626, %v8041
        %v8066 = vadd.f32 %v7668, %v8042
        %v8067 = vadd.f32 %v7710, %v8043
        %v8068 = vadd.f32 %v7752, %v8044
        %v8069 = vadd.f32 %v7794, %v8045
        %v8070 = vadd.f32 %v7836, %v8046
        %v8071 = vadd.f32 %v7878, %v8047
        %v8072 = vadd.f32 %v7920, %v8048
        %v8073 = vadd.f32 %v7962, %v8049
        %v8074 = vadd.f32 %v7502, %v8050
        %v8075 = vadd.f32 %v7544, %v8051
        %v8076 = vadd.f32 %v7586, %v8052
        %v8077 = vadd.f32 %v7628, %v8053
        %v8078 = vadd.f32 %v7670, %v8054
        %v8079 = vadd.f32 %v7712, %v8055
        %v8080 = vadd.f32 %v7754, %v8056
        %v8081 = vadd.f32 %v7796, %v8057
        %v8082 = vadd.f32 %v7838, %v8058
        %v8083 = vadd.f32 %v7880, %v8059
        %v8084 = vadd.f32 %v7922, %v8060
        %v8085 = vadd.f32 %v7964, %v8061
        %v8086 = vmul.f32 %v8062, 0.7978846
        %v8087 = vmul.f32 %v8063, 0.7978846
        %v8088 = vmul.f32 %v8064, 0.7978846
        %v8089 = vmul.f32 %v8065, 0.7978846
        %v8090 = vmul.f32 %v8066, 0.7978846
        %v8091 = vmul.f32 %v8067, 0.7978846
        %v8092 = vmul.f32 %v8068, 0.7978846
        %v8093 = vmul.f32 %v8069, 0.7978846
        %v8094 = vmul.f32 %v8070, 0.7978846
        %v8095 = vmul.f32 %v8071, 0.7978846
        %v8096 = vmul.f32 %v8072, 0.7978846
        %v8097 = vmul.f32 %v8073, 0.7978846
        %v8098 = vmul.f32 %v8074, 0.7978846
        %v8099 = vmul.f32 %v8075, 0.7978846
        %v8100 = vmul.f32 %v8076, 0.7978846
        %v8101 = vmul.f32 %v8077, 0.7978846
        %v8102 = vmul.f32 %v8078, 0.7978846
        %v8103 = vmul.f32 %v8079, 0.7978846
        %v8104 = vmul.f32 %v8080, 0.7978846
        %v8105 = vmul.f32 %v8081, 0.7978846
        %v8106 = vmul.f32 %v8082, 0.7978846
        %v8107 = vmul.f32 %v8083, 0.7978846
        %v8108 = vmul.f32 %v8084, 0.7978846
        %v8109 = vmul.f32 %v8085, 0.7978846
        %v8110 = vtanh.pop %v8086
        %v8111 = vtanh.pop %v8087
        %v8112 = vtanh.pop %v8088
        %v8113 = vtanh.pop %v8089
        %v8114 = vtanh.pop %v8090
        %v8115 = vtanh.pop %v8091
        %v8116 = vtanh.pop %v8092
        %v8117 = vtanh.pop %v8093
        %v8118 = vtanh.pop %v8094
        %v8119 = vtanh.pop %v8095
        %v8120 = vtanh.pop %v8096
        %v8121 = vtanh.pop %v8097
        %v8122 = vtanh.pop %v8098
        %v8123 = vtanh.pop %v8099
        %v8124 = vtanh.pop %v8100
        %v8125 = vtanh.pop %v8101
        %v8126 = vtanh.pop %v8102
        %v8127 = vtanh.pop %v8103
        %v8128 = vtanh.pop %v8104
        %v8129 = vtanh.pop %v8105
        %v8130 = vtanh.pop %v8106
        %v8131 = vtanh.pop %v8107
        %v8132 = vtanh.pop %v8108
        %v8133 = vtanh.pop %v8109
        %v8134 = vadd.f32 %v8110, 1.0
        %v8135 = vadd.f32 %v8111, 1.0
        %v8136 = vadd.f32 %v8112, 1.0
        %v8137 = vadd.f32 %v8113, 1.0
        %v8138 = vadd.f32 %v8114, 1.0
        %v8139 = vadd.f32 %v8115, 1.0
        %v8140 = vadd.f32 %v8116, 1.0
        %v8141 = vadd.f32 %v8117, 1.0
        %v8142 = vadd.f32 %v8118, 1.0
        %v8143 = vadd.f32 %v8119, 1.0
        %v8144 = vadd.f32 %v8120, 1.0
        %v8145 = vadd.f32 %v8121, 1.0
        %v8146 = vadd.f32 %v8122, 1.0
        %v8147 = vadd.f32 %v8123, 1.0
        %v8148 = vadd.f32 %v8124, 1.0
        %v8149 = vadd.f32 %v8125, 1.0
        %v8150 = vadd.f32 %v8126, 1.0
        %v8151 = vadd.f32 %v8127, 1.0
        %v8152 = vadd.f32 %v8128, 1.0
        %v8153 = vadd.f32 %v8129, 1.0
        %v8154 = vadd.f32 %v8130, 1.0
        %v8155 = vadd.f32 %v8131, 1.0
        %v8156 = vadd.f32 %v8132, 1.0
        %v8157 = vadd.f32 %v8133, 1.0
        %v8158 = vmul.f32 %v7966, %v8134
        %v8159 = vmul.f32 %v7967, %v8135
        %v8160 = vmul.f32 %v7968, %v8136
        %v8161 = vmul.f32 %v7969, %v8137
        %v8162 = vmul.f32 %v7970, %v8138
        %v8163 = vmul.f32 %v7971, %v8139
        %v8164 = vmul.f32 %v7972, %v8140
        %v8165 = vmul.f32 %v7973, %v8141
        %v8166 = vmul.f32 %v7974, %v8142
        %v8167 = vmul.f32 %v7975, %v8143
        %v8168 = vmul.f32 %v7976, %v8144
        %v8169 = vmul.f32 %v7977, %v8145
        %v8170 = vmul.f32 %v7978, %v8146
        %v8171 = vmul.f32 %v7979, %v8147
        %v8172 = vmul.f32 %v7980, %v8148
        %v8173 = vmul.f32 %v7981, %v8149
        %v8174 = vmul.f32 %v7982, %v8150
        %v8175 = vmul.f32 %v7983, %v8151
        %v8176 = vmul.f32 %v7984, %v8152
        %v8177 = vmul.f32 %v7985, %v8153
        %v8178 = vmul.f32 %v7986, %v8154
        %v8179 = vmul.f32 %v7987, %v8155
        %v8180 = vmul.f32 %v7988, %v8156
        %v8181 = vmul.f32 %v7989, %v8157
        %v8182 = vpack.c.bf16 %v8170, %v8158
        %v8183 = vpack.c.bf16 %v8171, %v8159
        %v8184 = vpack.c.bf16 %v8172, %v8160
        %v8185 = vpack.c.bf16 %v8173, %v8161
        %v8186 = vpack.c.bf16 %v8174, %v8162
        %v8187 = vpack.c.bf16 %v8175, %v8163
        %v8188 = vpack.c.bf16 %v8176, %v8164
        %v8189 = vpack.c.bf16 %v8177, %v8165
        %v8190 = vpack.c.bf16 %v8178, %v8166
        %v8191 = vpack.c.bf16 %v8179, %v8167
        %v8192 = vpack.c.bf16 %v8180, %v8168
        %v8193 = vpack.c.bf16 %v8181, %v8169
        %v8194 = vld [vmem:[%s748] sm:$0xff]
        %v8195 = vld [vmem:[%s748 + $0x8] sm:$0xf]
        %v8196 = vld [vmem:[%s748 + $0xc] sm:$0xff]
        %v8197 = vld [vmem:[%s748 + $0x14] sm:$0xf]
        %v8198 = vld [vmem:[%s748 + $0x18] sm:$0xff]
        %v8199 = vld [vmem:[%s748 + $0x20] sm:$0xf]
        %v8200 = vld [vmem:[%s748 + $0x24] sm:$0xff]
        %v8201 = vld [vmem:[%s748 + $0x2c] sm:$0xf]
        %v8202 = vld [vmem:[%s748 + $0x30] sm:$0xff]
        %v8203 = vld [vmem:[%s748 + $0x38] sm:$0xf]
        %v8204 = vld [vmem:[%s748 + $0x3c] sm:$0xff]
        %v8205 = vld [vmem:[%s748 + $0x44] sm:$0xf]
        %v8206 = vld [vmem:[%s748 + $0x48] sm:$0xff]
        %v8207 = vld [vmem:[%s748 + $0x50] sm:$0xf]
        %v8208 = vld [vmem:[%s748 + $0x54] sm:$0xff]
        %v8209 = vld [vmem:[%s748 + $0x5c] sm:$0xf]
        %v8210 = vld [vmem:[%s748 + $0x60] sm:$0xff]
        %v8211 = vld [vmem:[%s748 + $0x68] sm:$0xf]
        %v8212 = vld [vmem:[%s748 + $0x6c] sm:$0xff]
        %v8213 = vld [vmem:[%s748 + $0x74] sm:$0xf]
        %v8214 = vld [vmem:[%s748 + $0x78] sm:$0xff]
        %v8215 = vld [vmem:[%s748 + $0x80] sm:$0xf]
        %v8216 = vld [vmem:[%s748 + $0x84] sm:$0xff]
        %v8217 = vld [vmem:[%s748 + $0x8c] sm:$0xf]
        %v8218 = vld [vmem:[%s748 + $0x90] sm:$0xff]
        %v8219 = vld [vmem:[%s748 + $0x98] sm:$0xf]
        %v8220 = vld [vmem:[%s748 + $0x9c] sm:$0xff]
        %v8221 = vld [vmem:[%s748 + $0xa4] sm:$0xf]
        %v8222 = vld [vmem:[%s748 + $0xa8] sm:$0xff]
        %v8223 = vld [vmem:[%s748 + $0xb0] sm:$0xf]
        %v8224 = vld [vmem:[%s748 + $0xb4] sm:$0xff]
        %v8225 = vld [vmem:[%s748 + $0xbc] sm:$0xf]
        %v8226 = vld [vmem:[%s748 + $0xc0] sm:$0xff]
        %v8227 = vld [vmem:[%s748 + $0xc8] sm:$0xf]
        %v8228 = vld [vmem:[%s748 + $0xcc] sm:$0xff]
        %v8229 = vld [vmem:[%s748 + $0xd4] sm:$0xf]
        %v8230 = vld [vmem:[%s748 + $0xd8] sm:$0xff]
        %v8231 = vld [vmem:[%s748 + $0xe0] sm:$0xf]
        %v8232 = vld [vmem:[%s748 + $0xe4] sm:$0xff]
        %v8233 = vld [vmem:[%s748 + $0xec] sm:$0xf]
        %v8234 = vld [vmem:[%s748 + $0xf0] sm:$0xff]
        %v8235 = vld [vmem:[%s748 + $0xf8] sm:$0xf]
        %v8236 = vld [vmem:[%s748 + $0xfc] sm:$0xff]
        %v8237 = vld [vmem:[%s748 + $0x104] sm:$0xf]
        %v8238 = vld [vmem:[%s748 + $0x108] sm:$0xff]
        %v8239 = vld [vmem:[%s748 + $0x110] sm:$0xf]
        %v8240 = vld [vmem:[%s748 + $0x114] sm:$0xff]
        %v8241 = vld [vmem:[%s748 + $0x11c] sm:$0xf]
        %v8242 = vld [vmem:[%s748 + $0x120] sm:$0xff]
        %v8243 = vld [vmem:[%s748 + $0x128] sm:$0xf]
        %v8244 = vld [vmem:[%s748 + $0x12c] sm:$0xff]
        %v8245 = vld [vmem:[%s748 + $0x134] sm:$0xf]
        %v8246 = vld [vmem:[%s748 + $0x138] sm:$0xff]
        %v8247 = vld [vmem:[%s748 + $0x140] sm:$0xf]
        %v8248 = vld [vmem:[%s748 + $0x144] sm:$0xff]
        %v8249 = vld [vmem:[%s748 + $0x14c] sm:$0xf]
        %v8250 = vld [vmem:[%s748 + $0x150] sm:$0xff]
        %v8251 = vld [vmem:[%s748 + $0x158] sm:$0xf]
        %v8252 = vld [vmem:[%s748 + $0x15c] sm:$0xff]
        %v8253 = vld [vmem:[%s748 + $0x164] sm:$0xf]
        %v8254 = vld [vmem:[%s748 + $0x168] sm:$0xff]
        %v8255 = vld [vmem:[%s748 + $0x170] sm:$0xf]
        %v8256 = vld [vmem:[%s748 + $0x174] sm:$0xff]
        %v8257 = vld [vmem:[%s748 + $0x17c] sm:$0xf]
        %v8258 = vld [vmem:[%s748 + $0x180] sm:$0xff]
        %v8259 = vld [vmem:[%s748 + $0x188] sm:$0xf]
        %v8260 = vld [vmem:[%s748 + $0x18c] sm:$0xff]
        %v8261 = vld [vmem:[%s748 + $0x194] sm:$0xf]
        %v8262 = vld [vmem:[%s748 + $0x198] sm:$0xff]
        %v8263 = vld [vmem:[%s748 + $0x1a0] sm:$0xf]
        %v8264 = vld [vmem:[%s748 + $0x1a4] sm:$0xff]
        %v8265 = vld [vmem:[%s748 + $0x1ac] sm:$0xf]
        %v8266 = vld [vmem:[%s748 + $0x1b0] sm:$0xff]
        %v8267 = vld [vmem:[%s748 + $0x1b8] sm:$0xf]
        %v8268 = vld [vmem:[%s748 + $0x1bc] sm:$0xff]
        %v8269 = vld [vmem:[%s748 + $0x1c4] sm:$0xf]
        %v8270 = vld [vmem:[%s748 + $0x1c8] sm:$0xff]
        %v8271 = vld [vmem:[%s748 + $0x1d0] sm:$0xf]
        %v8272 = vld [vmem:[%s748 + $0x1d4] sm:$0xff]
        %v8273 = vld [vmem:[%s748 + $0x1dc] sm:$0xf]
        %v8274 = vld [vmem:[%s748 + $0x1e0] sm:$0xff]
        %v8275 = vld [vmem:[%s748 + $0x1e8] sm:$0xf]
        %v8276 = vld [vmem:[%s748 + $0x1ec] sm:$0xff]
        %v8277 = vld [vmem:[%s748 + $0x1f4] sm:$0xf]
        %v8278 = vld [vmem:[%s748 + $0x1f8] sm:$0xff]
        %v8279 = vld [vmem:[%s748 + $0x200] sm:$0xf]
        %v8280 = vld [vmem:[%s748 + $0x204] sm:$0xff]
        %v8281 = vld [vmem:[%s748 + $0x20c] sm:$0xf]
        %v8282 = vld [vmem:[%s748 + $0x210] sm:$0xff]
        %v8283 = vld [vmem:[%s748 + $0x218] sm:$0xf]
        %v8284 = vld [vmem:[%s748 + $0x21c] sm:$0xff]
        %v8285 = vld [vmem:[%s748 + $0x224] sm:$0xf]
        %v8286 = vld [vmem:[%s748 + $0x228] sm:$0xff]
        %v8287 = vld [vmem:[%s748 + $0x230] sm:$0xf]
        %v8288 = vld [vmem:[%s748 + $0x234] sm:$0xff]
        %v8289 = vld [vmem:[%s748 + $0x23c] sm:$0xf]
        %v8290 = vld [vmem:[%s748 + $0x240] sm:$0xff]
        %v8291 = vld [vmem:[%s748 + $0x248] sm:$0xf]
        %v8292 = vld [vmem:[%s748 + $0x24c] sm:$0xff]
        %v8293 = vld [vmem:[%s748 + $0x254] sm:$0xf]
        %v8294 = vld [vmem:[%s748 + $0x258] sm:$0xff]
        %v8295 = vld [vmem:[%s748 + $0x260] sm:$0xf]
        %v8296 = vld [vmem:[%s748 + $0x264] sm:$0xff]
        %v8297 = vld [vmem:[%s748 + $0x26c] sm:$0xf]
        %v8298 = vld [vmem:[%s748 + $0x270] sm:$0xff]
        %v8299 = vld [vmem:[%s748 + $0x278] sm:$0xf]
        %v8300 = vld [vmem:[%s748 + $0x27c] sm:$0xff]
        %v8301 = vld [vmem:[%s748 + $0x284] sm:$0xf]
        %v8302 = vld [vmem:[%s748 + $0x288] sm:$0xff]
        %v8303 = vld [vmem:[%s748 + $0x290] sm:$0xf]
        %v8304 = vld [vmem:[%s748 + $0x294] sm:$0xff]
        %v8305 = vld [vmem:[%s748 + $0x29c] sm:$0xf]
        %v8306 = vld [vmem:[%s748 + $0x2a0] sm:$0xff]
        %v8307 = vld [vmem:[%s748 + $0x2a8] sm:$0xf]
        %v8308 = vld [vmem:[%s748 + $0x2ac] sm:$0xff]
        %v8309 = vld [vmem:[%s748 + $0x2b4] sm:$0xf]
        %v8310 = vld [vmem:[%s748 + $0x2b8] sm:$0xff]
        %v8311 = vld [vmem:[%s748 + $0x2c0] sm:$0xf]
        %v8312 = vld [vmem:[%s748 + $0x2c4] sm:$0xff]
        %v8313 = vld [vmem:[%s748 + $0x2cc] sm:$0xf]
        %v8314 = vld [vmem:[%s748 + $0x2d0] sm:$0xff]
        %v8315 = vld [vmem:[%s748 + $0x2d8] sm:$0xf]
        %v8316 = vld [vmem:[%s748 + $0x2dc] sm:$0xff]
        %v8317 = vld [vmem:[%s748 + $0x2e4] sm:$0xf]
        %v8318 = vld [vmem:[%s748 + $0x2e8] sm:$0xff]
        %v8319 = vld [vmem:[%s748 + $0x2f0] sm:$0xf]
        %v8320 = vld [vmem:[%s748 + $0x2f4] sm:$0xff]
        %v8321 = vld [vmem:[%s748 + $0x2fc] sm:$0xf]
        %v8322 = vld [vmem:[%s748 + $0x300] sm:$0xff]
        %v8323 = vld [vmem:[%s748 + $0x308] sm:$0xf]
        %v8324 = vld [vmem:[%s748 + $0x30c] sm:$0xff]
        %v8325 = vld [vmem:[%s748 + $0x314] sm:$0xf]
        %v8326 = vld [vmem:[%s748 + $0x318] sm:$0xff]
        %v8327 = vld [vmem:[%s748 + $0x320] sm:$0xf]
        %v8328 = vld [vmem:[%s748 + $0x324] sm:$0xff]
        %v8329 = vld [vmem:[%s748 + $0x32c] sm:$0xf]
        %v8330 = vld [vmem:[%s748 + $0x330] sm:$0xff]
        %v8331 = vld [vmem:[%s748 + $0x338] sm:$0xf]
        %v8332 = vld [vmem:[%s748 + $0x33c] sm:$0xff]
        %v8333 = vld [vmem:[%s748 + $0x344] sm:$0xf]
        %v8334 = vld [vmem:[%s748 + $0x348] sm:$0xff]
        %v8335 = vld [vmem:[%s748 + $0x350] sm:$0xf]
        %v8336 = vld [vmem:[%s748 + $0x354] sm:$0xff]
        %v8337 = vld [vmem:[%s748 + $0x35c] sm:$0xf]
        %v8338 = vld [vmem:[%s748 + $0x360] sm:$0xff]
        %v8339 = vld [vmem:[%s748 + $0x368] sm:$0xf]
        %v8340 = vld [vmem:[%s748 + $0x36c] sm:$0xff]
        %v8341 = vld [vmem:[%s748 + $0x374] sm:$0xf]
        %v8342 = vld [vmem:[%s748 + $0x378] sm:$0xff]
        %v8343 = vld [vmem:[%s748 + $0x380] sm:$0xf]
        %v8344 = vld [vmem:[%s748 + $0x384] sm:$0xff]
        %v8345 = vld [vmem:[%s748 + $0x38c] sm:$0xf]
        %v8346 = vld [vmem:[%s748 + $0x390] sm:$0xff]
        %v8347 = vld [vmem:[%s748 + $0x398] sm:$0xf]
        %v8348 = vld [vmem:[%s748 + $0x39c] sm:$0xff]
        %v8349 = vld [vmem:[%s748 + $0x3a4] sm:$0xf]
        %v8350 = vld [vmem:[%s748 + $0x3a8] sm:$0xff]
        %v8351 = vld [vmem:[%s748 + $0x3b0] sm:$0xf]
        %v8352 = vld [vmem:[%s748 + $0x3b4] sm:$0xff]
        %v8353 = vld [vmem:[%s748 + $0x3bc] sm:$0xf]
        %v8354 = vld [vmem:[%s748 + $0x3c0] sm:$0xff]
        %v8355 = vld [vmem:[%s748 + $0x3c8] sm:$0xf]
        %v8356 = vld [vmem:[%s748 + $0x3cc] sm:$0xff]
        %v8357 = vld [vmem:[%s748 + $0x3d4] sm:$0xf]
        %v8358 = vld [vmem:[%s748 + $0x3d8] sm:$0xff]
        %v8359 = vld [vmem:[%s748 + $0x3e0] sm:$0xf]
        %v8360 = vld [vmem:[%s748 + $0x3e4] sm:$0xff]
        %v8361 = vld [vmem:[%s748 + $0x3ec] sm:$0xf]
        %v8362 = vld [vmem:[%s748 + $0x3f0] sm:$0xff]
        %v8363 = vld [vmem:[%s748 + $0x3f8] sm:$0xf]
        %v8364 = vld [vmem:[%s748 + $0x3fc] sm:$0xff]
        %v8365 = vld [vmem:[%s748 + $0x404] sm:$0xf]
        %v8366 = vld [vmem:[%s748 + $0x408] sm:$0xff]
        %v8367 = vld [vmem:[%s748 + $0x410] sm:$0xf]
        %v8368 = vld [vmem:[%s748 + $0x414] sm:$0xff]
        %v8369 = vld [vmem:[%s748 + $0x41c] sm:$0xf]
        %v8370 = vld [vmem:[%s748 + $0x420] sm:$0xff]
        %v8371 = vld [vmem:[%s748 + $0x428] sm:$0xf]
        %v8372 = vld [vmem:[%s748 + $0x42c] sm:$0xff]
        %v8373 = vld [vmem:[%s748 + $0x434] sm:$0xf]
        %v8374 = vld [vmem:[%s748 + $0x438] sm:$0xff]
        %v8375 = vld [vmem:[%s748 + $0x440] sm:$0xf]
        %v8376 = vld [vmem:[%s748 + $0x444] sm:$0xff]
        %v8377 = vld [vmem:[%s748 + $0x44c] sm:$0xf]
        %v8378 = vld [vmem:[%s748 + $0x450] sm:$0xff]
        %v8379 = vld [vmem:[%s748 + $0x458] sm:$0xf]
        %v8380 = vld [vmem:[%s748 + $0x45c] sm:$0xff]
        %v8381 = vld [vmem:[%s748 + $0x464] sm:$0xf]
        %v8382 = vld [vmem:[%s748 + $0x468] sm:$0xff]
        %v8383 = vld [vmem:[%s748 + $0x470] sm:$0xf]
        %v8384 = vld [vmem:[%s748 + $0x474] sm:$0xff]
        %v8385 = vld [vmem:[%s748 + $0x47c] sm:$0xf]
        %v8386 = vld [vmem:[%s748 + $0x480] sm:$0xff]
        %v8387 = vld [vmem:[%s748 + $0x488] sm:$0xf]
        %v8388 = vld [vmem:[%s748 + $0x48c] sm:$0xff]
        %v8389 = vld [vmem:[%s748 + $0x494] sm:$0xf]
        %v8390 = vld [vmem:[%s748 + $0x498] sm:$0xff]
        %v8391 = vld [vmem:[%s748 + $0x4a0] sm:$0xf]
        %v8392 = vld [vmem:[%s748 + $0x4a4] sm:$0xff]
        %v8393 = vld [vmem:[%s748 + $0x4ac] sm:$0xf]
        %v8394 = vld [vmem:[%s748 + $0x4b0] sm:$0xff]
        %v8395 = vld [vmem:[%s748 + $0x4b8] sm:$0xf]
        %v8396 = vld [vmem:[%s748 + $0x4bc] sm:$0xff]
        %v8397 = vld [vmem:[%s748 + $0x4c4] sm:$0xf]
        %v8398 = vld [vmem:[%s748 + $0x4c8] sm:$0xff]
        %v8399 = vld [vmem:[%s748 + $0x4d0] sm:$0xf]
        %v8400 = vld [vmem:[%s748 + $0x4d4] sm:$0xff]
        %v8401 = vld [vmem:[%s748 + $0x4dc] sm:$0xf]
        %v8402 = vld [vmem:[%s748 + $0x4e0] sm:$0xff]
        %v8403 = vld [vmem:[%s748 + $0x4e8] sm:$0xf]
        %v8404 = vld [vmem:[%s748 + $0x4ec] sm:$0xff]
        %v8405 = vld [vmem:[%s748 + $0x4f4] sm:$0xf]
        %v8406 = vld [vmem:[%s748 + $0x4f8] sm:$0xff]
        %v8407 = vld [vmem:[%s748 + $0x500] sm:$0xf]
        %v8408 = vld [vmem:[%s748 + $0x504] sm:$0xff]
        %v8409 = vld [vmem:[%s748 + $0x50c] sm:$0xf]
        %v8410 = vld [vmem:[%s748 + $0x510] sm:$0xff]
        %v8411 = vld [vmem:[%s748 + $0x518] sm:$0xf]
        %v8412 = vld [vmem:[%s748 + $0x51c] sm:$0xff]
        %v8413 = vld [vmem:[%s748 + $0x524] sm:$0xf]
        %v8414 = vld [vmem:[%s748 + $0x528] sm:$0xff]
        %v8415 = vld [vmem:[%s748 + $0x530] sm:$0xf]
        %v8416 = vld [vmem:[%s748 + $0x534] sm:$0xff]
        %v8417 = vld [vmem:[%s748 + $0x53c] sm:$0xf]
        %v8418 = vld [vmem:[%s748 + $0x540] sm:$0xff]
        %v8419 = vld [vmem:[%s748 + $0x548] sm:$0xf]
        %v8420 = vld [vmem:[%s748 + $0x54c] sm:$0xff]
        %v8421 = vld [vmem:[%s748 + $0x554] sm:$0xf]
        %v8422 = vld [vmem:[%s748 + $0x558] sm:$0xff]
        %v8423 = vld [vmem:[%s748 + $0x560] sm:$0xf]
        %v8424 = vld [vmem:[%s748 + $0x564] sm:$0xff]
        %v8425 = vld [vmem:[%s748 + $0x56c] sm:$0xf]
        %v8426 = vld [vmem:[%s748 + $0x570] sm:$0xff]
        %v8427 = vld [vmem:[%s748 + $0x578] sm:$0xf]
        %v8428 = vld [vmem:[%s748 + $0x57c] sm:$0xff]
        %v8429 = vld [vmem:[%s748 + $0x584] sm:$0xf]
        %v8430 = vld [vmem:[%s748 + $0x588] sm:$0xff]
        %v8431 = vld [vmem:[%s748 + $0x590] sm:$0xf]
        %v8432 = vld [vmem:[%s748 + $0x594] sm:$0xff]
        %v8433 = vld [vmem:[%s748 + $0x59c] sm:$0xf]
        %v8434 = vld [vmem:[%s748 + $0x5a0] sm:$0xff]
        %v8435 = vld [vmem:[%s748 + $0x5a8] sm:$0xf]
        %v8436 = vld [vmem:[%s748 + $0x5ac] sm:$0xff]
        %v8437 = vld [vmem:[%s748 + $0x5b4] sm:$0xf]
        %v8438 = vld [vmem:[%s748 + $0x5b8] sm:$0xff]
        %v8439 = vld [vmem:[%s748 + $0x5c0] sm:$0xf]
        %v8440 = vld [vmem:[%s748 + $0x5c4] sm:$0xff]
        %v8441 = vld [vmem:[%s748 + $0x5cc] sm:$0xf]
        %v8442 = vld [vmem:[%s748 + $0x5d0] sm:$0xff]
        %v8443 = vld [vmem:[%s748 + $0x5d8] sm:$0xf]
        %v8444 = vld [vmem:[%s748 + $0x5dc] sm:$0xff]
        %v8445 = vld [vmem:[%s748 + $0x5e4] sm:$0xf]
        %v8446 = vld [vmem:[%s748 + $0x5e8] sm:$0xff]
        %v8447 = vld [vmem:[%s748 + $0x5f0] sm:$0xf]
        %v8448 = vld [vmem:[%s748 + $0x5f4] sm:$0xff]
        %v8449 = vld [vmem:[%s748 + $0x5fc] sm:$0xf]
        %v8450 = vld [vmem:[%s748 + $0x600] sm:$0xff]
        %v8451 = vld [vmem:[%s748 + $0x608] sm:$0xf]
        %v8452 = vld [vmem:[%s748 + $0x60c] sm:$0xff]
        %v8453 = vld [vmem:[%s748 + $0x614] sm:$0xf]
        %v8454 = vld [vmem:[%s748 + $0x618] sm:$0xff]
        %v8455 = vld [vmem:[%s748 + $0x620] sm:$0xf]
        %v8456 = vld [vmem:[%s748 + $0x624] sm:$0xff]
        %v8457 = vld [vmem:[%s748 + $0x62c] sm:$0xf]
        %v8458 = vld [vmem:[%s748 + $0x630] sm:$0xff]
        %v8459 = vld [vmem:[%s748 + $0x638] sm:$0xf]
        %v8460 = vld [vmem:[%s748 + $0x63c] sm:$0xff]
        %v8461 = vld [vmem:[%s748 + $0x644] sm:$0xf]
        %v8462 = vld [vmem:[%s748 + $0x648] sm:$0xff]
        %v8463 = vld [vmem:[%s748 + $0x650] sm:$0xf]
        %v8464 = vld [vmem:[%s748 + $0x654] sm:$0xff]
        %v8465 = vld [vmem:[%s748 + $0x65c] sm:$0xf]
        %v8466 = vld [vmem:[%s748 + $0x660] sm:$0xff]
        %v8467 = vld [vmem:[%s748 + $0x668] sm:$0xf]
        %v8468 = vld [vmem:[%s748 + $0x66c] sm:$0xff]
        %v8469 = vld [vmem:[%s748 + $0x674] sm:$0xf]
        %v8470 = vld [vmem:[%s748 + $0x678] sm:$0xff]
        %v8471 = vld [vmem:[%s748 + $0x680] sm:$0xf]
        %v8472 = vld [vmem:[%s748 + $0x684] sm:$0xff]
        %v8473 = vld [vmem:[%s748 + $0x68c] sm:$0xf]
        %v8474 = vld [vmem:[%s748 + $0x690] sm:$0xff]
        %v8475 = vld [vmem:[%s748 + $0x698] sm:$0xf]
        %v8476 = vld [vmem:[%s748 + $0x69c] sm:$0xff]
        %v8477 = vld [vmem:[%s748 + $0x6a4] sm:$0xf]
        %v8478 = vld [vmem:[%s748 + $0x6a8] sm:$0xff]
        %v8479 = vld [vmem:[%s748 + $0x6b0] sm:$0xf]
        %v8480 = vld [vmem:[%s748 + $0x6b4] sm:$0xff]
        %v8481 = vld [vmem:[%s748 + $0x6bc] sm:$0xf]
        %v8482 = vld [vmem:[%s748 + $0x6c0] sm:$0xff]
        %v8483 = vld [vmem:[%s748 + $0x6c8] sm:$0xf]
        %v8484 = vld [vmem:[%s748 + $0x6cc] sm:$0xff]
        %v8485 = vld [vmem:[%s748 + $0x6d4] sm:$0xf]
        %v8486 = vld [vmem:[%s748 + $0x6d8] sm:$0xff]
        %v8487 = vld [vmem:[%s748 + $0x6e0] sm:$0xf]
        %v8488 = vld [vmem:[%s748 + $0x6e4] sm:$0xff]
        %v8489 = vld [vmem:[%s748 + $0x6ec] sm:$0xf]
        %v8490 = vld [vmem:[%s748 + $0x6f0] sm:$0xff]
        %v8491 = vld [vmem:[%s748 + $0x6f8] sm:$0xf]
        %v8492 = vld [vmem:[%s748 + $0x6fc] sm:$0xff]
        %v8493 = vld [vmem:[%s748 + $0x704] sm:$0xf]
        %v8494 = vld [vmem:[%s748 + $0x708] sm:$0xff]
        %v8495 = vld [vmem:[%s748 + $0x710] sm:$0xf]
        %v8496 = vld [vmem:[%s748 + $0x714] sm:$0xff]
        %v8497 = vld [vmem:[%s748 + $0x71c] sm:$0xf]
        %v8498 = vld [vmem:[%s748 + $0x720] sm:$0xff]
        %v8499 = vld [vmem:[%s748 + $0x728] sm:$0xf]
        %v8500 = vld [vmem:[%s748 + $0x72c] sm:$0xff]
        %v8501 = vld [vmem:[%s748 + $0x734] sm:$0xf]
        %v8502 = vld [vmem:[%s748 + $0x738] sm:$0xff]
        %v8503 = vld [vmem:[%s748 + $0x740] sm:$0xf]
        %v8504 = vld [vmem:[%s748 + $0x744] sm:$0xff]
        %v8505 = vld [vmem:[%s748 + $0x74c] sm:$0xf]
        %v8506 = vld [vmem:[%s748 + $0x750] sm:$0xff]
        %v8507 = vld [vmem:[%s748 + $0x758] sm:$0xf]
        %v8508 = vld [vmem:[%s748 + $0x75c] sm:$0xff]
        %v8509 = vld [vmem:[%s748 + $0x764] sm:$0xf]
        %v8510 = vld [vmem:[%s748 + $0x768] sm:$0xff]
        %v8511 = vld [vmem:[%s748 + $0x770] sm:$0xf]
        %v8512 = vld [vmem:[%s748 + $0x774] sm:$0xff]
        %v8513 = vld [vmem:[%s748 + $0x77c] sm:$0xf]
        %v8514 = vld [vmem:[%s748 + $0x780] sm:$0xff]
        %v8515 = vld [vmem:[%s748 + $0x788] sm:$0xf]
        %v8516 = vld [vmem:[%s748 + $0x78c] sm:$0xff]
        %v8517 = vld [vmem:[%s748 + $0x794] sm:$0xf]
        %v8518 = vld [vmem:[%s748 + $0x798] sm:$0xff]
        %v8519 = vld [vmem:[%s748 + $0x7a0] sm:$0xf]
        %v8520 = vld [vmem:[%s748 + $0x7a4] sm:$0xff]
        %v8521 = vld [vmem:[%s748 + $0x7ac] sm:$0xf]
        %v8522 = vld [vmem:[%s748 + $0x7b0] sm:$0xff]
        %v8523 = vld [vmem:[%s748 + $0x7b8] sm:$0xf]
        %v8524 = vld [vmem:[%s748 + $0x7bc] sm:$0xff]
        %v8525 = vld [vmem:[%s748 + $0x7c4] sm:$0xf]
        %v8526 = vld [vmem:[%s748 + $0x7c8] sm:$0xff]
        %v8527 = vld [vmem:[%s748 + $0x7d0] sm:$0xf]
        %v8528 = vld [vmem:[%s748 + $0x7d4] sm:$0xff]
        %v8529 = vld [vmem:[%s748 + $0x7dc] sm:$0xf]
        %v8530 = vld [vmem:[%s748 + $0x7e0] sm:$0xff]
        %v8531 = vld [vmem:[%s748 + $0x7e8] sm:$0xf]
        %v8532 = vld [vmem:[%s748 + $0x7ec] sm:$0xff]
        %v8533 = vld [vmem:[%s748 + $0x7f4] sm:$0xf]
        %v8534 = vld [vmem:[%s748 + $0x7f8] sm:$0xff]
        %v8535 = vld [vmem:[%s748 + $0x800] sm:$0xf]
        %v8536 = vld [vmem:[%s748 + $0x804] sm:$0xff]
        %v8537 = vld [vmem:[%s748 + $0x80c] sm:$0xf]
        %v8538 = vld [vmem:[%s748 + $0x810] sm:$0xff]
        %v8539 = vld [vmem:[%s748 + $0x818] sm:$0xf]
        %v8540 = vld [vmem:[%s748 + $0x81c] sm:$0xff]
        %v8541 = vld [vmem:[%s748 + $0x824] sm:$0xf]
        %v8542 = vld [vmem:[%s748 + $0x828] sm:$0xff]
        %v8543 = vld [vmem:[%s748 + $0x830] sm:$0xf]
        %v8544 = vld [vmem:[%s748 + $0x834] sm:$0xff]
        %v8545 = vld [vmem:[%s748 + $0x83c] sm:$0xf]
        %v8546 = vld [vmem:[%s748 + $0x840] sm:$0xff]
        %v8547 = vld [vmem:[%s748 + $0x848] sm:$0xf]
        %v8548 = vld [vmem:[%s748 + $0x84c] sm:$0xff]
        %v8549 = vld [vmem:[%s748 + $0x854] sm:$0xf]
        %v8550 = vld [vmem:[%s748 + $0x858] sm:$0xff]
        %v8551 = vld [vmem:[%s748 + $0x860] sm:$0xf]
        %v8552 = vld [vmem:[%s748 + $0x864] sm:$0xff]
        %v8553 = vld [vmem:[%s748 + $0x86c] sm:$0xf]
        %v8554 = vld [vmem:[%s748 + $0x870] sm:$0xff]
        %v8555 = vld [vmem:[%s748 + $0x878] sm:$0xf]
        %v8556 = vld [vmem:[%s748 + $0x87c] sm:$0xff]
        %v8557 = vld [vmem:[%s748 + $0x884] sm:$0xf]
        %v8558 = vld [vmem:[%s748 + $0x888] sm:$0xff]
        %v8559 = vld [vmem:[%s748 + $0x890] sm:$0xf]
        %v8560 = vld [vmem:[%s748 + $0x894] sm:$0xff]
        %v8561 = vld [vmem:[%s748 + $0x89c] sm:$0xf]
        %v8562 = vld [vmem:[%s748 + $0x8a0] sm:$0xff]
        %v8563 = vld [vmem:[%s748 + $0x8a8] sm:$0xf]
        %v8564 = vld [vmem:[%s748 + $0x8ac] sm:$0xff]
        %v8565 = vld [vmem:[%s748 + $0x8b4] sm:$0xf]
        %v8566 = vld [vmem:[%s748 + $0x8b8] sm:$0xff]
        %v8567 = vld [vmem:[%s748 + $0x8c0] sm:$0xf]
        %v8568 = vld [vmem:[%s748 + $0x8c4] sm:$0xff]
        %v8569 = vld [vmem:[%s748 + $0x8cc] sm:$0xf]
        %v8570 = vld [vmem:[%s748 + $0x8d0] sm:$0xff]
        %v8571 = vld [vmem:[%s748 + $0x8d8] sm:$0xf]
        %v8572 = vld [vmem:[%s748 + $0x8dc] sm:$0xff]
        %v8573 = vld [vmem:[%s748 + $0x8e4] sm:$0xf]
        %v8574 = vld [vmem:[%s748 + $0x8e8] sm:$0xff]
        %v8575 = vld [vmem:[%s748 + $0x8f0] sm:$0xf]
        %v8576 = vld [vmem:[%s748 + $0x8f4] sm:$0xff]
        %v8577 = vld [vmem:[%s748 + $0x8fc] sm:$0xf]
        %v8578 = vld [vmem:[%s758] sm:$0x7]
        %v8580 = vperm.slane %v8578, 0
        %v8581 = vperm.slane %v8578, 1
        %v8582 = vperm.slane %v8578, 2
        %v8970 = vunpack.c.l.b16 %v8194
        %v8971 = vunpack.c.h.b16 %v8194
        %v8972 = vunpack.c.l.b16 %v8195
        %v8973 = vunpack.c.l.b16 %v8196
        %v8974 = vunpack.c.h.b16 %v8196
        %v8975 = vunpack.c.l.b16 %v8197
        %v8976 = vunpack.c.l.b16 %v8198
        %v8977 = vunpack.c.h.b16 %v8198
        %v8978 = vunpack.c.l.b16 %v8199
        %v8979 = vunpack.c.l.b16 %v8200
        %v8980 = vunpack.c.h.b16 %v8200
        %v8981 = vunpack.c.l.b16 %v8201
        %v8982 = vunpack.c.l.b16 %v8202
        %v8983 = vunpack.c.h.b16 %v8202
        %v8984 = vunpack.c.l.b16 %v8203
        %v8985 = vunpack.c.l.b16 %v8204
        %v8986 = vunpack.c.h.b16 %v8204
        %v8987 = vunpack.c.l.b16 %v8205
        %v8988 = vunpack.c.l.b16 %v8206
        %v8989 = vunpack.c.h.b16 %v8206
        %v8990 = vunpack.c.l.b16 %v8207
        %v8991 = vunpack.c.l.b16 %v8208
        %v8992 = vunpack.c.h.b16 %v8208
        %v8993 = vunpack.c.l.b16 %v8209
        %v8994 = vunpack.c.l.b16 %v8210
        %v8995 = vunpack.c.h.b16 %v8210
        %v8996 = vunpack.c.l.b16 %v8211
        %v8997 = vunpack.c.l.b16 %v8212
        %v8998 = vunpack.c.h.b16 %v8212
        %v8999 = vunpack.c.l.b16 %v8213
        %v9000 = vunpack.c.l.b16 %v8214
        %v9001 = vunpack.c.h.b16 %v8214
        %v9002 = vunpack.c.l.b16 %v8215
        %v9003 = vunpack.c.l.b16 %v8216
        %v9004 = vunpack.c.h.b16 %v8216
        %v9005 = vunpack.c.l.b16 %v8217
        %v9006 = vunpack.c.l.b16 %v8218
        %v9007 = vunpack.c.h.b16 %v8218
        %v9008 = vunpack.c.l.b16 %v8219
        %v9009 = vunpack.c.l.b16 %v8220
        %v9010 = vunpack.c.h.b16 %v8220
        %v9011 = vunpack.c.l.b16 %v8221
        %v9012 = vunpack.c.l.b16 %v8222
        %v9013 = vunpack.c.h.b16 %v8222
        %v9014 = vunpack.c.l.b16 %v8223
        %v9015 = vunpack.c.l.b16 %v8224
        %v9016 = vunpack.c.h.b16 %v8224
        %v9017 = vunpack.c.l.b16 %v8225
        %v9018 = vunpack.c.l.b16 %v8226
        %v9019 = vunpack.c.h.b16 %v8226
        %v9020 = vunpack.c.l.b16 %v8227
        %v9021 = vunpack.c.l.b16 %v8228
        %v9022 = vunpack.c.h.b16 %v8228
        %v9023 = vunpack.c.l.b16 %v8229
        %v9024 = vunpack.c.l.b16 %v8230
        %v9025 = vunpack.c.h.b16 %v8230
        %v9026 = vunpack.c.l.b16 %v8231
        %v9027 = vunpack.c.l.b16 %v8232
        %v9028 = vunpack.c.h.b16 %v8232
        %v9029 = vunpack.c.l.b16 %v8233
        %v9030 = vunpack.c.l.b16 %v8234
        %v9031 = vunpack.c.h.b16 %v8234
        %v9032 = vunpack.c.l.b16 %v8235
        %v9033 = vunpack.c.l.b16 %v8236
        %v9034 = vunpack.c.h.b16 %v8236
        %v9035 = vunpack.c.l.b16 %v8237
        %v9036 = vunpack.c.l.b16 %v8238
        %v9037 = vunpack.c.h.b16 %v8238
        %v9038 = vunpack.c.l.b16 %v8239
        %v9039 = vunpack.c.l.b16 %v8240
        %v9040 = vunpack.c.h.b16 %v8240
        %v9041 = vunpack.c.l.b16 %v8241
        %v9042 = vunpack.c.l.b16 %v8242
        %v9043 = vunpack.c.h.b16 %v8242
        %v9044 = vunpack.c.l.b16 %v8243
        %v9045 = vunpack.c.l.b16 %v8244
        %v9046 = vunpack.c.h.b16 %v8244
        %v9047 = vunpack.c.l.b16 %v8245
        %v9048 = vunpack.c.l.b16 %v8246
        %v9049 = vunpack.c.h.b16 %v8246
        %v9050 = vunpack.c.l.b16 %v8247
        %v9051 = vunpack.c.l.b16 %v8248
        %v9052 = vunpack.c.h.b16 %v8248
        %v9053 = vunpack.c.l.b16 %v8249
        %v9054 = vunpack.c.l.b16 %v8250
        %v9055 = vunpack.c.h.b16 %v8250
        %v9056 = vunpack.c.l.b16 %v8251
        %v9057 = vunpack.c.l.b16 %v8252
        %v9058 = vunpack.c.h.b16 %v8252
        %v9059 = vunpack.c.l.b16 %v8253
        %v9060 = vunpack.c.l.b16 %v8254
        %v9061 = vunpack.c.h.b16 %v8254
        %v9062 = vunpack.c.l.b16 %v8255
        %v9063 = vunpack.c.l.b16 %v8256
        %v9064 = vunpack.c.h.b16 %v8256
        %v9065 = vunpack.c.l.b16 %v8257
        %v9066 = vunpack.c.l.b16 %v8258
        %v9067 = vunpack.c.h.b16 %v8258
        %v9068 = vunpack.c.l.b16 %v8259
        %v9069 = vunpack.c.l.b16 %v8260
        %v9070 = vunpack.c.h.b16 %v8260
        %v9071 = vunpack.c.l.b16 %v8261
        %v9072 = vunpack.c.l.b16 %v8262
        %v9073 = vunpack.c.h.b16 %v8262
        %v9074 = vunpack.c.l.b16 %v8263
        %v9075 = vunpack.c.l.b16 %v8264
        %v9076 = vunpack.c.h.b16 %v8264
        %v9077 = vunpack.c.l.b16 %v8265
        %v9078 = vunpack.c.l.b16 %v8266
        %v9079 = vunpack.c.h.b16 %v8266
        %v9080 = vunpack.c.l.b16 %v8267
        %v9081 = vunpack.c.l.b16 %v8268
        %v9082 = vunpack.c.h.b16 %v8268
        %v9083 = vunpack.c.l.b16 %v8269
        %v9084 = vunpack.c.l.b16 %v8270
        %v9085 = vunpack.c.h.b16 %v8270
        %v9086 = vunpack.c.l.b16 %v8271
        %v9087 = vunpack.c.l.b16 %v8272
        %v9088 = vunpack.c.h.b16 %v8272
        %v9089 = vunpack.c.l.b16 %v8273
        %v9090 = vunpack.c.l.b16 %v8274
        %v9091 = vunpack.c.h.b16 %v8274
        %v9092 = vunpack.c.l.b16 %v8275
        %v9093 = vunpack.c.l.b16 %v8276
        %v9094 = vunpack.c.h.b16 %v8276
        %v9095 = vunpack.c.l.b16 %v8277
        %v9096 = vunpack.c.l.b16 %v8278
        %v9097 = vunpack.c.h.b16 %v8278
        %v9098 = vunpack.c.l.b16 %v8279
        %v9099 = vunpack.c.l.b16 %v8280
        %v9100 = vunpack.c.h.b16 %v8280
        %v9101 = vunpack.c.l.b16 %v8281
        %v9102 = vunpack.c.l.b16 %v8282
        %v9103 = vunpack.c.h.b16 %v8282
        %v9104 = vunpack.c.l.b16 %v8283
        %v9105 = vunpack.c.l.b16 %v8284
        %v9106 = vunpack.c.h.b16 %v8284
        %v9107 = vunpack.c.l.b16 %v8285
        %v9108 = vunpack.c.l.b16 %v8286
        %v9109 = vunpack.c.h.b16 %v8286
        %v9110 = vunpack.c.l.b16 %v8287
        %v9111 = vunpack.c.l.b16 %v8288
        %v9112 = vunpack.c.h.b16 %v8288
        %v9113 = vunpack.c.l.b16 %v8289
        %v9114 = vunpack.c.l.b16 %v8290
        %v9115 = vunpack.c.h.b16 %v8290
        %v9116 = vunpack.c.l.b16 %v8291
        %v9117 = vunpack.c.l.b16 %v8292
        %v9118 = vunpack.c.h.b16 %v8292
        %v9119 = vunpack.c.l.b16 %v8293
        %v9120 = vunpack.c.l.b16 %v8294
        %v9121 = vunpack.c.h.b16 %v8294
        %v9122 = vunpack.c.l.b16 %v8295
        %v9123 = vunpack.c.l.b16 %v8296
        %v9124 = vunpack.c.h.b16 %v8296
        %v9125 = vunpack.c.l.b16 %v8297
        %v9126 = vunpack.c.l.b16 %v8298
        %v9127 = vunpack.c.h.b16 %v8298
        %v9128 = vunpack.c.l.b16 %v8299
        %v9129 = vunpack.c.l.b16 %v8300
        %v9130 = vunpack.c.h.b16 %v8300
        %v9131 = vunpack.c.l.b16 %v8301
        %v9132 = vunpack.c.l.b16 %v8302
        %v9133 = vunpack.c.h.b16 %v8302
        %v9134 = vunpack.c.l.b16 %v8303
        %v9135 = vunpack.c.l.b16 %v8304
        %v9136 = vunpack.c.h.b16 %v8304
        %v9137 = vunpack.c.l.b16 %v8305
        %v9138 = vunpack.c.l.b16 %v8306
        %v9139 = vunpack.c.h.b16 %v8306
        %v9140 = vunpack.c.l.b16 %v8307
        %v9141 = vunpack.c.l.b16 %v8308
        %v9142 = vunpack.c.h.b16 %v8308
        %v9143 = vunpack.c.l.b16 %v8309
        %v9144 = vunpack.c.l.b16 %v8310
        %v9145 = vunpack.c.h.b16 %v8310
        %v9146 = vunpack.c.l.b16 %v8311
        %v9147 = vunpack.c.l.b16 %v8312
        %v9148 = vunpack.c.h.b16 %v8312
        %v9149 = vunpack.c.l.b16 %v8313
        %v9150 = vunpack.c.l.b16 %v8314
        %v9151 = vunpack.c.h.b16 %v8314
        %v9152 = vunpack.c.l.b16 %v8315
        %v9153 = vunpack.c.l.b16 %v8316
        %v9154 = vunpack.c.h.b16 %v8316
        %v9155 = vunpack.c.l.b16 %v8317
        %v9156 = vunpack.c.l.b16 %v8318
        %v9157 = vunpack.c.h.b16 %v8318
        %v9158 = vunpack.c.l.b16 %v8319
        %v9159 = vunpack.c.l.b16 %v8320
        %v9160 = vunpack.c.h.b16 %v8320
        %v9161 = vunpack.c.l.b16 %v8321
        %v9162 = vunpack.c.l.b16 %v8322
        %v9163 = vunpack.c.h.b16 %v8322
        %v9164 = vunpack.c.l.b16 %v8323
        %v9165 = vunpack.c.l.b16 %v8324
        %v9166 = vunpack.c.h.b16 %v8324
        %v9167 = vunpack.c.l.b16 %v8325
        %v9168 = vunpack.c.l.b16 %v8326
        %v9169 = vunpack.c.h.b16 %v8326
        %v9170 = vunpack.c.l.b16 %v8327
        %v9171 = vunpack.c.l.b16 %v8328
        %v9172 = vunpack.c.h.b16 %v8328
        %v9173 = vunpack.c.l.b16 %v8329
        %v9174 = vunpack.c.l.b16 %v8330
        %v9175 = vunpack.c.h.b16 %v8330
        %v9176 = vunpack.c.l.b16 %v8331
        %v9177 = vunpack.c.l.b16 %v8332
        %v9178 = vunpack.c.h.b16 %v8332
        %v9179 = vunpack.c.l.b16 %v8333
        %v9180 = vunpack.c.l.b16 %v8334
        %v9181 = vunpack.c.h.b16 %v8334
        %v9182 = vunpack.c.l.b16 %v8335
        %v9183 = vunpack.c.l.b16 %v8336
        %v9184 = vunpack.c.h.b16 %v8336
        %v9185 = vunpack.c.l.b16 %v8337
        %v9186 = vunpack.c.l.b16 %v8338
        %v9187 = vunpack.c.h.b16 %v8338
        %v9188 = vunpack.c.l.b16 %v8339
        %v9189 = vunpack.c.l.b16 %v8340
        %v9190 = vunpack.c.h.b16 %v8340
        %v9191 = vunpack.c.l.b16 %v8341
        %v9192 = vunpack.c.l.b16 %v8342
        %v9193 = vunpack.c.h.b16 %v8342
        %v9194 = vunpack.c.l.b16 %v8343
        %v9195 = vunpack.c.l.b16 %v8344
        %v9196 = vunpack.c.h.b16 %v8344
        %v9197 = vunpack.c.l.b16 %v8345
        %v9198 = vunpack.c.l.b16 %v8346
        %v9199 = vunpack.c.h.b16 %v8346
        %v9200 = vunpack.c.l.b16 %v8347
        %v9201 = vunpack.c.l.b16 %v8348
        %v9202 = vunpack.c.h.b16 %v8348
        %v9203 = vunpack.c.l.b16 %v8349
        %v9204 = vunpack.c.l.b16 %v8350
        %v9205 = vunpack.c.h.b16 %v8350
        %v9206 = vunpack.c.l.b16 %v8351
        %v9207 = vunpack.c.l.b16 %v8352
        %v9208 = vunpack.c.h.b16 %v8352
        %v9209 = vunpack.c.l.b16 %v8353
        %v9210 = vunpack.c.l.b16 %v8354
        %v9211 = vunpack.c.h.b16 %v8354
        %v9212 = vunpack.c.l.b16 %v8355
        %v9213 = vunpack.c.l.b16 %v8356
        %v9214 = vunpack.c.h.b16 %v8356
        %v9215 = vunpack.c.l.b16 %v8357
        %v9216 = vunpack.c.l.b16 %v8358
        %v9217 = vunpack.c.h.b16 %v8358
        %v9218 = vunpack.c.l.b16 %v8359
        %v9219 = vunpack.c.l.b16 %v8360
        %v9220 = vunpack.c.h.b16 %v8360
        %v9221 = vunpack.c.l.b16 %v8361
        %v9222 = vunpack.c.l.b16 %v8362
        %v9223 = vunpack.c.h.b16 %v8362
        %v9224 = vunpack.c.l.b16 %v8363
        %v9225 = vunpack.c.l.b16 %v8364
        %v9226 = vunpack.c.h.b16 %v8364
        %v9227 = vunpack.c.l.b16 %v8365
        %v9228 = vunpack.c.l.b16 %v8366
        %v9229 = vunpack.c.h.b16 %v8366
        %v9230 = vunpack.c.l.b16 %v8367
        %v9231 = vunpack.c.l.b16 %v8368
        %v9232 = vunpack.c.h.b16 %v8368
        %v9233 = vunpack.c.l.b16 %v8369
        %v9234 = vunpack.c.l.b16 %v8370
        %v9235 = vunpack.c.h.b16 %v8370
        %v9236 = vunpack.c.l.b16 %v8371
        %v9237 = vunpack.c.l.b16 %v8372
        %v9238 = vunpack.c.h.b16 %v8372
        %v9239 = vunpack.c.l.b16 %v8373
        %v9240 = vunpack.c.l.b16 %v8374
        %v9241 = vunpack.c.h.b16 %v8374
        %v9242 = vunpack.c.l.b16 %v8375
        %v9243 = vunpack.c.l.b16 %v8376
        %v9244 = vunpack.c.h.b16 %v8376
        %v9245 = vunpack.c.l.b16 %v8377
        %v9246 = vunpack.c.l.b16 %v8378
        %v9247 = vunpack.c.h.b16 %v8378
        %v9248 = vunpack.c.l.b16 %v8379
        %v9249 = vunpack.c.l.b16 %v8380
        %v9250 = vunpack.c.h.b16 %v8380
        %v9251 = vunpack.c.l.b16 %v8381
        %v9252 = vunpack.c.l.b16 %v8382
        %v9253 = vunpack.c.h.b16 %v8382
        %v9254 = vunpack.c.l.b16 %v8383
        %v9255 = vunpack.c.l.b16 %v8384
        %v9256 = vunpack.c.h.b16 %v8384
        %v9257 = vunpack.c.l.b16 %v8385
        %v9258 = vunpack.c.l.b16 %v8386
        %v9259 = vunpack.c.h.b16 %v8386
        %v9260 = vunpack.c.l.b16 %v8387
        %v9261 = vunpack.c.l.b16 %v8388
        %v9262 = vunpack.c.h.b16 %v8388
        %v9263 = vunpack.c.l.b16 %v8389
        %v9264 = vunpack.c.l.b16 %v8390
        %v9265 = vunpack.c.h.b16 %v8390
        %v9266 = vunpack.c.l.b16 %v8391
        %v9267 = vunpack.c.l.b16 %v8392
        %v9268 = vunpack.c.h.b16 %v8392
        %v9269 = vunpack.c.l.b16 %v8393
        %v9270 = vunpack.c.l.b16 %v8394
        %v9271 = vunpack.c.h.b16 %v8394
        %v9272 = vunpack.c.l.b16 %v8395
        %v9273 = vunpack.c.l.b16 %v8396
        %v9274 = vunpack.c.h.b16 %v8396
        %v9275 = vunpack.c.l.b16 %v8397
        %v9276 = vunpack.c.l.b16 %v8398
        %v9277 = vunpack.c.h.b16 %v8398
        %v9278 = vunpack.c.l.b16 %v8399
        %v9279 = vunpack.c.l.b16 %v8400
        %v9280 = vunpack.c.h.b16 %v8400
        %v9281 = vunpack.c.l.b16 %v8401
        %v9282 = vunpack.c.l.b16 %v8402
        %v9283 = vunpack.c.h.b16 %v8402
        %v9284 = vunpack.c.l.b16 %v8403
        %v9285 = vunpack.c.l.b16 %v8404
        %v9286 = vunpack.c.h.b16 %v8404
        %v9287 = vunpack.c.l.b16 %v8405
        %v9288 = vunpack.c.l.b16 %v8406
        %v9289 = vunpack.c.h.b16 %v8406
        %v9290 = vunpack.c.l.b16 %v8407
        %v9291 = vunpack.c.l.b16 %v8408
        %v9292 = vunpack.c.h.b16 %v8408
        %v9293 = vunpack.c.l.b16 %v8409
        %v9294 = vunpack.c.l.b16 %v8410
        %v9295 = vunpack.c.h.b16 %v8410
        %v9296 = vunpack.c.l.b16 %v8411
        %v9297 = vunpack.c.l.b16 %v8412
        %v9298 = vunpack.c.h.b16 %v8412
        %v9299 = vunpack.c.l.b16 %v8413
        %v9300 = vunpack.c.l.b16 %v8414
        %v9301 = vunpack.c.h.b16 %v8414
        %v9302 = vunpack.c.l.b16 %v8415
        %v9303 = vunpack.c.l.b16 %v8416
        %v9304 = vunpack.c.h.b16 %v8416
        %v9305 = vunpack.c.l.b16 %v8417
        %v9306 = vunpack.c.l.b16 %v8418
        %v9307 = vunpack.c.h.b16 %v8418
        %v9308 = vunpack.c.l.b16 %v8419
        %v9309 = vunpack.c.l.b16 %v8420
        %v9310 = vunpack.c.h.b16 %v8420
        %v9311 = vunpack.c.l.b16 %v8421
        %v9312 = vunpack.c.l.b16 %v8422
        %v9313 = vunpack.c.h.b16 %v8422
        %v9314 = vunpack.c.l.b16 %v8423
        %v9315 = vunpack.c.l.b16 %v8424
        %v9316 = vunpack.c.h.b16 %v8424
        %v9317 = vunpack.c.l.b16 %v8425
        %v9318 = vunpack.c.l.b16 %v8426
        %v9319 = vunpack.c.h.b16 %v8426
        %v9320 = vunpack.c.l.b16 %v8427
        %v9321 = vunpack.c.l.b16 %v8428
        %v9322 = vunpack.c.h.b16 %v8428
        %v9323 = vunpack.c.l.b16 %v8429
        %v9324 = vunpack.c.l.b16 %v8430
        %v9325 = vunpack.c.h.b16 %v8430
        %v9326 = vunpack.c.l.b16 %v8431
        %v9327 = vunpack.c.l.b16 %v8432
        %v9328 = vunpack.c.h.b16 %v8432
        %v9329 = vunpack.c.l.b16 %v8433
        %v9330 = vunpack.c.l.b16 %v8434
        %v9331 = vunpack.c.h.b16 %v8434
        %v9332 = vunpack.c.l.b16 %v8435
        %v9333 = vunpack.c.l.b16 %v8436
        %v9334 = vunpack.c.h.b16 %v8436
        %v9335 = vunpack.c.l.b16 %v8437
        %v9336 = vunpack.c.l.b16 %v8438
        %v9337 = vunpack.c.h.b16 %v8438
        %v9338 = vunpack.c.l.b16 %v8439
        %v9339 = vunpack.c.l.b16 %v8440
        %v9340 = vunpack.c.h.b16 %v8440
        %v9341 = vunpack.c.l.b16 %v8441
        %v9342 = vunpack.c.l.b16 %v8442
        %v9343 = vunpack.c.h.b16 %v8442
        %v9344 = vunpack.c.l.b16 %v8443
        %v9345 = vunpack.c.l.b16 %v8444
        %v9346 = vunpack.c.h.b16 %v8444
        %v9347 = vunpack.c.l.b16 %v8445
        %v9348 = vunpack.c.l.b16 %v8446
        %v9349 = vunpack.c.h.b16 %v8446
        %v9350 = vunpack.c.l.b16 %v8447
        %v9351 = vunpack.c.l.b16 %v8448
        %v9352 = vunpack.c.h.b16 %v8448
        %v9353 = vunpack.c.l.b16 %v8449
        %v9354 = vunpack.c.l.b16 %v8450
        %v9355 = vunpack.c.h.b16 %v8450
        %v9356 = vunpack.c.l.b16 %v8451
        %v9357 = vunpack.c.l.b16 %v8452
        %v9358 = vunpack.c.h.b16 %v8452
        %v9359 = vunpack.c.l.b16 %v8453
        %v9360 = vunpack.c.l.b16 %v8454
        %v9361 = vunpack.c.h.b16 %v8454
        %v9362 = vunpack.c.l.b16 %v8455
        %v9363 = vunpack.c.l.b16 %v8456
        %v9364 = vunpack.c.h.b16 %v8456
        %v9365 = vunpack.c.l.b16 %v8457
        %v9366 = vunpack.c.l.b16 %v8458
        %v9367 = vunpack.c.h.b16 %v8458
        %v9368 = vunpack.c.l.b16 %v8459
        %v9369 = vunpack.c.l.b16 %v8460
        %v9370 = vunpack.c.h.b16 %v8460
        %v9371 = vunpack.c.l.b16 %v8461
        %v9372 = vunpack.c.l.b16 %v8462
        %v9373 = vunpack.c.h.b16 %v8462
        %v9374 = vunpack.c.l.b16 %v8463
        %v9375 = vunpack.c.l.b16 %v8464
        %v9376 = vunpack.c.h.b16 %v8464
        %v9377 = vunpack.c.l.b16 %v8465
        %v9378 = vunpack.c.l.b16 %v8466
        %v9379 = vunpack.c.h.b16 %v8466
        %v9380 = vunpack.c.l.b16 %v8467
        %v9381 = vunpack.c.l.b16 %v8468
        %v9382 = vunpack.c.h.b16 %v8468
        %v9383 = vunpack.c.l.b16 %v8469
        %v9384 = vunpack.c.l.b16 %v8470
        %v9385 = vunpack.c.h.b16 %v8470
        %v9386 = vunpack.c.l.b16 %v8471
        %v9387 = vunpack.c.l.b16 %v8472
        %v9388 = vunpack.c.h.b16 %v8472
        %v9389 = vunpack.c.l.b16 %v8473
        %v9390 = vunpack.c.l.b16 %v8474
        %v9391 = vunpack.c.h.b16 %v8474
        %v9392 = vunpack.c.l.b16 %v8475
        %v9393 = vunpack.c.l.b16 %v8476
        %v9394 = vunpack.c.h.b16 %v8476
        %v9395 = vunpack.c.l.b16 %v8477
        %v9396 = vunpack.c.l.b16 %v8478
        %v9397 = vunpack.c.h.b16 %v8478
        %v9398 = vunpack.c.l.b16 %v8479
        %v9399 = vunpack.c.l.b16 %v8480
        %v9400 = vunpack.c.h.b16 %v8480
        %v9401 = vunpack.c.l.b16 %v8481
        %v9402 = vunpack.c.l.b16 %v8482
        %v9403 = vunpack.c.h.b16 %v8482
        %v9404 = vunpack.c.l.b16 %v8483
        %v9405 = vunpack.c.l.b16 %v8484
        %v9406 = vunpack.c.h.b16 %v8484
        %v9407 = vunpack.c.l.b16 %v8485
        %v9408 = vunpack.c.l.b16 %v8486
        %v9409 = vunpack.c.h.b16 %v8486
        %v9410 = vunpack.c.l.b16 %v8487
        %v9411 = vunpack.c.l.b16 %v8488
        %v9412 = vunpack.c.h.b16 %v8488
        %v9413 = vunpack.c.l.b16 %v8489
        %v9414 = vunpack.c.l.b16 %v8490
        %v9415 = vunpack.c.h.b16 %v8490
        %v9416 = vunpack.c.l.b16 %v8491
        %v9417 = vunpack.c.l.b16 %v8492
        %v9418 = vunpack.c.h.b16 %v8492
        %v9419 = vunpack.c.l.b16 %v8493
        %v9420 = vunpack.c.l.b16 %v8494
        %v9421 = vunpack.c.h.b16 %v8494
        %v9422 = vunpack.c.l.b16 %v8495
        %v9423 = vunpack.c.l.b16 %v8496
        %v9424 = vunpack.c.h.b16 %v8496
        %v9425 = vunpack.c.l.b16 %v8497
        %v9426 = vunpack.c.l.b16 %v8498
        %v9427 = vunpack.c.h.b16 %v8498
        %v9428 = vunpack.c.l.b16 %v8499
        %v9429 = vunpack.c.l.b16 %v8500
        %v9430 = vunpack.c.h.b16 %v8500
        %v9431 = vunpack.c.l.b16 %v8501
        %v9432 = vunpack.c.l.b16 %v8502
        %v9433 = vunpack.c.h.b16 %v8502
        %v9434 = vunpack.c.l.b16 %v8503
        %v9435 = vunpack.c.l.b16 %v8504
        %v9436 = vunpack.c.h.b16 %v8504
        %v9437 = vunpack.c.l.b16 %v8505
        %v9438 = vunpack.c.l.b16 %v8506
        %v9439 = vunpack.c.h.b16 %v8506
        %v9440 = vunpack.c.l.b16 %v8507
        %v9441 = vunpack.c.l.b16 %v8508
        %v9442 = vunpack.c.h.b16 %v8508
        %v9443 = vunpack.c.l.b16 %v8509
        %v9444 = vunpack.c.l.b16 %v8510
        %v9445 = vunpack.c.h.b16 %v8510
        %v9446 = vunpack.c.l.b16 %v8511
        %v9447 = vunpack.c.l.b16 %v8512
        %v9448 = vunpack.c.h.b16 %v8512
        %v9449 = vunpack.c.l.b16 %v8513
        %v9450 = vunpack.c.l.b16 %v8514
        %v9451 = vunpack.c.h.b16 %v8514
        %v9452 = vunpack.c.l.b16 %v8515
        %v9453 = vunpack.c.l.b16 %v8516
        %v9454 = vunpack.c.h.b16 %v8516
        %v9455 = vunpack.c.l.b16 %v8517
        %v9456 = vunpack.c.l.b16 %v8518
        %v9457 = vunpack.c.h.b16 %v8518
        %v9458 = vunpack.c.l.b16 %v8519
        %v9459 = vunpack.c.l.b16 %v8520
        %v9460 = vunpack.c.h.b16 %v8520
        %v9461 = vunpack.c.l.b16 %v8521
        %v9462 = vunpack.c.l.b16 %v8522
        %v9463 = vunpack.c.h.b16 %v8522
        %v9464 = vunpack.c.l.b16 %v8523
        %v9465 = vunpack.c.l.b16 %v8524
        %v9466 = vunpack.c.h.b16 %v8524
        %v9467 = vunpack.c.l.b16 %v8525
        %v9468 = vunpack.c.l.b16 %v8526
        %v9469 = vunpack.c.h.b16 %v8526
        %v9470 = vunpack.c.l.b16 %v8527
        %v9471 = vunpack.c.l.b16 %v8528
        %v9472 = vunpack.c.h.b16 %v8528
        %v9473 = vunpack.c.l.b16 %v8529
        %v9474 = vunpack.c.l.b16 %v8530
        %v9475 = vunpack.c.h.b16 %v8530
        %v9476 = vunpack.c.l.b16 %v8531
        %v9477 = vunpack.c.l.b16 %v8532
        %v9478 = vunpack.c.h.b16 %v8532
        %v9479 = vunpack.c.l.b16 %v8533
        %v9480 = vunpack.c.l.b16 %v8534
        %v9481 = vunpack.c.h.b16 %v8534
        %v9482 = vunpack.c.l.b16 %v8535
        %v9483 = vunpack.c.l.b16 %v8536
        %v9484 = vunpack.c.h.b16 %v8536
        %v9485 = vunpack.c.l.b16 %v8537
        %v9486 = vunpack.c.l.b16 %v8538
        %v9487 = vunpack.c.h.b16 %v8538
        %v9488 = vunpack.c.l.b16 %v8539
        %v9489 = vunpack.c.l.b16 %v8540
        %v9490 = vunpack.c.h.b16 %v8540
        %v9491 = vunpack.c.l.b16 %v8541
        %v9492 = vunpack.c.l.b16 %v8542
        %v9493 = vunpack.c.h.b16 %v8542
        %v9494 = vunpack.c.l.b16 %v8543
        %v9495 = vunpack.c.l.b16 %v8544
        %v9496 = vunpack.c.h.b16 %v8544
        %v9497 = vunpack.c.l.b16 %v8545
        %v9498 = vunpack.c.l.b16 %v8546
        %v9499 = vunpack.c.h.b16 %v8546
        %v9500 = vunpack.c.l.b16 %v8547
        %v9501 = vunpack.c.l.b16 %v8548
        %v9502 = vunpack.c.h.b16 %v8548
        %v9503 = vunpack.c.l.b16 %v8549
        %v9504 = vunpack.c.l.b16 %v8550
        %v9505 = vunpack.c.h.b16 %v8550
        %v9506 = vunpack.c.l.b16 %v8551
        %v9507 = vunpack.c.l.b16 %v8552
        %v9508 = vunpack.c.h.b16 %v8552
        %v9509 = vunpack.c.l.b16 %v8553
        %v9510 = vunpack.c.l.b16 %v8554
        %v9511 = vunpack.c.h.b16 %v8554
        %v9512 = vunpack.c.l.b16 %v8555
        %v9513 = vunpack.c.l.b16 %v8556
        %v9514 = vunpack.c.h.b16 %v8556
        %v9515 = vunpack.c.l.b16 %v8557
        %v9516 = vunpack.c.l.b16 %v8558
        %v9517 = vunpack.c.h.b16 %v8558
        %v9518 = vunpack.c.l.b16 %v8559
        %v9519 = vunpack.c.l.b16 %v8560
        %v9520 = vunpack.c.h.b16 %v8560
        %v9521 = vunpack.c.l.b16 %v8561
        %v9522 = vunpack.c.l.b16 %v8562
        %v9523 = vunpack.c.h.b16 %v8562
        %v9524 = vunpack.c.l.b16 %v8563
        %v9525 = vunpack.c.l.b16 %v8564
        %v9526 = vunpack.c.h.b16 %v8564
        %v9527 = vunpack.c.l.b16 %v8565
        %v9528 = vunpack.c.l.b16 %v8566
        %v9529 = vunpack.c.h.b16 %v8566
        %v9530 = vunpack.c.l.b16 %v8567
        %v9531 = vunpack.c.l.b16 %v8568
        %v9532 = vunpack.c.h.b16 %v8568
        %v9533 = vunpack.c.l.b16 %v8569
        %v9534 = vunpack.c.l.b16 %v8570
        %v9535 = vunpack.c.h.b16 %v8570
        %v9536 = vunpack.c.l.b16 %v8571
        %v9537 = vunpack.c.l.b16 %v8572
        %v9538 = vunpack.c.h.b16 %v8572
        %v9539 = vunpack.c.l.b16 %v8573
        %v9540 = vunpack.c.l.b16 %v8574
        %v9541 = vunpack.c.h.b16 %v8574
        %v9542 = vunpack.c.l.b16 %v8575
        %v9543 = vunpack.c.l.b16 %v8576
        %v9544 = vunpack.c.h.b16 %v8576
        %v9545 = vunpack.c.l.b16 %v8577
        %v9546 = vpack.c.b16 %v8973, %v8970
        %v9547 = vpack.c.b16 %v8974, %v8971
        %v9548 = vpack.c.b16 %v8975, %v8972
        %v9549 = vpack.c.b16 %v8979, %v8976
        %v9550 = vpack.c.b16 %v8980, %v8977
        %v9551 = vpack.c.b16 %v8981, %v8978
        %v9552 = vpack.c.b16 %v8985, %v8982
        %v9553 = vpack.c.b16 %v8986, %v8983
        %v9554 = vpack.c.b16 %v8987, %v8984
        %v9555 = vpack.c.b16 %v8991, %v8988
        %v9556 = vpack.c.b16 %v8992, %v8989
        %v9557 = vpack.c.b16 %v8993, %v8990
        %v9558 = vpack.c.b16 %v8997, %v8994
        %v9559 = vpack.c.b16 %v8998, %v8995
        %v9560 = vpack.c.b16 %v8999, %v8996
        %v9561 = vpack.c.b16 %v9003, %v9000
        %v9562 = vpack.c.b16 %v9004, %v9001
        %v9563 = vpack.c.b16 %v9005, %v9002
        %v9564 = vpack.c.b16 %v9009, %v9006
        %v9565 = vpack.c.b16 %v9010, %v9007
        %v9566 = vpack.c.b16 %v9011, %v9008
        %v9567 = vpack.c.b16 %v9015, %v9012
        %v9568 = vpack.c.b16 %v9016, %v9013
        %v9569 = vpack.c.b16 %v9017, %v9014
        %v9570 = vpack.c.b16 %v9021, %v9018
        %v9571 = vpack.c.b16 %v9022, %v9019
        %v9572 = vpack.c.b16 %v9023, %v9020
        %v9573 = vpack.c.b16 %v9027, %v9024
        %v9574 = vpack.c.b16 %v9028, %v9025
        %v9575 = vpack.c.b16 %v9029, %v9026
        %v9576 = vpack.c.b16 %v9033, %v9030
        %v9577 = vpack.c.b16 %v9034, %v9031
        %v9578 = vpack.c.b16 %v9035, %v9032
        %v9579 = vpack.c.b16 %v9039, %v9036
        %v9580 = vpack.c.b16 %v9040, %v9037
        %v9581 = vpack.c.b16 %v9041, %v9038
        %v9582 = vpack.c.b16 %v9045, %v9042
        %v9583 = vpack.c.b16 %v9046, %v9043
        %v9584 = vpack.c.b16 %v9047, %v9044
        %v9585 = vpack.c.b16 %v9051, %v9048
        %v9586 = vpack.c.b16 %v9052, %v9049
        %v9587 = vpack.c.b16 %v9053, %v9050
        %v9588 = vpack.c.b16 %v9057, %v9054
        %v9589 = vpack.c.b16 %v9058, %v9055
        %v9590 = vpack.c.b16 %v9059, %v9056
        %v9591 = vpack.c.b16 %v9063, %v9060
        %v9592 = vpack.c.b16 %v9064, %v9061
        %v9593 = vpack.c.b16 %v9065, %v9062
        %v9594 = vpack.c.b16 %v9069, %v9066
        %v9595 = vpack.c.b16 %v9070, %v9067
        %v9596 = vpack.c.b16 %v9071, %v9068
        %v9597 = vpack.c.b16 %v9075, %v9072
        %v9598 = vpack.c.b16 %v9076, %v9073
        %v9599 = vpack.c.b16 %v9077, %v9074
        %v9600 = vpack.c.b16 %v9081, %v9078
        %v9601 = vpack.c.b16 %v9082, %v9079
        %v9602 = vpack.c.b16 %v9083, %v9080
        %v9603 = vpack.c.b16 %v9087, %v9084
        %v9604 = vpack.c.b16 %v9088, %v9085
        %v9605 = vpack.c.b16 %v9089, %v9086
        %v9606 = vpack.c.b16 %v9093, %v9090
        %v9607 = vpack.c.b16 %v9094, %v9091
        %v9608 = vpack.c.b16 %v9095, %v9092
        %v9609 = vpack.c.b16 %v9099, %v9096
        %v9610 = vpack.c.b16 %v9100, %v9097
        %v9611 = vpack.c.b16 %v9101, %v9098
        %v9612 = vpack.c.b16 %v9105, %v9102
        %v9613 = vpack.c.b16 %v9106, %v9103
        %v9614 = vpack.c.b16 %v9107, %v9104
        %v9615 = vpack.c.b16 %v9111, %v9108
        %v9616 = vpack.c.b16 %v9112, %v9109
        %v9617 = vpack.c.b16 %v9113, %v9110
        %v9618 = vpack.c.b16 %v9117, %v9114
        %v9619 = vpack.c.b16 %v9118, %v9115
        %v9620 = vpack.c.b16 %v9119, %v9116
        %v9621 = vpack.c.b16 %v9123, %v9120
        %v9622 = vpack.c.b16 %v9124, %v9121
        %v9623 = vpack.c.b16 %v9125, %v9122
        %v9624 = vpack.c.b16 %v9129, %v9126
        %v9625 = vpack.c.b16 %v9130, %v9127
        %v9626 = vpack.c.b16 %v9131, %v9128
        %v9627 = vpack.c.b16 %v9135, %v9132
        %v9628 = vpack.c.b16 %v9136, %v9133
        %v9629 = vpack.c.b16 %v9137, %v9134
        %v9630 = vpack.c.b16 %v9141, %v9138
        %v9631 = vpack.c.b16 %v9142, %v9139
        %v9632 = vpack.c.b16 %v9143, %v9140
        %v9633 = vpack.c.b16 %v9147, %v9144
        %v9634 = vpack.c.b16 %v9148, %v9145
        %v9635 = vpack.c.b16 %v9149, %v9146
        %v9636 = vpack.c.b16 %v9153, %v9150
        %v9637 = vpack.c.b16 %v9154, %v9151
        %v9638 = vpack.c.b16 %v9155, %v9152
        %v9639 = vpack.c.b16 %v9159, %v9156
        %v9640 = vpack.c.b16 %v9160, %v9157
        %v9641 = vpack.c.b16 %v9161, %v9158
        %v9642 = vpack.c.b16 %v9165, %v9162
        %v9643 = vpack.c.b16 %v9166, %v9163
        %v9644 = vpack.c.b16 %v9167, %v9164
        %v9645 = vpack.c.b16 %v9171, %v9168
        %v9646 = vpack.c.b16 %v9172, %v9169
        %v9647 = vpack.c.b16 %v9173, %v9170
        %v9648 = vpack.c.b16 %v9177, %v9174
        %v9649 = vpack.c.b16 %v9178, %v9175
        %v9650 = vpack.c.b16 %v9179, %v9176
        %v9651 = vpack.c.b16 %v9183, %v9180
        %v9652 = vpack.c.b16 %v9184, %v9181
        %v9653 = vpack.c.b16 %v9185, %v9182
        %v9654 = vpack.c.b16 %v9189, %v9186
        %v9655 = vpack.c.b16 %v9190, %v9187
        %v9656 = vpack.c.b16 %v9191, %v9188
        %v9657 = vpack.c.b16 %v9195, %v9192
        %v9658 = vpack.c.b16 %v9196, %v9193
        %v9659 = vpack.c.b16 %v9197, %v9194
        %v9660 = vpack.c.b16 %v9201, %v9198
        %v9661 = vpack.c.b16 %v9202, %v9199
        %v9662 = vpack.c.b16 %v9203, %v9200
        %v9663 = vpack.c.b16 %v9207, %v9204
        %v9664 = vpack.c.b16 %v9208, %v9205
        %v9665 = vpack.c.b16 %v9209, %v9206
        %v9666 = vpack.c.b16 %v9213, %v9210
        %v9667 = vpack.c.b16 %v9214, %v9211
        %v9668 = vpack.c.b16 %v9215, %v9212
        %v9669 = vpack.c.b16 %v9219, %v9216
        %v9670 = vpack.c.b16 %v9220, %v9217
        %v9671 = vpack.c.b16 %v9221, %v9218
        %v9672 = vpack.c.b16 %v9225, %v9222
        %v9673 = vpack.c.b16 %v9226, %v9223
        %v9674 = vpack.c.b16 %v9227, %v9224
        %v9675 = vpack.c.b16 %v9231, %v9228
        %v9676 = vpack.c.b16 %v9232, %v9229
        %v9677 = vpack.c.b16 %v9233, %v9230
        %v9678 = vpack.c.b16 %v9237, %v9234
        %v9679 = vpack.c.b16 %v9238, %v9235
        %v9680 = vpack.c.b16 %v9239, %v9236
        %v9681 = vpack.c.b16 %v9243, %v9240
        %v9682 = vpack.c.b16 %v9244, %v9241
        %v9683 = vpack.c.b16 %v9245, %v9242
        %v9684 = vpack.c.b16 %v9249, %v9246
        %v9685 = vpack.c.b16 %v9250, %v9247
        %v9686 = vpack.c.b16 %v9251, %v9248
        %v9687 = vpack.c.b16 %v9255, %v9252
        %v9688 = vpack.c.b16 %v9256, %v9253
        %v9689 = vpack.c.b16 %v9257, %v9254
        %v9690 = vpack.c.b16 %v9261, %v9258
        %v9691 = vpack.c.b16 %v9262, %v9259
        %v9692 = vpack.c.b16 %v9263, %v9260
        %v9693 = vpack.c.b16 %v9267, %v9264
        %v9694 = vpack.c.b16 %v9268, %v9265
        %v9695 = vpack.c.b16 %v9269, %v9266
        %v9696 = vpack.c.b16 %v9273, %v9270
        %v9697 = vpack.c.b16 %v9274, %v9271
        %v9698 = vpack.c.b16 %v9275, %v9272
        %v9699 = vpack.c.b16 %v9279, %v9276
        %v9700 = vpack.c.b16 %v9280, %v9277
        %v9701 = vpack.c.b16 %v9281, %v9278
        %v9702 = vpack.c.b16 %v9285, %v9282
        %v9703 = vpack.c.b16 %v9286, %v9283
        %v9704 = vpack.c.b16 %v9287, %v9284
        %v9705 = vpack.c.b16 %v9291, %v9288
        %v9706 = vpack.c.b16 %v9292, %v9289
        %v9707 = vpack.c.b16 %v9293, %v9290
        %v9708 = vpack.c.b16 %v9297, %v9294
        %v9709 = vpack.c.b16 %v9298, %v9295
        %v9710 = vpack.c.b16 %v9299, %v9296
        %v9711 = vpack.c.b16 %v9303, %v9300
        %v9712 = vpack.c.b16 %v9304, %v9301
        %v9713 = vpack.c.b16 %v9305, %v9302
        %v9714 = vpack.c.b16 %v9309, %v9306
        %v9715 = vpack.c.b16 %v9310, %v9307
        %v9716 = vpack.c.b16 %v9311, %v9308
        %v9717 = vpack.c.b16 %v9315, %v9312
        %v9718 = vpack.c.b16 %v9316, %v9313
        %v9719 = vpack.c.b16 %v9317, %v9314
        %v9720 = vpack.c.b16 %v9321, %v9318
        %v9721 = vpack.c.b16 %v9322, %v9319
        %v9722 = vpack.c.b16 %v9323, %v9320
        %v9723 = vpack.c.b16 %v9327, %v9324
        %v9724 = vpack.c.b16 %v9328, %v9325
        %v9725 = vpack.c.b16 %v9329, %v9326
        %v9726 = vpack.c.b16 %v9333, %v9330
        %v9727 = vpack.c.b16 %v9334, %v9331
        %v9728 = vpack.c.b16 %v9335, %v9332
        %v9729 = vpack.c.b16 %v9339, %v9336
        %v9730 = vpack.c.b16 %v9340, %v9337
        %v9731 = vpack.c.b16 %v9341, %v9338
        %v9732 = vpack.c.b16 %v9345, %v9342
        %v9733 = vpack.c.b16 %v9346, %v9343
        %v9734 = vpack.c.b16 %v9347, %v9344
        %v9735 = vpack.c.b16 %v9351, %v9348
        %v9736 = vpack.c.b16 %v9352, %v9349
        %v9737 = vpack.c.b16 %v9353, %v9350
        %v9738 = vpack.c.b16 %v9357, %v9354
        %v9739 = vpack.c.b16 %v9358, %v9355
        %v9740 = vpack.c.b16 %v9359, %v9356
        %v9741 = vpack.c.b16 %v9363, %v9360
        %v9742 = vpack.c.b16 %v9364, %v9361
        %v9743 = vpack.c.b16 %v9365, %v9362
        %v9744 = vpack.c.b16 %v9369, %v9366
        %v9745 = vpack.c.b16 %v9370, %v9367
        %v9746 = vpack.c.b16 %v9371, %v9368
        %v9747 = vpack.c.b16 %v9375, %v9372
        %v9748 = vpack.c.b16 %v9376, %v9373
        %v9749 = vpack.c.b16 %v9377, %v9374
        %v9750 = vpack.c.b16 %v9381, %v9378
        %v9751 = vpack.c.b16 %v9382, %v9379
        %v9752 = vpack.c.b16 %v9383, %v9380
        %v9753 = vpack.c.b16 %v9387, %v9384
        %v9754 = vpack.c.b16 %v9388, %v9385
        %v9755 = vpack.c.b16 %v9389, %v9386
        %v9756 = vpack.c.b16 %v9393, %v9390
        %v9757 = vpack.c.b16 %v9394, %v9391
        %v9758 = vpack.c.b16 %v9395, %v9392
        %v9759 = vpack.c.b16 %v9399, %v9396
        %v9760 = vpack.c.b16 %v9400, %v9397
        %v9761 = vpack.c.b16 %v9401, %v9398
        %v9762 = vpack.c.b16 %v9405, %v9402
        %v9763 = vpack.c.b16 %v9406, %v9403
        %v9764 = vpack.c.b16 %v9407, %v9404
        %v9765 = vpack.c.b16 %v9411, %v9408
        %v9766 = vpack.c.b16 %v9412, %v9409
        %v9767 = vpack.c.b16 %v9413, %v9410
        %v9768 = vpack.c.b16 %v9417, %v9414
        %v9769 = vpack.c.b16 %v9418, %v9415
        %v9770 = vpack.c.b16 %v9419, %v9416
        %v9771 = vpack.c.b16 %v9423, %v9420
        %v9772 = vpack.c.b16 %v9424, %v9421
        %v9773 = vpack.c.b16 %v9425, %v9422
        %v9774 = vpack.c.b16 %v9429, %v9426
        %v9775 = vpack.c.b16 %v9430, %v9427
        %v9776 = vpack.c.b16 %v9431, %v9428
        %v9777 = vpack.c.b16 %v9435, %v9432
        %v9778 = vpack.c.b16 %v9436, %v9433
        %v9779 = vpack.c.b16 %v9437, %v9434
        %v9780 = vpack.c.b16 %v9441, %v9438
        %v9781 = vpack.c.b16 %v9442, %v9439
        %v9782 = vpack.c.b16 %v9443, %v9440
        %v9783 = vpack.c.b16 %v9447, %v9444
        %v9784 = vpack.c.b16 %v9448, %v9445
        %v9785 = vpack.c.b16 %v9449, %v9446
        %v9786 = vpack.c.b16 %v9453, %v9450
        %v9787 = vpack.c.b16 %v9454, %v9451
        %v9788 = vpack.c.b16 %v9455, %v9452
        %v9789 = vpack.c.b16 %v9459, %v9456
        %v9790 = vpack.c.b16 %v9460, %v9457
        %v9791 = vpack.c.b16 %v9461, %v9458
        %v9792 = vpack.c.b16 %v9465, %v9462
        %v9793 = vpack.c.b16 %v9466, %v9463
        %v9794 = vpack.c.b16 %v9467, %v9464
        %v9795 = vpack.c.b16 %v9471, %v9468
        %v9796 = vpack.c.b16 %v9472, %v9469
        %v9797 = vpack.c.b16 %v9473, %v9470
        %v9798 = vpack.c.b16 %v9477, %v9474
        %v9799 = vpack.c.b16 %v9478, %v9475
        %v9800 = vpack.c.b16 %v9479, %v9476
        %v9801 = vpack.c.b16 %v9483, %v9480
        %v9802 = vpack.c.b16 %v9484, %v9481
        %v9803 = vpack.c.b16 %v9485, %v9482
        %v9804 = vpack.c.b16 %v9489, %v9486
        %v9805 = vpack.c.b16 %v9490, %v9487
        %v9806 = vpack.c.b16 %v9491, %v9488
        %v9807 = vpack.c.b16 %v9495, %v9492
        %v9808 = vpack.c.b16 %v9496, %v9493
        %v9809 = vpack.c.b16 %v9497, %v9494
        %v9810 = vpack.c.b16 %v9501, %v9498
        %v9811 = vpack.c.b16 %v9502, %v9499
        %v9812 = vpack.c.b16 %v9503, %v9500
        %v9813 = vpack.c.b16 %v9507, %v9504
        %v9814 = vpack.c.b16 %v9508, %v9505
        %v9815 = vpack.c.b16 %v9509, %v9506
        %v9816 = vpack.c.b16 %v9513, %v9510
        %v9817 = vpack.c.b16 %v9514, %v9511
        %v9818 = vpack.c.b16 %v9515, %v9512
        %v9819 = vpack.c.b16 %v9519, %v9516
        %v9820 = vpack.c.b16 %v9520, %v9517
        %v9821 = vpack.c.b16 %v9521, %v9518
        %v9822 = vpack.c.b16 %v9525, %v9522
        %v9823 = vpack.c.b16 %v9526, %v9523
        %v9824 = vpack.c.b16 %v9527, %v9524
        %v9825 = vpack.c.b16 %v9531, %v9528
        %v9826 = vpack.c.b16 %v9532, %v9529
        %v9827 = vpack.c.b16 %v9533, %v9530
        %v9828 = vpack.c.b16 %v9537, %v9534
        %v9829 = vpack.c.b16 %v9538, %v9535
        %v9830 = vpack.c.b16 %v9539, %v9536
        %v9831 = vpack.c.b16 %v9543, %v9540
        %v9832 = vpack.c.b16 %v9544, %v9541
        %v9833 = vpack.c.b16 %v9545, %v9542
        %10122 = vmatpush.bf16.msra.mxu0 %v9567
        %10123 = vmatpush.bf16.msra.mxu0 %v9564
        %10124 = vmatpush.bf16.msra.mxu0 %v9561
        %10125 = vmatpush.bf16.msra.mxu0 %v9558
        %10126 = vmatpush.bf16.msra.mxu0 %v9555
        %10127 = vmatpush.bf16.msra.mxu0 %v9552
        %10128 = vmatpush.bf16.msra.mxu0 %v9549
        %10129 = vmatpush.bf16.msra.mxu0 %v9546
        %10130 = vmatmul.bf16.gmra.mxu0 %v8182
        %v10131 = vpop.f32.mrf.mxu0
        %v10132 = vadd.f32 %v8580, %v10131
        %v10133 = vpop.f32.mrf.mxu0
        %v10134 = vadd.f32 %v8580, %v10133
        %10135 = vdwg.mxu0
        %10136 = vmatpush.bf16.msra.mxu0 %v9591
        %10137 = vmatpush.bf16.msra.mxu0 %v9588
        %10138 = vmatpush.bf16.msra.mxu0 %v9585
        %10139 = vmatpush.bf16.msra.mxu0 %v9582
        %10140 = vmatpush.bf16.msra.mxu0 %v9579
        %10141 = vmatpush.bf16.msra.mxu0 %v9576
        %10142 = vmatpush.bf16.msra.mxu0 %v9573
        %10143 = vmatpush.bf16.msra.mxu0 %v9570
        %10144 = vmatmul.bf16.gmra.mxu0 %v8183
        %v10145 = vpop.f32.mrf.mxu0
        %v10146 = vadd.f32 %v10132, %v10145
        %v10147 = vpop.f32.mrf.mxu0
        %v10148 = vadd.f32 %v10134, %v10147
        %10149 = vdwg.mxu0
        %10150 = vmatpush.bf16.msra.mxu0 %v9615
        %10151 = vmatpush.bf16.msra.mxu0 %v9612
        %10152 = vmatpush.bf16.msra.mxu0 %v9609
        %10153 = vmatpush.bf16.msra.mxu0 %v9606
        %10154 = vmatpush.bf16.msra.mxu0 %v9603
        %10155 = vmatpush.bf16.msra.mxu0 %v9600
        %10156 = vmatpush.bf16.msra.mxu0 %v9597
        %10157 = vmatpush.bf16.msra.mxu0 %v9594
        %10158 = vmatmul.bf16.gmra.mxu0 %v8184
        %v10159 = vpop.f32.mrf.mxu0
        %v10160 = vadd.f32 %v10146, %v10159
        %v10161 = vpop.f32.mrf.mxu0
        %v10162 = vadd.f32 %v10148, %v10161
        %10163 = vdwg.mxu0
        %10164 = vmatpush.bf16.msra.mxu0 %v9639
        %10165 = vmatpush.bf16.msra.mxu0 %v9636
        %10166 = vmatpush.bf16.msra.mxu0 %v9633
        %10167 = vmatpush.bf16.msra.mxu0 %v9630
        %10168 = vmatpush.bf16.msra.mxu0 %v9627
        %10169 = vmatpush.bf16.msra.mxu0 %v9624
        %10170 = vmatpush.bf16.msra.mxu0 %v9621
        %10171 = vmatpush.bf16.msra.mxu0 %v9618
        %10172 = vmatmul.bf16.gmra.mxu0 %v8185
        %v10173 = vpop.f32.mrf.mxu0
        %v10174 = vadd.f32 %v10160, %v10173
        %v10175 = vpop.f32.mrf.mxu0
        %v10176 = vadd.f32 %v10162, %v10175
        %10177 = vdwg.mxu0
        %10178 = vmatpush.bf16.msra.mxu0 %v9663
        %10179 = vmatpush.bf16.msra.mxu0 %v9660
        %10180 = vmatpush.bf16.msra.mxu0 %v9657
        %10181 = vmatpush.bf16.msra.mxu0 %v9654
        %10182 = vmatpush.bf16.msra.mxu0 %v9651
        %10183 = vmatpush.bf16.msra.mxu0 %v9648
        %10184 = vmatpush.bf16.msra.mxu0 %v9645
        %10185 = vmatpush.bf16.msra.mxu0 %v9642
        %10186 = vmatmul.bf16.gmra.mxu0 %v8186
        %v10187 = vpop.f32.mrf.mxu0
        %v10188 = vadd.f32 %v10174, %v10187
        %v10189 = vpop.f32.mrf.mxu0
        %v10190 = vadd.f32 %v10176, %v10189
        %10191 = vdwg.mxu0
        %10192 = vmatpush.bf16.msra.mxu0 %v9687
        %10193 = vmatpush.bf16.msra.mxu0 %v9684
        %10194 = vmatpush.bf16.msra.mxu0 %v9681
        %10195 = vmatpush.bf16.msra.mxu0 %v9678
        %10196 = vmatpush.bf16.msra.mxu0 %v9675
        %10197 = vmatpush.bf16.msra.mxu0 %v9672
        %10198 = vmatpush.bf16.msra.mxu0 %v9669
        %10199 = vmatpush.bf16.msra.mxu0 %v9666
        %10200 = vmatmul.bf16.gmra.mxu0 %v8187
        %v10201 = vpop.f32.mrf.mxu0
        %v10202 = vadd.f32 %v10188, %v10201
        %v10203 = vpop.f32.mrf.mxu0
        %v10204 = vadd.f32 %v10190, %v10203
        %10205 = vdwg.mxu0
        %10206 = vmatpush.bf16.msra.mxu0 %v9711
        %10207 = vmatpush.bf16.msra.mxu0 %v9708
        %10208 = vmatpush.bf16.msra.mxu0 %v9705
        %10209 = vmatpush.bf16.msra.mxu0 %v9702
        %10210 = vmatpush.bf16.msra.mxu0 %v9699
        %10211 = vmatpush.bf16.msra.mxu0 %v9696
        %10212 = vmatpush.bf16.msra.mxu0 %v9693
        %10213 = vmatpush.bf16.msra.mxu0 %v9690
        %10214 = vmatmul.bf16.gmra.mxu0 %v8188
        %v10215 = vpop.f32.mrf.mxu0
        %v10216 = vadd.f32 %v10202, %v10215
        %v10217 = vpop.f32.mrf.mxu0
        %v10218 = vadd.f32 %v10204, %v10217
        %10219 = vdwg.mxu0
        %10220 = vmatpush.bf16.msra.mxu0 %v9735
        %10221 = vmatpush.bf16.msra.mxu0 %v9732
        %10222 = vmatpush.bf16.msra.mxu0 %v9729
        %10223 = vmatpush.bf16.msra.mxu0 %v9726
        %10224 = vmatpush.bf16.msra.mxu0 %v9723
        %10225 = vmatpush.bf16.msra.mxu0 %v9720
        %10226 = vmatpush.bf16.msra.mxu0 %v9717
        %10227 = vmatpush.bf16.msra.mxu0 %v9714
        %10228 = vmatmul.bf16.gmra.mxu0 %v8189
        %v10229 = vpop.f32.mrf.mxu0
        %v10230 = vadd.f32 %v10216, %v10229
        %v10231 = vpop.f32.mrf.mxu0
        %v10232 = vadd.f32 %v10218, %v10231
        %10233 = vdwg.mxu0
        %10234 = vmatpush.bf16.msra.mxu0 %v9759
        %10235 = vmatpush.bf16.msra.mxu0 %v9756
        %10236 = vmatpush.bf16.msra.mxu0 %v9753
        %10237 = vmatpush.bf16.msra.mxu0 %v9750
        %10238 = vmatpush.bf16.msra.mxu0 %v9747
        %10239 = vmatpush.bf16.msra.mxu0 %v9744
        %10240 = vmatpush.bf16.msra.mxu0 %v9741
        %10241 = vmatpush.bf16.msra.mxu0 %v9738
        %10242 = vmatmul.bf16.gmra.mxu0 %v8190
        %v10243 = vpop.f32.mrf.mxu0
        %v10244 = vadd.f32 %v10230, %v10243
        %v10245 = vpop.f32.mrf.mxu0
        %v10246 = vadd.f32 %v10232, %v10245
        %10247 = vdwg.mxu0
        %10248 = vmatpush.bf16.msra.mxu0 %v9783
        %10249 = vmatpush.bf16.msra.mxu0 %v9780
        %10250 = vmatpush.bf16.msra.mxu0 %v9777
        %10251 = vmatpush.bf16.msra.mxu0 %v9774
        %10252 = vmatpush.bf16.msra.mxu0 %v9771
        %10253 = vmatpush.bf16.msra.mxu0 %v9768
        %10254 = vmatpush.bf16.msra.mxu0 %v9765
        %10255 = vmatpush.bf16.msra.mxu0 %v9762
        %10256 = vmatmul.bf16.gmra.mxu0 %v8191
        %v10257 = vpop.f32.mrf.mxu0
        %v10258 = vadd.f32 %v10244, %v10257
        %v10259 = vpop.f32.mrf.mxu0
        %v10260 = vadd.f32 %v10246, %v10259
        %10261 = vdwg.mxu0
        %10262 = vmatpush.bf16.msra.mxu0 %v9807
        %10263 = vmatpush.bf16.msra.mxu0 %v9804
        %10264 = vmatpush.bf16.msra.mxu0 %v9801
        %10265 = vmatpush.bf16.msra.mxu0 %v9798
        %10266 = vmatpush.bf16.msra.mxu0 %v9795
        %10267 = vmatpush.bf16.msra.mxu0 %v9792
        %10268 = vmatpush.bf16.msra.mxu0 %v9789
        %10269 = vmatpush.bf16.msra.mxu0 %v9786
        %10270 = vmatmul.bf16.gmra.mxu0 %v8192
        %v10271 = vpop.f32.mrf.mxu0
        %v10272 = vadd.f32 %v10258, %v10271
        %v10273 = vpop.f32.mrf.mxu0
        %v10274 = vadd.f32 %v10260, %v10273
        %10275 = vdwg.mxu0
        %10276 = vmatpush.bf16.msra.mxu0 %v9831
        %10277 = vmatpush.bf16.msra.mxu0 %v9828
        %10278 = vmatpush.bf16.msra.mxu0 %v9825
        %10279 = vmatpush.bf16.msra.mxu0 %v9822
        %10280 = vmatpush.bf16.msra.mxu0 %v9819
        %10281 = vmatpush.bf16.msra.mxu0 %v9816
        %10282 = vmatpush.bf16.msra.mxu0 %v9813
        %10283 = vmatpush.bf16.msra.mxu0 %v9810
        %10284 = vmatmul.bf16.gmra.mxu0 %v8193
        %v10285 = vpop.f32.mrf.mxu0
        %v10286 = vadd.f32 %v10272, %v10285
        %v10287 = vpop.f32.mrf.mxu0
        %v10288 = vadd.f32 %v10274, %v10287
        %10289 = vdwg.mxu0
        %10290 = vmatpush.bf16.msra.mxu0 %v9568
        %10291 = vmatpush.bf16.msra.mxu0 %v9565
        %10292 = vmatpush.bf16.msra.mxu0 %v9562
        %10293 = vmatpush.bf16.msra.mxu0 %v9559
        %10294 = vmatpush.bf16.msra.mxu0 %v9556
        %10295 = vmatpush.bf16.msra.mxu0 %v9553
        %10296 = vmatpush.bf16.msra.mxu0 %v9550
        %10297 = vmatpush.bf16.msra.mxu0 %v9547
        %10298 = vmatmul.bf16.gmra.mxu0 %v8182
        %v10299 = vpop.f32.mrf.mxu0
        %v10300 = vadd.f32 %v8581, %v10299
        %v10301 = vpop.f32.mrf.mxu0
        %v10302 = vadd.f32 %v8581, %v10301
        %10303 = vdwg.mxu0
        %10304 = vmatpush.bf16.msra.mxu0 %v9592
        %10305 = vmatpush.bf16.msra.mxu0 %v9589
        %10306 = vmatpush.bf16.msra.mxu0 %v9586
        %10307 = vmatpush.bf16.msra.mxu0 %v9583
        %10308 = vmatpush.bf16.msra.mxu0 %v9580
        %10309 = vmatpush.bf16.msra.mxu0 %v9577
        %10310 = vmatpush.bf16.msra.mxu0 %v9574
        %10311 = vmatpush.bf16.msra.mxu0 %v9571
        %10312 = vmatmul.bf16.gmra.mxu0 %v8183
        %v10313 = vpop.f32.mrf.mxu0
        %v10314 = vadd.f32 %v10300, %v10313
        %v10315 = vpop.f32.mrf.mxu0
        %v10316 = vadd.f32 %v10302, %v10315
        %10317 = vdwg.mxu0
        %10318 = vmatpush.bf16.msra.mxu0 %v9616
        %10319 = vmatpush.bf16.msra.mxu0 %v9613
        %10320 = vmatpush.bf16.msra.mxu0 %v9610
        %10321 = vmatpush.bf16.msra.mxu0 %v9607
        %10322 = vmatpush.bf16.msra.mxu0 %v9604
        %10323 = vmatpush.bf16.msra.mxu0 %v9601
        %10324 = vmatpush.bf16.msra.mxu0 %v9598
        %10325 = vmatpush.bf16.msra.mxu0 %v9595
        %10326 = vmatmul.bf16.gmra.mxu0 %v8184
        %v10327 = vpop.f32.mrf.mxu0
        %v10328 = vadd.f32 %v10314, %v10327
        %v10329 = vpop.f32.mrf.mxu0
        %v10330 = vadd.f32 %v10316, %v10329
        %10331 = vdwg.mxu0
        %10332 = vmatpush.bf16.msra.mxu0 %v9640
        %10333 = vmatpush.bf16.msra.mxu0 %v9637
        %10334 = vmatpush.bf16.msra.mxu0 %v9634
        %10335 = vmatpush.bf16.msra.mxu0 %v9631
        %10336 = vmatpush.bf16.msra.mxu0 %v9628
        %10337 = vmatpush.bf16.msra.mxu0 %v9625
        %10338 = vmatpush.bf16.msra.mxu0 %v9622
        %10339 = vmatpush.bf16.msra.mxu0 %v9619
        %10340 = vmatmul.bf16.gmra.mxu0 %v8185
        %v10341 = vpop.f32.mrf.mxu0
        %v10342 = vadd.f32 %v10328, %v10341
        %v10343 = vpop.f32.mrf.mxu0
        %v10344 = vadd.f32 %v10330, %v10343
        %10345 = vdwg.mxu0
        %10346 = vmatpush.bf16.msra.mxu0 %v9664
        %10347 = vmatpush.bf16.msra.mxu0 %v9661
        %10348 = vmatpush.bf16.msra.mxu0 %v9658
        %10349 = vmatpush.bf16.msra.mxu0 %v9655
        %10350 = vmatpush.bf16.msra.mxu0 %v9652
        %10351 = vmatpush.bf16.msra.mxu0 %v9649
        %10352 = vmatpush.bf16.msra.mxu0 %v9646
        %10353 = vmatpush.bf16.msra.mxu0 %v9643
        %10354 = vmatmul.bf16.gmra.mxu0 %v8186
        %v10355 = vpop.f32.mrf.mxu0
        %v10356 = vadd.f32 %v10342, %v10355
        %v10357 = vpop.f32.mrf.mxu0
        %v10358 = vadd.f32 %v10344, %v10357
        %10359 = vdwg.mxu0
        %10360 = vmatpush.bf16.msra.mxu0 %v9688
        %10361 = vmatpush.bf16.msra.mxu0 %v9685
        %10362 = vmatpush.bf16.msra.mxu0 %v9682
        %10363 = vmatpush.bf16.msra.mxu0 %v9679
        %10364 = vmatpush.bf16.msra.mxu0 %v9676
        %10365 = vmatpush.bf16.msra.mxu0 %v9673
        %10366 = vmatpush.bf16.msra.mxu0 %v9670
        %10367 = vmatpush.bf16.msra.mxu0 %v9667
        %10368 = vmatmul.bf16.gmra.mxu0 %v8187
        %v10369 = vpop.f32.mrf.mxu0
        %v10370 = vadd.f32 %v10356, %v10369
        %v10371 = vpop.f32.mrf.mxu0
        %v10372 = vadd.f32 %v10358, %v10371
        %10373 = vdwg.mxu0
        %10374 = vmatpush.bf16.msra.mxu0 %v9712
        %10375 = vmatpush.bf16.msra.mxu0 %v9709
        %10376 = vmatpush.bf16.msra.mxu0 %v9706
        %10377 = vmatpush.bf16.msra.mxu0 %v9703
        %10378 = vmatpush.bf16.msra.mxu0 %v9700
        %10379 = vmatpush.bf16.msra.mxu0 %v9697
        %10380 = vmatpush.bf16.msra.mxu0 %v9694
        %10381 = vmatpush.bf16.msra.mxu0 %v9691
        %10382 = vmatmul.bf16.gmra.mxu0 %v8188
        %v10383 = vpop.f32.mrf.mxu0
        %v10384 = vadd.f32 %v10370, %v10383
        %v10385 = vpop.f32.mrf.mxu0
        %v10386 = vadd.f32 %v10372, %v10385
        %10387 = vdwg.mxu0
        %10388 = vmatpush.bf16.msra.mxu0 %v9736
        %10389 = vmatpush.bf16.msra.mxu0 %v9733
        %10390 = vmatpush.bf16.msra.mxu0 %v9730
        %10391 = vmatpush.bf16.msra.mxu0 %v9727
        %10392 = vmatpush.bf16.msra.mxu0 %v9724
        %10393 = vmatpush.bf16.msra.mxu0 %v9721
        %10394 = vmatpush.bf16.msra.mxu0 %v9718
        %10395 = vmatpush.bf16.msra.mxu0 %v9715
        %10396 = vmatmul.bf16.gmra.mxu0 %v8189
        %v10397 = vpop.f32.mrf.mxu0
        %v10398 = vadd.f32 %v10384, %v10397
        %v10399 = vpop.f32.mrf.mxu0
        %v10400 = vadd.f32 %v10386, %v10399
        %10401 = vdwg.mxu0
        %10402 = vmatpush.bf16.msra.mxu0 %v9760
        %10403 = vmatpush.bf16.msra.mxu0 %v9757
        %10404 = vmatpush.bf16.msra.mxu0 %v9754
        %10405 = vmatpush.bf16.msra.mxu0 %v9751
        %10406 = vmatpush.bf16.msra.mxu0 %v9748
        %10407 = vmatpush.bf16.msra.mxu0 %v9745
        %10408 = vmatpush.bf16.msra.mxu0 %v9742
        %10409 = vmatpush.bf16.msra.mxu0 %v9739
        %10410 = vmatmul.bf16.gmra.mxu0 %v8190
        %v10411 = vpop.f32.mrf.mxu0
        %v10412 = vadd.f32 %v10398, %v10411
        %v10413 = vpop.f32.mrf.mxu0
        %v10414 = vadd.f32 %v10400, %v10413
        %10415 = vdwg.mxu0
        %10416 = vmatpush.bf16.msra.mxu0 %v9784
        %10417 = vmatpush.bf16.msra.mxu0 %v9781
        %10418 = vmatpush.bf16.msra.mxu0 %v9778
        %10419 = vmatpush.bf16.msra.mxu0 %v9775
        %10420 = vmatpush.bf16.msra.mxu0 %v9772
        %10421 = vmatpush.bf16.msra.mxu0 %v9769
        %10422 = vmatpush.bf16.msra.mxu0 %v9766
        %10423 = vmatpush.bf16.msra.mxu0 %v9763
        %10424 = vmatmul.bf16.gmra.mxu0 %v8191
        %v10425 = vpop.f32.mrf.mxu0
        %v10426 = vadd.f32 %v10412, %v10425
        %v10427 = vpop.f32.mrf.mxu0
        %v10428 = vadd.f32 %v10414, %v10427
        %10429 = vdwg.mxu0
        %10430 = vmatpush.bf16.msra.mxu0 %v9808
        %10431 = vmatpush.bf16.msra.mxu0 %v9805
        %10432 = vmatpush.bf16.msra.mxu0 %v9802
        %10433 = vmatpush.bf16.msra.mxu0 %v9799
        %10434 = vmatpush.bf16.msra.mxu0 %v9796
        %10435 = vmatpush.bf16.msra.mxu0 %v9793
        %10436 = vmatpush.bf16.msra.mxu0 %v9790
        %10437 = vmatpush.bf16.msra.mxu0 %v9787
        %10438 = vmatmul.bf16.gmra.mxu0 %v8192
        %v10439 = vpop.f32.mrf.mxu0
        %v10440 = vadd.f32 %v10426, %v10439
        %v10441 = vpop.f32.mrf.mxu0
        %v10442 = vadd.f32 %v10428, %v10441
        %10443 = vdwg.mxu0
        %10444 = vmatpush.bf16.msra.mxu0 %v9832
        %10445 = vmatpush.bf16.msra.mxu0 %v9829
        %10446 = vmatpush.bf16.msra.mxu0 %v9826
        %10447 = vmatpush.bf16.msra.mxu0 %v9823
        %10448 = vmatpush.bf16.msra.mxu0 %v9820
        %10449 = vmatpush.bf16.msra.mxu0 %v9817
        %10450 = vmatpush.bf16.msra.mxu0 %v9814
        %10451 = vmatpush.bf16.msra.mxu0 %v9811
        %10452 = vmatmul.bf16.gmra.mxu0 %v8193
        %v10453 = vpop.f32.mrf.mxu0
        %v10454 = vadd.f32 %v10440, %v10453
        %v10455 = vpop.f32.mrf.mxu0
        %v10456 = vadd.f32 %v10442, %v10455
        %10457 = vdwg.mxu0
        %10458 = vmatpush.bf16.msra.mxu0 %v9569
        %10459 = vmatpush.bf16.msra.mxu0 %v9566
        %10460 = vmatpush.bf16.msra.mxu0 %v9563
        %10461 = vmatpush.bf16.msra.mxu0 %v9560
        %10462 = vmatpush.bf16.msra.mxu0 %v9557
        %10463 = vmatpush.bf16.msra.mxu0 %v9554
        %10464 = vmatpush.bf16.msra.mxu0 %v9551
        %10465 = vmatpush.bf16.msra.mxu0 %v9548
        %10466 = vmatmul.bf16.gmra.mxu0 %v8182
        %v10467 = vpop.f32.mrf.mxu0
        %v10468 = vadd.f32 %v8582, %v10467
        %v10469 = vpop.f32.mrf.mxu0
        %v10470 = vadd.f32 %v8582, %v10469
        %10471 = vdwg.mxu0
        %10472 = vmatpush.bf16.msra.mxu0 %v9593
        %10473 = vmatpush.bf16.msra.mxu0 %v9590
        %10474 = vmatpush.bf16.msra.mxu0 %v9587
        %10475 = vmatpush.bf16.msra.mxu0 %v9584
        %10476 = vmatpush.bf16.msra.mxu0 %v9581
        %10477 = vmatpush.bf16.msra.mxu0 %v9578
        %10478 = vmatpush.bf16.msra.mxu0 %v9575
        %10479 = vmatpush.bf16.msra.mxu0 %v9572
        %10480 = vmatmul.bf16.gmra.mxu0 %v8183
        %v10481 = vpop.f32.mrf.mxu0
        %v10482 = vadd.f32 %v10468, %v10481
        %v10483 = vpop.f32.mrf.mxu0
        %v10484 = vadd.f32 %v10470, %v10483
        %10485 = vdwg.mxu0
        %10486 = vmatpush.bf16.msra.mxu0 %v9617
        %10487 = vmatpush.bf16.msra.mxu0 %v9614
        %10488 = vmatpush.bf16.msra.mxu0 %v9611
        %10489 = vmatpush.bf16.msra.mxu0 %v9608
        %10490 = vmatpush.bf16.msra.mxu0 %v9605
        %10491 = vmatpush.bf16.msra.mxu0 %v9602
        %10492 = vmatpush.bf16.msra.mxu0 %v9599
        %10493 = vmatpush.bf16.msra.mxu0 %v9596
        %10494 = vmatmul.bf16.gmra.mxu0 %v8184
        %v10495 = vpop.f32.mrf.mxu0
        %v10496 = vadd.f32 %v10482, %v10495
        %v10497 = vpop.f32.mrf.mxu0
        %v10498 = vadd.f32 %v10484, %v10497
        %10499 = vdwg.mxu0
        %10500 = vmatpush.bf16.msra.mxu0 %v9641
        %10501 = vmatpush.bf16.msra.mxu0 %v9638
        %10502 = vmatpush.bf16.msra.mxu0 %v9635
        %10503 = vmatpush.bf16.msra.mxu0 %v9632
        %10504 = vmatpush.bf16.msra.mxu0 %v9629
        %10505 = vmatpush.bf16.msra.mxu0 %v9626
        %10506 = vmatpush.bf16.msra.mxu0 %v9623
        %10507 = vmatpush.bf16.msra.mxu0 %v9620
        %10508 = vmatmul.bf16.gmra.mxu0 %v8185
        %v10509 = vpop.f32.mrf.mxu0
        %v10510 = vadd.f32 %v10496, %v10509
        %v10511 = vpop.f32.mrf.mxu0
        %v10512 = vadd.f32 %v10498, %v10511
        %10513 = vdwg.mxu0
        %10514 = vmatpush.bf16.msra.mxu0 %v9665
        %10515 = vmatpush.bf16.msra.mxu0 %v9662
        %10516 = vmatpush.bf16.msra.mxu0 %v9659
        %10517 = vmatpush.bf16.msra.mxu0 %v9656
        %10518 = vmatpush.bf16.msra.mxu0 %v9653
        %10519 = vmatpush.bf16.msra.mxu0 %v9650
        %10520 = vmatpush.bf16.msra.mxu0 %v9647
        %10521 = vmatpush.bf16.msra.mxu0 %v9644
        %10522 = vmatmul.bf16.gmra.mxu0 %v8186
        %v10523 = vpop.f32.mrf.mxu0
        %v10524 = vadd.f32 %v10510, %v10523
        %v10525 = vpop.f32.mrf.mxu0
        %v10526 = vadd.f32 %v10512, %v10525
        %10527 = vdwg.mxu0
        %10528 = vmatpush.bf16.msra.mxu0 %v9689
        %10529 = vmatpush.bf16.msra.mxu0 %v9686
        %10530 = vmatpush.bf16.msra.mxu0 %v9683
        %10531 = vmatpush.bf16.msra.mxu0 %v9680
        %10532 = vmatpush.bf16.msra.mxu0 %v9677
        %10533 = vmatpush.bf16.msra.mxu0 %v9674
        %10534 = vmatpush.bf16.msra.mxu0 %v9671
        %10535 = vmatpush.bf16.msra.mxu0 %v9668
        %10536 = vmatmul.bf16.gmra.mxu0 %v8187
        %v10537 = vpop.f32.mrf.mxu0
        %v10538 = vadd.f32 %v10524, %v10537
        %v10539 = vpop.f32.mrf.mxu0
        %v10540 = vadd.f32 %v10526, %v10539
        %10541 = vdwg.mxu0
        %10542 = vmatpush.bf16.msra.mxu0 %v9713
        %10543 = vmatpush.bf16.msra.mxu0 %v9710
        %10544 = vmatpush.bf16.msra.mxu0 %v9707
        %10545 = vmatpush.bf16.msra.mxu0 %v9704
        %10546 = vmatpush.bf16.msra.mxu0 %v9701
        %10547 = vmatpush.bf16.msra.mxu0 %v9698
        %10548 = vmatpush.bf16.msra.mxu0 %v9695
        %10549 = vmatpush.bf16.msra.mxu0 %v9692
        %10550 = vmatmul.bf16.gmra.mxu0 %v8188
        %v10551 = vpop.f32.mrf.mxu0
        %v10552 = vadd.f32 %v10538, %v10551
        %v10553 = vpop.f32.mrf.mxu0
        %v10554 = vadd.f32 %v10540, %v10553
        %10555 = vdwg.mxu0
        %10556 = vmatpush.bf16.msra.mxu0 %v9737
        %10557 = vmatpush.bf16.msra.mxu0 %v9734
        %10558 = vmatpush.bf16.msra.mxu0 %v9731
        %10559 = vmatpush.bf16.msra.mxu0 %v9728
        %10560 = vmatpush.bf16.msra.mxu0 %v9725
        %10561 = vmatpush.bf16.msra.mxu0 %v9722
        %10562 = vmatpush.bf16.msra.mxu0 %v9719
        %10563 = vmatpush.bf16.msra.mxu0 %v9716
        %10564 = vmatmul.bf16.gmra.mxu0 %v8189
        %v10565 = vpop.f32.mrf.mxu0
        %v10566 = vadd.f32 %v10552, %v10565
        %v10567 = vpop.f32.mrf.mxu0
        %v10568 = vadd.f32 %v10554, %v10567
        %10569 = vdwg.mxu0
        %10570 = vmatpush.bf16.msra.mxu0 %v9761
        %10571 = vmatpush.bf16.msra.mxu0 %v9758
        %10572 = vmatpush.bf16.msra.mxu0 %v9755
        %10573 = vmatpush.bf16.msra.mxu0 %v9752
        %10574 = vmatpush.bf16.msra.mxu0 %v9749
        %10575 = vmatpush.bf16.msra.mxu0 %v9746
        %10576 = vmatpush.bf16.msra.mxu0 %v9743
        %10577 = vmatpush.bf16.msra.mxu0 %v9740
        %10578 = vmatmul.bf16.gmra.mxu0 %v8190
        %v10579 = vpop.f32.mrf.mxu0
        %v10580 = vadd.f32 %v10566, %v10579
        %v10581 = vpop.f32.mrf.mxu0
        %v10582 = vadd.f32 %v10568, %v10581
        %10583 = vdwg.mxu0
        %10584 = vmatpush.bf16.msra.mxu0 %v9785
        %10585 = vmatpush.bf16.msra.mxu0 %v9782
        %10586 = vmatpush.bf16.msra.mxu0 %v9779
        %10587 = vmatpush.bf16.msra.mxu0 %v9776
        %10588 = vmatpush.bf16.msra.mxu0 %v9773
        %10589 = vmatpush.bf16.msra.mxu0 %v9770
        %10590 = vmatpush.bf16.msra.mxu0 %v9767
        %10591 = vmatpush.bf16.msra.mxu0 %v9764
        %10592 = vmatmul.bf16.gmra.mxu0 %v8191
        %v10593 = vpop.f32.mrf.mxu0
        %v10594 = vadd.f32 %v10580, %v10593
        %v10595 = vpop.f32.mrf.mxu0
        %v10596 = vadd.f32 %v10582, %v10595
        %10597 = vdwg.mxu0
        %10598 = vmatpush.bf16.msra.mxu0 %v9809
        %10599 = vmatpush.bf16.msra.mxu0 %v9806
        %10600 = vmatpush.bf16.msra.mxu0 %v9803
        %10601 = vmatpush.bf16.msra.mxu0 %v9800
        %10602 = vmatpush.bf16.msra.mxu0 %v9797
        %10603 = vmatpush.bf16.msra.mxu0 %v9794
        %10604 = vmatpush.bf16.msra.mxu0 %v9791
        %10605 = vmatpush.bf16.msra.mxu0 %v9788
        %10606 = vmatmul.bf16.gmra.mxu0 %v8192
        %v10607 = vpop.f32.mrf.mxu0
        %v10608 = vadd.f32 %v10594, %v10607
        %v10609 = vpop.f32.mrf.mxu0
        %v10610 = vadd.f32 %v10596, %v10609
        %10611 = vdwg.mxu0
        %10612 = vmatpush.bf16.msra.mxu0 %v9833
        %10613 = vmatpush.bf16.msra.mxu0 %v9830
        %10614 = vmatpush.bf16.msra.mxu0 %v9827
        %10615 = vmatpush.bf16.msra.mxu0 %v9824
        %10616 = vmatpush.bf16.msra.mxu0 %v9821
        %10617 = vmatpush.bf16.msra.mxu0 %v9818
        %10618 = vmatpush.bf16.msra.mxu0 %v9815
        %10619 = vmatpush.bf16.msra.mxu0 %v9812
        %10620 = vmatmul.bf16.gmra.mxu0 %v8193
        %v10621 = vpop.f32.mrf.mxu0
        %v10622 = vadd.f32 %v10608, %v10621
        %v10623 = vpop.f32.mrf.mxu0
        %v10624 = vadd.f32 %v10610, %v10623
        %10625 = vdwg.mxu0
        %v10626 = vadd.f32 %v5609, %v10286
        %v10627 = vadd.f32 %v5610, %v10454
        %v10628 = vadd.f32 %v5611, %v10622
        %v10629 = vadd.f32 %v5612, %v10288
        %v10630 = vadd.f32 %v5613, %v10456
        %v10631 = vadd.f32 %v5614, %v10624
        %10632 = vst [vmem:[%s2174] sm:$0xff] %v10626
        %10633 = vst [vmem:[%s2174 + $0x8] sm:$0xff] %v10627
        %10634 = vst [vmem:[%s2174 + $0x10] sm:$0xff] %v10628
        %10635 = vst [vmem:[%s2174 + $0x18] sm:$0xff] %v10629
        %10636 = vst [vmem:[%s2174 + $0x20] sm:$0xff] %v10630
        %10637 = vst [vmem:[%s2174 + $0x28] sm:$0xff] %v10631
        %p10638 = scmp.eq.s32.totalorder %s51, 1
        // Predicated region
        $region168: #{backbone_forward.1} parent=83 // pred_check
          %p10639 = pneg %p10638
        $region169: #{backbone_forward.1} parent=83 // pred_check_branch
          %10641 = sbr.rel (%p10639) target = $region171
        $region170: #{backbone_forward.1} parent=83 // pred_region
          %v10642 = vld [vmem:[#allocation26] sm:$0x7]
          %v10643 = vld [vmem:[#allocation28] sm:$0x7]
          %v10644 = vadd.f32 %v10626, %v10627
          %v10645 = vadd.f32 %v10644, %v10628
          %10646 = vadd.xlane.f32.xlu0 %v10645
          %v10647 = vpop.xlane.xlu0 %10646
          %v10648 = vadd.f32 %v10629, %v10630
          %v10649 = vadd.f32 %v10648, %v10631
          %10650 = vadd.xlane.f32.xlu0 %v10649
          %v10651 = vpop.xlane.xlu0 %10650
          %v10652 = vmul.f32 %v10647, %v2197
          %v10653 = vmul.f32 %v10651, %v2197
          %v10654 = vsub.f32 %v10626, %v10652
          %v10655 = vsub.f32 %v10627, %v10652
          %v10656 = vsub.f32 %v10628, %v10652
          %v10657 = vsub.f32 %v10629, %v10653
          %v10658 = vsub.f32 %v10630, %v10653
          %v10659 = vsub.f32 %v10631, %v10653
          %v10660 = vmul.f32 %v10654, %v10654
          %v10661 = vmul.f32 %v10655, %v10655
          %v10662 = vmul.f32 %v10656, %v10656
          %v10663 = vmul.f32 %v10657, %v10657
          %v10664 = vmul.f32 %v10658, %v10658
          %v10665 = vmul.f32 %v10659, %v10659
          %v10666 = vadd.f32 %v10660, %v10661
          %v10667 = vadd.f32 %v10666, %v10662
          %10668 = vadd.xlane.f32.xlu0 %v10667
          %v10669 = vpop.xlane.xlu0 %10668
          %v10670 = vadd.f32 %v10663, %v10664
          %v10671 = vadd.f32 %v10670, %v10665
          %10672 = vadd.xlane.f32.xlu0 %v10671
          %v10673 = vpop.xlane.xlu0 %10672
          %v10674 = vmul.f32 %v10669, %v2197
          %v10675 = vmul.f32 %v10673, %v2197
          %v10676 = vadd.f32 %v10674, 1e-06
          %v10677 = vadd.f32 %v10675, 1e-06
          %v10678 = vrsqrt.pop %v10676
          %v10679 = vmul.f32 %v10678, %v10676
          %v10680 = vmul.f32 %v10679, %v10678
          %v10681 = vmul.f32 0.5, %v10680
          %v10682 = vsub.f32 1.5, %v10681
          %v10683 = vmul.f32 %v10678, %v10682
          %vm10684 = vweird.f32 %v10676
          %vm10685 = vweird.f32 %v10678
          %vm10686 = vmor %vm10684, %vm10685
          %v10687 = vsel %vm10686, %v10678, %v10683
          %v10688 = vrsqrt.pop %v10677
          %v10689 = vmul.f32 %v10688, %v10677
          %v10690 = vmul.f32 %v10689, %v10688
          %v10691 = vmul.f32 0.5, %v10690
          %v10692 = vsub.f32 1.5, %v10691
          %v10693 = vmul.f32 %v10688, %v10692
          %vm10694 = vweird.f32 %v10677
          %vm10695 = vweird.f32 %v10688
          %vm10696 = vmor %vm10694, %vm10695
          %v10697 = vsel %vm10696, %v10688, %v10693
          %v10698 = vmul.f32 %v10654, %v10687
          %v10699 = vmul.f32 %v10655, %v10687
          %v10700 = vmul.f32 %v10656, %v10687
          %v10701 = vmul.f32 %v10657, %v10697
          %v10702 = vmul.f32 %v10658, %v10697
          %v10703 = vmul.f32 %v10659, %v10697
          %v10705 = vperm.slane %v10642, 0
          %v10706 = vperm.slane %v10642, 1
          %v10707 = vperm.slane %v10642, 2
          %v10711 = vmul.f32 %v10698, %v10705
          %v10712 = vmul.f32 %v10699, %v10706
          %v10713 = vmul.f32 %v10700, %v10707
          %v10714 = vmul.f32 %v10701, %v10705
          %v10715 = vmul.f32 %v10702, %v10706
          %v10716 = vmul.f32 %v10703, %v10707
          %v10718 = vperm.slane %v10643, 0
          %v10719 = vperm.slane %v10643, 1
          %v10720 = vperm.slane %v10643, 2
          %v10724 = vadd.f32 %v10711, %v10718
          %v10725 = vadd.f32 %v10712, %v10719
          %v10726 = vadd.f32 %v10713, %v10720
          %v10727 = vadd.f32 %v10714, %v10718
          %v10728 = vadd.f32 %v10715, %v10719
          %v10729 = vadd.f32 %v10716, %v10720
          %10730 = vst [vmem:[%s2174] sm:$0xff] %v10724
          %10731 = vst [vmem:[%s2174 + $0x8] sm:$0xff] %v10725
          %10732 = vst [vmem:[%s2174 + $0x10] sm:$0xff] %v10726
          %10733 = vst [vmem:[%s2174 + $0x18] sm:$0xff] %v10727
          %10734 = vst [vmem:[%s2174 + $0x20] sm:$0xff] %v10728
          %10735 = vst [vmem:[%s2174 + $0x28] sm:$0xff] %v10729
          %s10736 = smul.addr %s2172, 8
          %s10737 = scalar_lea.vmem %s17, %s10736
          // Predicated region
          $region172: #{backbone_forward.1} parent=170 // pred_check
            _
          $region173: #{backbone_forward.1} parent=170 // pred_check_branch
            %10739 = sbr.rel (0) target = $region175
          $region174: #{backbone_forward.1} parent=170 // pred_region
            loop: start=0, step=1, limit=1
            $region176: #{backbone_forward.1} parent=174 // loop_pre_header
              _
            $region177: #{backbone_forward.1} parent=174 // loop_header
              %s10741 = sphi 0, %s10745
              %p10742 = scmp.ge.s32.totalorder %s10741, 1
              %s10746 = sphi %s2174, %s2174
              %s10747 = sphi %s10737, %s10737
            $region178: #{backbone_forward.1} parent=174 // loop_header_branch
              %10744 = sbr.rel (%p10742) target = $region182
            $region179: #{backbone_forward.1} parent=174 // loop_body
              %v10748 = vld [vmem:[%s10746] sm:$0xff]
              %10749 = vst [vmem:[%s10747] sm:$0xff] %v10748
              %v10750 = vld [vmem:[%s10746 + $0x8] sm:$0xff]
              %10751 = vst [vmem:[%s10747 + $0x8] sm:$0xff] %v10750
              %v10752 = vld [vmem:[%s10746 + $0x10] sm:$0xff]
              %10753 = vst [vmem:[%s10747 + $0x10] sm:$0xff] %v10752
              %v10754 = vld [vmem:[%s10746 + $0x18] sm:$0xff]
              %10755 = vst [vmem:[%s10747 + $0x18] sm:$0xff] %v10754
              %v10756 = vld [vmem:[%s10746 + $0x20] sm:$0xff]
              %10757 = vst [vmem:[%s10747 + $0x20] sm:$0xff] %v10756
              %v10758 = vld [vmem:[%s10746 + $0x28] sm:$0xff]
              %10759 = vst [vmem:[%s10747 + $0x28] sm:$0xff] %v10758
            $region180: #{backbone_forward.1} parent=174 // loop_footer
              %s10745 = sadd.s32 1, %s10741
            $region181: #{backbone_forward.1} parent=174 // loop_footer_branch
              %10740 = sbr.rel target = $region177
            $region182: #{backbone_forward.1} parent=174 // loop_exit
              _
          $region175: #{backbone_forward.1} parent=170 // pred_fallthru
            _
          // Predicated region
          $region183: #{backbone_forward.1} parent=170 // pred_check
            _
          $region184: #{backbone_forward.1} parent=170 // pred_check_branch
            %10761 = sbr.rel target = $region186
          $region185: #{backbone_forward.1} parent=170 // pred_region
            _
          $region186: #{backbone_forward.1} parent=170 // pred_fallthru
            _
          // Predicated region
          $region187: #{backbone_forward.1} parent=170 // pred_check
            _
          $region188: #{backbone_forward.1} parent=170 // pred_check_branch
            %10764 = sbr.rel (0) target = $region190
          $region189: #{backbone_forward.1} parent=170 // pred_region
            %10765 = vsyncadd [#allocation5], 768
          $region190: #{backbone_forward.1} parent=170 // pred_fallthru
            _
          %s10766 = smul.u32 8, 2
          %s10767 = smul.u32 %s10766, 3
          %s10768 = sshll.u32 %s10767, 4
          %10769 = dma.done [#allocation5], %s10768
        $region171: #{backbone_forward.1} parent=83 // pred_fallthru
          _
      $region84: #{backbone_forward.1} parent=5 // pred_fallthru
        _
    $region6: #{backbone_forward.1} parent=1 // loop_footer
      %s47 = sadd.s32 1, %s43
    $region7: #{backbone_forward.1} parent=1 // loop_footer_branch
      %42 = sbr.rel target = $region3
    $region8: #{backbone_forward.1} parent=1 // loop_exit
      _
    %10770 = vsyncpa [#allocation7], 1
    %s10771 = scalar_lea.sflag [#allocation7], 1
    %10772 = vsyncpa %s10771, 1
    %10773 = vsyncpa [#allocation9], 1
    %s10774 = scalar_lea.sflag [#allocation9], 1
    %10775 = vsyncpa %s10774, 1
    %10776 = vsyncpa [#allocation12], 1
    %s10777 = scalar_lea.sflag [#allocation12], 1
    %10778 = vsyncpa %s10777, 1
    %10779 = vsyncpa [#allocation15], 1
    %s10780 = scalar_lea.sflag [#allocation15], 1
    %10781 = vsyncpa %s10780, 1
    %10782 = vsyncpa [#allocation18], 1
    %s10783 = scalar_lea.sflag [#allocation18], 1
    %10784 = vsyncpa %s10783, 1
    %10785 = vsyncpa [#allocation21], 1
    %s10786 = scalar_lea.sflag [#allocation21], 1
    %10787 = vsyncpa %s10786, 1
    %10788 = vsyncpa [#allocation24], 1
    %s10789 = scalar_lea.sflag [#allocation24], 1
    %10790 = vsyncpa %s10789, 1
    %10791 = vsyncpa [#allocation27], 1
  %10792 = vsyncmov [#allocation5]
  %s10793 = vpop.sfrf %10792
  %p10794 = scmp.eq.s32.totalorder %s10793, 0
  %p10795 = pneg %p10794
  %10797 = shalt.err (%p10795)

</llo_original>
